<compile_context>
chip_gen: v7x
topology: tpu7x:2x2x1
jax: 0.10.0
libtpu: 0.0.40
codegen_flags: <defaults>
</compile_context>

<pallas_src>
import jax
import jax.numpy as jnp
from jax import lax
from jax.experimental import pallas as pl
from jax.experimental.pallas import tpu as pltpu

# ----------------------------- hyper-parameters -----------------------------
N_USERS = 32
N_ITEMS = 32
N_NODES = N_USERS + N_ITEMS
EMB_DIM = 32
N_INTENTS = 16
N_LAYERS = 2
TEMP = 1.0
EMB_REG = 2.5e-5
CEN_REG = 5e-3
SSL_REG = 1e-1
BATCH = 8


def _full_spec(shape):
    """Whole-array BlockSpec (grid=(1,))."""
    return pl.BlockSpec(shape, lambda *_: (0,) * len(shape))


def _normalize_rows(x, eps=1e-12):
    # torch.nn.functional.normalize(..., dim=1): x / max(||x||, eps)
    n = jnp.sqrt(jnp.sum(x * x, axis=1, keepdims=True))
    return x / jnp.maximum(n, eps)


# ====================== single fused forward-pass kernel =====================
def _dccf_kernel(u_idx_ref, p_idx_ref, n_idx_ref, g_ref, a_ref,
                 ue_ref, ie_ref, uw_ref, iw_ref, out_ref):
    g = g_ref[...]                                   # [N, N] normalized adjacency
    a = a_ref[...]                                   # [N, N] 0/1 adjacency mask
    ue = ue_ref[...]                                 # [U, D]
    ie = ie_ref[...]                                 # [I, D]
    uw = uw_ref[...]                                 # [D, K]
    iw = iw_ref[...]                                 # [D, K]

    # -------------------------------- inference -----------------------------
    cur = jnp.concatenate([ue, ie], axis=0)          # [N, D]
    total = cur

    def intent(e, w):
        # softmax(E @ W, dim=1) @ W.T  (fused matmul + softmax + matmul)
        logits = jnp.dot(e, w, preferred_element_type=jnp.float32)      # [M, K]
        m = jnp.max(logits, axis=1, keepdims=True)
        p = jnp.exp(logits - m)
        p = p / jnp.sum(p, axis=1, keepdims=True)
        return lax.dot_general(p, w, (((1,), (1,)), ((), ())),
                               preferred_element_type=jnp.float32)       # [M, D]

    def adaptive(h, e):
        # dense equivalent of _adaptive_mask + spmm:
        #   hn = normalize(h); alpha = ((hn hn^T)+1)/2 masked by A
        #   D_inv = 1/rowsum(alpha) (0 where rowsum==0); out = (D_inv*alpha) @ E
        hn = _normalize_rows(h)
        sim = lax.dot_general(hn, hn, (((1,), (1,)), ((), ())),
                              preferred_element_type=jnp.float32)        # [N, N]
        alpha = (sim + 1.0) * 0.5 * a
        d = jnp.sum(alpha, axis=1, keepdims=True)
        d_inv = jnp.where(d > 0.0, 1.0 / d, 0.0)
        return jnp.dot(alpha * d_inv, e, preferred_element_type=jnp.float32)

    layer_parts = []                                 # per-layer (gnn, int, gaa, iaa)
    for _ in range(N_LAYERS):                        # static unroll
        gnn = jnp.dot(g, cur, preferred_element_type=jnp.float32)        # [N, D]
        int_e = jnp.concatenate(
            [intent(cur[:N_USERS], uw), intent(cur[N_USERS:], iw)], axis=0)
        gaa = adaptive(gnn, cur)
        iaa = adaptive(int_e, cur)
        layer_parts.append((gnn, int_e, gaa, iaa))
        cur = gnn + int_e + gaa + iaa + cur
        total = total + cur

    # ----------------- in-kernel batch gathers (one-hot MXU) ----------------
    u_iota = lax.broadcasted_iota(jnp.int32, (BATCH, N_USERS), 1)
    i_iota = lax.broadcasted_iota(jnp.int32, (BATCH, N_ITEMS), 1)
    oh_u = jnp.where(u_iota == u_idx_ref[...], 1.0, 0.0)       # [B, U]
    oh_p = jnp.where(i_iota == p_idx_ref[...], 1.0, 0.0)       # [B, I]
    oh_n = jnp.where(i_iota == n_idx_ref[...], 1.0, 0.0)       # [B, I]

    def sel_u(x):
        return jnp.dot(oh_u, x, preferred_element_type=jnp.float32)

    def sel_p(x):
        return jnp.dot(oh_p, x, preferred_element_type=jnp.float32)

    def sel_n(x):
        return jnp.dot(oh_n, x, preferred_element_type=jnp.float32)

    def sumsq(x):
        return jnp.sum(jnp.sum(x * x, axis=1, keepdims=True), axis=0, keepdims=True)

    # ---------------- BPR (mf) loss on the aggregated embeddings ------------
    u_e = sel_u(total[:N_USERS])
    p_e = sel_p(total[N_USERS:])
    n_e = sel_n(total[N_USERS:])
    pos_s = jnp.sum(u_e * p_e, axis=1, keepdims=True)
    neg_s = jnp.sum(u_e * n_e, axis=1, keepdims=True)
    x = neg_s - pos_s
    softplus = jnp.maximum(x, 0.0) + jnp.log1p(jnp.exp(-jnp.abs(x)))
    mf = jnp.sum(softplus, axis=0, keepdims=True) / BATCH                # (1,1)

    # ---------------- embedding / centroid regularizers ---------------------
    emb = EMB_REG * (sumsq(sel_u(ue)) + sumsq(sel_p(ie)) + sumsq(sel_n(ie)))
    cen = CEN_REG * (sumsq(uw) + sumsq(iw))

    # ---------------- contrastive (SSL) loss, all layers & pairs ------------
    # torch.unique sorts+dedups; the loss is permutation-invariant and the
    # batch indices are constructed unique in-script, so no sort is needed.
    # TODO(synk): general-case dedup (dynamic output size) has no static-shape
    # Pallas equivalent.
    def cal_loss(e1, e2):
        pos_score = jnp.exp(jnp.sum(e1 * e2, axis=1, keepdims=True) / TEMP)
        sims = lax.dot_general(e1, e2, (((1,), (1,)), ((), ())),
                               preferred_element_type=jnp.float32)       # [B, B]
        neg_score = jnp.sum(jnp.exp(sims / TEMP), axis=1, keepdims=True)
        per = -jnp.log(pos_score / (neg_score + 1e-8) + 1e-8)
        return jnp.sum(per, axis=0, keepdims=True) / e1.shape[0]

    # Lane-pack all L layers x 4 views -> a single [rows, L*4*D] slab, so the
    # batch gathers for the SSL loss are just 2 lane-dense MXU matmuls.
    pack_u = jnp.concatenate(
        [t[:N_USERS] for parts in layer_parts for t in parts], axis=1)   # [U, L*4*D]
    pack_i = jnp.concatenate(
        [t[N_USERS:] for parts in layer_parts for t in parts], axis=1)   # [I, L*4*D]
    ug = sel_u(pack_u)                                                   # [B, L*4*D]
    ig = sel_p(pack_i)                                                   # [B, L*4*D]

    D = EMB_DIM
    cl = jnp.zeros((1, 1), jnp.float32)
    for layer in range(N_LAYERS):                                        # static unroll
        base = layer * 4 * D
        u_gnn = _normalize_rows(ug[:, base + 0 * D:base + 1 * D])
        u_int = _normalize_rows(ug[:, base + 1 * D:base + 2 * D])
        u_gaa = _normalize_rows(ug[:, base + 2 * D:base + 3 * D])
        u_iaa = _normalize_rows(ug[:, base + 3 * D:base + 4 * D])
        i_gnn = _normalize_rows(ig[:, base + 0 * D:base + 1 * D])
        i_int = _normalize_rows(ig[:, base + 1 * D:base + 2 * D])
        i_gaa = _normalize_rows(ig[:, base + 2 * D:base + 3 * D])
        i_iaa = _normalize_rows(ig[:, base + 3 * D:base + 4 * D])
        cl = cl + cal_loss(u_gnn, u_int) + cal_loss(u_gnn, u_gaa) + cal_loss(u_gnn, u_iaa)
        cl = cl + cal_loss(i_gnn, i_int) + cal_loss(i_gnn, i_gaa) + cal_loss(i_gnn, i_iaa)
    cl = SSL_REG * cl

    # Single lane-dense write: losses placed at lanes 0..3 of a [1,128] row.
    lane = lax.broadcasted_iota(jnp.int32, (1, 128), 1)
    out_ref[...] = (jnp.where(lane == 0, mf, 0.0)
                    + jnp.where(lane == 1, emb, 0.0)
                    + jnp.where(lane == 2, cen, 0.0)
                    + jnp.where(lane == 3, cl, 0.0))


def pallas_dccf_forward(users, pos_items, neg_items, g, a_mask,
                        user_emb, item_emb, user_intent, item_intent):
    u2 = users.astype(jnp.int32).reshape(BATCH, 1)
    p2 = pos_items.astype(jnp.int32).reshape(BATCH, 1)
    n2 = neg_items.astype(jnp.int32).reshape(BATCH, 1)
    return pl.pallas_call(
        _dccf_kernel,
        out_shape=jax.ShapeDtypeStruct((1, 128), jnp.float32),
        grid=(1,),
        in_specs=[
            _full_spec((BATCH, 1)),
            _full_spec((BATCH, 1)),
            _full_spec((BATCH, 1)),
            _full_spec((N_NODES, N_NODES)),
            _full_spec((N_NODES, N_NODES)),
            _full_spec((N_USERS, EMB_DIM)),
            _full_spec((N_ITEMS, EMB_DIM)),
            _full_spec((EMB_DIM, N_INTENTS)),
            _full_spec((EMB_DIM, N_INTENTS)),
        ],
        out_specs=_full_spec((1, 128)),
        compiler_params=pltpu.CompilerParams(dimension_semantics=("arbitrary",)),
    )(u2, p2, n2, g, a_mask, user_emb, item_emb, user_intent, item_intent)


# ================================ model glue =================================
def build_graph():
    """Deterministic bipartite user-item graph (dense 0/1 adjacency) + G."""
    u_idx = jnp.arange(N_USERS)
    items = jnp.stack(
        [u_idx % N_ITEMS, (3 * u_idx + 1) % N_ITEMS, (7 * u_idx + 2) % N_ITEMS], axis=1
    )                                                                   # [U, 3]
    rows = jnp.repeat(u_idx, 3)
    cols = N_USERS + items.reshape(-1)
    a = jnp.zeros((N_NODES, N_NODES), jnp.float32)
    a = a.at[rows, cols].set(1.0).at[cols, rows].set(1.0)
    # normalized adjacency G = D^{-1/2} A D^{-1/2}   (== _cal_sparse_adj)
    deg = jnp.sum(a, axis=1)
    d_inv_sqrt = jnp.where(deg > 0, deg ** -0.5, 0.0)
    g = d_inv_sqrt[:, None] * a * d_inv_sqrt[None, :]
    return a, g


def init_params(key):
    def xavier_normal(k, shape):
        fan_in, fan_out = shape[0], shape[1]
        std = (2.0 / (fan_in + fan_out)) ** 0.5
        return std * jax.random.normal(k, shape, jnp.float32)

    k1, k2, k3, k4 = jax.random.split(key, 4)
    return {
        "user_embedding": xavier_normal(k1, (N_USERS, EMB_DIM)),
        "item_embedding": xavier_normal(k2, (N_ITEMS, EMB_DIM)),
        "user_intent": xavier_normal(k3, (EMB_DIM, N_INTENTS)),
        "item_intent": xavier_normal(k4, (EMB_DIM, N_INTENTS)),
    }


def dccf_forward(params, g, a_mask, users, pos_items, neg_items):
    out = pallas_dccf_forward(
        users, pos_items, neg_items, g, a_mask,
        params["user_embedding"], params["item_embedding"],
        params["user_intent"], params["item_intent"],
    )
    mf_loss = out[0, 0]
    emb_loss = out[0, 1]
    cen_loss = out[0, 2]
    cl_loss = out[0, 3]
    return mf_loss, emb_loss, cen_loss, cl_loss


# ==================================== main ===================================
if __name__ == "__main__":
    key = jax.random.PRNGKey(0)
    k_params, k_u, k_p, k_n = jax.random.split(key, 4)

    params = init_params(k_params)
    a_mask, g = build_graph()

    # unique user / pos-item indices (so torch.unique == identity up to perm),
    # arbitrary negatives
    users = jax.random.permutation(k_u, N_USERS)[:BATCH].astype(jnp.int32)
    pos_items = jax.random.permutation(k_p, N_ITEMS)[:BATCH].astype(jnp.int32)
    neg_items = jax.random.randint(k_n, (BATCH,), 0, N_ITEMS, jnp.int32)

    fwd = jax.jit(dccf_forward)
    mf_loss, emb_loss, cen_loss, cl_loss = fwd(
        params, g, a_mask, users, pos_items, neg_items
    )
    jax.block_until_ready((mf_loss, emb_loss, cen_loss, cl_loss))
    print("KERNEL_OK")
</pallas_src>

<mosaic_0001>
module attributes {stable_mosaic.version = 11 : i64} {
  func.func @_dccf_kernel(%arg0: i32, %arg1: memref<8x1xi32, #tpu.memory_space<vmem>>, %arg2: memref<8x1xi32, #tpu.memory_space<vmem>>, %arg3: memref<8x1xi32, #tpu.memory_space<vmem>>, %arg4: memref<64x64xf32, #tpu.memory_space<vmem>>, %arg5: memref<64x64xf32, #tpu.memory_space<vmem>>, %arg6: memref<32x32xf32, #tpu.memory_space<vmem>>, %arg7: memref<32x32xf32, #tpu.memory_space<vmem>>, %arg8: memref<32x16xf32, #tpu.memory_space<vmem>>, %arg9: memref<32x16xf32, #tpu.memory_space<vmem>>, %arg10: memref<1x128xf32, #tpu.memory_space<vmem>>) attributes {dimension_semantics = [#tpu.dimension_semantics<arbitrary>], iteration_bounds = array<i64: 1>, scalar_prefetch = 0 : i64, scratch_operands = 0 : i64, tpu.core_type = #tpu.core_type<tc>, window_params = [{pipeline_mode = #tpu.pipeline_mode<synchronous>, transform_indices = @transform_0, window_bounds = array<i64: 8, 1>}, {pipeline_mode = #tpu.pipeline_mode<synchronous>, transform_indices = @transform_1, window_bounds = array<i64: 8, 1>}, {pipeline_mode = #tpu.pipeline_mode<synchronous>, transform_indices = @transform_2, window_bounds = array<i64: 8, 1>}, {pipeline_mode = #tpu.pipeline_mode<synchronous>, transform_indices = @transform_3, window_bounds = array<i64: 64, 64>}, {pipeline_mode = #tpu.pipeline_mode<synchronous>, transform_indices = @transform_4, window_bounds = array<i64: 64, 64>}, {pipeline_mode = #tpu.pipeline_mode<synchronous>, transform_indices = @transform_5, window_bounds = array<i64: 32, 32>}, {pipeline_mode = #tpu.pipeline_mode<synchronous>, transform_indices = @transform_6, window_bounds = array<i64: 32, 32>}, {pipeline_mode = #tpu.pipeline_mode<synchronous>, transform_indices = @transform_7, window_bounds = array<i64: 32, 16>}, {pipeline_mode = #tpu.pipeline_mode<synchronous>, transform_indices = @transform_8, window_bounds = array<i64: 32, 16>}, {pipeline_mode = #tpu.pipeline_mode<synchronous>, transform_indices = @transform_9, window_bounds = array<i64: 1, 128>}]} {
    %c0 = arith.constant 0 : index
    %c0_0 = arith.constant 0 : index
    %0 = vector.load %arg4[%c0, %c0_0] : memref<64x64xf32, #tpu.memory_space<vmem>>, vector<64x64xf32>
    %c0_1 = arith.constant 0 : index
    %c0_2 = arith.constant 0 : index
    %1 = vector.load %arg5[%c0_1, %c0_2] : memref<64x64xf32, #tpu.memory_space<vmem>>, vector<64x64xf32>
    %c0_3 = arith.constant 0 : index
    %c0_4 = arith.constant 0 : index
    %2 = vector.load %arg6[%c0_3, %c0_4] : memref<32x32xf32, #tpu.memory_space<vmem>>, vector<32x32xf32>
    %c0_5 = arith.constant 0 : index
    %c0_6 = arith.constant 0 : index
    %3 = vector.load %arg7[%c0_5, %c0_6] : memref<32x32xf32, #tpu.memory_space<vmem>>, vector<32x32xf32>
    %c0_7 = arith.constant 0 : index
    %c0_8 = arith.constant 0 : index
    %4 = vector.load %arg8[%c0_7, %c0_8] : memref<32x16xf32, #tpu.memory_space<vmem>>, vector<32x16xf32>
    %c0_9 = arith.constant 0 : index
    %c0_10 = arith.constant 0 : index
    %5 = vector.load %arg9[%c0_9, %c0_10] : memref<32x16xf32, #tpu.memory_space<vmem>>, vector<32x16xf32>
    %6 = tpu.concatenate %2, %3 in 0 : vector<32x32xf32>, vector<32x32xf32> -> vector<64x32xf32>
    %cst = arith.constant dense<0.000000e+00> : vector<64x32xf32>
    %7 = tpu.matmul %0, %6, %cst {dimension_numbers = #tpu.dot_dimension_numbers<[1], [0], [0], [1], [0, 0, 1, 1], [], []>} : vector<64x64xf32>, vector<64x32xf32>, vector<64x32xf32> -> vector<64x32xf32>
    %8 = vector.extract_strided_slice %6 {offsets = [0, 0], sizes = [32, 32], strides = [1, 1]} : vector<64x32xf32> to vector<32x32xf32>
    %cst_11 = arith.constant dense<0.000000e+00> : vector<32x16xf32>
    %9 = tpu.matmul %8, %4, %cst_11 {dimension_numbers = #tpu.dot_dimension_numbers<[1], [0], [0], [1], [0, 0, 1, 1], [], []>} : vector<32x32xf32>, vector<32x16xf32>, vector<32x16xf32> -> vector<32x16xf32>
    %cst_12 = arith.constant dense<0xFF800000> : vector<32xf32>
    %10 = vector.multi_reduction <maximumf>, %9, %cst_12 [1] : vector<32x16xf32> to vector<32xf32>
    %11 = vector.shape_cast %10 : vector<32xf32> to vector<32x1xf32>
    %12 = vector.broadcast %11 : vector<32x1xf32> to vector<32x16xf32>
    %13 = arith.subf %9, %12 : vector<32x16xf32>
    %14 = math.exp %13 : vector<32x16xf32>
    %cst_13 = arith.constant dense<0.000000e+00> : vector<32xf32>
    %15 = vector.multi_reduction <add>, %14, %cst_13 [1] : vector<32x16xf32> to vector<32xf32>
    %16 = vector.shape_cast %15 : vector<32xf32> to vector<32x1xf32>
    %17 = vector.broadcast %16 : vector<32x1xf32> to vector<32x16xf32>
    %18 = arith.divf %14, %17 : vector<32x16xf32>
    %cst_14 = arith.constant dense<0.000000e+00> : vector<32x32xf32>
    %19 = tpu.matmul %18, %4, %cst_14 {dimension_numbers = #tpu.dot_dimension_numbers<[1], [1], [0], [0], [0, 0, 1, 0], [], []>} : vector<32x16xf32>, vector<32x16xf32>, vector<32x32xf32> -> vector<32x32xf32>
    %20 = vector.extract_strided_slice %6 {offsets = [32, 0], sizes = [32, 32], strides = [1, 1]} : vector<64x32xf32> to vector<32x32xf32>
    %cst_15 = arith.constant dense<0.000000e+00> : vector<32x16xf32>
    %21 = tpu.matmul %20, %5, %cst_15 {dimension_numbers = #tpu.dot_dimension_numbers<[1], [0], [0], [1], [0, 0, 1, 1], [], []>} : vector<32x32xf32>, vector<32x16xf32>, vector<32x16xf32> -> vector<32x16xf32>
    %cst_16 = arith.constant dense<0xFF800000> : vector<32xf32>
    %22 = vector.multi_reduction <maximumf>, %21, %cst_16 [1] : vector<32x16xf32> to vector<32xf32>
    %23 = vector.shape_cast %22 : vector<32xf32> to vector<32x1xf32>
    %24 = vector.broadcast %23 : vector<32x1xf32> to vector<32x16xf32>
    %25 = arith.subf %21, %24 : vector<32x16xf32>
    %26 = math.exp %25 : vector<32x16xf32>
    %cst_17 = arith.constant dense<0.000000e+00> : vector<32xf32>
    %27 = vector.multi_reduction <add>, %26, %cst_17 [1] : vector<32x16xf32> to vector<32xf32>
    %28 = vector.shape_cast %27 : vector<32xf32> to vector<32x1xf32>
    %29 = vector.broadcast %28 : vector<32x1xf32> to vector<32x16xf32>
    %30 = arith.divf %26, %29 : vector<32x16xf32>
    %cst_18 = arith.constant dense<0.000000e+00> : vector<32x32xf32>
    %31 = tpu.matmul %30, %5, %cst_18 {dimension_numbers = #tpu.dot_dimension_numbers<[1], [1], [0], [0], [0, 0, 1, 0], [], []>} : vector<32x16xf32>, vector<32x16xf32>, vector<32x32xf32> -> vector<32x32xf32>
    %32 = tpu.concatenate %19, %31 in 0 : vector<32x32xf32>, vector<32x32xf32> -> vector<64x32xf32>
    %33 = arith.mulf %7, %7 : vector<64x32xf32>
    %cst_19 = arith.constant dense<0.000000e+00> : vector<64xf32>
    %34 = vector.multi_reduction <add>, %33, %cst_19 [1] : vector<64x32xf32> to vector<64xf32>
    %35 = vector.shape_cast %34 : vector<64xf32> to vector<64x1xf32>
    %36 = math.sqrt %35 : vector<64x1xf32>
    %cst_20 = arith.constant 9.99999996E-13 : f32
    %37 = vector.broadcast %cst_20 : f32 to vector<64x1xf32>
    %38 = arith.maximumf %36, %37 : vector<64x1xf32>
    %39 = vector.broadcast %38 : vector<64x1xf32> to vector<64x32xf32>
    %40 = arith.divf %7, %39 : vector<64x32xf32>
    %cst_21 = arith.constant dense<0.000000e+00> : vector<64x64xf32>
    %41 = tpu.matmul %40, %40, %cst_21 {dimension_numbers = #tpu.dot_dimension_numbers<[1], [1], [0], [0], [0, 0, 1, 0], [], []>} : vector<64x32xf32>, vector<64x32xf32>, vector<64x64xf32> -> vector<64x64xf32>
    %cst_22 = arith.constant 1.000000e+00 : f32
    %42 = vector.broadcast %cst_22 : f32 to vector<64x64xf32>
    %43 = arith.addf %41, %42 : vector<64x64xf32>
    %cst_23 = arith.constant 5.000000e-01 : f32
    %44 = vector.broadcast %cst_23 : f32 to vector<64x64xf32>
    %45 = arith.mulf %43, %44 : vector<64x64xf32>
    %46 = arith.mulf %45, %1 : vector<64x64xf32>
    %cst_24 = arith.constant dense<0.000000e+00> : vector<64xf32>
    %47 = vector.multi_reduction <add>, %46, %cst_24 [1] : vector<64x64xf32> to vector<64xf32>
    %48 = vector.shape_cast %47 : vector<64xf32> to vector<64x1xf32>
    %cst_25 = arith.constant 0.000000e+00 : f32
    %49 = vector.broadcast %cst_25 : f32 to vector<64x1xf32>
    %50 = arith.cmpf ogt, %48, %49 : vector<64x1xf32>
    %cst_26 = arith.constant 1.000000e+00 : f32
    %51 = vector.broadcast %cst_26 : f32 to vector<64x1xf32>
    %52 = arith.divf %51, %48 : vector<64x1xf32>
    %cst_27 = arith.constant 0.000000e+00 : f32
    %53 = vector.broadcast %cst_27 : f32 to vector<64x1xf32>
    %54 = arith.select %50, %52, %53 : vector<64x1xi1>, vector<64x1xf32>
    %55 = vector.broadcast %54 : vector<64x1xf32> to vector<64x64xf32>
    %56 = arith.mulf %46, %55 : vector<64x64xf32>
    %cst_28 = arith.constant dense<0.000000e+00> : vector<64x32xf32>
    %57 = tpu.matmul %56, %6, %cst_28 {dimension_numbers = #tpu.dot_dimension_numbers<[1], [0], [0], [1], [0, 0, 1, 1], [], []>} : vector<64x64xf32>, vector<64x32xf32>, vector<64x32xf32> -> vector<64x32xf32>
    %58 = arith.mulf %32, %32 : vector<64x32xf32>
    %cst_29 = arith.constant dense<0.000000e+00> : vector<64xf32>
    %59 = vector.multi_reduction <add>, %58, %cst_29 [1] : vector<64x32xf32> to vector<64xf32>
    %60 = vector.shape_cast %59 : vector<64xf32> to vector<64x1xf32>
    %61 = math.sqrt %60 : vector<64x1xf32>
    %cst_30 = arith.constant 9.99999996E-13 : f32
    %62 = vector.broadcast %cst_30 : f32 to vector<64x1xf32>
    %63 = arith.maximumf %61, %62 : vector<64x1xf32>
    %64 = vector.broadcast %63 : vector<64x1xf32> to vector<64x32xf32>
    %65 = arith.divf %32, %64 : vector<64x32xf32>
    %cst_31 = arith.constant dense<0.000000e+00> : vector<64x64xf32>
    %66 = tpu.matmul %65, %65, %cst_31 {dimension_numbers = #tpu.dot_dimension_numbers<[1], [1], [0], [0], [0, 0, 1, 0], [], []>} : vector<64x32xf32>, vector<64x32xf32>, vector<64x64xf32> -> vector<64x64xf32>
    %cst_32 = arith.constant 1.000000e+00 : f32
    %67 = vector.broadcast %cst_32 : f32 to vector<64x64xf32>
    %68 = arith.addf %66, %67 : vector<64x64xf32>
    %cst_33 = arith.constant 5.000000e-01 : f32
    %69 = vector.broadcast %cst_33 : f32 to vector<64x64xf32>
    %70 = arith.mulf %68, %69 : vector<64x64xf32>
    %71 = arith.mulf %70, %1 : vector<64x64xf32>
    %cst_34 = arith.constant dense<0.000000e+00> : vector<64xf32>
    %72 = vector.multi_reduction <add>, %71, %cst_34 [1] : vector<64x64xf32> to vector<64xf32>
    %73 = vector.shape_cast %72 : vector<64xf32> to vector<64x1xf32>
    %cst_35 = arith.constant 0.000000e+00 : f32
    %74 = vector.broadcast %cst_35 : f32 to vector<64x1xf32>
    %75 = arith.cmpf ogt, %73, %74 : vector<64x1xf32>
    %cst_36 = arith.constant 1.000000e+00 : f32
    %76 = vector.broadcast %cst_36 : f32 to vector<64x1xf32>
    %77 = arith.divf %76, %73 : vector<64x1xf32>
    %cst_37 = arith.constant 0.000000e+00 : f32
    %78 = vector.broadcast %cst_37 : f32 to vector<64x1xf32>
    %79 = arith.select %75, %77, %78 : vector<64x1xi1>, vector<64x1xf32>
    %80 = vector.broadcast %79 : vector<64x1xf32> to vector<64x64xf32>
    %81 = arith.mulf %71, %80 : vector<64x64xf32>
    %cst_38 = arith.constant dense<0.000000e+00> : vector<64x32xf32>
    %82 = tpu.matmul %81, %6, %cst_38 {dimension_numbers = #tpu.dot_dimension_numbers<[1], [0], [0], [1], [0, 0, 1, 1], [], []>} : vector<64x64xf32>, vector<64x32xf32>, vector<64x32xf32> -> vector<64x32xf32>
    %83 = arith.addf %7, %32 : vector<64x32xf32>
    %84 = arith.addf %83, %57 : vector<64x32xf32>
    %85 = arith.addf %84, %82 : vector<64x32xf32>
    %86 = arith.addf %85, %6 : vector<64x32xf32>
    %87 = arith.addf %6, %86 : vector<64x32xf32>
    %cst_39 = arith.constant dense<0.000000e+00> : vector<64x32xf32>
    %88 = tpu.matmul %0, %86, %cst_39 {dimension_numbers = #tpu.dot_dimension_numbers<[1], [0], [0], [1], [0, 0, 1, 1], [], []>} : vector<64x64xf32>, vector<64x32xf32>, vector<64x32xf32> -> vector<64x32xf32>
    %89 = vector.extract_strided_slice %86 {offsets = [0, 0], sizes = [32, 32], strides = [1, 1]} : vector<64x32xf32> to vector<32x32xf32>
    %cst_40 = arith.constant dense<0.000000e+00> : vector<32x16xf32>
    %90 = tpu.matmul %89, %4, %cst_40 {dimension_numbers = #tpu.dot_dimension_numbers<[1], [0], [0], [1], [0, 0, 1, 1], [], []>} : vector<32x32xf32>, vector<32x16xf32>, vector<32x16xf32> -> vector<32x16xf32>
    %cst_41 = arith.constant dense<0xFF800000> : vector<32xf32>
    %91 = vector.multi_reduction <maximumf>, %90, %cst_41 [1] : vector<32x16xf32> to vector<32xf32>
    %92 = vector.shape_cast %91 : vector<32xf32> to vector<32x1xf32>
    %93 = vector.broadcast %92 : vector<32x1xf32> to vector<32x16xf32>
    %94 = arith.subf %90, %93 : vector<32x16xf32>
    %95 = math.exp %94 : vector<32x16xf32>
    %cst_42 = arith.constant dense<0.000000e+00> : vector<32xf32>
    %96 = vector.multi_reduction <add>, %95, %cst_42 [1] : vector<32x16xf32> to vector<32xf32>
    %97 = vector.shape_cast %96 : vector<32xf32> to vector<32x1xf32>
    %98 = vector.broadcast %97 : vector<32x1xf32> to vector<32x16xf32>
    %99 = arith.divf %95, %98 : vector<32x16xf32>
    %cst_43 = arith.constant dense<0.000000e+00> : vector<32x32xf32>
    %100 = tpu.matmul %99, %4, %cst_43 {dimension_numbers = #tpu.dot_dimension_numbers<[1], [1], [0], [0], [0, 0, 1, 0], [], []>} : vector<32x16xf32>, vector<32x16xf32>, vector<32x32xf32> -> vector<32x32xf32>
    %101 = vector.extract_strided_slice %86 {offsets = [32, 0], sizes = [32, 32], strides = [1, 1]} : vector<64x32xf32> to vector<32x32xf32>
    %cst_44 = arith.constant dense<0.000000e+00> : vector<32x16xf32>
    %102 = tpu.matmul %101, %5, %cst_44 {dimension_numbers = #tpu.dot_dimension_numbers<[1], [0], [0], [1], [0, 0, 1, 1], [], []>} : vector<32x32xf32>, vector<32x16xf32>, vector<32x16xf32> -> vector<32x16xf32>
    %cst_45 = arith.constant dense<0xFF800000> : vector<32xf32>
    %103 = vector.multi_reduction <maximumf>, %102, %cst_45 [1] : vector<32x16xf32> to vector<32xf32>
    %104 = vector.shape_cast %103 : vector<32xf32> to vector<32x1xf32>
    %105 = vector.broadcast %104 : vector<32x1xf32> to vector<32x16xf32>
    %106 = arith.subf %102, %105 : vector<32x16xf32>
    %107 = math.exp %106 : vector<32x16xf32>
    %cst_46 = arith.constant dense<0.000000e+00> : vector<32xf32>
    %108 = vector.multi_reduction <add>, %107, %cst_46 [1] : vector<32x16xf32> to vector<32xf32>
    %109 = vector.shape_cast %108 : vector<32xf32> to vector<32x1xf32>
    %110 = vector.broadcast %109 : vector<32x1xf32> to vector<32x16xf32>
    %111 = arith.divf %107, %110 : vector<32x16xf32>
    %cst_47 = arith.constant dense<0.000000e+00> : vector<32x32xf32>
    %112 = tpu.matmul %111, %5, %cst_47 {dimension_numbers = #tpu.dot_dimension_numbers<[1], [1], [0], [0], [0, 0, 1, 0], [], []>} : vector<32x16xf32>, vector<32x16xf32>, vector<32x32xf32> -> vector<32x32xf32>
    %113 = tpu.concatenate %100, %112 in 0 : vector<32x32xf32>, vector<32x32xf32> -> vector<64x32xf32>
    %114 = arith.mulf %88, %88 : vector<64x32xf32>
    %cst_48 = arith.constant dense<0.000000e+00> : vector<64xf32>
    %115 = vector.multi_reduction <add>, %114, %cst_48 [1] : vector<64x32xf32> to vector<64xf32>
    %116 = vector.shape_cast %115 : vector<64xf32> to vector<64x1xf32>
    %117 = math.sqrt %116 : vector<64x1xf32>
    %cst_49 = arith.constant 9.99999996E-13 : f32
    %118 = vector.broadcast %cst_49 : f32 to vector<64x1xf32>
    %119 = arith.maximumf %117, %118 : vector<64x1xf32>
    %120 = vector.broadcast %119 : vector<64x1xf32> to vector<64x32xf32>
    %121 = arith.divf %88, %120 : vector<64x32xf32>
    %cst_50 = arith.constant dense<0.000000e+00> : vector<64x64xf32>
    %122 = tpu.matmul %121, %121, %cst_50 {dimension_numbers = #tpu.dot_dimension_numbers<[1], [1], [0], [0], [0, 0, 1, 0], [], []>} : vector<64x32xf32>, vector<64x32xf32>, vector<64x64xf32> -> vector<64x64xf32>
    %cst_51 = arith.constant 1.000000e+00 : f32
    %123 = vector.broadcast %cst_51 : f32 to vector<64x64xf32>
    %124 = arith.addf %122, %123 : vector<64x64xf32>
    %cst_52 = arith.constant 5.000000e-01 : f32
    %125 = vector.broadcast %cst_52 : f32 to vector<64x64xf32>
    %126 = arith.mulf %124, %125 : vector<64x64xf32>
    %127 = arith.mulf %126, %1 : vector<64x64xf32>
    %cst_53 = arith.constant dense<0.000000e+00> : vector<64xf32>
    %128 = vector.multi_reduction <add>, %127, %cst_53 [1] : vector<64x64xf32> to vector<64xf32>
    %129 = vector.shape_cast %128 : vector<64xf32> to vector<64x1xf32>
    %cst_54 = arith.constant 0.000000e+00 : f32
    %130 = vector.broadcast %cst_54 : f32 to vector<64x1xf32>
    %131 = arith.cmpf ogt, %129, %130 : vector<64x1xf32>
    %cst_55 = arith.constant 1.000000e+00 : f32
    %132 = vector.broadcast %cst_55 : f32 to vector<64x1xf32>
    %133 = arith.divf %132, %129 : vector<64x1xf32>
    %cst_56 = arith.constant 0.000000e+00 : f32
    %134 = vector.broadcast %cst_56 : f32 to vector<64x1xf32>
    %135 = arith.select %131, %133, %134 : vector<64x1xi1>, vector<64x1xf32>
    %136 = vector.broadcast %135 : vector<64x1xf32> to vector<64x64xf32>
    %137 = arith.mulf %127, %136 : vector<64x64xf32>
    %cst_57 = arith.constant dense<0.000000e+00> : vector<64x32xf32>
    %138 = tpu.matmul %137, %86, %cst_57 {dimension_numbers = #tpu.dot_dimension_numbers<[1], [0], [0], [1], [0, 0, 1, 1], [], []>} : vector<64x64xf32>, vector<64x32xf32>, vector<64x32xf32> -> vector<64x32xf32>
    %139 = arith.mulf %113, %113 : vector<64x32xf32>
    %cst_58 = arith.constant dense<0.000000e+00> : vector<64xf32>
    %140 = vector.multi_reduction <add>, %139, %cst_58 [1] : vector<64x32xf32> to vector<64xf32>
    %141 = vector.shape_cast %140 : vector<64xf32> to vector<64x1xf32>
    %142 = math.sqrt %141 : vector<64x1xf32>
    %cst_59 = arith.constant 9.99999996E-13 : f32
    %143 = vector.broadcast %cst_59 : f32 to vector<64x1xf32>
    %144 = arith.maximumf %142, %143 : vector<64x1xf32>
    %145 = vector.broadcast %144 : vector<64x1xf32> to vector<64x32xf32>
    %146 = arith.divf %113, %145 : vector<64x32xf32>
    %cst_60 = arith.constant dense<0.000000e+00> : vector<64x64xf32>
    %147 = tpu.matmul %146, %146, %cst_60 {dimension_numbers = #tpu.dot_dimension_numbers<[1], [1], [0], [0], [0, 0, 1, 0], [], []>} : vector<64x32xf32>, vector<64x32xf32>, vector<64x64xf32> -> vector<64x64xf32>
    %cst_61 = arith.constant 1.000000e+00 : f32
    %148 = vector.broadcast %cst_61 : f32 to vector<64x64xf32>
    %149 = arith.addf %147, %148 : vector<64x64xf32>
    %cst_62 = arith.constant 5.000000e-01 : f32
    %150 = vector.broadcast %cst_62 : f32 to vector<64x64xf32>
    %151 = arith.mulf %149, %150 : vector<64x64xf32>
    %152 = arith.mulf %151, %1 : vector<64x64xf32>
    %cst_63 = arith.constant dense<0.000000e+00> : vector<64xf32>
    %153 = vector.multi_reduction <add>, %152, %cst_63 [1] : vector<64x64xf32> to vector<64xf32>
    %154 = vector.shape_cast %153 : vector<64xf32> to vector<64x1xf32>
    %cst_64 = arith.constant 0.000000e+00 : f32
    %155 = vector.broadcast %cst_64 : f32 to vector<64x1xf32>
    %156 = arith.cmpf ogt, %154, %155 : vector<64x1xf32>
    %cst_65 = arith.constant 1.000000e+00 : f32
    %157 = vector.broadcast %cst_65 : f32 to vector<64x1xf32>
    %158 = arith.divf %157, %154 : vector<64x1xf32>
    %cst_66 = arith.constant 0.000000e+00 : f32
    %159 = vector.broadcast %cst_66 : f32 to vector<64x1xf32>
    %160 = arith.select %156, %158, %159 : vector<64x1xi1>, vector<64x1xf32>
    %161 = vector.broadcast %160 : vector<64x1xf32> to vector<64x64xf32>
    %162 = arith.mulf %152, %161 : vector<64x64xf32>
    %cst_67 = arith.constant dense<0.000000e+00> : vector<64x32xf32>
    %163 = tpu.matmul %162, %86, %cst_67 {dimension_numbers = #tpu.dot_dimension_numbers<[1], [0], [0], [1], [0, 0, 1, 1], [], []>} : vector<64x64xf32>, vector<64x32xf32>, vector<64x32xf32> -> vector<64x32xf32>
    %164 = arith.addf %88, %113 : vector<64x32xf32>
    %165 = arith.addf %164, %138 : vector<64x32xf32>
    %166 = arith.addf %165, %163 : vector<64x32xf32>
    %167 = arith.addf %166, %86 : vector<64x32xf32>
    %168 = arith.addf %87, %167 : vector<64x32xf32>
    %169 = tpu.iota {dimensions = array<i32: 1>} : vector<8x32xi32>
    %170 = tpu.iota {dimensions = array<i32: 1>} : vector<8x32xi32>
    %c0_68 = arith.constant 0 : index
    %c0_69 = arith.constant 0 : index
    %171 = vector.load %arg1[%c0_68, %c0_69] : memref<8x1xi32, #tpu.memory_space<vmem>>, vector<8x1xi32>
    %172 = vector.broadcast %171 : vector<8x1xi32> to vector<8x32xi32>
    %173 = arith.cmpi eq, %169, %172 : vector<8x32xi32>
    %cst_70 = arith.constant 1.000000e+00 : f32
    %cst_71 = arith.constant 0.000000e+00 : f32
    %174 = vector.broadcast %cst_70 : f32 to vector<8x32xf32>
    %175 = vector.broadcast %cst_71 : f32 to vector<8x32xf32>
    %176 = arith.select %173, %174, %175 : vector<8x32xi1>, vector<8x32xf32>
    %c0_72 = arith.constant 0 : index
    %c0_73 = arith.constant 0 : index
    %177 = vector.load %arg2[%c0_72, %c0_73] : memref<8x1xi32, #tpu.memory_space<vmem>>, vector<8x1xi32>
    %178 = vector.broadcast %177 : vector<8x1xi32> to vector<8x32xi32>
    %179 = arith.cmpi eq, %170, %178 : vector<8x32xi32>
    %cst_74 = arith.constant 1.000000e+00 : f32
    %cst_75 = arith.constant 0.000000e+00 : f32
    %180 = vector.broadcast %cst_74 : f32 to vector<8x32xf32>
    %181 = vector.broadcast %cst_75 : f32 to vector<8x32xf32>
    %182 = arith.select %179, %180, %181 : vector<8x32xi1>, vector<8x32xf32>
    %c0_76 = arith.constant 0 : index
    %c0_77 = arith.constant 0 : index
    %183 = vector.load %arg3[%c0_76, %c0_77] : memref<8x1xi32, #tpu.memory_space<vmem>>, vector<8x1xi32>
    %184 = vector.broadcast %183 : vector<8x1xi32> to vector<8x32xi32>
    %185 = arith.cmpi eq, %170, %184 : vector<8x32xi32>
    %cst_78 = arith.constant 1.000000e+00 : f32
    %cst_79 = arith.constant 0.000000e+00 : f32
    %186 = vector.broadcast %cst_78 : f32 to vector<8x32xf32>
    %187 = vector.broadcast %cst_79 : f32 to vector<8x32xf32>
    %188 = arith.select %185, %186, %187 : vector<8x32xi1>, vector<8x32xf32>
    %189 = vector.extract_strided_slice %168 {offsets = [0, 0], sizes = [32, 32], strides = [1, 1]} : vector<64x32xf32> to vector<32x32xf32>
    %cst_80 = arith.constant dense<0.000000e+00> : vector<8x32xf32>
    %190 = tpu.matmul %176, %189, %cst_80 {dimension_numbers = #tpu.dot_dimension_numbers<[1], [0], [0], [1], [0, 0, 1, 1], [], []>} : vector<8x32xf32>, vector<32x32xf32>, vector<8x32xf32> -> vector<8x32xf32>
    %191 = vector.extract_strided_slice %168 {offsets = [32, 0], sizes = [32, 32], strides = [1, 1]} : vector<64x32xf32> to vector<32x32xf32>
    %cst_81 = arith.constant dense<0.000000e+00> : vector<8x32xf32>
    %192 = tpu.matmul %182, %191, %cst_81 {dimension_numbers = #tpu.dot_dimension_numbers<[1], [0], [0], [1], [0, 0, 1, 1], [], []>} : vector<8x32xf32>, vector<32x32xf32>, vector<8x32xf32> -> vector<8x32xf32>
    %193 = vector.extract_strided_slice %168 {offsets = [32, 0], sizes = [32, 32], strides = [1, 1]} : vector<64x32xf32> to vector<32x32xf32>
    %cst_82 = arith.constant dense<0.000000e+00> : vector<8x32xf32>
    %194 = tpu.matmul %188, %193, %cst_82 {dimension_numbers = #tpu.dot_dimension_numbers<[1], [0], [0], [1], [0, 0, 1, 1], [], []>} : vector<8x32xf32>, vector<32x32xf32>, vector<8x32xf32> -> vector<8x32xf32>
    %195 = arith.mulf %190, %192 : vector<8x32xf32>
    %cst_83 = arith.constant dense<0.000000e+00> : vector<8xf32>
    %196 = vector.multi_reduction <add>, %195, %cst_83 [1] : vector<8x32xf32> to vector<8xf32>
    %197 = vector.shape_cast %196 : vector<8xf32> to vector<8x1xf32>
    %198 = arith.mulf %190, %194 : vector<8x32xf32>
    %cst_84 = arith.constant dense<0.000000e+00> : vector<8xf32>
    %199 = vector.multi_reduction <add>, %198, %cst_84 [1] : vector<8x32xf32> to vector<8xf32>
    %200 = vector.shape_cast %199 : vector<8xf32> to vector<8x1xf32>
    %201 = arith.subf %200, %197 : vector<8x1xf32>
    %cst_85 = arith.constant 0.000000e+00 : f32
    %202 = vector.broadcast %cst_85 : f32 to vector<8x1xf32>
    %203 = arith.maximumf %201, %202 : vector<8x1xf32>
    %204 = math.absf %201 : vector<8x1xf32>
    %cst_86 = arith.constant 0.000000e+00 : f32
    %205 = vector.broadcast %cst_86 : f32 to vector<8x1xf32>
    %206 = arith.subf %205, %204 : vector<8x1xf32>
    %207 = math.exp %206 : vector<8x1xf32>
    %208 = math.log1p %207 : vector<8x1xf32>
    %209 = arith.addf %203, %208 : vector<8x1xf32>
    %cst_87 = arith.constant dense<0.000000e+00> : vector<1xf32>
    %210 = vector.multi_reduction <add>, %209, %cst_87 [0] : vector<8x1xf32> to vector<1xf32>
    %211 = vector.shape_cast %210 : vector<1xf32> to vector<1x1xf32>
    %cst_88 = arith.constant 8.000000e+00 : f32
    %212 = vector.broadcast %cst_88 : f32 to vector<1x1xf32>
    %213 = arith.divf %211, %212 : vector<1x1xf32>
    %cst_89 = arith.constant dense<0.000000e+00> : vector<8x32xf32>
    %214 = tpu.matmul %176, %2, %cst_89 {dimension_numbers = #tpu.dot_dimension_numbers<[1], [0], [0], [1], [0, 0, 1, 1], [], []>} : vector<8x32xf32>, vector<32x32xf32>, vector<8x32xf32> -> vector<8x32xf32>
    %215 = arith.mulf %214, %214 : vector<8x32xf32>
    %cst_90 = arith.constant dense<0.000000e+00> : vector<8xf32>
    %216 = vector.multi_reduction <add>, %215, %cst_90 [1] : vector<8x32xf32> to vector<8xf32>
    %217 = vector.shape_cast %216 : vector<8xf32> to vector<8x1xf32>
    %cst_91 = arith.constant dense<0.000000e+00> : vector<1xf32>
    %218 = vector.multi_reduction <add>, %217, %cst_91 [0] : vector<8x1xf32> to vector<1xf32>
    %219 = vector.shape_cast %218 : vector<1xf32> to vector<1x1xf32>
    %cst_92 = arith.constant dense<0.000000e+00> : vector<8x32xf32>
    %220 = tpu.matmul %182, %3, %cst_92 {dimension_numbers = #tpu.dot_dimension_numbers<[1], [0], [0], [1], [0, 0, 1, 1], [], []>} : vector<8x32xf32>, vector<32x32xf32>, vector<8x32xf32> -> vector<8x32xf32>
    %221 = arith.mulf %220, %220 : vector<8x32xf32>
    %cst_93 = arith.constant dense<0.000000e+00> : vector<8xf32>
    %222 = vector.multi_reduction <add>, %221, %cst_93 [1] : vector<8x32xf32> to vector<8xf32>
    %223 = vector.shape_cast %222 : vector<8xf32> to vector<8x1xf32>
    %cst_94 = arith.constant dense<0.000000e+00> : vector<1xf32>
    %224 = vector.multi_reduction <add>, %223, %cst_94 [0] : vector<8x1xf32> to vector<1xf32>
    %225 = vector.shape_cast %224 : vector<1xf32> to vector<1x1xf32>
    %226 = arith.addf %219, %225 : vector<1x1xf32>
    %cst_95 = arith.constant dense<0.000000e+00> : vector<8x32xf32>
    %227 = tpu.matmul %188, %3, %cst_95 {dimension_numbers = #tpu.dot_dimension_numbers<[1], [0], [0], [1], [0, 0, 1, 1], [], []>} : vector<8x32xf32>, vector<32x32xf32>, vector<8x32xf32> -> vector<8x32xf32>
    %228 = arith.mulf %227, %227 : vector<8x32xf32>
    %cst_96 = arith.constant dense<0.000000e+00> : vector<8xf32>
    %229 = vector.multi_reduction <add>, %228, %cst_96 [1] : vector<8x32xf32> to vector<8xf32>
    %230 = vector.shape_cast %229 : vector<8xf32> to vector<8x1xf32>
    %cst_97 = arith.constant dense<0.000000e+00> : vector<1xf32>
    %231 = vector.multi_reduction <add>, %230, %cst_97 [0] : vector<8x1xf32> to vector<1xf32>
    %232 = vector.shape_cast %231 : vector<1xf32> to vector<1x1xf32>
    %233 = arith.addf %226, %232 : vector<1x1xf32>
    %cst_98 = arith.constant 2.500000e-05 : f32
    %234 = vector.broadcast %cst_98 : f32 to vector<1x1xf32>
    %235 = arith.mulf %234, %233 : vector<1x1xf32>
    %236 = arith.mulf %4, %4 : vector<32x16xf32>
    %cst_99 = arith.constant dense<0.000000e+00> : vector<32xf32>
    %237 = vector.multi_reduction <add>, %236, %cst_99 [1] : vector<32x16xf32> to vector<32xf32>
    %238 = vector.shape_cast %237 : vector<32xf32> to vector<32x1xf32>
    %cst_100 = arith.constant dense<0.000000e+00> : vector<1xf32>
    %239 = vector.multi_reduction <add>, %238, %cst_100 [0] : vector<32x1xf32> to vector<1xf32>
    %240 = vector.shape_cast %239 : vector<1xf32> to vector<1x1xf32>
    %241 = arith.mulf %5, %5 : vector<32x16xf32>
    %cst_101 = arith.constant dense<0.000000e+00> : vector<32xf32>
    %242 = vector.multi_reduction <add>, %241, %cst_101 [1] : vector<32x16xf32> to vector<32xf32>
    %243 = vector.shape_cast %242 : vector<32xf32> to vector<32x1xf32>
    %cst_102 = arith.constant dense<0.000000e+00> : vector<1xf32>
    %244 = vector.multi_reduction <add>, %243, %cst_102 [0] : vector<32x1xf32> to vector<1xf32>
    %245 = vector.shape_cast %244 : vector<1xf32> to vector<1x1xf32>
    %246 = arith.addf %240, %245 : vector<1x1xf32>
    %cst_103 = arith.constant 5.000000e-03 : f32
    %247 = vector.broadcast %cst_103 : f32 to vector<1x1xf32>
    %248 = arith.mulf %247, %246 : vector<1x1xf32>
    %249 = vector.extract_strided_slice %7 {offsets = [0, 0], sizes = [32, 32], strides = [1, 1]} : vector<64x32xf32> to vector<32x32xf32>
    %250 = vector.extract_strided_slice %32 {offsets = [0, 0], sizes = [32, 32], strides = [1, 1]} : vector<64x32xf32> to vector<32x32xf32>
    %251 = vector.extract_strided_slice %57 {offsets = [0, 0], sizes = [32, 32], strides = [1, 1]} : vector<64x32xf32> to vector<32x32xf32>
    %252 = vector.extract_strided_slice %82 {offsets = [0, 0], sizes = [32, 32], strides = [1, 1]} : vector<64x32xf32> to vector<32x32xf32>
    %253 = vector.extract_strided_slice %88 {offsets = [0, 0], sizes = [32, 32], strides = [1, 1]} : vector<64x32xf32> to vector<32x32xf32>
    %254 = vector.extract_strided_slice %113 {offsets = [0, 0], sizes = [32, 32], strides = [1, 1]} : vector<64x32xf32> to vector<32x32xf32>
    %255 = vector.extract_strided_slice %138 {offsets = [0, 0], sizes = [32, 32], strides = [1, 1]} : vector<64x32xf32> to vector<32x32xf32>
    %256 = vector.extract_strided_slice %163 {offsets = [0, 0], sizes = [32, 32], strides = [1, 1]} : vector<64x32xf32> to vector<32x32xf32>
    %257 = tpu.concatenate %249, %250, %251, %252, %253, %254, %255, %256 in 1 : vector<32x32xf32>, vector<32x32xf32>, vector<32x32xf32>, vector<32x32xf32>, vector<32x32xf32>, vector<32x32xf32>, vector<32x32xf32>, vector<32x32xf32> -> vector<32x256xf32>
    %258 = vector.extract_strided_slice %7 {offsets = [32, 0], sizes = [32, 32], strides = [1, 1]} : vector<64x32xf32> to vector<32x32xf32>
    %259 = vector.extract_strided_slice %32 {offsets = [32, 0], sizes = [32, 32], strides = [1, 1]} : vector<64x32xf32> to vector<32x32xf32>
    %260 = vector.extract_strided_slice %57 {offsets = [32, 0], sizes = [32, 32], strides = [1, 1]} : vector<64x32xf32> to vector<32x32xf32>
    %261 = vector.extract_strided_slice %82 {offsets = [32, 0], sizes = [32, 32], strides = [1, 1]} : vector<64x32xf32> to vector<32x32xf32>
    %262 = vector.extract_strided_slice %88 {offsets = [32, 0], sizes = [32, 32], strides = [1, 1]} : vector<64x32xf32> to vector<32x32xf32>
    %263 = vector.extract_strided_slice %113 {offsets = [32, 0], sizes = [32, 32], strides = [1, 1]} : vector<64x32xf32> to vector<32x32xf32>
    %264 = vector.extract_strided_slice %138 {offsets = [32, 0], sizes = [32, 32], strides = [1, 1]} : vector<64x32xf32> to vector<32x32xf32>
    %265 = vector.extract_strided_slice %163 {offsets = [32, 0], sizes = [32, 32], strides = [1, 1]} : vector<64x32xf32> to vector<32x32xf32>
    %266 = tpu.concatenate %258, %259, %260, %261, %262, %263, %264, %265 in 1 : vector<32x32xf32>, vector<32x32xf32>, vector<32x32xf32>, vector<32x32xf32>, vector<32x32xf32>, vector<32x32xf32>, vector<32x32xf32>, vector<32x32xf32> -> vector<32x256xf32>
    %cst_104 = arith.constant dense<0.000000e+00> : vector<8x256xf32>
    %267 = tpu.matmul %176, %257, %cst_104 {dimension_numbers = #tpu.dot_dimension_numbers<[1], [0], [0], [1], [0, 0, 1, 1], [], []>} : vector<8x32xf32>, vector<32x256xf32>, vector<8x256xf32> -> vector<8x256xf32>
    %cst_105 = arith.constant dense<0.000000e+00> : vector<8x256xf32>
    %268 = tpu.matmul %182, %266, %cst_105 {dimension_numbers = #tpu.dot_dimension_numbers<[1], [0], [0], [1], [0, 0, 1, 1], [], []>} : vector<8x32xf32>, vector<32x256xf32>, vector<8x256xf32> -> vector<8x256xf32>
    %cst_106 = arith.constant 0.000000e+00 : f32
    %269 = vector.broadcast %cst_106 : f32 to vector<1x1xf32>
    %270 = vector.extract_strided_slice %267 {offsets = [0, 0], sizes = [8, 32], strides = [1, 1]} : vector<8x256xf32> to vector<8x32xf32>
    %271 = arith.mulf %270, %270 : vector<8x32xf32>
    %cst_107 = arith.constant dense<0.000000e+00> : vector<8xf32>
    %272 = vector.multi_reduction <add>, %271, %cst_107 [1] : vector<8x32xf32> to vector<8xf32>
    %273 = vector.shape_cast %272 : vector<8xf32> to vector<8x1xf32>
    %274 = math.sqrt %273 : vector<8x1xf32>
    %cst_108 = arith.constant 9.99999996E-13 : f32
    %275 = vector.broadcast %cst_108 : f32 to vector<8x1xf32>
    %276 = arith.maximumf %274, %275 : vector<8x1xf32>
    %277 = vector.broadcast %276 : vector<8x1xf32> to vector<8x32xf32>
    %278 = arith.divf %270, %277 : vector<8x32xf32>
    %279 = vector.extract_strided_slice %267 {offsets = [0, 32], sizes = [8, 32], strides = [1, 1]} : vector<8x256xf32> to vector<8x32xf32>
    %280 = arith.mulf %279, %279 : vector<8x32xf32>
    %cst_109 = arith.constant dense<0.000000e+00> : vector<8xf32>
    %281 = vector.multi_reduction <add>, %280, %cst_109 [1] : vector<8x32xf32> to vector<8xf32>
    %282 = vector.shape_cast %281 : vector<8xf32> to vector<8x1xf32>
    %283 = math.sqrt %282 : vector<8x1xf32>
    %cst_110 = arith.constant 9.99999996E-13 : f32
    %284 = vector.broadcast %cst_110 : f32 to vector<8x1xf32>
    %285 = arith.maximumf %283, %284 : vector<8x1xf32>
    %286 = vector.broadcast %285 : vector<8x1xf32> to vector<8x32xf32>
    %287 = arith.divf %279, %286 : vector<8x32xf32>
    %288 = vector.extract_strided_slice %267 {offsets = [0, 64], sizes = [8, 32], strides = [1, 1]} : vector<8x256xf32> to vector<8x32xf32>
    %289 = arith.mulf %288, %288 : vector<8x32xf32>
    %cst_111 = arith.constant dense<0.000000e+00> : vector<8xf32>
    %290 = vector.multi_reduction <add>, %289, %cst_111 [1] : vector<8x32xf32> to vector<8xf32>
    %291 = vector.shape_cast %290 : vector<8xf32> to vector<8x1xf32>
    %292 = math.sqrt %291 : vector<8x1xf32>
    %cst_112 = arith.constant 9.99999996E-13 : f32
    %293 = vector.broadcast %cst_112 : f32 to vector<8x1xf32>
    %294 = arith.maximumf %292, %293 : vector<8x1xf32>
    %295 = vector.broadcast %294 : vector<8x1xf32> to vector<8x32xf32>
    %296 = arith.divf %288, %295 : vector<8x32xf32>
    %297 = vector.extract_strided_slice %267 {offsets = [0, 96], sizes = [8, 32], strides = [1, 1]} : vector<8x256xf32> to vector<8x32xf32>
    %298 = arith.mulf %297, %297 : vector<8x32xf32>
    %cst_113 = arith.constant dense<0.000000e+00> : vector<8xf32>
    %299 = vector.multi_reduction <add>, %298, %cst_113 [1] : vector<8x32xf32> to vector<8xf32>
    %300 = vector.shape_cast %299 : vector<8xf32> to vector<8x1xf32>
    %301 = math.sqrt %300 : vector<8x1xf32>
    %cst_114 = arith.constant 9.99999996E-13 : f32
    %302 = vector.broadcast %cst_114 : f32 to vector<8x1xf32>
    %303 = arith.maximumf %301, %302 : vector<8x1xf32>
    %304 = vector.broadcast %303 : vector<8x1xf32> to vector<8x32xf32>
    %305 = arith.divf %297, %304 : vector<8x32xf32>
    %306 = vector.extract_strided_slice %268 {offsets = [0, 0], sizes = [8, 32], strides = [1, 1]} : vector<8x256xf32> to vector<8x32xf32>
    %307 = arith.mulf %306, %306 : vector<8x32xf32>
    %cst_115 = arith.constant dense<0.000000e+00> : vector<8xf32>
    %308 = vector.multi_reduction <add>, %307, %cst_115 [1] : vector<8x32xf32> to vector<8xf32>
    %309 = vector.shape_cast %308 : vector<8xf32> to vector<8x1xf32>
    %310 = math.sqrt %309 : vector<8x1xf32>
    %cst_116 = arith.constant 9.99999996E-13 : f32
    %311 = vector.broadcast %cst_116 : f32 to vector<8x1xf32>
    %312 = arith.maximumf %310, %311 : vector<8x1xf32>
    %313 = vector.broadcast %312 : vector<8x1xf32> to vector<8x32xf32>
    %314 = arith.divf %306, %313 : vector<8x32xf32>
    %315 = vector.extract_strided_slice %268 {offsets = [0, 32], sizes = [8, 32], strides = [1, 1]} : vector<8x256xf32> to vector<8x32xf32>
    %316 = arith.mulf %315, %315 : vector<8x32xf32>
    %cst_117 = arith.constant dense<0.000000e+00> : vector<8xf32>
    %317 = vector.multi_reduction <add>, %316, %cst_117 [1] : vector<8x32xf32> to vector<8xf32>
    %318 = vector.shape_cast %317 : vector<8xf32> to vector<8x1xf32>
    %319 = math.sqrt %318 : vector<8x1xf32>
    %cst_118 = arith.constant 9.99999996E-13 : f32
    %320 = vector.broadcast %cst_118 : f32 to vector<8x1xf32>
    %321 = arith.maximumf %319, %320 : vector<8x1xf32>
    %322 = vector.broadcast %321 : vector<8x1xf32> to vector<8x32xf32>
    %323 = arith.divf %315, %322 : vector<8x32xf32>
    %324 = vector.extract_strided_slice %268 {offsets = [0, 64], sizes = [8, 32], strides = [1, 1]} : vector<8x256xf32> to vector<8x32xf32>
    %325 = arith.mulf %324, %324 : vector<8x32xf32>
    %cst_119 = arith.constant dense<0.000000e+00> : vector<8xf32>
    %326 = vector.multi_reduction <add>, %325, %cst_119 [1] : vector<8x32xf32> to vector<8xf32>
    %327 = vector.shape_cast %326 : vector<8xf32> to vector<8x1xf32>
    %328 = math.sqrt %327 : vector<8x1xf32>
    %cst_120 = arith.constant 9.99999996E-13 : f32
    %329 = vector.broadcast %cst_120 : f32 to vector<8x1xf32>
    %330 = arith.maximumf %328, %329 : vector<8x1xf32>
    %331 = vector.broadcast %330 : vector<8x1xf32> to vector<8x32xf32>
    %332 = arith.divf %324, %331 : vector<8x32xf32>
    %333 = vector.extract_strided_slice %268 {offsets = [0, 96], sizes = [8, 32], strides = [1, 1]} : vector<8x256xf32> to vector<8x32xf32>
    %334 = arith.mulf %333, %333 : vector<8x32xf32>
    %cst_121 = arith.constant dense<0.000000e+00> : vector<8xf32>
    %335 = vector.multi_reduction <add>, %334, %cst_121 [1] : vector<8x32xf32> to vector<8xf32>
    %336 = vector.shape_cast %335 : vector<8xf32> to vector<8x1xf32>
    %337 = math.sqrt %336 : vector<8x1xf32>
    %cst_122 = arith.constant 9.99999996E-13 : f32
    %338 = vector.broadcast %cst_122 : f32 to vector<8x1xf32>
    %339 = arith.maximumf %337, %338 : vector<8x1xf32>
    %340 = vector.broadcast %339 : vector<8x1xf32> to vector<8x32xf32>
    %341 = arith.divf %333, %340 : vector<8x32xf32>
    %342 = arith.mulf %278, %287 : vector<8x32xf32>
    %cst_123 = arith.constant dense<0.000000e+00> : vector<8xf32>
    %343 = vector.multi_reduction <add>, %342, %cst_123 [1] : vector<8x32xf32> to vector<8xf32>
    %344 = vector.shape_cast %343 : vector<8xf32> to vector<8x1xf32>
    %cst_124 = arith.constant 1.000000e+00 : f32
    %345 = vector.broadcast %cst_124 : f32 to vector<8x1xf32>
    %346 = arith.divf %344, %345 : vector<8x1xf32>
    %347 = math.exp %346 : vector<8x1xf32>
    %cst_125 = arith.constant dense<0.000000e+00> : vector<8x8xf32>
    %348 = tpu.matmul %278, %287, %cst_125 {dimension_numbers = #tpu.dot_dimension_numbers<[1], [1], [0], [0], [0, 0, 1, 0], [], []>} : vector<8x32xf32>, vector<8x32xf32>, vector<8x8xf32> -> vector<8x8xf32>
    %cst_126 = arith.constant 1.000000e+00 : f32
    %349 = vector.broadcast %cst_126 : f32 to vector<8x8xf32>
    %350 = arith.divf %348, %349 : vector<8x8xf32>
    %351 = math.exp %350 : vector<8x8xf32>
    %cst_127 = arith.constant dense<0.000000e+00> : vector<8xf32>
    %352 = vector.multi_reduction <add>, %351, %cst_127 [1] : vector<8x8xf32> to vector<8xf32>
    %353 = vector.shape_cast %352 : vector<8xf32> to vector<8x1xf32>
    %cst_128 = arith.constant 9.99999993E-9 : f32
    %354 = vector.broadcast %cst_128 : f32 to vector<8x1xf32>
    %355 = arith.addf %353, %354 : vector<8x1xf32>
    %356 = arith.divf %347, %355 : vector<8x1xf32>
    %cst_129 = arith.constant 9.99999993E-9 : f32
    %357 = vector.broadcast %cst_129 : f32 to vector<8x1xf32>
    %358 = arith.addf %356, %357 : vector<8x1xf32>
    %359 = math.log %358 : vector<8x1xf32>
    %cst_130 = arith.constant 0.000000e+00 : f32
    %360 = vector.broadcast %cst_130 : f32 to vector<8x1xf32>
    %361 = arith.subf %360, %359 : vector<8x1xf32>
    %cst_131 = arith.constant dense<0.000000e+00> : vector<1xf32>
    %362 = vector.multi_reduction <add>, %361, %cst_131 [0] : vector<8x1xf32> to vector<1xf32>
    %363 = vector.shape_cast %362 : vector<1xf32> to vector<1x1xf32>
    %cst_132 = arith.constant 8.000000e+00 : f32
    %364 = vector.broadcast %cst_132 : f32 to vector<1x1xf32>
    %365 = arith.divf %363, %364 : vector<1x1xf32>
    %366 = arith.addf %269, %365 : vector<1x1xf32>
    %367 = arith.mulf %278, %296 : vector<8x32xf32>
    %cst_133 = arith.constant dense<0.000000e+00> : vector<8xf32>
    %368 = vector.multi_reduction <add>, %367, %cst_133 [1] : vector<8x32xf32> to vector<8xf32>
    %369 = vector.shape_cast %368 : vector<8xf32> to vector<8x1xf32>
    %cst_134 = arith.constant 1.000000e+00 : f32
    %370 = vector.broadcast %cst_134 : f32 to vector<8x1xf32>
    %371 = arith.divf %369, %370 : vector<8x1xf32>
    %372 = math.exp %371 : vector<8x1xf32>
    %cst_135 = arith.constant dense<0.000000e+00> : vector<8x8xf32>
    %373 = tpu.matmul %278, %296, %cst_135 {dimension_numbers = #tpu.dot_dimension_numbers<[1], [1], [0], [0], [0, 0, 1, 0], [], []>} : vector<8x32xf32>, vector<8x32xf32>, vector<8x8xf32> -> vector<8x8xf32>
    %cst_136 = arith.constant 1.000000e+00 : f32
    %374 = vector.broadcast %cst_136 : f32 to vector<8x8xf32>
    %375 = arith.divf %373, %374 : vector<8x8xf32>
    %376 = math.exp %375 : vector<8x8xf32>
    %cst_137 = arith.constant dense<0.000000e+00> : vector<8xf32>
    %377 = vector.multi_reduction <add>, %376, %cst_137 [1] : vector<8x8xf32> to vector<8xf32>
    %378 = vector.shape_cast %377 : vector<8xf32> to vector<8x1xf32>
    %cst_138 = arith.constant 9.99999993E-9 : f32
    %379 = vector.broadcast %cst_138 : f32 to vector<8x1xf32>
    %380 = arith.addf %378, %379 : vector<8x1xf32>
    %381 = arith.divf %372, %380 : vector<8x1xf32>
    %cst_139 = arith.constant 9.99999993E-9 : f32
    %382 = vector.broadcast %cst_139 : f32 to vector<8x1xf32>
    %383 = arith.addf %381, %382 : vector<8x1xf32>
    %384 = math.log %383 : vector<8x1xf32>
    %cst_140 = arith.constant 0.000000e+00 : f32
    %385 = vector.broadcast %cst_140 : f32 to vector<8x1xf32>
    %386 = arith.subf %385, %384 : vector<8x1xf32>
    %cst_141 = arith.constant dense<0.000000e+00> : vector<1xf32>
    %387 = vector.multi_reduction <add>, %386, %cst_141 [0] : vector<8x1xf32> to vector<1xf32>
    %388 = vector.shape_cast %387 : vector<1xf32> to vector<1x1xf32>
    %cst_142 = arith.constant 8.000000e+00 : f32
    %389 = vector.broadcast %cst_142 : f32 to vector<1x1xf32>
    %390 = arith.divf %388, %389 : vector<1x1xf32>
    %391 = arith.addf %366, %390 : vector<1x1xf32>
    %392 = arith.mulf %278, %305 : vector<8x32xf32>
    %cst_143 = arith.constant dense<0.000000e+00> : vector<8xf32>
    %393 = vector.multi_reduction <add>, %392, %cst_143 [1] : vector<8x32xf32> to vector<8xf32>
    %394 = vector.shape_cast %393 : vector<8xf32> to vector<8x1xf32>
    %cst_144 = arith.constant 1.000000e+00 : f32
    %395 = vector.broadcast %cst_144 : f32 to vector<8x1xf32>
    %396 = arith.divf %394, %395 : vector<8x1xf32>
    %397 = math.exp %396 : vector<8x1xf32>
    %cst_145 = arith.constant dense<0.000000e+00> : vector<8x8xf32>
    %398 = tpu.matmul %278, %305, %cst_145 {dimension_numbers = #tpu.dot_dimension_numbers<[1], [1], [0], [0], [0, 0, 1, 0], [], []>} : vector<8x32xf32>, vector<8x32xf32>, vector<8x8xf32> -> vector<8x8xf32>
    %cst_146 = arith.constant 1.000000e+00 : f32
    %399 = vector.broadcast %cst_146 : f32 to vector<8x8xf32>
    %400 = arith.divf %398, %399 : vector<8x8xf32>
    %401 = math.exp %400 : vector<8x8xf32>
    %cst_147 = arith.constant dense<0.000000e+00> : vector<8xf32>
    %402 = vector.multi_reduction <add>, %401, %cst_147 [1] : vector<8x8xf32> to vector<8xf32>
    %403 = vector.shape_cast %402 : vector<8xf32> to vector<8x1xf32>
    %cst_148 = arith.constant 9.99999993E-9 : f32
    %404 = vector.broadcast %cst_148 : f32 to vector<8x1xf32>
    %405 = arith.addf %403, %404 : vector<8x1xf32>
    %406 = arith.divf %397, %405 : vector<8x1xf32>
    %cst_149 = arith.constant 9.99999993E-9 : f32
    %407 = vector.broadcast %cst_149 : f32 to vector<8x1xf32>
    %408 = arith.addf %406, %407 : vector<8x1xf32>
    %409 = math.log %408 : vector<8x1xf32>
    %cst_150 = arith.constant 0.000000e+00 : f32
    %410 = vector.broadcast %cst_150 : f32 to vector<8x1xf32>
    %411 = arith.subf %410, %409 : vector<8x1xf32>
    %cst_151 = arith.constant dense<0.000000e+00> : vector<1xf32>
    %412 = vector.multi_reduction <add>, %411, %cst_151 [0] : vector<8x1xf32> to vector<1xf32>
    %413 = vector.shape_cast %412 : vector<1xf32> to vector<1x1xf32>
    %cst_152 = arith.constant 8.000000e+00 : f32
    %414 = vector.broadcast %cst_152 : f32 to vector<1x1xf32>
    %415 = arith.divf %413, %414 : vector<1x1xf32>
    %416 = arith.addf %391, %415 : vector<1x1xf32>
    %417 = arith.mulf %314, %323 : vector<8x32xf32>
    %cst_153 = arith.constant dense<0.000000e+00> : vector<8xf32>
    %418 = vector.multi_reduction <add>, %417, %cst_153 [1] : vector<8x32xf32> to vector<8xf32>
    %419 = vector.shape_cast %418 : vector<8xf32> to vector<8x1xf32>
    %cst_154 = arith.constant 1.000000e+00 : f32
    %420 = vector.broadcast %cst_154 : f32 to vector<8x1xf32>
    %421 = arith.divf %419, %420 : vector<8x1xf32>
    %422 = math.exp %421 : vector<8x1xf32>
    %cst_155 = arith.constant dense<0.000000e+00> : vector<8x8xf32>
    %423 = tpu.matmul %314, %323, %cst_155 {dimension_numbers = #tpu.dot_dimension_numbers<[1], [1], [0], [0], [0, 0, 1, 0], [], []>} : vector<8x32xf32>, vector<8x32xf32>, vector<8x8xf32> -> vector<8x8xf32>
    %cst_156 = arith.constant 1.000000e+00 : f32
    %424 = vector.broadcast %cst_156 : f32 to vector<8x8xf32>
    %425 = arith.divf %423, %424 : vector<8x8xf32>
    %426 = math.exp %425 : vector<8x8xf32>
    %cst_157 = arith.constant dense<0.000000e+00> : vector<8xf32>
    %427 = vector.multi_reduction <add>, %426, %cst_157 [1] : vector<8x8xf32> to vector<8xf32>
    %428 = vector.shape_cast %427 : vector<8xf32> to vector<8x1xf32>
    %cst_158 = arith.constant 9.99999993E-9 : f32
    %429 = vector.broadcast %cst_158 : f32 to vector<8x1xf32>
    %430 = arith.addf %428, %429 : vector<8x1xf32>
    %431 = arith.divf %422, %430 : vector<8x1xf32>
    %cst_159 = arith.constant 9.99999993E-9 : f32
    %432 = vector.broadcast %cst_159 : f32 to vector<8x1xf32>
    %433 = arith.addf %431, %432 : vector<8x1xf32>
    %434 = math.log %433 : vector<8x1xf32>
    %cst_160 = arith.constant 0.000000e+00 : f32
    %435 = vector.broadcast %cst_160 : f32 to vector<8x1xf32>
    %436 = arith.subf %435, %434 : vector<8x1xf32>
    %cst_161 = arith.constant dense<0.000000e+00> : vector<1xf32>
    %437 = vector.multi_reduction <add>, %436, %cst_161 [0] : vector<8x1xf32> to vector<1xf32>
    %438 = vector.shape_cast %437 : vector<1xf32> to vector<1x1xf32>
    %cst_162 = arith.constant 8.000000e+00 : f32
    %439 = vector.broadcast %cst_162 : f32 to vector<1x1xf32>
    %440 = arith.divf %438, %439 : vector<1x1xf32>
    %441 = arith.addf %416, %440 : vector<1x1xf32>
    %442 = arith.mulf %314, %332 : vector<8x32xf32>
    %cst_163 = arith.constant dense<0.000000e+00> : vector<8xf32>
    %443 = vector.multi_reduction <add>, %442, %cst_163 [1] : vector<8x32xf32> to vector<8xf32>
    %444 = vector.shape_cast %443 : vector<8xf32> to vector<8x1xf32>
    %cst_164 = arith.constant 1.000000e+00 : f32
    %445 = vector.broadcast %cst_164 : f32 to vector<8x1xf32>
    %446 = arith.divf %444, %445 : vector<8x1xf32>
    %447 = math.exp %446 : vector<8x1xf32>
    %cst_165 = arith.constant dense<0.000000e+00> : vector<8x8xf32>
    %448 = tpu.matmul %314, %332, %cst_165 {dimension_numbers = #tpu.dot_dimension_numbers<[1], [1], [0], [0], [0, 0, 1, 0], [], []>} : vector<8x32xf32>, vector<8x32xf32>, vector<8x8xf32> -> vector<8x8xf32>
    %cst_166 = arith.constant 1.000000e+00 : f32
    %449 = vector.broadcast %cst_166 : f32 to vector<8x8xf32>
    %450 = arith.divf %448, %449 : vector<8x8xf32>
    %451 = math.exp %450 : vector<8x8xf32>
    %cst_167 = arith.constant dense<0.000000e+00> : vector<8xf32>
    %452 = vector.multi_reduction <add>, %451, %cst_167 [1] : vector<8x8xf32> to vector<8xf32>
    %453 = vector.shape_cast %452 : vector<8xf32> to vector<8x1xf32>
    %cst_168 = arith.constant 9.99999993E-9 : f32
    %454 = vector.broadcast %cst_168 : f32 to vector<8x1xf32>
    %455 = arith.addf %453, %454 : vector<8x1xf32>
    %456 = arith.divf %447, %455 : vector<8x1xf32>
    %cst_169 = arith.constant 9.99999993E-9 : f32
    %457 = vector.broadcast %cst_169 : f32 to vector<8x1xf32>
    %458 = arith.addf %456, %457 : vector<8x1xf32>
    %459 = math.log %458 : vector<8x1xf32>
    %cst_170 = arith.constant 0.000000e+00 : f32
    %460 = vector.broadcast %cst_170 : f32 to vector<8x1xf32>
    %461 = arith.subf %460, %459 : vector<8x1xf32>
    %cst_171 = arith.constant dense<0.000000e+00> : vector<1xf32>
    %462 = vector.multi_reduction <add>, %461, %cst_171 [0] : vector<8x1xf32> to vector<1xf32>
    %463 = vector.shape_cast %462 : vector<1xf32> to vector<1x1xf32>
    %cst_172 = arith.constant 8.000000e+00 : f32
    %464 = vector.broadcast %cst_172 : f32 to vector<1x1xf32>
    %465 = arith.divf %463, %464 : vector<1x1xf32>
    %466 = arith.addf %441, %465 : vector<1x1xf32>
    %467 = arith.mulf %314, %341 : vector<8x32xf32>
    %cst_173 = arith.constant dense<0.000000e+00> : vector<8xf32>
    %468 = vector.multi_reduction <add>, %467, %cst_173 [1] : vector<8x32xf32> to vector<8xf32>
    %469 = vector.shape_cast %468 : vector<8xf32> to vector<8x1xf32>
    %cst_174 = arith.constant 1.000000e+00 : f32
    %470 = vector.broadcast %cst_174 : f32 to vector<8x1xf32>
    %471 = arith.divf %469, %470 : vector<8x1xf32>
    %472 = math.exp %471 : vector<8x1xf32>
    %cst_175 = arith.constant dense<0.000000e+00> : vector<8x8xf32>
    %473 = tpu.matmul %314, %341, %cst_175 {dimension_numbers = #tpu.dot_dimension_numbers<[1], [1], [0], [0], [0, 0, 1, 0], [], []>} : vector<8x32xf32>, vector<8x32xf32>, vector<8x8xf32> -> vector<8x8xf32>
    %cst_176 = arith.constant 1.000000e+00 : f32
    %474 = vector.broadcast %cst_176 : f32 to vector<8x8xf32>
    %475 = arith.divf %473, %474 : vector<8x8xf32>
    %476 = math.exp %475 : vector<8x8xf32>
    %cst_177 = arith.constant dense<0.000000e+00> : vector<8xf32>
    %477 = vector.multi_reduction <add>, %476, %cst_177 [1] : vector<8x8xf32> to vector<8xf32>
    %478 = vector.shape_cast %477 : vector<8xf32> to vector<8x1xf32>
    %cst_178 = arith.constant 9.99999993E-9 : f32
    %479 = vector.broadcast %cst_178 : f32 to vector<8x1xf32>
    %480 = arith.addf %478, %479 : vector<8x1xf32>
    %481 = arith.divf %472, %480 : vector<8x1xf32>
    %cst_179 = arith.constant 9.99999993E-9 : f32
    %482 = vector.broadcast %cst_179 : f32 to vector<8x1xf32>
    %483 = arith.addf %481, %482 : vector<8x1xf32>
    %484 = math.log %483 : vector<8x1xf32>
    %cst_180 = arith.constant 0.000000e+00 : f32
    %485 = vector.broadcast %cst_180 : f32 to vector<8x1xf32>
    %486 = arith.subf %485, %484 : vector<8x1xf32>
    %cst_181 = arith.constant dense<0.000000e+00> : vector<1xf32>
    %487 = vector.multi_reduction <add>, %486, %cst_181 [0] : vector<8x1xf32> to vector<1xf32>
    %488 = vector.shape_cast %487 : vector<1xf32> to vector<1x1xf32>
    %cst_182 = arith.constant 8.000000e+00 : f32
    %489 = vector.broadcast %cst_182 : f32 to vector<1x1xf32>
    %490 = arith.divf %488, %489 : vector<1x1xf32>
    %491 = arith.addf %466, %490 : vector<1x1xf32>
    %492 = vector.extract_strided_slice %267 {offsets = [0, 128], sizes = [8, 32], strides = [1, 1]} : vector<8x256xf32> to vector<8x32xf32>
    %493 = arith.mulf %492, %492 : vector<8x32xf32>
    %cst_183 = arith.constant dense<0.000000e+00> : vector<8xf32>
    %494 = vector.multi_reduction <add>, %493, %cst_183 [1] : vector<8x32xf32> to vector<8xf32>
    %495 = vector.shape_cast %494 : vector<8xf32> to vector<8x1xf32>
    %496 = math.sqrt %495 : vector<8x1xf32>
    %cst_184 = arith.constant 9.99999996E-13 : f32
    %497 = vector.broadcast %cst_184 : f32 to vector<8x1xf32>
    %498 = arith.maximumf %496, %497 : vector<8x1xf32>
    %499 = vector.broadcast %498 : vector<8x1xf32> to vector<8x32xf32>
    %500 = arith.divf %492, %499 : vector<8x32xf32>
    %501 = vector.extract_strided_slice %267 {offsets = [0, 160], sizes = [8, 32], strides = [1, 1]} : vector<8x256xf32> to vector<8x32xf32>
    %502 = arith.mulf %501, %501 : vector<8x32xf32>
    %cst_185 = arith.constant dense<0.000000e+00> : vector<8xf32>
    %503 = vector.multi_reduction <add>, %502, %cst_185 [1] : vector<8x32xf32> to vector<8xf32>
    %504 = vector.shape_cast %503 : vector<8xf32> to vector<8x1xf32>
    %505 = math.sqrt %504 : vector<8x1xf32>
    %cst_186 = arith.constant 9.99999996E-13 : f32
    %506 = vector.broadcast %cst_186 : f32 to vector<8x1xf32>
    %507 = arith.maximumf %505, %506 : vector<8x1xf32>
    %508 = vector.broadcast %507 : vector<8x1xf32> to vector<8x32xf32>
    %509 = arith.divf %501, %508 : vector<8x32xf32>
    %510 = vector.extract_strided_slice %267 {offsets = [0, 192], sizes = [8, 32], strides = [1, 1]} : vector<8x256xf32> to vector<8x32xf32>
    %511 = arith.mulf %510, %510 : vector<8x32xf32>
    %cst_187 = arith.constant dense<0.000000e+00> : vector<8xf32>
    %512 = vector.multi_reduction <add>, %511, %cst_187 [1] : vector<8x32xf32> to vector<8xf32>
    %513 = vector.shape_cast %512 : vector<8xf32> to vector<8x1xf32>
    %514 = math.sqrt %513 : vector<8x1xf32>
    %cst_188 = arith.constant 9.99999996E-13 : f32
    %515 = vector.broadcast %cst_188 : f32 to vector<8x1xf32>
    %516 = arith.maximumf %514, %515 : vector<8x1xf32>
    %517 = vector.broadcast %516 : vector<8x1xf32> to vector<8x32xf32>
    %518 = arith.divf %510, %517 : vector<8x32xf32>
    %519 = vector.extract_strided_slice %267 {offsets = [0, 224], sizes = [8, 32], strides = [1, 1]} : vector<8x256xf32> to vector<8x32xf32>
    %520 = arith.mulf %519, %519 : vector<8x32xf32>
    %cst_189 = arith.constant dense<0.000000e+00> : vector<8xf32>
    %521 = vector.multi_reduction <add>, %520, %cst_189 [1] : vector<8x32xf32> to vector<8xf32>
    %522 = vector.shape_cast %521 : vector<8xf32> to vector<8x1xf32>
    %523 = math.sqrt %522 : vector<8x1xf32>
    %cst_190 = arith.constant 9.99999996E-13 : f32
    %524 = vector.broadcast %cst_190 : f32 to vector<8x1xf32>
    %525 = arith.maximumf %523, %524 : vector<8x1xf32>
    %526 = vector.broadcast %525 : vector<8x1xf32> to vector<8x32xf32>
    %527 = arith.divf %519, %526 : vector<8x32xf32>
    %528 = vector.extract_strided_slice %268 {offsets = [0, 128], sizes = [8, 32], strides = [1, 1]} : vector<8x256xf32> to vector<8x32xf32>
    %529 = arith.mulf %528, %528 : vector<8x32xf32>
    %cst_191 = arith.constant dense<0.000000e+00> : vector<8xf32>
    %530 = vector.multi_reduction <add>, %529, %cst_191 [1] : vector<8x32xf32> to vector<8xf32>
    %531 = vector.shape_cast %530 : vector<8xf32> to vector<8x1xf32>
    %532 = math.sqrt %531 : vector<8x1xf32>
    %cst_192 = arith.constant 9.99999996E-13 : f32
    %533 = vector.broadcast %cst_192 : f32 to vector<8x1xf32>
    %534 = arith.maximumf %532, %533 : vector<8x1xf32>
    %535 = vector.broadcast %534 : vector<8x1xf32> to vector<8x32xf32>
    %536 = arith.divf %528, %535 : vector<8x32xf32>
    %537 = vector.extract_strided_slice %268 {offsets = [0, 160], sizes = [8, 32], strides = [1, 1]} : vector<8x256xf32> to vector<8x32xf32>
    %538 = arith.mulf %537, %537 : vector<8x32xf32>
    %cst_193 = arith.constant dense<0.000000e+00> : vector<8xf32>
    %539 = vector.multi_reduction <add>, %538, %cst_193 [1] : vector<8x32xf32> to vector<8xf32>
    %540 = vector.shape_cast %539 : vector<8xf32> to vector<8x1xf32>
    %541 = math.sqrt %540 : vector<8x1xf32>
    %cst_194 = arith.constant 9.99999996E-13 : f32
    %542 = vector.broadcast %cst_194 : f32 to vector<8x1xf32>
    %543 = arith.maximumf %541, %542 : vector<8x1xf32>
    %544 = vector.broadcast %543 : vector<8x1xf32> to vector<8x32xf32>
    %545 = arith.divf %537, %544 : vector<8x32xf32>
    %546 = vector.extract_strided_slice %268 {offsets = [0, 192], sizes = [8, 32], strides = [1, 1]} : vector<8x256xf32> to vector<8x32xf32>
    %547 = arith.mulf %546, %546 : vector<8x32xf32>
    %cst_195 = arith.constant dense<0.000000e+00> : vector<8xf32>
    %548 = vector.multi_reduction <add>, %547, %cst_195 [1] : vector<8x32xf32> to vector<8xf32>
    %549 = vector.shape_cast %548 : vector<8xf32> to vector<8x1xf32>
    %550 = math.sqrt %549 : vector<8x1xf32>
    %cst_196 = arith.constant 9.99999996E-13 : f32
    %551 = vector.broadcast %cst_196 : f32 to vector<8x1xf32>
    %552 = arith.maximumf %550, %551 : vector<8x1xf32>
    %553 = vector.broadcast %552 : vector<8x1xf32> to vector<8x32xf32>
    %554 = arith.divf %546, %553 : vector<8x32xf32>
    %555 = vector.extract_strided_slice %268 {offsets = [0, 224], sizes = [8, 32], strides = [1, 1]} : vector<8x256xf32> to vector<8x32xf32>
    %556 = arith.mulf %555, %555 : vector<8x32xf32>
    %cst_197 = arith.constant dense<0.000000e+00> : vector<8xf32>
    %557 = vector.multi_reduction <add>, %556, %cst_197 [1] : vector<8x32xf32> to vector<8xf32>
    %558 = vector.shape_cast %557 : vector<8xf32> to vector<8x1xf32>
    %559 = math.sqrt %558 : vector<8x1xf32>
    %cst_198 = arith.constant 9.99999996E-13 : f32
    %560 = vector.broadcast %cst_198 : f32 to vector<8x1xf32>
    %561 = arith.maximumf %559, %560 : vector<8x1xf32>
    %562 = vector.broadcast %561 : vector<8x1xf32> to vector<8x32xf32>
    %563 = arith.divf %555, %562 : vector<8x32xf32>
    %564 = arith.mulf %500, %509 : vector<8x32xf32>
    %cst_199 = arith.constant dense<0.000000e+00> : vector<8xf32>
    %565 = vector.multi_reduction <add>, %564, %cst_199 [1] : vector<8x32xf32> to vector<8xf32>
    %566 = vector.shape_cast %565 : vector<8xf32> to vector<8x1xf32>
    %cst_200 = arith.constant 1.000000e+00 : f32
    %567 = vector.broadcast %cst_200 : f32 to vector<8x1xf32>
    %568 = arith.divf %566, %567 : vector<8x1xf32>
    %569 = math.exp %568 : vector<8x1xf32>
    %cst_201 = arith.constant dense<0.000000e+00> : vector<8x8xf32>
    %570 = tpu.matmul %500, %509, %cst_201 {dimension_numbers = #tpu.dot_dimension_numbers<[1], [1], [0], [0], [0, 0, 1, 0], [], []>} : vector<8x32xf32>, vector<8x32xf32>, vector<8x8xf32> -> vector<8x8xf32>
    %cst_202 = arith.constant 1.000000e+00 : f32
    %571 = vector.broadcast %cst_202 : f32 to vector<8x8xf32>
    %572 = arith.divf %570, %571 : vector<8x8xf32>
    %573 = math.exp %572 : vector<8x8xf32>
    %cst_203 = arith.constant dense<0.000000e+00> : vector<8xf32>
    %574 = vector.multi_reduction <add>, %573, %cst_203 [1] : vector<8x8xf32> to vector<8xf32>
    %575 = vector.shape_cast %574 : vector<8xf32> to vector<8x1xf32>
    %cst_204 = arith.constant 9.99999993E-9 : f32
    %576 = vector.broadcast %cst_204 : f32 to vector<8x1xf32>
    %577 = arith.addf %575, %576 : vector<8x1xf32>
    %578 = arith.divf %569, %577 : vector<8x1xf32>
    %cst_205 = arith.constant 9.99999993E-9 : f32
    %579 = vector.broadcast %cst_205 : f32 to vector<8x1xf32>
    %580 = arith.addf %578, %579 : vector<8x1xf32>
    %581 = math.log %580 : vector<8x1xf32>
    %cst_206 = arith.constant 0.000000e+00 : f32
    %582 = vector.broadcast %cst_206 : f32 to vector<8x1xf32>
    %583 = arith.subf %582, %581 : vector<8x1xf32>
    %cst_207 = arith.constant dense<0.000000e+00> : vector<1xf32>
    %584 = vector.multi_reduction <add>, %583, %cst_207 [0] : vector<8x1xf32> to vector<1xf32>
    %585 = vector.shape_cast %584 : vector<1xf32> to vector<1x1xf32>
    %cst_208 = arith.constant 8.000000e+00 : f32
    %586 = vector.broadcast %cst_208 : f32 to vector<1x1xf32>
    %587 = arith.divf %585, %586 : vector<1x1xf32>
    %588 = arith.addf %491, %587 : vector<1x1xf32>
    %589 = arith.mulf %500, %518 : vector<8x32xf32>
    %cst_209 = arith.constant dense<0.000000e+00> : vector<8xf32>
    %590 = vector.multi_reduction <add>, %589, %cst_209 [1] : vector<8x32xf32> to vector<8xf32>
    %591 = vector.shape_cast %590 : vector<8xf32> to vector<8x1xf32>
    %cst_210 = arith.constant 1.000000e+00 : f32
    %592 = vector.broadcast %cst_210 : f32 to vector<8x1xf32>
    %593 = arith.divf %591, %592 : vector<8x1xf32>
    %594 = math.exp %593 : vector<8x1xf32>
    %cst_211 = arith.constant dense<0.000000e+00> : vector<8x8xf32>
    %595 = tpu.matmul %500, %518, %cst_211 {dimension_numbers = #tpu.dot_dimension_numbers<[1], [1], [0], [0], [0, 0, 1, 0], [], []>} : vector<8x32xf32>, vector<8x32xf32>, vector<8x8xf32> -> vector<8x8xf32>
    %cst_212 = arith.constant 1.000000e+00 : f32
    %596 = vector.broadcast %cst_212 : f32 to vector<8x8xf32>
    %597 = arith.divf %595, %596 : vector<8x8xf32>
    %598 = math.exp %597 : vector<8x8xf32>
    %cst_213 = arith.constant dense<0.000000e+00> : vector<8xf32>
    %599 = vector.multi_reduction <add>, %598, %cst_213 [1] : vector<8x8xf32> to vector<8xf32>
    %600 = vector.shape_cast %599 : vector<8xf32> to vector<8x1xf32>
    %cst_214 = arith.constant 9.99999993E-9 : f32
    %601 = vector.broadcast %cst_214 : f32 to vector<8x1xf32>
    %602 = arith.addf %600, %601 : vector<8x1xf32>
    %603 = arith.divf %594, %602 : vector<8x1xf32>
    %cst_215 = arith.constant 9.99999993E-9 : f32
    %604 = vector.broadcast %cst_215 : f32 to vector<8x1xf32>
    %605 = arith.addf %603, %604 : vector<8x1xf32>
    %606 = math.log %605 : vector<8x1xf32>
    %cst_216 = arith.constant 0.000000e+00 : f32
    %607 = vector.broadcast %cst_216 : f32 to vector<8x1xf32>
    %608 = arith.subf %607, %606 : vector<8x1xf32>
    %cst_217 = arith.constant dense<0.000000e+00> : vector<1xf32>
    %609 = vector.multi_reduction <add>, %608, %cst_217 [0] : vector<8x1xf32> to vector<1xf32>
    %610 = vector.shape_cast %609 : vector<1xf32> to vector<1x1xf32>
    %cst_218 = arith.constant 8.000000e+00 : f32
    %611 = vector.broadcast %cst_218 : f32 to vector<1x1xf32>
    %612 = arith.divf %610, %611 : vector<1x1xf32>
    %613 = arith.addf %588, %612 : vector<1x1xf32>
    %614 = arith.mulf %500, %527 : vector<8x32xf32>
    %cst_219 = arith.constant dense<0.000000e+00> : vector<8xf32>
    %615 = vector.multi_reduction <add>, %614, %cst_219 [1] : vector<8x32xf32> to vector<8xf32>
    %616 = vector.shape_cast %615 : vector<8xf32> to vector<8x1xf32>
    %cst_220 = arith.constant 1.000000e+00 : f32
    %617 = vector.broadcast %cst_220 : f32 to vector<8x1xf32>
    %618 = arith.divf %616, %617 : vector<8x1xf32>
    %619 = math.exp %618 : vector<8x1xf32>
    %cst_221 = arith.constant dense<0.000000e+00> : vector<8x8xf32>
    %620 = tpu.matmul %500, %527, %cst_221 {dimension_numbers = #tpu.dot_dimension_numbers<[1], [1], [0], [0], [0, 0, 1, 0], [], []>} : vector<8x32xf32>, vector<8x32xf32>, vector<8x8xf32> -> vector<8x8xf32>
    %cst_222 = arith.constant 1.000000e+00 : f32
    %621 = vector.broadcast %cst_222 : f32 to vector<8x8xf32>
    %622 = arith.divf %620, %621 : vector<8x8xf32>
    %623 = math.exp %622 : vector<8x8xf32>
    %cst_223 = arith.constant dense<0.000000e+00> : vector<8xf32>
    %624 = vector.multi_reduction <add>, %623, %cst_223 [1] : vector<8x8xf32> to vector<8xf32>
    %625 = vector.shape_cast %624 : vector<8xf32> to vector<8x1xf32>
    %cst_224 = arith.constant 9.99999993E-9 : f32
    %626 = vector.broadcast %cst_224 : f32 to vector<8x1xf32>
    %627 = arith.addf %625, %626 : vector<8x1xf32>
    %628 = arith.divf %619, %627 : vector<8x1xf32>
    %cst_225 = arith.constant 9.99999993E-9 : f32
    %629 = vector.broadcast %cst_225 : f32 to vector<8x1xf32>
    %630 = arith.addf %628, %629 : vector<8x1xf32>
    %631 = math.log %630 : vector<8x1xf32>
    %cst_226 = arith.constant 0.000000e+00 : f32
    %632 = vector.broadcast %cst_226 : f32 to vector<8x1xf32>
    %633 = arith.subf %632, %631 : vector<8x1xf32>
    %cst_227 = arith.constant dense<0.000000e+00> : vector<1xf32>
    %634 = vector.multi_reduction <add>, %633, %cst_227 [0] : vector<8x1xf32> to vector<1xf32>
    %635 = vector.shape_cast %634 : vector<1xf32> to vector<1x1xf32>
    %cst_228 = arith.constant 8.000000e+00 : f32
    %636 = vector.broadcast %cst_228 : f32 to vector<1x1xf32>
    %637 = arith.divf %635, %636 : vector<1x1xf32>
    %638 = arith.addf %613, %637 : vector<1x1xf32>
    %639 = arith.mulf %536, %545 : vector<8x32xf32>
    %cst_229 = arith.constant dense<0.000000e+00> : vector<8xf32>
    %640 = vector.multi_reduction <add>, %639, %cst_229 [1] : vector<8x32xf32> to vector<8xf32>
    %641 = vector.shape_cast %640 : vector<8xf32> to vector<8x1xf32>
    %cst_230 = arith.constant 1.000000e+00 : f32
    %642 = vector.broadcast %cst_230 : f32 to vector<8x1xf32>
    %643 = arith.divf %641, %642 : vector<8x1xf32>
    %644 = math.exp %643 : vector<8x1xf32>
    %cst_231 = arith.constant dense<0.000000e+00> : vector<8x8xf32>
    %645 = tpu.matmul %536, %545, %cst_231 {dimension_numbers = #tpu.dot_dimension_numbers<[1], [1], [0], [0], [0, 0, 1, 0], [], []>} : vector<8x32xf32>, vector<8x32xf32>, vector<8x8xf32> -> vector<8x8xf32>
    %cst_232 = arith.constant 1.000000e+00 : f32
    %646 = vector.broadcast %cst_232 : f32 to vector<8x8xf32>
    %647 = arith.divf %645, %646 : vector<8x8xf32>
    %648 = math.exp %647 : vector<8x8xf32>
    %cst_233 = arith.constant dense<0.000000e+00> : vector<8xf32>
    %649 = vector.multi_reduction <add>, %648, %cst_233 [1] : vector<8x8xf32> to vector<8xf32>
    %650 = vector.shape_cast %649 : vector<8xf32> to vector<8x1xf32>
    %cst_234 = arith.constant 9.99999993E-9 : f32
    %651 = vector.broadcast %cst_234 : f32 to vector<8x1xf32>
    %652 = arith.addf %650, %651 : vector<8x1xf32>
    %653 = arith.divf %644, %652 : vector<8x1xf32>
    %cst_235 = arith.constant 9.99999993E-9 : f32
    %654 = vector.broadcast %cst_235 : f32 to vector<8x1xf32>
    %655 = arith.addf %653, %654 : vector<8x1xf32>
    %656 = math.log %655 : vector<8x1xf32>
    %cst_236 = arith.constant 0.000000e+00 : f32
    %657 = vector.broadcast %cst_236 : f32 to vector<8x1xf32>
    %658 = arith.subf %657, %656 : vector<8x1xf32>
    %cst_237 = arith.constant dense<0.000000e+00> : vector<1xf32>
    %659 = vector.multi_reduction <add>, %658, %cst_237 [0] : vector<8x1xf32> to vector<1xf32>
    %660 = vector.shape_cast %659 : vector<1xf32> to vector<1x1xf32>
    %cst_238 = arith.constant 8.000000e+00 : f32
    %661 = vector.broadcast %cst_238 : f32 to vector<1x1xf32>
    %662 = arith.divf %660, %661 : vector<1x1xf32>
    %663 = arith.addf %638, %662 : vector<1x1xf32>
    %664 = arith.mulf %536, %554 : vector<8x32xf32>
    %cst_239 = arith.constant dense<0.000000e+00> : vector<8xf32>
    %665 = vector.multi_reduction <add>, %664, %cst_239 [1] : vector<8x32xf32> to vector<8xf32>
    %666 = vector.shape_cast %665 : vector<8xf32> to vector<8x1xf32>
    %cst_240 = arith.constant 1.000000e+00 : f32
    %667 = vector.broadcast %cst_240 : f32 to vector<8x1xf32>
    %668 = arith.divf %666, %667 : vector<8x1xf32>
    %669 = math.exp %668 : vector<8x1xf32>
    %cst_241 = arith.constant dense<0.000000e+00> : vector<8x8xf32>
    %670 = tpu.matmul %536, %554, %cst_241 {dimension_numbers = #tpu.dot_dimension_numbers<[1], [1], [0], [0], [0, 0, 1, 0], [], []>} : vector<8x32xf32>, vector<8x32xf32>, vector<8x8xf32> -> vector<8x8xf32>
    %cst_242 = arith.constant 1.000000e+00 : f32
    %671 = vector.broadcast %cst_242 : f32 to vector<8x8xf32>
    %672 = arith.divf %670, %671 : vector<8x8xf32>
    %673 = math.exp %672 : vector<8x8xf32>
    %cst_243 = arith.constant dense<0.000000e+00> : vector<8xf32>
    %674 = vector.multi_reduction <add>, %673, %cst_243 [1] : vector<8x8xf32> to vector<8xf32>
    %675 = vector.shape_cast %674 : vector<8xf32> to vector<8x1xf32>
    %cst_244 = arith.constant 9.99999993E-9 : f32
    %676 = vector.broadcast %cst_244 : f32 to vector<8x1xf32>
    %677 = arith.addf %675, %676 : vector<8x1xf32>
    %678 = arith.divf %669, %677 : vector<8x1xf32>
    %cst_245 = arith.constant 9.99999993E-9 : f32
    %679 = vector.broadcast %cst_245 : f32 to vector<8x1xf32>
    %680 = arith.addf %678, %679 : vector<8x1xf32>
    %681 = math.log %680 : vector<8x1xf32>
    %cst_246 = arith.constant 0.000000e+00 : f32
    %682 = vector.broadcast %cst_246 : f32 to vector<8x1xf32>
    %683 = arith.subf %682, %681 : vector<8x1xf32>
    %cst_247 = arith.constant dense<0.000000e+00> : vector<1xf32>
    %684 = vector.multi_reduction <add>, %683, %cst_247 [0] : vector<8x1xf32> to vector<1xf32>
    %685 = vector.shape_cast %684 : vector<1xf32> to vector<1x1xf32>
    %cst_248 = arith.constant 8.000000e+00 : f32
    %686 = vector.broadcast %cst_248 : f32 to vector<1x1xf32>
    %687 = arith.divf %685, %686 : vector<1x1xf32>
    %688 = arith.addf %663, %687 : vector<1x1xf32>
    %689 = arith.mulf %536, %563 : vector<8x32xf32>
    %cst_249 = arith.constant dense<0.000000e+00> : vector<8xf32>
    %690 = vector.multi_reduction <add>, %689, %cst_249 [1] : vector<8x32xf32> to vector<8xf32>
    %691 = vector.shape_cast %690 : vector<8xf32> to vector<8x1xf32>
    %cst_250 = arith.constant 1.000000e+00 : f32
    %692 = vector.broadcast %cst_250 : f32 to vector<8x1xf32>
    %693 = arith.divf %691, %692 : vector<8x1xf32>
    %694 = math.exp %693 : vector<8x1xf32>
    %cst_251 = arith.constant dense<0.000000e+00> : vector<8x8xf32>
    %695 = tpu.matmul %536, %563, %cst_251 {dimension_numbers = #tpu.dot_dimension_numbers<[1], [1], [0], [0], [0, 0, 1, 0], [], []>} : vector<8x32xf32>, vector<8x32xf32>, vector<8x8xf32> -> vector<8x8xf32>
    %cst_252 = arith.constant 1.000000e+00 : f32
    %696 = vector.broadcast %cst_252 : f32 to vector<8x8xf32>
    %697 = arith.divf %695, %696 : vector<8x8xf32>
    %698 = math.exp %697 : vector<8x8xf32>
    %cst_253 = arith.constant dense<0.000000e+00> : vector<8xf32>
    %699 = vector.multi_reduction <add>, %698, %cst_253 [1] : vector<8x8xf32> to vector<8xf32>
    %700 = vector.shape_cast %699 : vector<8xf32> to vector<8x1xf32>
    %cst_254 = arith.constant 9.99999993E-9 : f32
    %701 = vector.broadcast %cst_254 : f32 to vector<8x1xf32>
    %702 = arith.addf %700, %701 : vector<8x1xf32>
    %703 = arith.divf %694, %702 : vector<8x1xf32>
    %cst_255 = arith.constant 9.99999993E-9 : f32
    %704 = vector.broadcast %cst_255 : f32 to vector<8x1xf32>
    %705 = arith.addf %703, %704 : vector<8x1xf32>
    %706 = math.log %705 : vector<8x1xf32>
    %cst_256 = arith.constant 0.000000e+00 : f32
    %707 = vector.broadcast %cst_256 : f32 to vector<8x1xf32>
    %708 = arith.subf %707, %706 : vector<8x1xf32>
    %cst_257 = arith.constant dense<0.000000e+00> : vector<1xf32>
    %709 = vector.multi_reduction <add>, %708, %cst_257 [0] : vector<8x1xf32> to vector<1xf32>
    %710 = vector.shape_cast %709 : vector<1xf32> to vector<1x1xf32>
    %cst_258 = arith.constant 8.000000e+00 : f32
    %711 = vector.broadcast %cst_258 : f32 to vector<1x1xf32>
    %712 = arith.divf %710, %711 : vector<1x1xf32>
    %713 = arith.addf %688, %712 : vector<1x1xf32>
    %cst_259 = arith.constant 1.000000e-01 : f32
    %714 = vector.broadcast %cst_259 : f32 to vector<1x1xf32>
    %715 = arith.mulf %714, %713 : vector<1x1xf32>
    %716 = tpu.iota {dimensions = array<i32: 1>} : vector<1x128xi32>
    %c0_i32 = arith.constant 0 : i32
    %717 = vector.broadcast %c0_i32 : i32 to vector<1x128xi32>
    %718 = arith.cmpi eq, %716, %717 : vector<1x128xi32>
    %cst_260 = arith.constant 0.000000e+00 : f32
    %719 = vector.shape_cast %213 : vector<1x1xf32> to vector<1x1xf32>
    %720 = vector.broadcast %719 : vector<1x1xf32> to vector<1x128xf32>
    %721 = vector.broadcast %cst_260 : f32 to vector<1x128xf32>
    %722 = arith.select %718, %720, %721 : vector<1x128xi1>, vector<1x128xf32>
    %c1_i32 = arith.constant 1 : i32
    %723 = vector.broadcast %c1_i32 : i32 to vector<1x128xi32>
    %724 = arith.cmpi eq, %716, %723 : vector<1x128xi32>
    %cst_261 = arith.constant 0.000000e+00 : f32
    %725 = vector.shape_cast %235 : vector<1x1xf32> to vector<1x1xf32>
    %726 = vector.broadcast %725 : vector<1x1xf32> to vector<1x128xf32>
    %727 = vector.broadcast %cst_261 : f32 to vector<1x128xf32>
    %728 = arith.select %724, %726, %727 : vector<1x128xi1>, vector<1x128xf32>
    %729 = arith.addf %722, %728 : vector<1x128xf32>
    %c2_i32 = arith.constant 2 : i32
    %730 = vector.broadcast %c2_i32 : i32 to vector<1x128xi32>
    %731 = arith.cmpi eq, %716, %730 : vector<1x128xi32>
    %cst_262 = arith.constant 0.000000e+00 : f32
    %732 = vector.shape_cast %248 : vector<1x1xf32> to vector<1x1xf32>
    %733 = vector.broadcast %732 : vector<1x1xf32> to vector<1x128xf32>
    %734 = vector.broadcast %cst_262 : f32 to vector<1x128xf32>
    %735 = arith.select %731, %733, %734 : vector<1x128xi1>, vector<1x128xf32>
    %736 = arith.addf %729, %735 : vector<1x128xf32>
    %c3_i32 = arith.constant 3 : i32
    %737 = vector.broadcast %c3_i32 : i32 to vector<1x128xi32>
    %738 = arith.cmpi eq, %716, %737 : vector<1x128xi32>
    %cst_263 = arith.constant 0.000000e+00 : f32
    %739 = vector.shape_cast %715 : vector<1x1xf32> to vector<1x1xf32>
    %740 = vector.broadcast %739 : vector<1x1xf32> to vector<1x128xf32>
    %741 = vector.broadcast %cst_263 : f32 to vector<1x128xf32>
    %742 = arith.select %738, %740, %741 : vector<1x128xi1>, vector<1x128xf32>
    %743 = arith.addf %736, %742 : vector<1x128xf32>
    %c0_264 = arith.constant 0 : index
    %c0_265 = arith.constant 0 : index
    %744 = vector.load %arg10[%c0_264, %c0_265] : memref<1x128xf32, #tpu.memory_space<vmem>>, vector<1x128xf32>
    tpu.vector_store %arg10[%c0_264, %c0_265], %743 {strides = array<i32>} : memref<1x128xf32, #tpu.memory_space<vmem>>, vector<1x128xf32>,
    return
  }
  func.func @transform_0(%arg0: i32) -> (i32, i32) {
    %c0_i32 = arith.constant 0 : i32
    %c0_i32_0 = arith.constant 0 : i32
    %c0_i32_1 = arith.constant 0 : i32
    return %c0_i32, %c0_i32_0 : i32, i32
  }
  func.func @transform_1(%arg0: i32) -> (i32, i32) {
    %c0_i32 = arith.constant 0 : i32
    %c0_i32_0 = arith.constant 0 : i32
    %c0_i32_1 = arith.constant 0 : i32
    return %c0_i32, %c0_i32_0 : i32, i32
  }
  func.func @transform_2(%arg0: i32) -> (i32, i32) {
    %c0_i32 = arith.constant 0 : i32
    %c0_i32_0 = arith.constant 0 : i32
    %c0_i32_1 = arith.constant 0 : i32
    return %c0_i32, %c0_i32_0 : i32, i32
  }
  func.func @transform_3(%arg0: i32) -> (i32, i32) {
    %c0_i32 = arith.constant 0 : i32
    %c0_i32_0 = arith.constant 0 : i32
    %c0_i32_1 = arith.constant 0 : i32
    return %c0_i32, %c0_i32_0 : i32, i32
  }
  func.func @transform_4(%arg0: i32) -> (i32, i32) {
    %c0_i32 = arith.constant 0 : i32
    %c0_i32_0 = arith.constant 0 : i32
    %c0_i32_1 = arith.constant 0 : i32
    return %c0_i32, %c0_i32_0 : i32, i32
  }
  func.func @transform_5(%arg0: i32) -> (i32, i32) {
    %c0_i32 = arith.constant 0 : i32
    %c0_i32_0 = arith.constant 0 : i32
    %c0_i32_1 = arith.constant 0 : i32
    return %c0_i32, %c0_i32_0 : i32, i32
  }
  func.func @transform_6(%arg0: i32) -> (i32, i32) {
    %c0_i32 = arith.constant 0 : i32
    %c0_i32_0 = arith.constant 0 : i32
    %c0_i32_1 = arith.constant 0 : i32
    return %c0_i32, %c0_i32_0 : i32, i32
  }
  func.func @transform_7(%arg0: i32) -> (i32, i32) {
    %c0_i32 = arith.constant 0 : i32
    %c0_i32_0 = arith.constant 0 : i32
    %c0_i32_1 = arith.constant 0 : i32
    return %c0_i32, %c0_i32_0 : i32, i32
  }
  func.func @transform_8(%arg0: i32) -> (i32, i32) {
    %c0_i32 = arith.constant 0 : i32
    %c0_i32_0 = arith.constant 0 : i32
    %c0_i32_1 = arith.constant 0 : i32
    return %c0_i32, %c0_i32_0 : i32, i32
  }
  func.func @transform_9(%arg0: i32) -> (i32, i32) {
    %c0_i32 = arith.constant 0 : i32
    %c0_i32_0 = arith.constant 0 : i32
    %c0_i32_1 = arith.constant 0 : i32
    return %c0_i32, %c0_i32_0 : i32, i32
  }
}

</mosaic_0001>

<llo_original>
// kernel: dccf_forward.1
$region0: #{dccf_forward.1}
  #allocation0 [shape = 'u32[]', space=smem, size = 0x4, offset = 0x4, fixed_abs, tag = 'smem constant byte address 0x4 - core index']
  #allocation1 [shape = 'u32[144,128]{1,0:T(1,128)}', space=vmem, size = 0x12000, scoped, tag = 'internal scratch']
  %s0 = inlined_call_operand.vmem [shape: s32[8,1], index: 0, kind: input, shape index: {}]
  %s1 = inlined_call_operand.vmem [shape: s32[8,1], index: 1, kind: input, shape index: {}]
  %s2 = inlined_call_operand.vmem [shape: s32[8,1], index: 2, kind: input, shape index: {}]
  %s3 = inlined_call_operand.vmem [shape: f32[64,64], index: 3, kind: input, shape index: {}]
  %s4 = inlined_call_operand.vmem [shape: f32[64,64], index: 4, kind: input, shape index: {}]
  %s5 = inlined_call_operand.hbm [shape: f32[32,32], index: 5, kind: input, shape index: {}]
  %s6 = inlined_call_operand.hbm [shape: f32[32,32], index: 6, kind: input, shape index: {}]
  %s7 = inlined_call_operand.vmem [shape: f32[32,16], index: 7, kind: input, shape index: {}]
  %s8 = inlined_call_operand.vmem [shape: f32[32,16], index: 8, kind: input, shape index: {}]
  %s9 = inlined_call_operand.vmem [shape: f32[1,128], index: 9, kind: output, shape index: {}]
  %s10 = sld [smem:[#allocation0]]
  $region54: #{dccf_forward.1} parent=0
    _
  %s12 = ssub.s32 1, %s10
  %s13 = scalar_select 0, %s12, %s10
  $region1: #{dccf_forward.1} parent=0
    #allocation2 [shape = 'u8[16384]{0}', space=vmem, size = 0x4000, scoped, tag = 'input window, operand 5, single buffered']
    #allocation3 [shape = 's32[1]{0}', space=sflag, size = 0x4, scoped, tag = 'scoped memory for dccf_forward.1']
    #allocation4 [shape = 'u8[16384]{0}', space=vmem, size = 0x4000, scoped, tag = 'input window, operand 6, single buffered']
    #allocation5 [shape = 's32[1]{0}', space=sflag, size = 0x4, scoped, tag = 'scoped memory for dccf_forward.1']
    %14 = vsyncpa [#allocation3], 0
    %15 = vsyncpa [#allocation5], 0
    // Predicated region
    $region2: #{dccf_forward.1} parent=1 // pred_check
      _
    $region3: #{dccf_forward.1} parent=1 // pred_check_branch
      %17 = sbr.rel (0) target = $region5
    $region4: #{dccf_forward.1} parent=1 // pred_region
      _
    $region5: #{dccf_forward.1} parent=1 // pred_fallthru
      _
    // Predicated region
    $region6: #{dccf_forward.1} parent=1 // pred_check
      _
    $region7: #{dccf_forward.1} parent=1 // pred_check_branch
      %19 = sbr.rel (0) target = $region9
    $region8: #{dccf_forward.1} parent=1 // pred_region
      _
    $region9: #{dccf_forward.1} parent=1 // pred_fallthru
      _
    // Predicated region
    $region10: #{dccf_forward.1} parent=1 // pred_check
      _
    $region11: #{dccf_forward.1} parent=1 // pred_check_branch
      %21 = sbr.rel (0) target = $region13
    $region12: #{dccf_forward.1} parent=1 // pred_region
      _
    $region13: #{dccf_forward.1} parent=1 // pred_fallthru
      _
    // Predicated region
    $region14: #{dccf_forward.1} parent=1 // pred_check
      _
    $region15: #{dccf_forward.1} parent=1 // pred_check_branch
      %23 = sbr.rel (0) target = $region17
    $region16: #{dccf_forward.1} parent=1 // pred_region
      _
    $region17: #{dccf_forward.1} parent=1 // pred_fallthru
      _
    // Predicated region
    $region18: #{dccf_forward.1} parent=1 // pred_check
      _
    $region19: #{dccf_forward.1} parent=1 // pred_check_branch
      %25 = sbr.rel (0) target = $region21
    $region20: #{dccf_forward.1} parent=1 // pred_region
      _
    $region21: #{dccf_forward.1} parent=1 // pred_fallthru
      _
    // Predicated region
    $region22: #{dccf_forward.1} parent=1 // pred_check
      _
    $region23: #{dccf_forward.1} parent=1 // pred_check_branch
      %27 = sbr.rel (0) target = $region25
    $region24: #{dccf_forward.1} parent=1 // pred_region
      %s29 = ssub.s32 512, 512
      %30 = vsyncadd [#allocation3], %s29
      %s31 = sshll.u32 [#allocation2], 4
      %s32 = int_to_ptr.vmem [resolvable:$true] %s31
      %37 = dma.hbm_to_vmem [thread:$0]  %s5, 512, %s32, [#allocation3], 128, 128, 8
    $region25: #{dccf_forward.1} parent=1 // pred_fallthru
      _
    // Predicated region
    $region26: #{dccf_forward.1} parent=1 // pred_check
      _
    $region27: #{dccf_forward.1} parent=1 // pred_check_branch
      %39 = sbr.rel (0) target = $region29
    $region28: #{dccf_forward.1} parent=1 // pred_region
      %s41 = ssub.s32 512, 512
      %42 = vsyncadd [#allocation5], %s41
      %s43 = sshll.u32 [#allocation4], 4
      %s44 = int_to_ptr.vmem [resolvable:$true] %s43
      %49 = dma.hbm_to_vmem [thread:$0]  %s6, 512, %s44, [#allocation5], 128, 128, 8
    $region29: #{dccf_forward.1} parent=1 // pred_fallthru
      _
    // Predicated region
    $region30: #{dccf_forward.1} parent=1 // pred_check
      _
    $region31: #{dccf_forward.1} parent=1 // pred_check_branch
      %51 = sbr.rel (0) target = $region33
    $region32: #{dccf_forward.1} parent=1 // pred_region
      _
    $region33: #{dccf_forward.1} parent=1 // pred_fallthru
      _
    // Predicated region
    $region34: #{dccf_forward.1} parent=1 // pred_check
      _
    $region35: #{dccf_forward.1} parent=1 // pred_check_branch
      %53 = sbr.rel (0) target = $region37
    $region36: #{dccf_forward.1} parent=1 // pred_region
      _
    $region37: #{dccf_forward.1} parent=1 // pred_fallthru
      _
    // Predicated region
    $region38: #{dccf_forward.1} parent=1 // pred_check
      _
    $region39: #{dccf_forward.1} parent=1 // pred_check_branch
      %55 = sbr.rel (0) target = $region41
    $region40: #{dccf_forward.1} parent=1 // pred_region
      %56 = dma.done [#allocation3], 512
    $region41: #{dccf_forward.1} parent=1 // pred_fallthru
      _
    // Predicated region
    $region42: #{dccf_forward.1} parent=1 // pred_check
      _
    $region43: #{dccf_forward.1} parent=1 // pred_check_branch
      %58 = sbr.rel (0) target = $region45
    $region44: #{dccf_forward.1} parent=1 // pred_region
      %59 = dma.done [#allocation5], 512
    $region45: #{dccf_forward.1} parent=1 // pred_fallthru
      _
    %v60 = vld [vmem:[%s3] sm:$0xff]
    %v61 = vld [vmem:[%s3 + $0x8] sm:$0xff]
    %v62 = vld [vmem:[%s3 + $0x10] sm:$0xff]
    %v63 = vld [vmem:[%s3 + $0x18] sm:$0xff]
    %v64 = vld [vmem:[%s3 + $0x20] sm:$0xff]
    %v65 = vld [vmem:[%s3 + $0x28] sm:$0xff]
    %v66 = vld [vmem:[%s3 + $0x30] sm:$0xff]
    %v67 = vld [vmem:[%s3 + $0x38] sm:$0xff]
    %v68 = vld [vmem:[%s4] sm:$0xff]
    %v69 = vld [vmem:[%s4 + $0x8] sm:$0xff]
    %v70 = vld [vmem:[%s4 + $0x10] sm:$0xff]
    %v71 = vld [vmem:[%s4 + $0x18] sm:$0xff]
    %v72 = vld [vmem:[%s4 + $0x20] sm:$0xff]
    %v73 = vld [vmem:[%s4 + $0x28] sm:$0xff]
    %v74 = vld [vmem:[%s4 + $0x30] sm:$0xff]
    %v75 = vld [vmem:[%s4 + $0x38] sm:$0xff]
    %v76 = vld [vmem:[#allocation2] sm:$0xff]
    %v77 = vld [vmem:[#allocation2 + $0x8] sm:$0xff]
    %v78 = vld [vmem:[#allocation2 + $0x10] sm:$0xff]
    %v79 = vld [vmem:[#allocation2 + $0x18] sm:$0xff]
    %v80 = vld [vmem:[#allocation4] sm:$0xff]
    %v81 = vld [vmem:[#allocation4 + $0x8] sm:$0xff]
    %v82 = vld [vmem:[#allocation4 + $0x10] sm:$0xff]
    %v83 = vld [vmem:[#allocation4 + $0x18] sm:$0xff]
    %v84 = vld [vmem:[%s7] sm:$0xff]
    %v85 = vld [vmem:[%s7 + $0x8] sm:$0xff]
    %v86 = vld [vmem:[%s7 + $0x10] sm:$0xff]
    %v87 = vld [vmem:[%s7 + $0x18] sm:$0xff]
    %v88 = vld [vmem:[%s8] sm:$0xff]
    %v89 = vld [vmem:[%s8 + $0x8] sm:$0xff]
    %v90 = vld [vmem:[%s8 + $0x10] sm:$0xff]
    %v91 = vld [vmem:[%s8 + $0x18] sm:$0xff]
    %vm92 = vcmask 523264
    %v94 = vsel %vm92, %v60, 0
    %v97 = vsel %vm92, %v61, 0
    %v100 = vsel %vm92, %v62, 0
    %v103 = vsel %vm92, %v63, 0
    %v106 = vsel %vm92, %v64, 0
    %v109 = vsel %vm92, %v65, 0
    %v112 = vsel %vm92, %v66, 0
    %v115 = vsel %vm92, %v67, 0
    %117 = vmatprep.subr.mxu0 0.0
    %118 = vmatpush1.msra.mxu0 %v76
    %119 = vmatprep.subr.mxu0 0.0
    %120 = vmatpush1.msra.mxu0 %v77
    %121 = vmatprep.subr.mxu0 0.0
    %122 = vmatpush1.msra.mxu0 %v78
    %123 = vmatprep.subr.mxu0 0.0
    %124 = vmatpush1.msra.mxu0 %v79
    %125 = vmatprep.subr.mxu0 0.0
    %126 = vmatpush1.msra.mxu0 %v80
    %127 = vmatprep.subr.mxu0 0.0
    %128 = vmatpush1.msra.mxu0 %v81
    %129 = vmatprep.subr.mxu0 0.0
    %130 = vmatpush1.msra.mxu0 %v82
    %131 = vmatprep.subr.mxu0 0.0
    %132 = vmatpush1.msra.mxu0 %v83
    %133 = vmatprep.subr.mxu0 0.0
    %134 = vmatpush1.msra.mxu0 0.0
    %135 = vmatprep.subr.mxu0 0.0
    %136 = vmatpush1.msra.mxu0 0.0
    %137 = vmatprep.subr.mxu0 0.0
    %138 = vmatpush1.msra.mxu0 0.0
    %139 = vmatprep.subr.mxu0 0.0
    %140 = vmatpush1.msra.mxu0 0.0
    %141 = vmatprep.subr.mxu0 0.0
    %142 = vmatpush1.msra.mxu0 0.0
    %143 = vmatprep.subr.mxu0 0.0
    %144 = vmatpush1.msra.mxu0 0.0
    %145 = vmatprep.subr.mxu0 0.0
    %146 = vmatpush1.msra.mxu0 0.0
    %147 = vmatprep.subr.mxu0 0.0
    %148 = vmatpush1.msra.mxu0 0.0
    %149 = vmatprep.subr.mxu0 0.0
    %150 = vmatpush1.msra.mxu0 0.0
    %151 = vmatprep.subr.mxu0 0.0
    %152 = vmatpush1.msra.mxu0 0.0
    %153 = vmatprep.subr.mxu0 0.0
    %154 = vmatpush1.msra.mxu0 0.0
    %155 = vmatprep.subr.mxu0 0.0
    %156 = vmatpush1.msra.mxu0 0.0
    %157 = vmatprep.subr.mxu0 0.0
    %158 = vmatpush1.msra.mxu0 0.0
    %159 = vmatprep.subr.mxu0 0.0
    %160 = vmatpush1.msra.mxu0 0.0
    %161 = vmatprep.subr.mxu0 0.0
    %162 = vmatpush1.msra.mxu0 0.0
    %163 = vmatprep.subr.mxu0 0.0
    %164 = vmatpush1.msra.mxu0 0.0
    %165 = vmatprep.subr.mxu0 0.0
    %166 = vmatpush1.msra.mxu0 0.0
    %167 = vmatprep.subr.mxu0 0.0
    %168 = vmatpush1.msra.mxu0 0.0
    %169 = vmatprep.subr.mxu0 0.0
    %170 = vmatpush1.msra.mxu0 0.0
    %171 = vmatprep.subr.mxu0 0.0
    %172 = vmatpush1.msra.mxu0 0.0
    %173 = vmatprep.subr.mxu0 0.0
    %174 = vmatpush1.msra.mxu0 0.0
    %175 = vmatprep.subr.mxu0 0.0
    %176 = vmatpush1.msra.mxu0 0.0
    %177 = vmatprep.subr.mxu0 0.0
    %178 = vmatpush1.msra.mxu0 0.0
    %179 = vmatprep.subr.mxu0 0.0
    %180 = vmatpush1.msra.mxu0 0.0
    %181 = vmatprep.mubr.f32.mxu0 0.0
    %182 = vmatmul.mubr.f32.gmra.mrb[0].mxu0 %v94
    %v183 = vpop.f32.mrb[0].mxu0
    %v184 = vadd.f32 0.0, %v183
    %v185 = vpop.f32.mrb[0].mxu0
    %186 = vmatprep.mubr.f32.mxu0 0.0
    %187 = vmatmul.mubr.f32.gmra.mrb[0].mxu0 %v97
    %v188 = vpop.f32.mrb[0].mxu0
    %v189 = vadd.f32 0.0, %v188
    %v190 = vpop.f32.mrb[0].mxu0
    %191 = vmatprep.mubr.f32.mxu0 0.0
    %192 = vmatmul.mubr.f32.gmra.mrb[0].mxu0 %v100
    %v193 = vpop.f32.mrb[0].mxu0
    %v194 = vadd.f32 0.0, %v193
    %v195 = vpop.f32.mrb[0].mxu0
    %196 = vmatprep.mubr.f32.mxu0 0.0
    %197 = vmatmul.mubr.f32.gmra.mrb[0].mxu0 %v103
    %v198 = vpop.f32.mrb[0].mxu0
    %v199 = vadd.f32 0.0, %v198
    %v200 = vpop.f32.mrb[0].mxu0
    %201 = vmatprep.mubr.f32.mxu0 0.0
    %202 = vmatmul.mubr.f32.gmra.mrb[0].mxu0 %v106
    %v203 = vpop.f32.mrb[0].mxu0
    %v204 = vadd.f32 0.0, %v203
    %v205 = vpop.f32.mrb[0].mxu0
    %206 = vmatprep.mubr.f32.mxu0 0.0
    %207 = vmatmul.mubr.f32.gmra.mrb[0].mxu0 %v109
    %v208 = vpop.f32.mrb[0].mxu0
    %v209 = vadd.f32 0.0, %v208
    %v210 = vpop.f32.mrb[0].mxu0
    %211 = vmatprep.mubr.f32.mxu0 0.0
    %212 = vmatmul.mubr.f32.gmra.mrb[0].mxu0 %v112
    %v213 = vpop.f32.mrb[0].mxu0
    %v214 = vadd.f32 0.0, %v213
    %v215 = vpop.f32.mrb[0].mxu0
    %216 = vmatprep.mubr.f32.mxu0 0.0
    %217 = vmatmul.mubr.f32.gmra.mrb[0].mxu0 %v115
    %v218 = vpop.f32.mrb[0].mxu0
    %v219 = vadd.f32 0.0, %v218
    %v220 = vpop.f32.mrb[0].mxu0
    %221 = vdwg.mxu0
    %vm222 = vcmask 261120
    %v224 = vsel %vm222, %v76, 0
    %v227 = vsel %vm222, %v77, 0
    %v230 = vsel %vm222, %v78, 0
    %v233 = vsel %vm222, %v79, 0
    %235 = vmatprep.subr.mxu0 0.0
    %236 = vmatpush1.msra.mxu0 %v84
    %237 = vmatprep.subr.mxu0 0.0
    %238 = vmatpush1.msra.mxu0 %v85
    %239 = vmatprep.subr.mxu0 0.0
    %240 = vmatpush1.msra.mxu0 %v86
    %241 = vmatprep.subr.mxu0 0.0
    %242 = vmatpush1.msra.mxu0 %v87
    %243 = vmatprep.subr.mxu0 0.0
    %244 = vmatpush1.msra.mxu0 0.0
    %245 = vmatprep.subr.mxu0 0.0
    %246 = vmatpush1.msra.mxu0 0.0
    %247 = vmatprep.subr.mxu0 0.0
    %248 = vmatpush1.msra.mxu0 0.0
    %249 = vmatprep.subr.mxu0 0.0
    %250 = vmatpush1.msra.mxu0 0.0
    %251 = vmatprep.subr.mxu0 0.0
    %252 = vmatpush1.msra.mxu0 0.0
    %253 = vmatprep.subr.mxu0 0.0
    %254 = vmatpush1.msra.mxu0 0.0
    %255 = vmatprep.subr.mxu0 0.0
    %256 = vmatpush1.msra.mxu0 0.0
    %257 = vmatprep.subr.mxu0 0.0
    %258 = vmatpush1.msra.mxu0 0.0
    %259 = vmatprep.subr.mxu0 0.0
    %260 = vmatpush1.msra.mxu0 0.0
    %261 = vmatprep.subr.mxu0 0.0
    %262 = vmatpush1.msra.mxu0 0.0
    %263 = vmatprep.subr.mxu0 0.0
    %264 = vmatpush1.msra.mxu0 0.0
    %265 = vmatprep.subr.mxu0 0.0
    %266 = vmatpush1.msra.mxu0 0.0
    %267 = vmatprep.subr.mxu0 0.0
    %268 = vmatpush1.msra.mxu0 0.0
    %269 = vmatprep.subr.mxu0 0.0
    %270 = vmatpush1.msra.mxu0 0.0
    %271 = vmatprep.subr.mxu0 0.0
    %272 = vmatpush1.msra.mxu0 0.0
    %273 = vmatprep.subr.mxu0 0.0
    %274 = vmatpush1.msra.mxu0 0.0
    %275 = vmatprep.subr.mxu0 0.0
    %276 = vmatpush1.msra.mxu0 0.0
    %277 = vmatprep.subr.mxu0 0.0
    %278 = vmatpush1.msra.mxu0 0.0
    %279 = vmatprep.subr.mxu0 0.0
    %280 = vmatpush1.msra.mxu0 0.0
    %281 = vmatprep.subr.mxu0 0.0
    %282 = vmatpush1.msra.mxu0 0.0
    %283 = vmatprep.subr.mxu0 0.0
    %284 = vmatpush1.msra.mxu0 0.0
    %285 = vmatprep.subr.mxu0 0.0
    %286 = vmatpush1.msra.mxu0 0.0
    %287 = vmatprep.subr.mxu0 0.0
    %288 = vmatpush1.msra.mxu0 0.0
    %289 = vmatprep.subr.mxu0 0.0
    %290 = vmatpush1.msra.mxu0 0.0
    %291 = vmatprep.subr.mxu0 0.0
    %292 = vmatpush1.msra.mxu0 0.0
    %293 = vmatprep.subr.mxu0 0.0
    %294 = vmatpush1.msra.mxu0 0.0
    %295 = vmatprep.subr.mxu0 0.0
    %296 = vmatpush1.msra.mxu0 0.0
    %297 = vmatprep.subr.mxu0 0.0
    %298 = vmatpush1.msra.mxu0 0.0
    %299 = vmatprep.mubr.f32.mxu0 0.0
    %300 = vmatmul.mubr.f32.gmra.mrb[0].mxu0 %v224
    %v301 = vpop.f32.mrb[0].mxu0
    %v302 = vadd.f32 0.0, %v301
    %v303 = vpop.f32.mrb[0].mxu0
    %304 = vmatprep.mubr.f32.mxu0 0.0
    %305 = vmatmul.mubr.f32.gmra.mrb[0].mxu0 %v227
    %v306 = vpop.f32.mrb[0].mxu0
    %v307 = vadd.f32 0.0, %v306
    %v308 = vpop.f32.mrb[0].mxu0
    %309 = vmatprep.mubr.f32.mxu0 0.0
    %310 = vmatmul.mubr.f32.gmra.mrb[0].mxu0 %v230
    %v311 = vpop.f32.mrb[0].mxu0
    %v312 = vadd.f32 0.0, %v311
    %v313 = vpop.f32.mrb[0].mxu0
    %314 = vmatprep.mubr.f32.mxu0 0.0
    %315 = vmatmul.mubr.f32.gmra.mrb[0].mxu0 %v233
    %v316 = vpop.f32.mrb[0].mxu0
    %v317 = vadd.f32 0.0, %v316
    %v318 = vpop.f32.mrb[0].mxu0
    %319 = vdwg.mxu0
    %vm320 = vcmask 130048
    %v321 = vsel %vm320, %v302, -inf
    %322 = vmax.xlane.f32.xlu0 %v321
    %v323 = vpop.xlane.xlu0 %322
    %v324 = vsel %vm320, %v307, -inf
    %325 = vmax.xlane.f32.xlu0 %v324
    %v326 = vpop.xlane.xlu0 %325
    %v327 = vsel %vm320, %v312, -inf
    %328 = vmax.xlane.f32.xlu0 %v327
    %v329 = vpop.xlane.xlu0 %328
    %v330 = vsel %vm320, %v317, -inf
    %331 = vmax.xlane.f32.xlu0 %v330
    %v332 = vpop.xlane.xlu0 %331
    %v333 = vsub.f32 %v302, %v323
    %v334 = vsub.f32 %v307, %v326
    %v335 = vsub.f32 %v312, %v329
    %v336 = vsub.f32 %v317, %v332
    %v337 = vmul.f32 %v333, 1.442695
    %v338 = vpow.pop %v337
    %v339 = vmul.f32 %v334, 1.442695
    %v340 = vpow.pop %v339
    %v341 = vmul.f32 %v335, 1.442695
    %v342 = vpow.pop %v341
    %v343 = vmul.f32 %v336, 1.442695
    %v344 = vpow.pop %v343
    %v345 = vsel %vm320, %v338, 0.0
    %346 = vadd.xlane.f32.xlu0 %v345
    %v347 = vpop.xlane.xlu0 %346
    %v348 = vsel %vm320, %v340, 0.0
    %349 = vadd.xlane.f32.xlu0 %v348
    %v350 = vpop.xlane.xlu0 %349
    %v351 = vsel %vm320, %v342, 0.0
    %352 = vadd.xlane.f32.xlu0 %v351
    %v353 = vpop.xlane.xlu0 %352
    %v354 = vsel %vm320, %v344, 0.0
    %355 = vadd.xlane.f32.xlu0 %v354
    %v356 = vpop.xlane.xlu0 %355
    %v357 = vrcp.pop %v347
    %v358 = vmul.f32 %v338, %v357
    %v359 = vrcp.pop %v350
    %v360 = vmul.f32 %v340, %v359
    %v361 = vrcp.pop %v353
    %v362 = vmul.f32 %v342, %v361
    %v363 = vrcp.pop %v356
    %v364 = vmul.f32 %v344, %v363
    %v366 = vsel %vm320, %v358, 0
    %v369 = vsel %vm320, %v360, 0
    %v372 = vsel %vm320, %v362, 0
    %v375 = vsel %vm320, %v364, 0
    %v378 = vsel %vm320, %v84, 0
    %v381 = vsel %vm320, %v85, 0
    %v384 = vsel %vm320, %v86, 0
    %v387 = vsel %vm320, %v87, 0
    %389 = vmatprep.subr.mxu0 0.0
    %390 = vmatpush1.xpose.msra.mxu0 %v378
    %391 = vmatprep.subr.mxu0 0.0
    %392 = vmatpush1.xpose.msra.mxu0 %v381
    %393 = vmatprep.subr.mxu0 0.0
    %394 = vmatpush1.xpose.msra.mxu0 %v384
    %395 = vmatprep.subr.mxu0 0.0
    %396 = vmatpush1.xpose.msra.mxu0 %v387
    %397 = vmatprep.subr.mxu0 0.0
    %398 = vmatpush1.xpose.msra.mxu0 0.0
    %399 = vmatprep.subr.mxu0 0.0
    %400 = vmatpush1.xpose.msra.mxu0 0.0
    %401 = vmatprep.subr.mxu0 0.0
    %402 = vmatpush1.xpose.msra.mxu0 0.0
    %403 = vmatprep.subr.mxu0 0.0
    %404 = vmatpush1.xpose.msra.mxu0 0.0
    %405 = vmatprep.subr.mxu0 0.0
    %406 = vmatpush1.xpose.msra.mxu0 0.0
    %407 = vmatprep.subr.mxu0 0.0
    %408 = vmatpush1.xpose.msra.mxu0 0.0
    %409 = vmatprep.subr.mxu0 0.0
    %410 = vmatpush1.xpose.msra.mxu0 0.0
    %411 = vmatprep.subr.mxu0 0.0
    %412 = vmatpush1.xpose.msra.mxu0 0.0
    %413 = vmatprep.subr.mxu0 0.0
    %414 = vmatpush1.xpose.msra.mxu0 0.0
    %415 = vmatprep.subr.mxu0 0.0
    %416 = vmatpush1.xpose.msra.mxu0 0.0
    %417 = vmatprep.subr.mxu0 0.0
    %418 = vmatpush1.xpose.msra.mxu0 0.0
    %419 = vmatprep.subr.mxu0 0.0
    %420 = vmatpush1.xpose.msra.mxu0 0.0
    %421 = vmatprep.subr.mxu0 0.0
    %422 = vmatpush1.xpose.msra.mxu0 0.0
    %423 = vmatprep.subr.mxu0 0.0
    %424 = vmatpush1.xpose.msra.mxu0 0.0
    %425 = vmatprep.subr.mxu0 0.0
    %426 = vmatpush1.xpose.msra.mxu0 0.0
    %427 = vmatprep.subr.mxu0 0.0
    %428 = vmatpush1.xpose.msra.mxu0 0.0
    %429 = vmatprep.subr.mxu0 0.0
    %430 = vmatpush1.xpose.msra.mxu0 0.0
    %431 = vmatprep.subr.mxu0 0.0
    %432 = vmatpush1.xpose.msra.mxu0 0.0
    %433 = vmatprep.subr.mxu0 0.0
    %434 = vmatpush1.xpose.msra.mxu0 0.0
    %435 = vmatprep.subr.mxu0 0.0
    %436 = vmatpush1.xpose.msra.mxu0 0.0
    %437 = vmatprep.subr.mxu0 0.0
    %438 = vmatpush1.xpose.msra.mxu0 0.0
    %439 = vmatprep.subr.mxu0 0.0
    %440 = vmatpush1.xpose.msra.mxu0 0.0
    %441 = vmatprep.subr.mxu0 0.0
    %442 = vmatpush1.xpose.msra.mxu0 0.0
    %443 = vmatprep.subr.mxu0 0.0
    %444 = vmatpush1.xpose.msra.mxu0 0.0
    %445 = vmatprep.subr.mxu0 0.0
    %446 = vmatpush1.xpose.msra.mxu0 0.0
    %447 = vmatprep.subr.mxu0 0.0
    %448 = vmatpush1.xpose.msra.mxu0 0.0
    %449 = vmatprep.subr.mxu0 0.0
    %450 = vmatpush1.xpose.msra.mxu0 0.0
    %451 = vmatprep.subr.mxu0 0.0
    %452 = vmatpush1.xpose.msra.mxu0 0.0
    %453 = vmatprep.mubr.f32.mxu0 0.0
    %454 = vmatmul.mubr.f32.gmra.mrb[0].mxu0 %v366
    %v455 = vpop.f32.mrb[0].mxu0
    %v456 = vadd.f32 0.0, %v455
    %v457 = vpop.f32.mrb[0].mxu0
    %458 = vmatprep.mubr.f32.mxu0 0.0
    %459 = vmatmul.mubr.f32.gmra.mrb[0].mxu0 %v369
    %v460 = vpop.f32.mrb[0].mxu0
    %v461 = vadd.f32 0.0, %v460
    %v462 = vpop.f32.mrb[0].mxu0
    %463 = vmatprep.mubr.f32.mxu0 0.0
    %464 = vmatmul.mubr.f32.gmra.mrb[0].mxu0 %v372
    %v465 = vpop.f32.mrb[0].mxu0
    %v466 = vadd.f32 0.0, %v465
    %v467 = vpop.f32.mrb[0].mxu0
    %468 = vmatprep.mubr.f32.mxu0 0.0
    %469 = vmatmul.mubr.f32.gmra.mrb[0].mxu0 %v375
    %v470 = vpop.f32.mrb[0].mxu0
    %v471 = vadd.f32 0.0, %v470
    %v472 = vpop.f32.mrb[0].mxu0
    %473 = vdwg.mxu0
    %v475 = vsel %vm222, %v80, 0
    %v478 = vsel %vm222, %v81, 0
    %v481 = vsel %vm222, %v82, 0
    %v484 = vsel %vm222, %v83, 0
    %486 = vmatprep.subr.mxu0 0.0
    %487 = vmatpush1.msra.mxu0 %v88
    %488 = vmatprep.subr.mxu0 0.0
    %489 = vmatpush1.msra.mxu0 %v89
    %490 = vmatprep.subr.mxu0 0.0
    %491 = vmatpush1.msra.mxu0 %v90
    %492 = vmatprep.subr.mxu0 0.0
    %493 = vmatpush1.msra.mxu0 %v91
    %494 = vmatprep.subr.mxu0 0.0
    %495 = vmatpush1.msra.mxu0 0.0
    %496 = vmatprep.subr.mxu0 0.0
    %497 = vmatpush1.msra.mxu0 0.0
    %498 = vmatprep.subr.mxu0 0.0
    %499 = vmatpush1.msra.mxu0 0.0
    %500 = vmatprep.subr.mxu0 0.0
    %501 = vmatpush1.msra.mxu0 0.0
    %502 = vmatprep.subr.mxu0 0.0
    %503 = vmatpush1.msra.mxu0 0.0
    %504 = vmatprep.subr.mxu0 0.0
    %505 = vmatpush1.msra.mxu0 0.0
    %506 = vmatprep.subr.mxu0 0.0
    %507 = vmatpush1.msra.mxu0 0.0
    %508 = vmatprep.subr.mxu0 0.0
    %509 = vmatpush1.msra.mxu0 0.0
    %510 = vmatprep.subr.mxu0 0.0
    %511 = vmatpush1.msra.mxu0 0.0
    %512 = vmatprep.subr.mxu0 0.0
    %513 = vmatpush1.msra.mxu0 0.0
    %514 = vmatprep.subr.mxu0 0.0
    %515 = vmatpush1.msra.mxu0 0.0
    %516 = vmatprep.subr.mxu0 0.0
    %517 = vmatpush1.msra.mxu0 0.0
    %518 = vmatprep.subr.mxu0 0.0
    %519 = vmatpush1.msra.mxu0 0.0
    %520 = vmatprep.subr.mxu0 0.0
    %521 = vmatpush1.msra.mxu0 0.0
    %522 = vmatprep.subr.mxu0 0.0
    %523 = vmatpush1.msra.mxu0 0.0
    %524 = vmatprep.subr.mxu0 0.0
    %525 = vmatpush1.msra.mxu0 0.0
    %526 = vmatprep.subr.mxu0 0.0
    %527 = vmatpush1.msra.mxu0 0.0
    %528 = vmatprep.subr.mxu0 0.0
    %529 = vmatpush1.msra.mxu0 0.0
    %530 = vmatprep.subr.mxu0 0.0
    %531 = vmatpush1.msra.mxu0 0.0
    %532 = vmatprep.subr.mxu0 0.0
    %533 = vmatpush1.msra.mxu0 0.0
    %534 = vmatprep.subr.mxu0 0.0
    %535 = vmatpush1.msra.mxu0 0.0
    %536 = vmatprep.subr.mxu0 0.0
    %537 = vmatpush1.msra.mxu0 0.0
    %538 = vmatprep.subr.mxu0 0.0
    %539 = vmatpush1.msra.mxu0 0.0
    %540 = vmatprep.subr.mxu0 0.0
    %541 = vmatpush1.msra.mxu0 0.0
    %542 = vmatprep.subr.mxu0 0.0
    %543 = vmatpush1.msra.mxu0 0.0
    %544 = vmatprep.subr.mxu0 0.0
    %545 = vmatpush1.msra.mxu0 0.0
    %546 = vmatprep.subr.mxu0 0.0
    %547 = vmatpush1.msra.mxu0 0.0
    %548 = vmatprep.subr.mxu0 0.0
    %549 = vmatpush1.msra.mxu0 0.0
    %550 = vmatprep.mubr.f32.mxu0 0.0
    %551 = vmatmul.mubr.f32.gmra.mrb[0].mxu0 %v475
    %v552 = vpop.f32.mrb[0].mxu0
    %v553 = vadd.f32 0.0, %v552
    %v554 = vpop.f32.mrb[0].mxu0
    %555 = vmatprep.mubr.f32.mxu0 0.0
    %556 = vmatmul.mubr.f32.gmra.mrb[0].mxu0 %v478
    %v557 = vpop.f32.mrb[0].mxu0
    %v558 = vadd.f32 0.0, %v557
    %v559 = vpop.f32.mrb[0].mxu0
    %560 = vmatprep.mubr.f32.mxu0 0.0
    %561 = vmatmul.mubr.f32.gmra.mrb[0].mxu0 %v481
    %v562 = vpop.f32.mrb[0].mxu0
    %v563 = vadd.f32 0.0, %v562
    %v564 = vpop.f32.mrb[0].mxu0
    %565 = vmatprep.mubr.f32.mxu0 0.0
    %566 = vmatmul.mubr.f32.gmra.mrb[0].mxu0 %v484
    %v567 = vpop.f32.mrb[0].mxu0
    %v568 = vadd.f32 0.0, %v567
    %v569 = vpop.f32.mrb[0].mxu0
    %570 = vdwg.mxu0
    %v571 = vsel %vm320, %v553, -inf
    %572 = vmax.xlane.f32.xlu0 %v571
    %v573 = vpop.xlane.xlu0 %572
    %v574 = vsel %vm320, %v558, -inf
    %575 = vmax.xlane.f32.xlu0 %v574
    %v576 = vpop.xlane.xlu0 %575
    %v577 = vsel %vm320, %v563, -inf
    %578 = vmax.xlane.f32.xlu0 %v577
    %v579 = vpop.xlane.xlu0 %578
    %v580 = vsel %vm320, %v568, -inf
    %581 = vmax.xlane.f32.xlu0 %v580
    %v582 = vpop.xlane.xlu0 %581
    %v583 = vsub.f32 %v553, %v573
    %v584 = vsub.f32 %v558, %v576
    %v585 = vsub.f32 %v563, %v579
    %v586 = vsub.f32 %v568, %v582
    %v587 = vmul.f32 %v583, 1.442695
    %v588 = vpow.pop %v587
    %v589 = vmul.f32 %v584, 1.442695
    %v590 = vpow.pop %v589
    %v591 = vmul.f32 %v585, 1.442695
    %v592 = vpow.pop %v591
    %v593 = vmul.f32 %v586, 1.442695
    %v594 = vpow.pop %v593
    %v595 = vsel %vm320, %v588, 0.0
    %596 = vadd.xlane.f32.xlu0 %v595
    %v597 = vpop.xlane.xlu0 %596
    %v598 = vsel %vm320, %v590, 0.0
    %599 = vadd.xlane.f32.xlu0 %v598
    %v600 = vpop.xlane.xlu0 %599
    %v601 = vsel %vm320, %v592, 0.0
    %602 = vadd.xlane.f32.xlu0 %v601
    %v603 = vpop.xlane.xlu0 %602
    %v604 = vsel %vm320, %v594, 0.0
    %605 = vadd.xlane.f32.xlu0 %v604
    %v606 = vpop.xlane.xlu0 %605
    %v607 = vrcp.pop %v597
    %v608 = vmul.f32 %v588, %v607
    %v609 = vrcp.pop %v600
    %v610 = vmul.f32 %v590, %v609
    %v611 = vrcp.pop %v603
    %v612 = vmul.f32 %v592, %v611
    %v613 = vrcp.pop %v606
    %v614 = vmul.f32 %v594, %v613
    %v616 = vsel %vm320, %v608, 0
    %v619 = vsel %vm320, %v610, 0
    %v622 = vsel %vm320, %v612, 0
    %v625 = vsel %vm320, %v614, 0
    %v628 = vsel %vm320, %v88, 0
    %v631 = vsel %vm320, %v89, 0
    %v634 = vsel %vm320, %v90, 0
    %v637 = vsel %vm320, %v91, 0
    %639 = vmatprep.subr.mxu0 0.0
    %640 = vmatpush1.xpose.msra.mxu0 %v628
    %641 = vmatprep.subr.mxu0 0.0
    %642 = vmatpush1.xpose.msra.mxu0 %v631
    %643 = vmatprep.subr.mxu0 0.0
    %644 = vmatpush1.xpose.msra.mxu0 %v634
    %645 = vmatprep.subr.mxu0 0.0
    %646 = vmatpush1.xpose.msra.mxu0 %v637
    %647 = vmatprep.subr.mxu0 0.0
    %648 = vmatpush1.xpose.msra.mxu0 0.0
    %649 = vmatprep.subr.mxu0 0.0
    %650 = vmatpush1.xpose.msra.mxu0 0.0
    %651 = vmatprep.subr.mxu0 0.0
    %652 = vmatpush1.xpose.msra.mxu0 0.0
    %653 = vmatprep.subr.mxu0 0.0
    %654 = vmatpush1.xpose.msra.mxu0 0.0
    %655 = vmatprep.subr.mxu0 0.0
    %656 = vmatpush1.xpose.msra.mxu0 0.0
    %657 = vmatprep.subr.mxu0 0.0
    %658 = vmatpush1.xpose.msra.mxu0 0.0
    %659 = vmatprep.subr.mxu0 0.0
    %660 = vmatpush1.xpose.msra.mxu0 0.0
    %661 = vmatprep.subr.mxu0 0.0
    %662 = vmatpush1.xpose.msra.mxu0 0.0
    %663 = vmatprep.subr.mxu0 0.0
    %664 = vmatpush1.xpose.msra.mxu0 0.0
    %665 = vmatprep.subr.mxu0 0.0
    %666 = vmatpush1.xpose.msra.mxu0 0.0
    %667 = vmatprep.subr.mxu0 0.0
    %668 = vmatpush1.xpose.msra.mxu0 0.0
    %669 = vmatprep.subr.mxu0 0.0
    %670 = vmatpush1.xpose.msra.mxu0 0.0
    %671 = vmatprep.subr.mxu0 0.0
    %672 = vmatpush1.xpose.msra.mxu0 0.0
    %673 = vmatprep.subr.mxu0 0.0
    %674 = vmatpush1.xpose.msra.mxu0 0.0
    %675 = vmatprep.subr.mxu0 0.0
    %676 = vmatpush1.xpose.msra.mxu0 0.0
    %677 = vmatprep.subr.mxu0 0.0
    %678 = vmatpush1.xpose.msra.mxu0 0.0
    %679 = vmatprep.subr.mxu0 0.0
    %680 = vmatpush1.xpose.msra.mxu0 0.0
    %681 = vmatprep.subr.mxu0 0.0
    %682 = vmatpush1.xpose.msra.mxu0 0.0
    %683 = vmatprep.subr.mxu0 0.0
    %684 = vmatpush1.xpose.msra.mxu0 0.0
    %685 = vmatprep.subr.mxu0 0.0
    %686 = vmatpush1.xpose.msra.mxu0 0.0
    %687 = vmatprep.subr.mxu0 0.0
    %688 = vmatpush1.xpose.msra.mxu0 0.0
    %689 = vmatprep.subr.mxu0 0.0
    %690 = vmatpush1.xpose.msra.mxu0 0.0
    %691 = vmatprep.subr.mxu0 0.0
    %692 = vmatpush1.xpose.msra.mxu0 0.0
    %693 = vmatprep.subr.mxu0 0.0
    %694 = vmatpush1.xpose.msra.mxu0 0.0
    %695 = vmatprep.subr.mxu0 0.0
    %696 = vmatpush1.xpose.msra.mxu0 0.0
    %697 = vmatprep.subr.mxu0 0.0
    %698 = vmatpush1.xpose.msra.mxu0 0.0
    %699 = vmatprep.subr.mxu0 0.0
    %700 = vmatpush1.xpose.msra.mxu0 0.0
    %701 = vmatprep.subr.mxu0 0.0
    %702 = vmatpush1.xpose.msra.mxu0 0.0
    %703 = vmatprep.mubr.f32.mxu0 0.0
    %704 = vmatmul.mubr.f32.gmra.mrb[0].mxu0 %v616
    %v705 = vpop.f32.mrb[0].mxu0
    %v706 = vadd.f32 0.0, %v705
    %v707 = vpop.f32.mrb[0].mxu0
    %708 = vmatprep.mubr.f32.mxu0 0.0
    %709 = vmatmul.mubr.f32.gmra.mrb[0].mxu0 %v619
    %v710 = vpop.f32.mrb[0].mxu0
    %v711 = vadd.f32 0.0, %v710
    %v712 = vpop.f32.mrb[0].mxu0
    %713 = vmatprep.mubr.f32.mxu0 0.0
    %714 = vmatmul.mubr.f32.gmra.mrb[0].mxu0 %v622
    %v715 = vpop.f32.mrb[0].mxu0
    %v716 = vadd.f32 0.0, %v715
    %v717 = vpop.f32.mrb[0].mxu0
    %718 = vmatprep.mubr.f32.mxu0 0.0
    %719 = vmatmul.mubr.f32.gmra.mrb[0].mxu0 %v625
    %v720 = vpop.f32.mrb[0].mxu0
    %v721 = vadd.f32 0.0, %v720
    %v722 = vpop.f32.mrb[0].mxu0
    %723 = vdwg.mxu0
    %v724 = vmul.f32 %v184, %v184
    %v725 = vmul.f32 %v189, %v189
    %v726 = vmul.f32 %v194, %v194
    %v727 = vmul.f32 %v199, %v199
    %v728 = vmul.f32 %v204, %v204
    %v729 = vmul.f32 %v209, %v209
    %v730 = vmul.f32 %v214, %v214
    %v731 = vmul.f32 %v219, %v219
    %v732 = vsel %vm222, %v724, 0.0
    %733 = vadd.xlane.f32.xlu0 %v732
    %v734 = vpop.xlane.xlu0 %733
    %v735 = vsel %vm222, %v725, 0.0
    %736 = vadd.xlane.f32.xlu0 %v735
    %v737 = vpop.xlane.xlu0 %736
    %v738 = vsel %vm222, %v726, 0.0
    %739 = vadd.xlane.f32.xlu0 %v738
    %v740 = vpop.xlane.xlu0 %739
    %v741 = vsel %vm222, %v727, 0.0
    %742 = vadd.xlane.f32.xlu0 %v741
    %v743 = vpop.xlane.xlu0 %742
    %v744 = vsel %vm222, %v728, 0.0
    %745 = vadd.xlane.f32.xlu0 %v744
    %v746 = vpop.xlane.xlu0 %745
    %v747 = vsel %vm222, %v729, 0.0
    %748 = vadd.xlane.f32.xlu0 %v747
    %v749 = vpop.xlane.xlu0 %748
    %v750 = vsel %vm222, %v730, 0.0
    %751 = vadd.xlane.f32.xlu0 %v750
    %v752 = vpop.xlane.xlu0 %751
    %v753 = vsel %vm222, %v731, 0.0
    %754 = vadd.xlane.f32.xlu0 %v753
    %v755 = vpop.xlane.xlu0 %754
    %v756 = vrsqrt.pop %v734
    %v757 = vmul.f32 %v734, %v756
    %vm758 = vcmp.eq.f32.partialorder %v734, inf
    %v759 = vsel %vm758, %v734, %v757
    %vm760 = vcmp.eq.f32.partialorder %v734, 0.0
    %v761 = vand.u32 %v734, 2147483648
    %v762 = vsel %vm760, %v761, %v759
    %v763 = vrsqrt.pop %v737
    %v764 = vmul.f32 %v737, %v763
    %vm765 = vcmp.eq.f32.partialorder %v737, inf
    %v766 = vsel %vm765, %v737, %v764
    %vm767 = vcmp.eq.f32.partialorder %v737, 0.0
    %v768 = vand.u32 %v737, 2147483648
    %v769 = vsel %vm767, %v768, %v766
    %v770 = vrsqrt.pop %v740
    %v771 = vmul.f32 %v740, %v770
    %vm772 = vcmp.eq.f32.partialorder %v740, inf
    %v773 = vsel %vm772, %v740, %v771
    %vm774 = vcmp.eq.f32.partialorder %v740, 0.0
    %v775 = vand.u32 %v740, 2147483648
    %v776 = vsel %vm774, %v775, %v773
    %v777 = vrsqrt.pop %v743
    %v778 = vmul.f32 %v743, %v777
    %vm779 = vcmp.eq.f32.partialorder %v743, inf
    %v780 = vsel %vm779, %v743, %v778
    %vm781 = vcmp.eq.f32.partialorder %v743, 0.0
    %v782 = vand.u32 %v743, 2147483648
    %v783 = vsel %vm781, %v782, %v780
    %v784 = vrsqrt.pop %v746
    %v785 = vmul.f32 %v746, %v784
    %vm786 = vcmp.eq.f32.partialorder %v746, inf
    %v787 = vsel %vm786, %v746, %v785
    %vm788 = vcmp.eq.f32.partialorder %v746, 0.0
    %v789 = vand.u32 %v746, 2147483648
    %v790 = vsel %vm788, %v789, %v787
    %v791 = vrsqrt.pop %v749
    %v792 = vmul.f32 %v749, %v791
    %vm793 = vcmp.eq.f32.partialorder %v749, inf
    %v794 = vsel %vm793, %v749, %v792
    %vm795 = vcmp.eq.f32.partialorder %v749, 0.0
    %v796 = vand.u32 %v749, 2147483648
    %v797 = vsel %vm795, %v796, %v794
    %v798 = vrsqrt.pop %v752
    %v799 = vmul.f32 %v752, %v798
    %vm800 = vcmp.eq.f32.partialorder %v752, inf
    %v801 = vsel %vm800, %v752, %v799
    %vm802 = vcmp.eq.f32.partialorder %v752, 0.0
    %v803 = vand.u32 %v752, 2147483648
    %v804 = vsel %vm802, %v803, %v801
    %v805 = vrsqrt.pop %v755
    %v806 = vmul.f32 %v755, %v805
    %vm807 = vcmp.eq.f32.partialorder %v755, inf
    %v808 = vsel %vm807, %v755, %v806
    %vm809 = vcmp.eq.f32.partialorder %v755, 0.0
    %v810 = vand.u32 %v755, 2147483648
    %v811 = vsel %vm809, %v810, %v808
    %v812 = vmax.f32 %v762, 1e-12
    %v813 = vmax.f32 %v769, 1e-12
    %v814 = vmax.f32 %v776, 1e-12
    %v815 = vmax.f32 %v783, 1e-12
    %v816 = vmax.f32 %v790, 1e-12
    %v817 = vmax.f32 %v797, 1e-12
    %v818 = vmax.f32 %v804, 1e-12
    %v819 = vmax.f32 %v811, 1e-12
    %v820 = vrcp.pop %v812
    %v821 = vmul.f32 %v184, %v820
    %v822 = vrcp.pop %v813
    %v823 = vmul.f32 %v189, %v822
    %v824 = vrcp.pop %v814
    %v825 = vmul.f32 %v194, %v824
    %v826 = vrcp.pop %v815
    %v827 = vmul.f32 %v199, %v826
    %v828 = vrcp.pop %v816
    %v829 = vmul.f32 %v204, %v828
    %v830 = vrcp.pop %v817
    %v831 = vmul.f32 %v209, %v830
    %v832 = vrcp.pop %v818
    %v833 = vmul.f32 %v214, %v832
    %v834 = vrcp.pop %v819
    %v835 = vmul.f32 %v219, %v834
    %v837 = vsel %vm222, %v821, 0
    %v840 = vsel %vm222, %v823, 0
    %v843 = vsel %vm222, %v825, 0
    %v846 = vsel %vm222, %v827, 0
    %v849 = vsel %vm222, %v829, 0
    %v852 = vsel %vm222, %v831, 0
    %v855 = vsel %vm222, %v833, 0
    %v858 = vsel %vm222, %v835, 0
    %860 = vmatprep.subr.mxu0 0.0
    %861 = vmatpush1.xpose.msra.mxu0 %v837
    %862 = vmatprep.subr.mxu0 0.0
    %863 = vmatpush1.xpose.msra.mxu0 %v840
    %864 = vmatprep.subr.mxu0 0.0
    %865 = vmatpush1.xpose.msra.mxu0 %v843
    %866 = vmatprep.subr.mxu0 0.0
    %867 = vmatpush1.xpose.msra.mxu0 %v846
    %868 = vmatprep.subr.mxu0 0.0
    %869 = vmatpush1.xpose.msra.mxu0 %v849
    %870 = vmatprep.subr.mxu0 0.0
    %871 = vmatpush1.xpose.msra.mxu0 %v852
    %872 = vmatprep.subr.mxu0 0.0
    %873 = vmatpush1.xpose.msra.mxu0 %v855
    %874 = vmatprep.subr.mxu0 0.0
    %875 = vmatpush1.xpose.msra.mxu0 %v858
    %876 = vmatprep.subr.mxu0 0.0
    %877 = vmatpush1.xpose.msra.mxu0 0.0
    %878 = vmatprep.subr.mxu0 0.0
    %879 = vmatpush1.xpose.msra.mxu0 0.0
    %880 = vmatprep.subr.mxu0 0.0
    %881 = vmatpush1.xpose.msra.mxu0 0.0
    %882 = vmatprep.subr.mxu0 0.0
    %883 = vmatpush1.xpose.msra.mxu0 0.0
    %884 = vmatprep.subr.mxu0 0.0
    %885 = vmatpush1.xpose.msra.mxu0 0.0
    %886 = vmatprep.subr.mxu0 0.0
    %887 = vmatpush1.xpose.msra.mxu0 0.0
    %888 = vmatprep.subr.mxu0 0.0
    %889 = vmatpush1.xpose.msra.mxu0 0.0
    %890 = vmatprep.subr.mxu0 0.0
    %891 = vmatpush1.xpose.msra.mxu0 0.0
    %892 = vmatprep.subr.mxu0 0.0
    %893 = vmatpush1.xpose.msra.mxu0 0.0
    %894 = vmatprep.subr.mxu0 0.0
    %895 = vmatpush1.xpose.msra.mxu0 0.0
    %896 = vmatprep.subr.mxu0 0.0
    %897 = vmatpush1.xpose.msra.mxu0 0.0
    %898 = vmatprep.subr.mxu0 0.0
    %899 = vmatpush1.xpose.msra.mxu0 0.0
    %900 = vmatprep.subr.mxu0 0.0
    %901 = vmatpush1.xpose.msra.mxu0 0.0
    %902 = vmatprep.subr.mxu0 0.0
    %903 = vmatpush1.xpose.msra.mxu0 0.0
    %904 = vmatprep.subr.mxu0 0.0
    %905 = vmatpush1.xpose.msra.mxu0 0.0
    %906 = vmatprep.subr.mxu0 0.0
    %907 = vmatpush1.xpose.msra.mxu0 0.0
    %908 = vmatprep.subr.mxu0 0.0
    %909 = vmatpush1.xpose.msra.mxu0 0.0
    %910 = vmatprep.subr.mxu0 0.0
    %911 = vmatpush1.xpose.msra.mxu0 0.0
    %912 = vmatprep.subr.mxu0 0.0
    %913 = vmatpush1.xpose.msra.mxu0 0.0
    %914 = vmatprep.subr.mxu0 0.0
    %915 = vmatpush1.xpose.msra.mxu0 0.0
    %916 = vmatprep.subr.mxu0 0.0
    %917 = vmatpush1.xpose.msra.mxu0 0.0
    %918 = vmatprep.subr.mxu0 0.0
    %919 = vmatpush1.xpose.msra.mxu0 0.0
    %920 = vmatprep.subr.mxu0 0.0
    %921 = vmatpush1.xpose.msra.mxu0 0.0
    %922 = vmatprep.subr.mxu0 0.0
    %923 = vmatpush1.xpose.msra.mxu0 0.0
    %924 = vmatprep.mubr.f32.mxu0 0.0
    %925 = vmatmul.mubr.f32.gmra.mrb[0].mxu0 %v837
    %v926 = vpop.f32.mrb[0].mxu0
    %v927 = vadd.f32 1.0, %v926
    %v928 = vpop.f32.mrb[0].mxu0
    %929 = vmatprep.mubr.f32.mxu0 0.0
    %930 = vmatmul.mubr.f32.gmra.mrb[0].mxu0 %v840
    %v931 = vpop.f32.mrb[0].mxu0
    %v932 = vadd.f32 1.0, %v931
    %v933 = vpop.f32.mrb[0].mxu0
    %934 = vmatprep.mubr.f32.mxu0 0.0
    %935 = vmatmul.mubr.f32.gmra.mrb[0].mxu0 %v843
    %v936 = vpop.f32.mrb[0].mxu0
    %v937 = vadd.f32 1.0, %v936
    %v938 = vpop.f32.mrb[0].mxu0
    %939 = vmatprep.mubr.f32.mxu0 0.0
    %940 = vmatmul.mubr.f32.gmra.mrb[0].mxu0 %v846
    %v941 = vpop.f32.mrb[0].mxu0
    %v942 = vadd.f32 1.0, %v941
    %v943 = vpop.f32.mrb[0].mxu0
    %944 = vmatprep.mubr.f32.mxu0 0.0
    %945 = vmatmul.mubr.f32.gmra.mrb[0].mxu0 %v849
    %v946 = vpop.f32.mrb[0].mxu0
    %v947 = vadd.f32 1.0, %v946
    %v948 = vpop.f32.mrb[0].mxu0
    %949 = vmatprep.mubr.f32.mxu0 0.0
    %950 = vmatmul.mubr.f32.gmra.mrb[0].mxu0 %v852
    %v951 = vpop.f32.mrb[0].mxu0
    %v952 = vadd.f32 1.0, %v951
    %v953 = vpop.f32.mrb[0].mxu0
    %954 = vmatprep.mubr.f32.mxu0 0.0
    %955 = vmatmul.mubr.f32.gmra.mrb[0].mxu0 %v855
    %v956 = vpop.f32.mrb[0].mxu0
    %v957 = vadd.f32 1.0, %v956
    %v958 = vpop.f32.mrb[0].mxu0
    %959 = vmatprep.mubr.f32.mxu0 0.0
    %960 = vmatmul.mubr.f32.gmra.mrb[0].mxu0 %v858
    %v961 = vpop.f32.mrb[0].mxu0
    %v962 = vadd.f32 1.0, %v961
    %v963 = vpop.f32.mrb[0].mxu0
    %964 = vdwg.mxu0
    %v965 = vmul.f32 %v927, 0.5
    %v966 = vmul.f32 %v932, 0.5
    %v967 = vmul.f32 %v937, 0.5
    %v968 = vmul.f32 %v942, 0.5
    %v969 = vmul.f32 %v947, 0.5
    %v970 = vmul.f32 %v952, 0.5
    %v971 = vmul.f32 %v957, 0.5
    %v972 = vmul.f32 %v962, 0.5
    %v973 = vmul.f32 %v965, %v68
    %v974 = vmul.f32 %v966, %v69
    %v975 = vmul.f32 %v967, %v70
    %v976 = vmul.f32 %v968, %v71
    %v977 = vmul.f32 %v969, %v72
    %v978 = vmul.f32 %v970, %v73
    %v979 = vmul.f32 %v971, %v74
    %v980 = vmul.f32 %v972, %v75
    %v981 = vsel %vm92, %v973, 0.0
    %982 = vadd.xlane.f32.xlu0 %v981
    %v983 = vpop.xlane.xlu0 %982
    %v984 = vsel %vm92, %v974, 0.0
    %985 = vadd.xlane.f32.xlu0 %v984
    %v986 = vpop.xlane.xlu0 %985
    %v987 = vsel %vm92, %v975, 0.0
    %988 = vadd.xlane.f32.xlu0 %v987
    %v989 = vpop.xlane.xlu0 %988
    %v990 = vsel %vm92, %v976, 0.0
    %991 = vadd.xlane.f32.xlu0 %v990
    %v992 = vpop.xlane.xlu0 %991
    %v993 = vsel %vm92, %v977, 0.0
    %994 = vadd.xlane.f32.xlu0 %v993
    %v995 = vpop.xlane.xlu0 %994
    %v996 = vsel %vm92, %v978, 0.0
    %997 = vadd.xlane.f32.xlu0 %v996
    %v998 = vpop.xlane.xlu0 %997
    %v999 = vsel %vm92, %v979, 0.0
    %1000 = vadd.xlane.f32.xlu0 %v999
    %v1001 = vpop.xlane.xlu0 %1000
    %v1002 = vsel %vm92, %v980, 0.0
    %1003 = vadd.xlane.f32.xlu0 %v1002
    %v1004 = vpop.xlane.xlu0 %1003
    %vm1005 = vcmp.gt.f32.partialorder %v983, 0.0
    %vm1006 = vcmp.gt.f32.partialorder %v986, 0.0
    %vm1007 = vcmp.gt.f32.partialorder %v989, 0.0
    %vm1008 = vcmp.gt.f32.partialorder %v992, 0.0
    %vm1009 = vcmp.gt.f32.partialorder %v995, 0.0
    %vm1010 = vcmp.gt.f32.partialorder %v998, 0.0
    %vm1011 = vcmp.gt.f32.partialorder %v1001, 0.0
    %vm1012 = vcmp.gt.f32.partialorder %v1004, 0.0
    %v1013 = vrcp.pop %v983
    %v1014 = vmul.f32 1.0, %v1013
    %v1015 = vrcp.pop %v986
    %v1016 = vmul.f32 1.0, %v1015
    %v1017 = vrcp.pop %v989
    %v1018 = vmul.f32 1.0, %v1017
    %v1019 = vrcp.pop %v992
    %v1020 = vmul.f32 1.0, %v1019
    %v1021 = vrcp.pop %v995
    %v1022 = vmul.f32 1.0, %v1021
    %v1023 = vrcp.pop %v998
    %v1024 = vmul.f32 1.0, %v1023
    %v1025 = vrcp.pop %v1001
    %v1026 = vmul.f32 1.0, %v1025
    %v1027 = vrcp.pop %v1004
    %v1028 = vmul.f32 1.0, %v1027
    %v1029 = vsel %vm1005, %v1014, 0.0
    %v1030 = vsel %vm1006, %v1016, 0.0
    %v1031 = vsel %vm1007, %v1018, 0.0
    %v1032 = vsel %vm1008, %v1020, 0.0
    %v1033 = vsel %vm1009, %v1022, 0.0
    %v1034 = vsel %vm1010, %v1024, 0.0
    %v1035 = vsel %vm1011, %v1026, 0.0
    %v1036 = vsel %vm1012, %v1028, 0.0
    %v1037 = vmul.f32 %v973, %v1029
    %v1038 = vmul.f32 %v974, %v1030
    %v1039 = vmul.f32 %v975, %v1031
    %v1040 = vmul.f32 %v976, %v1032
    %v1041 = vmul.f32 %v977, %v1033
    %v1042 = vmul.f32 %v978, %v1034
    %v1043 = vmul.f32 %v979, %v1035
    %v1044 = vmul.f32 %v980, %v1036
    %v1046 = vsel %vm92, %v1037, 0
    %v1049 = vsel %vm92, %v1038, 0
    %v1052 = vsel %vm92, %v1039, 0
    %v1055 = vsel %vm92, %v1040, 0
    %v1058 = vsel %vm92, %v1041, 0
    %v1061 = vsel %vm92, %v1042, 0
    %v1064 = vsel %vm92, %v1043, 0
    %v1067 = vsel %vm92, %v1044, 0
    %1069 = vmatprep.subr.mxu0 0.0
    %1070 = vmatpush1.msra.mxu0 %v76
    %1071 = vmatprep.subr.mxu0 0.0
    %1072 = vmatpush1.msra.mxu0 %v77
    %1073 = vmatprep.subr.mxu0 0.0
    %1074 = vmatpush1.msra.mxu0 %v78
    %1075 = vmatprep.subr.mxu0 0.0
    %1076 = vmatpush1.msra.mxu0 %v79
    %1077 = vmatprep.subr.mxu0 0.0
    %1078 = vmatpush1.msra.mxu0 %v80
    %1079 = vmatprep.subr.mxu0 0.0
    %1080 = vmatpush1.msra.mxu0 %v81
    %1081 = vmatprep.subr.mxu0 0.0
    %1082 = vmatpush1.msra.mxu0 %v82
    %1083 = vmatprep.subr.mxu0 0.0
    %1084 = vmatpush1.msra.mxu0 %v83
    %1085 = vmatprep.subr.mxu0 0.0
    %1086 = vmatpush1.msra.mxu0 0.0
    %1087 = vmatprep.subr.mxu0 0.0
    %1088 = vmatpush1.msra.mxu0 0.0
    %1089 = vmatprep.subr.mxu0 0.0
    %1090 = vmatpush1.msra.mxu0 0.0
    %1091 = vmatprep.subr.mxu0 0.0
    %1092 = vmatpush1.msra.mxu0 0.0
    %1093 = vmatprep.subr.mxu0 0.0
    %1094 = vmatpush1.msra.mxu0 0.0
    %1095 = vmatprep.subr.mxu0 0.0
    %1096 = vmatpush1.msra.mxu0 0.0
    %1097 = vmatprep.subr.mxu0 0.0
    %1098 = vmatpush1.msra.mxu0 0.0
    %1099 = vmatprep.subr.mxu0 0.0
    %1100 = vmatpush1.msra.mxu0 0.0
    %1101 = vmatprep.subr.mxu0 0.0
    %1102 = vmatpush1.msra.mxu0 0.0
    %1103 = vmatprep.subr.mxu0 0.0
    %1104 = vmatpush1.msra.mxu0 0.0
    %1105 = vmatprep.subr.mxu0 0.0
    %1106 = vmatpush1.msra.mxu0 0.0
    %1107 = vmatprep.subr.mxu0 0.0
    %1108 = vmatpush1.msra.mxu0 0.0
    %1109 = vmatprep.subr.mxu0 0.0
    %1110 = vmatpush1.msra.mxu0 0.0
    %1111 = vmatprep.subr.mxu0 0.0
    %1112 = vmatpush1.msra.mxu0 0.0
    %1113 = vmatprep.subr.mxu0 0.0
    %1114 = vmatpush1.msra.mxu0 0.0
    %1115 = vmatprep.subr.mxu0 0.0
    %1116 = vmatpush1.msra.mxu0 0.0
    %1117 = vmatprep.subr.mxu0 0.0
    %1118 = vmatpush1.msra.mxu0 0.0
    %1119 = vmatprep.subr.mxu0 0.0
    %1120 = vmatpush1.msra.mxu0 0.0
    %1121 = vmatprep.subr.mxu0 0.0
    %1122 = vmatpush1.msra.mxu0 0.0
    %1123 = vmatprep.subr.mxu0 0.0
    %1124 = vmatpush1.msra.mxu0 0.0
    %1125 = vmatprep.subr.mxu0 0.0
    %1126 = vmatpush1.msra.mxu0 0.0
    %1127 = vmatprep.subr.mxu0 0.0
    %1128 = vmatpush1.msra.mxu0 0.0
    %1129 = vmatprep.subr.mxu0 0.0
    %1130 = vmatpush1.msra.mxu0 0.0
    %1131 = vmatprep.subr.mxu0 0.0
    %1132 = vmatpush1.msra.mxu0 0.0
    %1133 = vmatprep.mubr.f32.mxu0 0.0
    %1134 = vmatmul.mubr.f32.gmra.mrb[0].mxu0 %v1046
    %v1135 = vpop.f32.mrb[0].mxu0
    %v1136 = vadd.f32 0.0, %v1135
    %v1137 = vpop.f32.mrb[0].mxu0
    %1138 = vmatprep.mubr.f32.mxu0 0.0
    %1139 = vmatmul.mubr.f32.gmra.mrb[0].mxu0 %v1049
    %v1140 = vpop.f32.mrb[0].mxu0
    %v1141 = vadd.f32 0.0, %v1140
    %v1142 = vpop.f32.mrb[0].mxu0
    %1143 = vmatprep.mubr.f32.mxu0 0.0
    %1144 = vmatmul.mubr.f32.gmra.mrb[0].mxu0 %v1052
    %v1145 = vpop.f32.mrb[0].mxu0
    %v1146 = vadd.f32 0.0, %v1145
    %v1147 = vpop.f32.mrb[0].mxu0
    %1148 = vmatprep.mubr.f32.mxu0 0.0
    %1149 = vmatmul.mubr.f32.gmra.mrb[0].mxu0 %v1055
    %v1150 = vpop.f32.mrb[0].mxu0
    %v1151 = vadd.f32 0.0, %v1150
    %v1152 = vpop.f32.mrb[0].mxu0
    %1153 = vmatprep.mubr.f32.mxu0 0.0
    %1154 = vmatmul.mubr.f32.gmra.mrb[0].mxu0 %v1058
    %v1155 = vpop.f32.mrb[0].mxu0
    %v1156 = vadd.f32 0.0, %v1155
    %v1157 = vpop.f32.mrb[0].mxu0
    %1158 = vmatprep.mubr.f32.mxu0 0.0
    %1159 = vmatmul.mubr.f32.gmra.mrb[0].mxu0 %v1061
    %v1160 = vpop.f32.mrb[0].mxu0
    %v1161 = vadd.f32 0.0, %v1160
    %v1162 = vpop.f32.mrb[0].mxu0
    %1163 = vmatprep.mubr.f32.mxu0 0.0
    %1164 = vmatmul.mubr.f32.gmra.mrb[0].mxu0 %v1064
    %v1165 = vpop.f32.mrb[0].mxu0
    %v1166 = vadd.f32 0.0, %v1165
    %v1167 = vpop.f32.mrb[0].mxu0
    %1168 = vmatprep.mubr.f32.mxu0 0.0
    %1169 = vmatmul.mubr.f32.gmra.mrb[0].mxu0 %v1067
    %v1170 = vpop.f32.mrb[0].mxu0
    %v1171 = vadd.f32 0.0, %v1170
    %v1172 = vpop.f32.mrb[0].mxu0
    %1173 = vdwg.mxu0
    %v1174 = vmul.f32 %v456, %v456
    %v1175 = vmul.f32 %v461, %v461
    %v1176 = vmul.f32 %v466, %v466
    %v1177 = vmul.f32 %v471, %v471
    %v1178 = vmul.f32 %v706, %v706
    %v1179 = vmul.f32 %v711, %v711
    %v1180 = vmul.f32 %v716, %v716
    %v1181 = vmul.f32 %v721, %v721
    %v1182 = vsel %vm222, %v1174, 0.0
    %1183 = vadd.xlane.f32.xlu0 %v1182
    %v1184 = vpop.xlane.xlu0 %1183
    %v1185 = vsel %vm222, %v1175, 0.0
    %1186 = vadd.xlane.f32.xlu0 %v1185
    %v1187 = vpop.xlane.xlu0 %1186
    %v1188 = vsel %vm222, %v1176, 0.0
    %1189 = vadd.xlane.f32.xlu0 %v1188
    %v1190 = vpop.xlane.xlu0 %1189
    %v1191 = vsel %vm222, %v1177, 0.0
    %1192 = vadd.xlane.f32.xlu0 %v1191
    %v1193 = vpop.xlane.xlu0 %1192
    %v1194 = vsel %vm222, %v1178, 0.0
    %1195 = vadd.xlane.f32.xlu0 %v1194
    %v1196 = vpop.xlane.xlu0 %1195
    %v1197 = vsel %vm222, %v1179, 0.0
    %1198 = vadd.xlane.f32.xlu0 %v1197
    %v1199 = vpop.xlane.xlu0 %1198
    %v1200 = vsel %vm222, %v1180, 0.0
    %1201 = vadd.xlane.f32.xlu0 %v1200
    %v1202 = vpop.xlane.xlu0 %1201
    %v1203 = vsel %vm222, %v1181, 0.0
    %1204 = vadd.xlane.f32.xlu0 %v1203
    %v1205 = vpop.xlane.xlu0 %1204
    %v1206 = vrsqrt.pop %v1184
    %v1207 = vmul.f32 %v1184, %v1206
    %vm1208 = vcmp.eq.f32.partialorder %v1184, inf
    %v1209 = vsel %vm1208, %v1184, %v1207
    %vm1210 = vcmp.eq.f32.partialorder %v1184, 0.0
    %v1211 = vand.u32 %v1184, 2147483648
    %v1212 = vsel %vm1210, %v1211, %v1209
    %v1213 = vrsqrt.pop %v1187
    %v1214 = vmul.f32 %v1187, %v1213
    %vm1215 = vcmp.eq.f32.partialorder %v1187, inf
    %v1216 = vsel %vm1215, %v1187, %v1214
    %vm1217 = vcmp.eq.f32.partialorder %v1187, 0.0
    %v1218 = vand.u32 %v1187, 2147483648
    %v1219 = vsel %vm1217, %v1218, %v1216
    %v1220 = vrsqrt.pop %v1190
    %v1221 = vmul.f32 %v1190, %v1220
    %vm1222 = vcmp.eq.f32.partialorder %v1190, inf
    %v1223 = vsel %vm1222, %v1190, %v1221
    %vm1224 = vcmp.eq.f32.partialorder %v1190, 0.0
    %v1225 = vand.u32 %v1190, 2147483648
    %v1226 = vsel %vm1224, %v1225, %v1223
    %v1227 = vrsqrt.pop %v1193
    %v1228 = vmul.f32 %v1193, %v1227
    %vm1229 = vcmp.eq.f32.partialorder %v1193, inf
    %v1230 = vsel %vm1229, %v1193, %v1228
    %vm1231 = vcmp.eq.f32.partialorder %v1193, 0.0
    %v1232 = vand.u32 %v1193, 2147483648
    %v1233 = vsel %vm1231, %v1232, %v1230
    %v1234 = vrsqrt.pop %v1196
    %v1235 = vmul.f32 %v1196, %v1234
    %vm1236 = vcmp.eq.f32.partialorder %v1196, inf
    %v1237 = vsel %vm1236, %v1196, %v1235
    %vm1238 = vcmp.eq.f32.partialorder %v1196, 0.0
    %v1239 = vand.u32 %v1196, 2147483648
    %v1240 = vsel %vm1238, %v1239, %v1237
    %v1241 = vrsqrt.pop %v1199
    %v1242 = vmul.f32 %v1199, %v1241
    %vm1243 = vcmp.eq.f32.partialorder %v1199, inf
    %v1244 = vsel %vm1243, %v1199, %v1242
    %vm1245 = vcmp.eq.f32.partialorder %v1199, 0.0
    %v1246 = vand.u32 %v1199, 2147483648
    %v1247 = vsel %vm1245, %v1246, %v1244
    %v1248 = vrsqrt.pop %v1202
    %v1249 = vmul.f32 %v1202, %v1248
    %vm1250 = vcmp.eq.f32.partialorder %v1202, inf
    %v1251 = vsel %vm1250, %v1202, %v1249
    %vm1252 = vcmp.eq.f32.partialorder %v1202, 0.0
    %v1253 = vand.u32 %v1202, 2147483648
    %v1254 = vsel %vm1252, %v1253, %v1251
    %v1255 = vrsqrt.pop %v1205
    %v1256 = vmul.f32 %v1205, %v1255
    %vm1257 = vcmp.eq.f32.partialorder %v1205, inf
    %v1258 = vsel %vm1257, %v1205, %v1256
    %vm1259 = vcmp.eq.f32.partialorder %v1205, 0.0
    %v1260 = vand.u32 %v1205, 2147483648
    %v1261 = vsel %vm1259, %v1260, %v1258
    %v1262 = vmax.f32 %v1212, 1e-12
    %v1263 = vmax.f32 %v1219, 1e-12
    %v1264 = vmax.f32 %v1226, 1e-12
    %v1265 = vmax.f32 %v1233, 1e-12
    %v1266 = vmax.f32 %v1240, 1e-12
    %v1267 = vmax.f32 %v1247, 1e-12
    %v1268 = vmax.f32 %v1254, 1e-12
    %v1269 = vmax.f32 %v1261, 1e-12
    %v1270 = vrcp.pop %v1262
    %v1271 = vmul.f32 %v456, %v1270
    %v1272 = vrcp.pop %v1263
    %v1273 = vmul.f32 %v461, %v1272
    %v1274 = vrcp.pop %v1264
    %v1275 = vmul.f32 %v466, %v1274
    %v1276 = vrcp.pop %v1265
    %v1277 = vmul.f32 %v471, %v1276
    %v1278 = vrcp.pop %v1266
    %v1279 = vmul.f32 %v706, %v1278
    %v1280 = vrcp.pop %v1267
    %v1281 = vmul.f32 %v711, %v1280
    %v1282 = vrcp.pop %v1268
    %v1283 = vmul.f32 %v716, %v1282
    %v1284 = vrcp.pop %v1269
    %v1285 = vmul.f32 %v721, %v1284
    %v1287 = vsel %vm222, %v1271, 0
    %v1290 = vsel %vm222, %v1273, 0
    %v1293 = vsel %vm222, %v1275, 0
    %v1296 = vsel %vm222, %v1277, 0
    %v1299 = vsel %vm222, %v1279, 0
    %v1302 = vsel %vm222, %v1281, 0
    %v1305 = vsel %vm222, %v1283, 0
    %v1308 = vsel %vm222, %v1285, 0
    %1310 = vmatprep.subr.mxu0 0.0
    %1311 = vmatpush1.xpose.msra.mxu0 %v1287
    %1312 = vmatprep.subr.mxu0 0.0
    %1313 = vmatpush1.xpose.msra.mxu0 %v1290
    %1314 = vmatprep.subr.mxu0 0.0
    %1315 = vmatpush1.xpose.msra.mxu0 %v1293
    %1316 = vmatprep.subr.mxu0 0.0
    %1317 = vmatpush1.xpose.msra.mxu0 %v1296
    %1318 = vmatprep.subr.mxu0 0.0
    %1319 = vmatpush1.xpose.msra.mxu0 %v1299
    %1320 = vmatprep.subr.mxu0 0.0
    %1321 = vmatpush1.xpose.msra.mxu0 %v1302
    %1322 = vmatprep.subr.mxu0 0.0
    %1323 = vmatpush1.xpose.msra.mxu0 %v1305
    %1324 = vmatprep.subr.mxu0 0.0
    %1325 = vmatpush1.xpose.msra.mxu0 %v1308
    %1326 = vmatprep.subr.mxu0 0.0
    %1327 = vmatpush1.xpose.msra.mxu0 0.0
    %1328 = vmatprep.subr.mxu0 0.0
    %1329 = vmatpush1.xpose.msra.mxu0 0.0
    %1330 = vmatprep.subr.mxu0 0.0
    %1331 = vmatpush1.xpose.msra.mxu0 0.0
    %1332 = vmatprep.subr.mxu0 0.0
    %1333 = vmatpush1.xpose.msra.mxu0 0.0
    %1334 = vmatprep.subr.mxu0 0.0
    %1335 = vmatpush1.xpose.msra.mxu0 0.0
    %1336 = vmatprep.subr.mxu0 0.0
    %1337 = vmatpush1.xpose.msra.mxu0 0.0
    %1338 = vmatprep.subr.mxu0 0.0
    %1339 = vmatpush1.xpose.msra.mxu0 0.0
    %1340 = vmatprep.subr.mxu0 0.0
    %1341 = vmatpush1.xpose.msra.mxu0 0.0
    %1342 = vmatprep.subr.mxu0 0.0
    %1343 = vmatpush1.xpose.msra.mxu0 0.0
    %1344 = vmatprep.subr.mxu0 0.0
    %1345 = vmatpush1.xpose.msra.mxu0 0.0
    %1346 = vmatprep.subr.mxu0 0.0
    %1347 = vmatpush1.xpose.msra.mxu0 0.0
    %1348 = vmatprep.subr.mxu0 0.0
    %1349 = vmatpush1.xpose.msra.mxu0 0.0
    %1350 = vmatprep.subr.mxu0 0.0
    %1351 = vmatpush1.xpose.msra.mxu0 0.0
    %1352 = vmatprep.subr.mxu0 0.0
    %1353 = vmatpush1.xpose.msra.mxu0 0.0
    %1354 = vmatprep.subr.mxu0 0.0
    %1355 = vmatpush1.xpose.msra.mxu0 0.0
    %1356 = vmatprep.subr.mxu0 0.0
    %1357 = vmatpush1.xpose.msra.mxu0 0.0
    %1358 = vmatprep.subr.mxu0 0.0
    %1359 = vmatpush1.xpose.msra.mxu0 0.0
    %1360 = vmatprep.subr.mxu0 0.0
    %1361 = vmatpush1.xpose.msra.mxu0 0.0
    %1362 = vmatprep.subr.mxu0 0.0
    %1363 = vmatpush1.xpose.msra.mxu0 0.0
    %1364 = vmatprep.subr.mxu0 0.0
    %1365 = vmatpush1.xpose.msra.mxu0 0.0
    %1366 = vmatprep.subr.mxu0 0.0
    %1367 = vmatpush1.xpose.msra.mxu0 0.0
    %1368 = vmatprep.subr.mxu0 0.0
    %1369 = vmatpush1.xpose.msra.mxu0 0.0
    %1370 = vmatprep.subr.mxu0 0.0
    %1371 = vmatpush1.xpose.msra.mxu0 0.0
    %1372 = vmatprep.subr.mxu0 0.0
    %1373 = vmatpush1.xpose.msra.mxu0 0.0
    %1374 = vmatprep.mubr.f32.mxu0 0.0
    %1375 = vmatmul.mubr.f32.gmra.mrb[0].mxu0 %v1287
    %v1376 = vpop.f32.mrb[0].mxu0
    %v1377 = vadd.f32 1.0, %v1376
    %v1378 = vpop.f32.mrb[0].mxu0
    %1379 = vmatprep.mubr.f32.mxu0 0.0
    %1380 = vmatmul.mubr.f32.gmra.mrb[0].mxu0 %v1290
    %v1381 = vpop.f32.mrb[0].mxu0
    %v1382 = vadd.f32 1.0, %v1381
    %v1383 = vpop.f32.mrb[0].mxu0
    %1384 = vmatprep.mubr.f32.mxu0 0.0
    %1385 = vmatmul.mubr.f32.gmra.mrb[0].mxu0 %v1293
    %v1386 = vpop.f32.mrb[0].mxu0
    %v1387 = vadd.f32 1.0, %v1386
    %v1388 = vpop.f32.mrb[0].mxu0
    %1389 = vmatprep.mubr.f32.mxu0 0.0
    %1390 = vmatmul.mubr.f32.gmra.mrb[0].mxu0 %v1296
    %v1391 = vpop.f32.mrb[0].mxu0
    %v1392 = vadd.f32 1.0, %v1391
    %v1393 = vpop.f32.mrb[0].mxu0
    %1394 = vmatprep.mubr.f32.mxu0 0.0
    %1395 = vmatmul.mubr.f32.gmra.mrb[0].mxu0 %v1299
    %v1396 = vpop.f32.mrb[0].mxu0
    %v1397 = vadd.f32 1.0, %v1396
    %v1398 = vpop.f32.mrb[0].mxu0
    %1399 = vmatprep.mubr.f32.mxu0 0.0
    %1400 = vmatmul.mubr.f32.gmra.mrb[0].mxu0 %v1302
    %v1401 = vpop.f32.mrb[0].mxu0
    %v1402 = vadd.f32 1.0, %v1401
    %v1403 = vpop.f32.mrb[0].mxu0
    %1404 = vmatprep.mubr.f32.mxu0 0.0
    %1405 = vmatmul.mubr.f32.gmra.mrb[0].mxu0 %v1305
    %v1406 = vpop.f32.mrb[0].mxu0
    %v1407 = vadd.f32 1.0, %v1406
    %v1408 = vpop.f32.mrb[0].mxu0
    %1409 = vmatprep.mubr.f32.mxu0 0.0
    %1410 = vmatmul.mubr.f32.gmra.mrb[0].mxu0 %v1308
    %v1411 = vpop.f32.mrb[0].mxu0
    %v1412 = vadd.f32 1.0, %v1411
    %v1413 = vpop.f32.mrb[0].mxu0
    %1414 = vdwg.mxu0
    %v1415 = vmul.f32 %v1377, 0.5
    %v1416 = vmul.f32 %v1382, 0.5
    %v1417 = vmul.f32 %v1387, 0.5
    %v1418 = vmul.f32 %v1392, 0.5
    %v1419 = vmul.f32 %v1397, 0.5
    %v1420 = vmul.f32 %v1402, 0.5
    %v1421 = vmul.f32 %v1407, 0.5
    %v1422 = vmul.f32 %v1412, 0.5
    %v1423 = vmul.f32 %v1415, %v68
    %v1424 = vmul.f32 %v1416, %v69
    %v1425 = vmul.f32 %v1417, %v70
    %v1426 = vmul.f32 %v1418, %v71
    %v1427 = vmul.f32 %v1419, %v72
    %v1428 = vmul.f32 %v1420, %v73
    %v1429 = vmul.f32 %v1421, %v74
    %v1430 = vmul.f32 %v1422, %v75
    %v1431 = vsel %vm92, %v1423, 0.0
    %1432 = vadd.xlane.f32.xlu0 %v1431
    %v1433 = vpop.xlane.xlu0 %1432
    %v1434 = vsel %vm92, %v1424, 0.0
    %1435 = vadd.xlane.f32.xlu0 %v1434
    %v1436 = vpop.xlane.xlu0 %1435
    %v1437 = vsel %vm92, %v1425, 0.0
    %1438 = vadd.xlane.f32.xlu0 %v1437
    %v1439 = vpop.xlane.xlu0 %1438
    %v1440 = vsel %vm92, %v1426, 0.0
    %1441 = vadd.xlane.f32.xlu0 %v1440
    %v1442 = vpop.xlane.xlu0 %1441
    %v1443 = vsel %vm92, %v1427, 0.0
    %1444 = vadd.xlane.f32.xlu0 %v1443
    %v1445 = vpop.xlane.xlu0 %1444
    %v1446 = vsel %vm92, %v1428, 0.0
    %1447 = vadd.xlane.f32.xlu0 %v1446
    %v1448 = vpop.xlane.xlu0 %1447
    %v1449 = vsel %vm92, %v1429, 0.0
    %1450 = vadd.xlane.f32.xlu0 %v1449
    %v1451 = vpop.xlane.xlu0 %1450
    %v1452 = vsel %vm92, %v1430, 0.0
    %1453 = vadd.xlane.f32.xlu0 %v1452
    %v1454 = vpop.xlane.xlu0 %1453
    %vm1455 = vcmp.gt.f32.partialorder %v1433, 0.0
    %vm1456 = vcmp.gt.f32.partialorder %v1436, 0.0
    %vm1457 = vcmp.gt.f32.partialorder %v1439, 0.0
    %vm1458 = vcmp.gt.f32.partialorder %v1442, 0.0
    %vm1459 = vcmp.gt.f32.partialorder %v1445, 0.0
    %vm1460 = vcmp.gt.f32.partialorder %v1448, 0.0
    %vm1461 = vcmp.gt.f32.partialorder %v1451, 0.0
    %vm1462 = vcmp.gt.f32.partialorder %v1454, 0.0
    %v1463 = vrcp.pop %v1433
    %v1464 = vmul.f32 1.0, %v1463
    %v1465 = vrcp.pop %v1436
    %v1466 = vmul.f32 1.0, %v1465
    %v1467 = vrcp.pop %v1439
    %v1468 = vmul.f32 1.0, %v1467
    %v1469 = vrcp.pop %v1442
    %v1470 = vmul.f32 1.0, %v1469
    %v1471 = vrcp.pop %v1445
    %v1472 = vmul.f32 1.0, %v1471
    %v1473 = vrcp.pop %v1448
    %v1474 = vmul.f32 1.0, %v1473
    %v1475 = vrcp.pop %v1451
    %v1476 = vmul.f32 1.0, %v1475
    %v1477 = vrcp.pop %v1454
    %v1478 = vmul.f32 1.0, %v1477
    %v1479 = vsel %vm1455, %v1464, 0.0
    %v1480 = vsel %vm1456, %v1466, 0.0
    %v1481 = vsel %vm1457, %v1468, 0.0
    %v1482 = vsel %vm1458, %v1470, 0.0
    %v1483 = vsel %vm1459, %v1472, 0.0
    %v1484 = vsel %vm1460, %v1474, 0.0
    %v1485 = vsel %vm1461, %v1476, 0.0
    %v1486 = vsel %vm1462, %v1478, 0.0
    %v1487 = vmul.f32 %v1423, %v1479
    %v1488 = vmul.f32 %v1424, %v1480
    %v1489 = vmul.f32 %v1425, %v1481
    %v1490 = vmul.f32 %v1426, %v1482
    %v1491 = vmul.f32 %v1427, %v1483
    %v1492 = vmul.f32 %v1428, %v1484
    %v1493 = vmul.f32 %v1429, %v1485
    %v1494 = vmul.f32 %v1430, %v1486
    %v1496 = vsel %vm92, %v1487, 0
    %v1499 = vsel %vm92, %v1488, 0
    %v1502 = vsel %vm92, %v1489, 0
    %v1505 = vsel %vm92, %v1490, 0
    %v1508 = vsel %vm92, %v1491, 0
    %v1511 = vsel %vm92, %v1492, 0
    %v1514 = vsel %vm92, %v1493, 0
    %v1517 = vsel %vm92, %v1494, 0
    %1519 = vmatprep.subr.mxu0 0.0
    %1520 = vmatpush1.msra.mxu0 %v76
    %1521 = vmatprep.subr.mxu0 0.0
    %1522 = vmatpush1.msra.mxu0 %v77
    %1523 = vmatprep.subr.mxu0 0.0
    %1524 = vmatpush1.msra.mxu0 %v78
    %1525 = vmatprep.subr.mxu0 0.0
    %1526 = vmatpush1.msra.mxu0 %v79
    %1527 = vmatprep.subr.mxu0 0.0
    %1528 = vmatpush1.msra.mxu0 %v80
    %1529 = vmatprep.subr.mxu0 0.0
    %1530 = vmatpush1.msra.mxu0 %v81
    %1531 = vmatprep.subr.mxu0 0.0
    %1532 = vmatpush1.msra.mxu0 %v82
    %1533 = vmatprep.subr.mxu0 0.0
    %1534 = vmatpush1.msra.mxu0 %v83
    %1535 = vmatprep.subr.mxu0 0.0
    %1536 = vmatpush1.msra.mxu0 0.0
    %1537 = vmatprep.subr.mxu0 0.0
    %1538 = vmatpush1.msra.mxu0 0.0
    %1539 = vmatprep.subr.mxu0 0.0
    %1540 = vmatpush1.msra.mxu0 0.0
    %1541 = vmatprep.subr.mxu0 0.0
    %1542 = vmatpush1.msra.mxu0 0.0
    %1543 = vmatprep.subr.mxu0 0.0
    %1544 = vmatpush1.msra.mxu0 0.0
    %1545 = vmatprep.subr.mxu0 0.0
    %1546 = vmatpush1.msra.mxu0 0.0
    %1547 = vmatprep.subr.mxu0 0.0
    %1548 = vmatpush1.msra.mxu0 0.0
    %1549 = vmatprep.subr.mxu0 0.0
    %1550 = vmatpush1.msra.mxu0 0.0
    %1551 = vmatprep.subr.mxu0 0.0
    %1552 = vmatpush1.msra.mxu0 0.0
    %1553 = vmatprep.subr.mxu0 0.0
    %1554 = vmatpush1.msra.mxu0 0.0
    %1555 = vmatprep.subr.mxu0 0.0
    %1556 = vmatpush1.msra.mxu0 0.0
    %1557 = vmatprep.subr.mxu0 0.0
    %1558 = vmatpush1.msra.mxu0 0.0
    %1559 = vmatprep.subr.mxu0 0.0
    %1560 = vmatpush1.msra.mxu0 0.0
    %1561 = vmatprep.subr.mxu0 0.0
    %1562 = vmatpush1.msra.mxu0 0.0
    %1563 = vmatprep.subr.mxu0 0.0
    %1564 = vmatpush1.msra.mxu0 0.0
    %1565 = vmatprep.subr.mxu0 0.0
    %1566 = vmatpush1.msra.mxu0 0.0
    %1567 = vmatprep.subr.mxu0 0.0
    %1568 = vmatpush1.msra.mxu0 0.0
    %1569 = vmatprep.subr.mxu0 0.0
    %1570 = vmatpush1.msra.mxu0 0.0
    %1571 = vmatprep.subr.mxu0 0.0
    %1572 = vmatpush1.msra.mxu0 0.0
    %1573 = vmatprep.subr.mxu0 0.0
    %1574 = vmatpush1.msra.mxu0 0.0
    %1575 = vmatprep.subr.mxu0 0.0
    %1576 = vmatpush1.msra.mxu0 0.0
    %1577 = vmatprep.subr.mxu0 0.0
    %1578 = vmatpush1.msra.mxu0 0.0
    %1579 = vmatprep.subr.mxu0 0.0
    %1580 = vmatpush1.msra.mxu0 0.0
    %1581 = vmatprep.subr.mxu0 0.0
    %1582 = vmatpush1.msra.mxu0 0.0
    %1583 = vmatprep.mubr.f32.mxu0 0.0
    %1584 = vmatmul.mubr.f32.gmra.mrb[0].mxu0 %v1496
    %v1585 = vpop.f32.mrb[0].mxu0
    %v1586 = vadd.f32 0.0, %v1585
    %v1587 = vpop.f32.mrb[0].mxu0
    %1588 = vmatprep.mubr.f32.mxu0 0.0
    %1589 = vmatmul.mubr.f32.gmra.mrb[0].mxu0 %v1499
    %v1590 = vpop.f32.mrb[0].mxu0
    %v1591 = vadd.f32 0.0, %v1590
    %v1592 = vpop.f32.mrb[0].mxu0
    %1593 = vmatprep.mubr.f32.mxu0 0.0
    %1594 = vmatmul.mubr.f32.gmra.mrb[0].mxu0 %v1502
    %v1595 = vpop.f32.mrb[0].mxu0
    %v1596 = vadd.f32 0.0, %v1595
    %v1597 = vpop.f32.mrb[0].mxu0
    %1598 = vmatprep.mubr.f32.mxu0 0.0
    %1599 = vmatmul.mubr.f32.gmra.mrb[0].mxu0 %v1505
    %v1600 = vpop.f32.mrb[0].mxu0
    %v1601 = vadd.f32 0.0, %v1600
    %v1602 = vpop.f32.mrb[0].mxu0
    %1603 = vmatprep.mubr.f32.mxu0 0.0
    %1604 = vmatmul.mubr.f32.gmra.mrb[0].mxu0 %v1508
    %v1605 = vpop.f32.mrb[0].mxu0
    %v1606 = vadd.f32 0.0, %v1605
    %v1607 = vpop.f32.mrb[0].mxu0
    %1608 = vmatprep.mubr.f32.mxu0 0.0
    %1609 = vmatmul.mubr.f32.gmra.mrb[0].mxu0 %v1511
    %v1610 = vpop.f32.mrb[0].mxu0
    %v1611 = vadd.f32 0.0, %v1610
    %v1612 = vpop.f32.mrb[0].mxu0
    %1613 = vmatprep.mubr.f32.mxu0 0.0
    %1614 = vmatmul.mubr.f32.gmra.mrb[0].mxu0 %v1514
    %v1615 = vpop.f32.mrb[0].mxu0
    %v1616 = vadd.f32 0.0, %v1615
    %v1617 = vpop.f32.mrb[0].mxu0
    %1618 = vmatprep.mubr.f32.mxu0 0.0
    %1619 = vmatmul.mubr.f32.gmra.mrb[0].mxu0 %v1517
    %v1620 = vpop.f32.mrb[0].mxu0
    %v1621 = vadd.f32 0.0, %v1620
    %v1622 = vpop.f32.mrb[0].mxu0
    %1623 = vdwg.mxu0
    %v1624 = vadd.f32 %v184, %v456
    %v1625 = vadd.f32 %v189, %v461
    %v1626 = vadd.f32 %v194, %v466
    %v1627 = vadd.f32 %v199, %v471
    %v1628 = vadd.f32 %v204, %v706
    %v1629 = vadd.f32 %v209, %v711
    %v1630 = vadd.f32 %v214, %v716
    %v1631 = vadd.f32 %v219, %v721
    %v1632 = vadd.f32 %v1624, %v1136
    %v1633 = vadd.f32 %v1625, %v1141
    %v1634 = vadd.f32 %v1626, %v1146
    %v1635 = vadd.f32 %v1627, %v1151
    %v1636 = vadd.f32 %v1628, %v1156
    %v1637 = vadd.f32 %v1629, %v1161
    %v1638 = vadd.f32 %v1630, %v1166
    %v1639 = vadd.f32 %v1631, %v1171
    %v1640 = vadd.f32 %v1632, %v1586
    %v1641 = vadd.f32 %v1633, %v1591
    %v1642 = vadd.f32 %v1634, %v1596
    %v1643 = vadd.f32 %v1635, %v1601
    %v1644 = vadd.f32 %v1636, %v1606
    %v1645 = vadd.f32 %v1637, %v1611
    %v1646 = vadd.f32 %v1638, %v1616
    %v1647 = vadd.f32 %v1639, %v1621
    %v1648 = vadd.f32 %v1640, %v76
    %v1649 = vadd.f32 %v1641, %v77
    %v1650 = vadd.f32 %v1642, %v78
    %v1651 = vadd.f32 %v1643, %v79
    %v1652 = vadd.f32 %v1644, %v80
    %v1653 = vadd.f32 %v1645, %v81
    %v1654 = vadd.f32 %v1646, %v82
    %v1655 = vadd.f32 %v1647, %v83
    %v1656 = vadd.f32 %v76, %v1648
    %v1657 = vadd.f32 %v77, %v1649
    %v1658 = vadd.f32 %v78, %v1650
    %v1659 = vadd.f32 %v79, %v1651
    %v1660 = vadd.f32 %v80, %v1652
    %v1661 = vadd.f32 %v81, %v1653
    %v1662 = vadd.f32 %v82, %v1654
    %v1663 = vadd.f32 %v83, %v1655
    %1664 = vmatprep.subr.mxu0 0.0
    %1665 = vmatpush1.msra.mxu0 %v1648
    %1666 = vmatprep.subr.mxu0 0.0
    %1667 = vmatpush1.msra.mxu0 %v1649
    %1668 = vmatprep.subr.mxu0 0.0
    %1669 = vmatpush1.msra.mxu0 %v1650
    %1670 = vmatprep.subr.mxu0 0.0
    %1671 = vmatpush1.msra.mxu0 %v1651
    %1672 = vmatprep.subr.mxu0 0.0
    %1673 = vmatpush1.msra.mxu0 %v1652
    %1674 = vmatprep.subr.mxu0 0.0
    %1675 = vmatpush1.msra.mxu0 %v1653
    %1676 = vmatprep.subr.mxu0 0.0
    %1677 = vmatpush1.msra.mxu0 %v1654
    %1678 = vmatprep.subr.mxu0 0.0
    %1679 = vmatpush1.msra.mxu0 %v1655
    %1680 = vmatprep.subr.mxu0 0.0
    %1681 = vmatpush1.msra.mxu0 0.0
    %1682 = vmatprep.subr.mxu0 0.0
    %1683 = vmatpush1.msra.mxu0 0.0
    %1684 = vmatprep.subr.mxu0 0.0
    %1685 = vmatpush1.msra.mxu0 0.0
    %1686 = vmatprep.subr.mxu0 0.0
    %1687 = vmatpush1.msra.mxu0 0.0
    %1688 = vmatprep.subr.mxu0 0.0
    %1689 = vmatpush1.msra.mxu0 0.0
    %1690 = vmatprep.subr.mxu0 0.0
    %1691 = vmatpush1.msra.mxu0 0.0
    %1692 = vmatprep.subr.mxu0 0.0
    %1693 = vmatpush1.msra.mxu0 0.0
    %1694 = vmatprep.subr.mxu0 0.0
    %1695 = vmatpush1.msra.mxu0 0.0
    %1696 = vmatprep.subr.mxu0 0.0
    %1697 = vmatpush1.msra.mxu0 0.0
    %1698 = vmatprep.subr.mxu0 0.0
    %1699 = vmatpush1.msra.mxu0 0.0
    %1700 = vmatprep.subr.mxu0 0.0
    %1701 = vmatpush1.msra.mxu0 0.0
    %1702 = vmatprep.subr.mxu0 0.0
    %1703 = vmatpush1.msra.mxu0 0.0
    %1704 = vmatprep.subr.mxu0 0.0
    %1705 = vmatpush1.msra.mxu0 0.0
    %1706 = vmatprep.subr.mxu0 0.0
    %1707 = vmatpush1.msra.mxu0 0.0
    %1708 = vmatprep.subr.mxu0 0.0
    %1709 = vmatpush1.msra.mxu0 0.0
    %1710 = vmatprep.subr.mxu0 0.0
    %1711 = vmatpush1.msra.mxu0 0.0
    %1712 = vmatprep.subr.mxu0 0.0
    %1713 = vmatpush1.msra.mxu0 0.0
    %1714 = vmatprep.subr.mxu0 0.0
    %1715 = vmatpush1.msra.mxu0 0.0
    %1716 = vmatprep.subr.mxu0 0.0
    %1717 = vmatpush1.msra.mxu0 0.0
    %1718 = vmatprep.subr.mxu0 0.0
    %1719 = vmatpush1.msra.mxu0 0.0
    %1720 = vmatprep.subr.mxu0 0.0
    %1721 = vmatpush1.msra.mxu0 0.0
    %1722 = vmatprep.subr.mxu0 0.0
    %1723 = vmatpush1.msra.mxu0 0.0
    %1724 = vmatprep.subr.mxu0 0.0
    %1725 = vmatpush1.msra.mxu0 0.0
    %1726 = vmatprep.subr.mxu0 0.0
    %1727 = vmatpush1.msra.mxu0 0.0
    %1728 = vmatprep.mubr.f32.mxu0 0.0
    %1729 = vmatmul.mubr.f32.gmra.mrb[0].mxu0 %v94
    %v1730 = vpop.f32.mrb[0].mxu0
    %v1731 = vadd.f32 0.0, %v1730
    %v1732 = vpop.f32.mrb[0].mxu0
    %1733 = vmatprep.mubr.f32.mxu0 0.0
    %1734 = vmatmul.mubr.f32.gmra.mrb[0].mxu0 %v97
    %v1735 = vpop.f32.mrb[0].mxu0
    %v1736 = vadd.f32 0.0, %v1735
    %v1737 = vpop.f32.mrb[0].mxu0
    %1738 = vmatprep.mubr.f32.mxu0 0.0
    %1739 = vmatmul.mubr.f32.gmra.mrb[0].mxu0 %v100
    %v1740 = vpop.f32.mrb[0].mxu0
    %v1741 = vadd.f32 0.0, %v1740
    %v1742 = vpop.f32.mrb[0].mxu0
    %1743 = vmatprep.mubr.f32.mxu0 0.0
    %1744 = vmatmul.mubr.f32.gmra.mrb[0].mxu0 %v103
    %v1745 = vpop.f32.mrb[0].mxu0
    %v1746 = vadd.f32 0.0, %v1745
    %v1747 = vpop.f32.mrb[0].mxu0
    %1748 = vmatprep.mubr.f32.mxu0 0.0
    %1749 = vmatmul.mubr.f32.gmra.mrb[0].mxu0 %v106
    %v1750 = vpop.f32.mrb[0].mxu0
    %v1751 = vadd.f32 0.0, %v1750
    %v1752 = vpop.f32.mrb[0].mxu0
    %1753 = vmatprep.mubr.f32.mxu0 0.0
    %1754 = vmatmul.mubr.f32.gmra.mrb[0].mxu0 %v109
    %v1755 = vpop.f32.mrb[0].mxu0
    %v1756 = vadd.f32 0.0, %v1755
    %v1757 = vpop.f32.mrb[0].mxu0
    %1758 = vmatprep.mubr.f32.mxu0 0.0
    %1759 = vmatmul.mubr.f32.gmra.mrb[0].mxu0 %v112
    %v1760 = vpop.f32.mrb[0].mxu0
    %v1761 = vadd.f32 0.0, %v1760
    %v1762 = vpop.f32.mrb[0].mxu0
    %1763 = vmatprep.mubr.f32.mxu0 0.0
    %1764 = vmatmul.mubr.f32.gmra.mrb[0].mxu0 %v115
    %v1765 = vpop.f32.mrb[0].mxu0
    %v1766 = vadd.f32 0.0, %v1765
    %v1767 = vpop.f32.mrb[0].mxu0
    %1768 = vdwg.mxu0
    %v1770 = vsel %vm222, %v1648, 0
    %v1773 = vsel %vm222, %v1649, 0
    %v1776 = vsel %vm222, %v1650, 0
    %v1779 = vsel %vm222, %v1651, 0
    %1781 = vmatprep.subr.mxu0 0.0
    %1782 = vmatpush1.msra.mxu0 %v84
    %1783 = vmatprep.subr.mxu0 0.0
    %1784 = vmatpush1.msra.mxu0 %v85
    %1785 = vmatprep.subr.mxu0 0.0
    %1786 = vmatpush1.msra.mxu0 %v86
    %1787 = vmatprep.subr.mxu0 0.0
    %1788 = vmatpush1.msra.mxu0 %v87
    %1789 = vmatprep.subr.mxu0 0.0
    %1790 = vmatpush1.msra.mxu0 0.0
    %1791 = vmatprep.subr.mxu0 0.0
    %1792 = vmatpush1.msra.mxu0 0.0
    %1793 = vmatprep.subr.mxu0 0.0
    %1794 = vmatpush1.msra.mxu0 0.0
    %1795 = vmatprep.subr.mxu0 0.0
    %1796 = vmatpush1.msra.mxu0 0.0
    %1797 = vmatprep.subr.mxu0 0.0
    %1798 = vmatpush1.msra.mxu0 0.0
    %1799 = vmatprep.subr.mxu0 0.0
    %1800 = vmatpush1.msra.mxu0 0.0
    %1801 = vmatprep.subr.mxu0 0.0
    %1802 = vmatpush1.msra.mxu0 0.0
    %1803 = vmatprep.subr.mxu0 0.0
    %1804 = vmatpush1.msra.mxu0 0.0
    %1805 = vmatprep.subr.mxu0 0.0
    %1806 = vmatpush1.msra.mxu0 0.0
    %1807 = vmatprep.subr.mxu0 0.0
    %1808 = vmatpush1.msra.mxu0 0.0
    %1809 = vmatprep.subr.mxu0 0.0
    %1810 = vmatpush1.msra.mxu0 0.0
    %1811 = vmatprep.subr.mxu0 0.0
    %1812 = vmatpush1.msra.mxu0 0.0
    %1813 = vmatprep.subr.mxu0 0.0
    %1814 = vmatpush1.msra.mxu0 0.0
    %1815 = vmatprep.subr.mxu0 0.0
    %1816 = vmatpush1.msra.mxu0 0.0
    %1817 = vmatprep.subr.mxu0 0.0
    %1818 = vmatpush1.msra.mxu0 0.0
    %1819 = vmatprep.subr.mxu0 0.0
    %1820 = vmatpush1.msra.mxu0 0.0
    %1821 = vmatprep.subr.mxu0 0.0
    %1822 = vmatpush1.msra.mxu0 0.0
    %1823 = vmatprep.subr.mxu0 0.0
    %1824 = vmatpush1.msra.mxu0 0.0
    %1825 = vmatprep.subr.mxu0 0.0
    %1826 = vmatpush1.msra.mxu0 0.0
    %1827 = vmatprep.subr.mxu0 0.0
    %1828 = vmatpush1.msra.mxu0 0.0
    %1829 = vmatprep.subr.mxu0 0.0
    %1830 = vmatpush1.msra.mxu0 0.0
    %1831 = vmatprep.subr.mxu0 0.0
    %1832 = vmatpush1.msra.mxu0 0.0
    %1833 = vmatprep.subr.mxu0 0.0
    %1834 = vmatpush1.msra.mxu0 0.0
    %1835 = vmatprep.subr.mxu0 0.0
    %1836 = vmatpush1.msra.mxu0 0.0
    %1837 = vmatprep.subr.mxu0 0.0
    %1838 = vmatpush1.msra.mxu0 0.0
    %1839 = vmatprep.subr.mxu0 0.0
    %1840 = vmatpush1.msra.mxu0 0.0
    %1841 = vmatprep.subr.mxu0 0.0
    %1842 = vmatpush1.msra.mxu0 0.0
    %1843 = vmatprep.subr.mxu0 0.0
    %1844 = vmatpush1.msra.mxu0 0.0
    %1845 = vmatprep.mubr.f32.mxu0 0.0
    %1846 = vmatmul.mubr.f32.gmra.mrb[0].mxu0 %v1770
    %v1847 = vpop.f32.mrb[0].mxu0
    %v1848 = vadd.f32 0.0, %v1847
    %v1849 = vpop.f32.mrb[0].mxu0
    %1850 = vmatprep.mubr.f32.mxu0 0.0
    %1851 = vmatmul.mubr.f32.gmra.mrb[0].mxu0 %v1773
    %v1852 = vpop.f32.mrb[0].mxu0
    %v1853 = vadd.f32 0.0, %v1852
    %v1854 = vpop.f32.mrb[0].mxu0
    %1855 = vmatprep.mubr.f32.mxu0 0.0
    %1856 = vmatmul.mubr.f32.gmra.mrb[0].mxu0 %v1776
    %v1857 = vpop.f32.mrb[0].mxu0
    %v1858 = vadd.f32 0.0, %v1857
    %v1859 = vpop.f32.mrb[0].mxu0
    %1860 = vmatprep.mubr.f32.mxu0 0.0
    %1861 = vmatmul.mubr.f32.gmra.mrb[0].mxu0 %v1779
    %v1862 = vpop.f32.mrb[0].mxu0
    %v1863 = vadd.f32 0.0, %v1862
    %v1864 = vpop.f32.mrb[0].mxu0
    %1865 = vdwg.mxu0
    %v1866 = vsel %vm320, %v1848, -inf
    %1867 = vmax.xlane.f32.xlu0 %v1866
    %v1868 = vpop.xlane.xlu0 %1867
    %v1869 = vsel %vm320, %v1853, -inf
    %1870 = vmax.xlane.f32.xlu0 %v1869
    %v1871 = vpop.xlane.xlu0 %1870
    %v1872 = vsel %vm320, %v1858, -inf
    %1873 = vmax.xlane.f32.xlu0 %v1872
    %v1874 = vpop.xlane.xlu0 %1873
    %v1875 = vsel %vm320, %v1863, -inf
    %1876 = vmax.xlane.f32.xlu0 %v1875
    %v1877 = vpop.xlane.xlu0 %1876
    %v1878 = vsub.f32 %v1848, %v1868
    %v1879 = vsub.f32 %v1853, %v1871
    %v1880 = vsub.f32 %v1858, %v1874
    %v1881 = vsub.f32 %v1863, %v1877
    %v1882 = vmul.f32 %v1878, 1.442695
    %v1883 = vpow.pop %v1882
    %v1884 = vmul.f32 %v1879, 1.442695
    %v1885 = vpow.pop %v1884
    %v1886 = vmul.f32 %v1880, 1.442695
    %v1887 = vpow.pop %v1886
    %v1888 = vmul.f32 %v1881, 1.442695
    %v1889 = vpow.pop %v1888
    %v1890 = vsel %vm320, %v1883, 0.0
    %1891 = vadd.xlane.f32.xlu0 %v1890
    %v1892 = vpop.xlane.xlu0 %1891
    %v1893 = vsel %vm320, %v1885, 0.0
    %1894 = vadd.xlane.f32.xlu0 %v1893
    %v1895 = vpop.xlane.xlu0 %1894
    %v1896 = vsel %vm320, %v1887, 0.0
    %1897 = vadd.xlane.f32.xlu0 %v1896
    %v1898 = vpop.xlane.xlu0 %1897
    %v1899 = vsel %vm320, %v1889, 0.0
    %1900 = vadd.xlane.f32.xlu0 %v1899
    %v1901 = vpop.xlane.xlu0 %1900
    %v1902 = vrcp.pop %v1892
    %v1903 = vmul.f32 %v1883, %v1902
    %v1904 = vrcp.pop %v1895
    %v1905 = vmul.f32 %v1885, %v1904
    %v1906 = vrcp.pop %v1898
    %v1907 = vmul.f32 %v1887, %v1906
    %v1908 = vrcp.pop %v1901
    %v1909 = vmul.f32 %v1889, %v1908
    %v1911 = vsel %vm320, %v1903, 0
    %v1914 = vsel %vm320, %v1905, 0
    %v1917 = vsel %vm320, %v1907, 0
    %v1920 = vsel %vm320, %v1909, 0
    %1922 = vmatprep.subr.mxu0 0.0
    %1923 = vmatpush1.xpose.msra.mxu0 %v378
    %1924 = vmatprep.subr.mxu0 0.0
    %1925 = vmatpush1.xpose.msra.mxu0 %v381
    %1926 = vmatprep.subr.mxu0 0.0
    %1927 = vmatpush1.xpose.msra.mxu0 %v384
    %1928 = vmatprep.subr.mxu0 0.0
    %1929 = vmatpush1.xpose.msra.mxu0 %v387
    %1930 = vmatprep.subr.mxu0 0.0
    %1931 = vmatpush1.xpose.msra.mxu0 0.0
    %1932 = vmatprep.subr.mxu0 0.0
    %1933 = vmatpush1.xpose.msra.mxu0 0.0
    %1934 = vmatprep.subr.mxu0 0.0
    %1935 = vmatpush1.xpose.msra.mxu0 0.0
    %1936 = vmatprep.subr.mxu0 0.0
    %1937 = vmatpush1.xpose.msra.mxu0 0.0
    %1938 = vmatprep.subr.mxu0 0.0
    %1939 = vmatpush1.xpose.msra.mxu0 0.0
    %1940 = vmatprep.subr.mxu0 0.0
    %1941 = vmatpush1.xpose.msra.mxu0 0.0
    %1942 = vmatprep.subr.mxu0 0.0
    %1943 = vmatpush1.xpose.msra.mxu0 0.0
    %1944 = vmatprep.subr.mxu0 0.0
    %1945 = vmatpush1.xpose.msra.mxu0 0.0
    %1946 = vmatprep.subr.mxu0 0.0
    %1947 = vmatpush1.xpose.msra.mxu0 0.0
    %1948 = vmatprep.subr.mxu0 0.0
    %1949 = vmatpush1.xpose.msra.mxu0 0.0
    %1950 = vmatprep.subr.mxu0 0.0
    %1951 = vmatpush1.xpose.msra.mxu0 0.0
    %1952 = vmatprep.subr.mxu0 0.0
    %1953 = vmatpush1.xpose.msra.mxu0 0.0
    %1954 = vmatprep.subr.mxu0 0.0
    %1955 = vmatpush1.xpose.msra.mxu0 0.0
    %1956 = vmatprep.subr.mxu0 0.0
    %1957 = vmatpush1.xpose.msra.mxu0 0.0
    %1958 = vmatprep.subr.mxu0 0.0
    %1959 = vmatpush1.xpose.msra.mxu0 0.0
    %1960 = vmatprep.subr.mxu0 0.0
    %1961 = vmatpush1.xpose.msra.mxu0 0.0
    %1962 = vmatprep.subr.mxu0 0.0
    %1963 = vmatpush1.xpose.msra.mxu0 0.0
    %1964 = vmatprep.subr.mxu0 0.0
    %1965 = vmatpush1.xpose.msra.mxu0 0.0
    %1966 = vmatprep.subr.mxu0 0.0
    %1967 = vmatpush1.xpose.msra.mxu0 0.0
    %1968 = vmatprep.subr.mxu0 0.0
    %1969 = vmatpush1.xpose.msra.mxu0 0.0
    %1970 = vmatprep.subr.mxu0 0.0
    %1971 = vmatpush1.xpose.msra.mxu0 0.0
    %1972 = vmatprep.subr.mxu0 0.0
    %1973 = vmatpush1.xpose.msra.mxu0 0.0
    %1974 = vmatprep.subr.mxu0 0.0
    %1975 = vmatpush1.xpose.msra.mxu0 0.0
    %1976 = vmatprep.subr.mxu0 0.0
    %1977 = vmatpush1.xpose.msra.mxu0 0.0
    %1978 = vmatprep.subr.mxu0 0.0
    %1979 = vmatpush1.xpose.msra.mxu0 0.0
    %1980 = vmatprep.subr.mxu0 0.0
    %1981 = vmatpush1.xpose.msra.mxu0 0.0
    %1982 = vmatprep.subr.mxu0 0.0
    %1983 = vmatpush1.xpose.msra.mxu0 0.0
    %1984 = vmatprep.subr.mxu0 0.0
    %1985 = vmatpush1.xpose.msra.mxu0 0.0
    %1986 = vmatprep.mubr.f32.mxu0 0.0
    %1987 = vmatmul.mubr.f32.gmra.mrb[0].mxu0 %v1911
    %v1988 = vpop.f32.mrb[0].mxu0
    %v1989 = vadd.f32 0.0, %v1988
    %v1990 = vpop.f32.mrb[0].mxu0
    %1991 = vmatprep.mubr.f32.mxu0 0.0
    %1992 = vmatmul.mubr.f32.gmra.mrb[0].mxu0 %v1914
    %v1993 = vpop.f32.mrb[0].mxu0
    %v1994 = vadd.f32 0.0, %v1993
    %v1995 = vpop.f32.mrb[0].mxu0
    %1996 = vmatprep.mubr.f32.mxu0 0.0
    %1997 = vmatmul.mubr.f32.gmra.mrb[0].mxu0 %v1917
    %v1998 = vpop.f32.mrb[0].mxu0
    %v1999 = vadd.f32 0.0, %v1998
    %v2000 = vpop.f32.mrb[0].mxu0
    %2001 = vmatprep.mubr.f32.mxu0 0.0
    %2002 = vmatmul.mubr.f32.gmra.mrb[0].mxu0 %v1920
    %v2003 = vpop.f32.mrb[0].mxu0
    %v2004 = vadd.f32 0.0, %v2003
    %v2005 = vpop.f32.mrb[0].mxu0
    %2006 = vdwg.mxu0
    %v2008 = vsel %vm222, %v1652, 0
    %v2011 = vsel %vm222, %v1653, 0
    %v2014 = vsel %vm222, %v1654, 0
    %v2017 = vsel %vm222, %v1655, 0
    %2019 = vmatprep.subr.mxu0 0.0
    %2020 = vmatpush1.msra.mxu0 %v88
    %2021 = vmatprep.subr.mxu0 0.0
    %2022 = vmatpush1.msra.mxu0 %v89
    %2023 = vmatprep.subr.mxu0 0.0
    %2024 = vmatpush1.msra.mxu0 %v90
    %2025 = vmatprep.subr.mxu0 0.0
    %2026 = vmatpush1.msra.mxu0 %v91
    %2027 = vmatprep.subr.mxu0 0.0
    %2028 = vmatpush1.msra.mxu0 0.0
    %2029 = vmatprep.subr.mxu0 0.0
    %2030 = vmatpush1.msra.mxu0 0.0
    %2031 = vmatprep.subr.mxu0 0.0
    %2032 = vmatpush1.msra.mxu0 0.0
    %2033 = vmatprep.subr.mxu0 0.0
    %2034 = vmatpush1.msra.mxu0 0.0
    %2035 = vmatprep.subr.mxu0 0.0
    %2036 = vmatpush1.msra.mxu0 0.0
    %2037 = vmatprep.subr.mxu0 0.0
    %2038 = vmatpush1.msra.mxu0 0.0
    %2039 = vmatprep.subr.mxu0 0.0
    %2040 = vmatpush1.msra.mxu0 0.0
    %2041 = vmatprep.subr.mxu0 0.0
    %2042 = vmatpush1.msra.mxu0 0.0
    %2043 = vmatprep.subr.mxu0 0.0
    %2044 = vmatpush1.msra.mxu0 0.0
    %2045 = vmatprep.subr.mxu0 0.0
    %2046 = vmatpush1.msra.mxu0 0.0
    %2047 = vmatprep.subr.mxu0 0.0
    %2048 = vmatpush1.msra.mxu0 0.0
    %2049 = vmatprep.subr.mxu0 0.0
    %2050 = vmatpush1.msra.mxu0 0.0
    %2051 = vmatprep.subr.mxu0 0.0
    %2052 = vmatpush1.msra.mxu0 0.0
    %2053 = vmatprep.subr.mxu0 0.0
    %2054 = vmatpush1.msra.mxu0 0.0
    %2055 = vmatprep.subr.mxu0 0.0
    %2056 = vmatpush1.msra.mxu0 0.0
    %2057 = vmatprep.subr.mxu0 0.0
    %2058 = vmatpush1.msra.mxu0 0.0
    %2059 = vmatprep.subr.mxu0 0.0
    %2060 = vmatpush1.msra.mxu0 0.0
    %2061 = vmatprep.subr.mxu0 0.0
    %2062 = vmatpush1.msra.mxu0 0.0
    %2063 = vmatprep.subr.mxu0 0.0
    %2064 = vmatpush1.msra.mxu0 0.0
    %2065 = vmatprep.subr.mxu0 0.0
    %2066 = vmatpush1.msra.mxu0 0.0
    %2067 = vmatprep.subr.mxu0 0.0
    %2068 = vmatpush1.msra.mxu0 0.0
    %2069 = vmatprep.subr.mxu0 0.0
    %2070 = vmatpush1.msra.mxu0 0.0
    %2071 = vmatprep.subr.mxu0 0.0
    %2072 = vmatpush1.msra.mxu0 0.0
    %2073 = vmatprep.subr.mxu0 0.0
    %2074 = vmatpush1.msra.mxu0 0.0
    %2075 = vmatprep.subr.mxu0 0.0
    %2076 = vmatpush1.msra.mxu0 0.0
    %2077 = vmatprep.subr.mxu0 0.0
    %2078 = vmatpush1.msra.mxu0 0.0
    %2079 = vmatprep.subr.mxu0 0.0
    %2080 = vmatpush1.msra.mxu0 0.0
    %2081 = vmatprep.subr.mxu0 0.0
    %2082 = vmatpush1.msra.mxu0 0.0
    %2083 = vmatprep.mubr.f32.mxu0 0.0
    %2084 = vmatmul.mubr.f32.gmra.mrb[0].mxu0 %v2008
    %v2085 = vpop.f32.mrb[0].mxu0
    %v2086 = vadd.f32 0.0, %v2085
    %v2087 = vpop.f32.mrb[0].mxu0
    %2088 = vmatprep.mubr.f32.mxu0 0.0
    %2089 = vmatmul.mubr.f32.gmra.mrb[0].mxu0 %v2011
    %v2090 = vpop.f32.mrb[0].mxu0
    %v2091 = vadd.f32 0.0, %v2090
    %v2092 = vpop.f32.mrb[0].mxu0
    %2093 = vmatprep.mubr.f32.mxu0 0.0
    %2094 = vmatmul.mubr.f32.gmra.mrb[0].mxu0 %v2014
    %v2095 = vpop.f32.mrb[0].mxu0
    %v2096 = vadd.f32 0.0, %v2095
    %v2097 = vpop.f32.mrb[0].mxu0
    %2098 = vmatprep.mubr.f32.mxu0 0.0
    %2099 = vmatmul.mubr.f32.gmra.mrb[0].mxu0 %v2017
    %v2100 = vpop.f32.mrb[0].mxu0
    %v2101 = vadd.f32 0.0, %v2100
    %v2102 = vpop.f32.mrb[0].mxu0
    %2103 = vdwg.mxu0
    %v2104 = vsel %vm320, %v2086, -inf
    %2105 = vmax.xlane.f32.xlu0 %v2104
    %v2106 = vpop.xlane.xlu0 %2105
    %v2107 = vsel %vm320, %v2091, -inf
    %2108 = vmax.xlane.f32.xlu0 %v2107
    %v2109 = vpop.xlane.xlu0 %2108
    %v2110 = vsel %vm320, %v2096, -inf
    %2111 = vmax.xlane.f32.xlu0 %v2110
    %v2112 = vpop.xlane.xlu0 %2111
    %v2113 = vsel %vm320, %v2101, -inf
    %2114 = vmax.xlane.f32.xlu0 %v2113
    %v2115 = vpop.xlane.xlu0 %2114
    %v2116 = vsub.f32 %v2086, %v2106
    %v2117 = vsub.f32 %v2091, %v2109
    %v2118 = vsub.f32 %v2096, %v2112
    %v2119 = vsub.f32 %v2101, %v2115
    %v2120 = vmul.f32 %v2116, 1.442695
    %v2121 = vpow.pop %v2120
    %v2122 = vmul.f32 %v2117, 1.442695
    %v2123 = vpow.pop %v2122
    %v2124 = vmul.f32 %v2118, 1.442695
    %v2125 = vpow.pop %v2124
    %v2126 = vmul.f32 %v2119, 1.442695
    %v2127 = vpow.pop %v2126
    %v2128 = vsel %vm320, %v2121, 0.0
    %2129 = vadd.xlane.f32.xlu0 %v2128
    %v2130 = vpop.xlane.xlu0 %2129
    %v2131 = vsel %vm320, %v2123, 0.0
    %2132 = vadd.xlane.f32.xlu0 %v2131
    %v2133 = vpop.xlane.xlu0 %2132
    %v2134 = vsel %vm320, %v2125, 0.0
    %2135 = vadd.xlane.f32.xlu0 %v2134
    %v2136 = vpop.xlane.xlu0 %2135
    %v2137 = vsel %vm320, %v2127, 0.0
    %2138 = vadd.xlane.f32.xlu0 %v2137
    %v2139 = vpop.xlane.xlu0 %2138
    %v2140 = vrcp.pop %v2130
    %v2141 = vmul.f32 %v2121, %v2140
    %v2142 = vrcp.pop %v2133
    %v2143 = vmul.f32 %v2123, %v2142
    %v2144 = vrcp.pop %v2136
    %v2145 = vmul.f32 %v2125, %v2144
    %v2146 = vrcp.pop %v2139
    %v2147 = vmul.f32 %v2127, %v2146
    %v2149 = vsel %vm320, %v2141, 0
    %v2152 = vsel %vm320, %v2143, 0
    %v2155 = vsel %vm320, %v2145, 0
    %v2158 = vsel %vm320, %v2147, 0
    %2160 = vmatprep.subr.mxu0 0.0
    %2161 = vmatpush1.xpose.msra.mxu0 %v628
    %2162 = vmatprep.subr.mxu0 0.0
    %2163 = vmatpush1.xpose.msra.mxu0 %v631
    %2164 = vmatprep.subr.mxu0 0.0
    %2165 = vmatpush1.xpose.msra.mxu0 %v634
    %2166 = vmatprep.subr.mxu0 0.0
    %2167 = vmatpush1.xpose.msra.mxu0 %v637
    %2168 = vmatprep.subr.mxu0 0.0
    %2169 = vmatpush1.xpose.msra.mxu0 0.0
    %2170 = vmatprep.subr.mxu0 0.0
    %2171 = vmatpush1.xpose.msra.mxu0 0.0
    %2172 = vmatprep.subr.mxu0 0.0
    %2173 = vmatpush1.xpose.msra.mxu0 0.0
    %2174 = vmatprep.subr.mxu0 0.0
    %2175 = vmatpush1.xpose.msra.mxu0 0.0
    %2176 = vmatprep.subr.mxu0 0.0
    %2177 = vmatpush1.xpose.msra.mxu0 0.0
    %2178 = vmatprep.subr.mxu0 0.0
    %2179 = vmatpush1.xpose.msra.mxu0 0.0
    %2180 = vmatprep.subr.mxu0 0.0
    %2181 = vmatpush1.xpose.msra.mxu0 0.0
    %2182 = vmatprep.subr.mxu0 0.0
    %2183 = vmatpush1.xpose.msra.mxu0 0.0
    %2184 = vmatprep.subr.mxu0 0.0
    %2185 = vmatpush1.xpose.msra.mxu0 0.0
    %2186 = vmatprep.subr.mxu0 0.0
    %2187 = vmatpush1.xpose.msra.mxu0 0.0
    %2188 = vmatprep.subr.mxu0 0.0
    %2189 = vmatpush1.xpose.msra.mxu0 0.0
    %2190 = vmatprep.subr.mxu0 0.0
    %2191 = vmatpush1.xpose.msra.mxu0 0.0
    %2192 = vmatprep.subr.mxu0 0.0
    %2193 = vmatpush1.xpose.msra.mxu0 0.0
    %2194 = vmatprep.subr.mxu0 0.0
    %2195 = vmatpush1.xpose.msra.mxu0 0.0
    %2196 = vmatprep.subr.mxu0 0.0
    %2197 = vmatpush1.xpose.msra.mxu0 0.0
    %2198 = vmatprep.subr.mxu0 0.0
    %2199 = vmatpush1.xpose.msra.mxu0 0.0
    %2200 = vmatprep.subr.mxu0 0.0
    %2201 = vmatpush1.xpose.msra.mxu0 0.0
    %2202 = vmatprep.subr.mxu0 0.0
    %2203 = vmatpush1.xpose.msra.mxu0 0.0
    %2204 = vmatprep.subr.mxu0 0.0
    %2205 = vmatpush1.xpose.msra.mxu0 0.0
    %2206 = vmatprep.subr.mxu0 0.0
    %2207 = vmatpush1.xpose.msra.mxu0 0.0
    %2208 = vmatprep.subr.mxu0 0.0
    %2209 = vmatpush1.xpose.msra.mxu0 0.0
    %2210 = vmatprep.subr.mxu0 0.0
    %2211 = vmatpush1.xpose.msra.mxu0 0.0
    %2212 = vmatprep.subr.mxu0 0.0
    %2213 = vmatpush1.xpose.msra.mxu0 0.0
    %2214 = vmatprep.subr.mxu0 0.0
    %2215 = vmatpush1.xpose.msra.mxu0 0.0
    %2216 = vmatprep.subr.mxu0 0.0
    %2217 = vmatpush1.xpose.msra.mxu0 0.0
    %2218 = vmatprep.subr.mxu0 0.0
    %2219 = vmatpush1.xpose.msra.mxu0 0.0
    %2220 = vmatprep.subr.mxu0 0.0
    %2221 = vmatpush1.xpose.msra.mxu0 0.0
    %2222 = vmatprep.subr.mxu0 0.0
    %2223 = vmatpush1.xpose.msra.mxu0 0.0
    %2224 = vmatprep.mubr.f32.mxu0 0.0
    %2225 = vmatmul.mubr.f32.gmra.mrb[0].mxu0 %v2149
    %v2226 = vpop.f32.mrb[0].mxu0
    %v2227 = vadd.f32 0.0, %v2226
    %v2228 = vpop.f32.mrb[0].mxu0
    %2229 = vmatprep.mubr.f32.mxu0 0.0
    %2230 = vmatmul.mubr.f32.gmra.mrb[0].mxu0 %v2152
    %v2231 = vpop.f32.mrb[0].mxu0
    %v2232 = vadd.f32 0.0, %v2231
    %v2233 = vpop.f32.mrb[0].mxu0
    %2234 = vmatprep.mubr.f32.mxu0 0.0
    %2235 = vmatmul.mubr.f32.gmra.mrb[0].mxu0 %v2155
    %v2236 = vpop.f32.mrb[0].mxu0
    %v2237 = vadd.f32 0.0, %v2236
    %v2238 = vpop.f32.mrb[0].mxu0
    %2239 = vmatprep.mubr.f32.mxu0 0.0
    %2240 = vmatmul.mubr.f32.gmra.mrb[0].mxu0 %v2158
    %v2241 = vpop.f32.mrb[0].mxu0
    %v2242 = vadd.f32 0.0, %v2241
    %v2243 = vpop.f32.mrb[0].mxu0
    %2244 = vdwg.mxu0
    %v2245 = vmul.f32 %v1731, %v1731
    %v2246 = vmul.f32 %v1736, %v1736
    %v2247 = vmul.f32 %v1741, %v1741
    %v2248 = vmul.f32 %v1746, %v1746
    %v2249 = vmul.f32 %v1751, %v1751
    %v2250 = vmul.f32 %v1756, %v1756
    %v2251 = vmul.f32 %v1761, %v1761
    %v2252 = vmul.f32 %v1766, %v1766
    %v2253 = vsel %vm222, %v2245, 0.0
    %2254 = vadd.xlane.f32.xlu0 %v2253
    %v2255 = vpop.xlane.xlu0 %2254
    %v2256 = vsel %vm222, %v2246, 0.0
    %2257 = vadd.xlane.f32.xlu0 %v2256
    %v2258 = vpop.xlane.xlu0 %2257
    %v2259 = vsel %vm222, %v2247, 0.0
    %2260 = vadd.xlane.f32.xlu0 %v2259
    %v2261 = vpop.xlane.xlu0 %2260
    %v2262 = vsel %vm222, %v2248, 0.0
    %2263 = vadd.xlane.f32.xlu0 %v2262
    %v2264 = vpop.xlane.xlu0 %2263
    %v2265 = vsel %vm222, %v2249, 0.0
    %2266 = vadd.xlane.f32.xlu0 %v2265
    %v2267 = vpop.xlane.xlu0 %2266
    %v2268 = vsel %vm222, %v2250, 0.0
    %2269 = vadd.xlane.f32.xlu0 %v2268
    %v2270 = vpop.xlane.xlu0 %2269
    %v2271 = vsel %vm222, %v2251, 0.0
    %2272 = vadd.xlane.f32.xlu0 %v2271
    %v2273 = vpop.xlane.xlu0 %2272
    %v2274 = vsel %vm222, %v2252, 0.0
    %2275 = vadd.xlane.f32.xlu0 %v2274
    %v2276 = vpop.xlane.xlu0 %2275
    %v2277 = vrsqrt.pop %v2255
    %v2278 = vmul.f32 %v2255, %v2277
    %vm2279 = vcmp.eq.f32.partialorder %v2255, inf
    %v2280 = vsel %vm2279, %v2255, %v2278
    %vm2281 = vcmp.eq.f32.partialorder %v2255, 0.0
    %v2282 = vand.u32 %v2255, 2147483648
    %v2283 = vsel %vm2281, %v2282, %v2280
    %v2284 = vrsqrt.pop %v2258
    %v2285 = vmul.f32 %v2258, %v2284
    %vm2286 = vcmp.eq.f32.partialorder %v2258, inf
    %v2287 = vsel %vm2286, %v2258, %v2285
    %vm2288 = vcmp.eq.f32.partialorder %v2258, 0.0
    %v2289 = vand.u32 %v2258, 2147483648
    %v2290 = vsel %vm2288, %v2289, %v2287
    %v2291 = vrsqrt.pop %v2261
    %v2292 = vmul.f32 %v2261, %v2291
    %vm2293 = vcmp.eq.f32.partialorder %v2261, inf
    %v2294 = vsel %vm2293, %v2261, %v2292
    %vm2295 = vcmp.eq.f32.partialorder %v2261, 0.0
    %v2296 = vand.u32 %v2261, 2147483648
    %v2297 = vsel %vm2295, %v2296, %v2294
    %v2298 = vrsqrt.pop %v2264
    %v2299 = vmul.f32 %v2264, %v2298
    %vm2300 = vcmp.eq.f32.partialorder %v2264, inf
    %v2301 = vsel %vm2300, %v2264, %v2299
    %vm2302 = vcmp.eq.f32.partialorder %v2264, 0.0
    %v2303 = vand.u32 %v2264, 2147483648
    %v2304 = vsel %vm2302, %v2303, %v2301
    %v2305 = vrsqrt.pop %v2267
    %v2306 = vmul.f32 %v2267, %v2305
    %vm2307 = vcmp.eq.f32.partialorder %v2267, inf
    %v2308 = vsel %vm2307, %v2267, %v2306
    %vm2309 = vcmp.eq.f32.partialorder %v2267, 0.0
    %v2310 = vand.u32 %v2267, 2147483648
    %v2311 = vsel %vm2309, %v2310, %v2308
    %v2312 = vrsqrt.pop %v2270
    %v2313 = vmul.f32 %v2270, %v2312
    %vm2314 = vcmp.eq.f32.partialorder %v2270, inf
    %v2315 = vsel %vm2314, %v2270, %v2313
    %vm2316 = vcmp.eq.f32.partialorder %v2270, 0.0
    %v2317 = vand.u32 %v2270, 2147483648
    %v2318 = vsel %vm2316, %v2317, %v2315
    %v2319 = vrsqrt.pop %v2273
    %v2320 = vmul.f32 %v2273, %v2319
    %vm2321 = vcmp.eq.f32.partialorder %v2273, inf
    %v2322 = vsel %vm2321, %v2273, %v2320
    %vm2323 = vcmp.eq.f32.partialorder %v2273, 0.0
    %v2324 = vand.u32 %v2273, 2147483648
    %v2325 = vsel %vm2323, %v2324, %v2322
    %v2326 = vrsqrt.pop %v2276
    %v2327 = vmul.f32 %v2276, %v2326
    %vm2328 = vcmp.eq.f32.partialorder %v2276, inf
    %v2329 = vsel %vm2328, %v2276, %v2327
    %vm2330 = vcmp.eq.f32.partialorder %v2276, 0.0
    %v2331 = vand.u32 %v2276, 2147483648
    %v2332 = vsel %vm2330, %v2331, %v2329
    %v2333 = vmax.f32 %v2283, 1e-12
    %v2334 = vmax.f32 %v2290, 1e-12
    %v2335 = vmax.f32 %v2297, 1e-12
    %v2336 = vmax.f32 %v2304, 1e-12
    %v2337 = vmax.f32 %v2311, 1e-12
    %v2338 = vmax.f32 %v2318, 1e-12
    %v2339 = vmax.f32 %v2325, 1e-12
    %v2340 = vmax.f32 %v2332, 1e-12
    %v2341 = vrcp.pop %v2333
    %v2342 = vmul.f32 %v1731, %v2341
    %v2343 = vrcp.pop %v2334
    %v2344 = vmul.f32 %v1736, %v2343
    %v2345 = vrcp.pop %v2335
    %v2346 = vmul.f32 %v1741, %v2345
    %v2347 = vrcp.pop %v2336
    %v2348 = vmul.f32 %v1746, %v2347
    %v2349 = vrcp.pop %v2337
    %v2350 = vmul.f32 %v1751, %v2349
    %v2351 = vrcp.pop %v2338
    %v2352 = vmul.f32 %v1756, %v2351
    %v2353 = vrcp.pop %v2339
    %v2354 = vmul.f32 %v1761, %v2353
    %v2355 = vrcp.pop %v2340
    %v2356 = vmul.f32 %v1766, %v2355
    %v2358 = vsel %vm222, %v2342, 0
    %v2361 = vsel %vm222, %v2344, 0
    %v2364 = vsel %vm222, %v2346, 0
    %v2367 = vsel %vm222, %v2348, 0
    %v2370 = vsel %vm222, %v2350, 0
    %v2373 = vsel %vm222, %v2352, 0
    %v2376 = vsel %vm222, %v2354, 0
    %v2379 = vsel %vm222, %v2356, 0
    %2381 = vmatprep.subr.mxu0 0.0
    %2382 = vmatpush1.xpose.msra.mxu0 %v2358
    %2383 = vmatprep.subr.mxu0 0.0
    %2384 = vmatpush1.xpose.msra.mxu0 %v2361
    %2385 = vmatprep.subr.mxu0 0.0
    %2386 = vmatpush1.xpose.msra.mxu0 %v2364
    %2387 = vmatprep.subr.mxu0 0.0
    %2388 = vmatpush1.xpose.msra.mxu0 %v2367
    %2389 = vmatprep.subr.mxu0 0.0
    %2390 = vmatpush1.xpose.msra.mxu0 %v2370
    %2391 = vmatprep.subr.mxu0 0.0
    %2392 = vmatpush1.xpose.msra.mxu0 %v2373
    %2393 = vmatprep.subr.mxu0 0.0
    %2394 = vmatpush1.xpose.msra.mxu0 %v2376
    %2395 = vmatprep.subr.mxu0 0.0
    %2396 = vmatpush1.xpose.msra.mxu0 %v2379
    %2397 = vmatprep.subr.mxu0 0.0
    %2398 = vmatpush1.xpose.msra.mxu0 0.0
    %2399 = vmatprep.subr.mxu0 0.0
    %2400 = vmatpush1.xpose.msra.mxu0 0.0
    %2401 = vmatprep.subr.mxu0 0.0
    %2402 = vmatpush1.xpose.msra.mxu0 0.0
    %2403 = vmatprep.subr.mxu0 0.0
    %2404 = vmatpush1.xpose.msra.mxu0 0.0
    %2405 = vmatprep.subr.mxu0 0.0
    %2406 = vmatpush1.xpose.msra.mxu0 0.0
    %2407 = vmatprep.subr.mxu0 0.0
    %2408 = vmatpush1.xpose.msra.mxu0 0.0
    %2409 = vmatprep.subr.mxu0 0.0
    %2410 = vmatpush1.xpose.msra.mxu0 0.0
    %2411 = vmatprep.subr.mxu0 0.0
    %2412 = vmatpush1.xpose.msra.mxu0 0.0
    %2413 = vmatprep.subr.mxu0 0.0
    %2414 = vmatpush1.xpose.msra.mxu0 0.0
    %2415 = vmatprep.subr.mxu0 0.0
    %2416 = vmatpush1.xpose.msra.mxu0 0.0
    %2417 = vmatprep.subr.mxu0 0.0
    %2418 = vmatpush1.xpose.msra.mxu0 0.0
    %2419 = vmatprep.subr.mxu0 0.0
    %2420 = vmatpush1.xpose.msra.mxu0 0.0
    %2421 = vmatprep.subr.mxu0 0.0
    %2422 = vmatpush1.xpose.msra.mxu0 0.0
    %2423 = vmatprep.subr.mxu0 0.0
    %2424 = vmatpush1.xpose.msra.mxu0 0.0
    %2425 = vmatprep.subr.mxu0 0.0
    %2426 = vmatpush1.xpose.msra.mxu0 0.0
    %2427 = vmatprep.subr.mxu0 0.0
    %2428 = vmatpush1.xpose.msra.mxu0 0.0
    %2429 = vmatprep.subr.mxu0 0.0
    %2430 = vmatpush1.xpose.msra.mxu0 0.0
    %2431 = vmatprep.subr.mxu0 0.0
    %2432 = vmatpush1.xpose.msra.mxu0 0.0
    %2433 = vmatprep.subr.mxu0 0.0
    %2434 = vmatpush1.xpose.msra.mxu0 0.0
    %2435 = vmatprep.subr.mxu0 0.0
    %2436 = vmatpush1.xpose.msra.mxu0 0.0
    %2437 = vmatprep.subr.mxu0 0.0
    %2438 = vmatpush1.xpose.msra.mxu0 0.0
    %2439 = vmatprep.subr.mxu0 0.0
    %2440 = vmatpush1.xpose.msra.mxu0 0.0
    %2441 = vmatprep.subr.mxu0 0.0
    %2442 = vmatpush1.xpose.msra.mxu0 0.0
    %2443 = vmatprep.subr.mxu0 0.0
    %2444 = vmatpush1.xpose.msra.mxu0 0.0
    %2445 = vmatprep.mubr.f32.mxu0 0.0
    %2446 = vmatmul.mubr.f32.gmra.mrb[0].mxu0 %v2358
    %v2447 = vpop.f32.mrb[0].mxu0
    %v2448 = vadd.f32 1.0, %v2447
    %v2449 = vpop.f32.mrb[0].mxu0
    %2450 = vmatprep.mubr.f32.mxu0 0.0
    %2451 = vmatmul.mubr.f32.gmra.mrb[0].mxu0 %v2361
    %v2452 = vpop.f32.mrb[0].mxu0
    %v2453 = vadd.f32 1.0, %v2452
    %v2454 = vpop.f32.mrb[0].mxu0
    %2455 = vmatprep.mubr.f32.mxu0 0.0
    %2456 = vmatmul.mubr.f32.gmra.mrb[0].mxu0 %v2364
    %v2457 = vpop.f32.mrb[0].mxu0
    %v2458 = vadd.f32 1.0, %v2457
    %v2459 = vpop.f32.mrb[0].mxu0
    %2460 = vmatprep.mubr.f32.mxu0 0.0
    %2461 = vmatmul.mubr.f32.gmra.mrb[0].mxu0 %v2367
    %v2462 = vpop.f32.mrb[0].mxu0
    %v2463 = vadd.f32 1.0, %v2462
    %v2464 = vpop.f32.mrb[0].mxu0
    %2465 = vmatprep.mubr.f32.mxu0 0.0
    %2466 = vmatmul.mubr.f32.gmra.mrb[0].mxu0 %v2370
    %v2467 = vpop.f32.mrb[0].mxu0
    %v2468 = vadd.f32 1.0, %v2467
    %v2469 = vpop.f32.mrb[0].mxu0
    %2470 = vmatprep.mubr.f32.mxu0 0.0
    %2471 = vmatmul.mubr.f32.gmra.mrb[0].mxu0 %v2373
    %v2472 = vpop.f32.mrb[0].mxu0
    %v2473 = vadd.f32 1.0, %v2472
    %v2474 = vpop.f32.mrb[0].mxu0
    %2475 = vmatprep.mubr.f32.mxu0 0.0
    %2476 = vmatmul.mubr.f32.gmra.mrb[0].mxu0 %v2376
    %v2477 = vpop.f32.mrb[0].mxu0
    %v2478 = vadd.f32 1.0, %v2477
    %v2479 = vpop.f32.mrb[0].mxu0
    %2480 = vmatprep.mubr.f32.mxu0 0.0
    %2481 = vmatmul.mubr.f32.gmra.mrb[0].mxu0 %v2379
    %v2482 = vpop.f32.mrb[0].mxu0
    %v2483 = vadd.f32 1.0, %v2482
    %v2484 = vpop.f32.mrb[0].mxu0
    %2485 = vdwg.mxu0
    %v2486 = vmul.f32 %v2448, 0.5
    %v2487 = vmul.f32 %v2453, 0.5
    %v2488 = vmul.f32 %v2458, 0.5
    %v2489 = vmul.f32 %v2463, 0.5
    %v2490 = vmul.f32 %v2468, 0.5
    %v2491 = vmul.f32 %v2473, 0.5
    %v2492 = vmul.f32 %v2478, 0.5
    %v2493 = vmul.f32 %v2483, 0.5
    %v2494 = vmul.f32 %v2486, %v68
    %v2495 = vmul.f32 %v2487, %v69
    %v2496 = vmul.f32 %v2488, %v70
    %v2497 = vmul.f32 %v2489, %v71
    %v2498 = vmul.f32 %v2490, %v72
    %v2499 = vmul.f32 %v2491, %v73
    %v2500 = vmul.f32 %v2492, %v74
    %v2501 = vmul.f32 %v2493, %v75
    %v2502 = vsel %vm92, %v2494, 0.0
    %2503 = vadd.xlane.f32.xlu0 %v2502
    %v2504 = vpop.xlane.xlu0 %2503
    %v2505 = vsel %vm92, %v2495, 0.0
    %2506 = vadd.xlane.f32.xlu0 %v2505
    %v2507 = vpop.xlane.xlu0 %2506
    %v2508 = vsel %vm92, %v2496, 0.0
    %2509 = vadd.xlane.f32.xlu0 %v2508
    %v2510 = vpop.xlane.xlu0 %2509
    %v2511 = vsel %vm92, %v2497, 0.0
    %2512 = vadd.xlane.f32.xlu0 %v2511
    %v2513 = vpop.xlane.xlu0 %2512
    %v2514 = vsel %vm92, %v2498, 0.0
    %2515 = vadd.xlane.f32.xlu0 %v2514
    %v2516 = vpop.xlane.xlu0 %2515
    %v2517 = vsel %vm92, %v2499, 0.0
    %2518 = vadd.xlane.f32.xlu0 %v2517
    %v2519 = vpop.xlane.xlu0 %2518
    %v2520 = vsel %vm92, %v2500, 0.0
    %2521 = vadd.xlane.f32.xlu0 %v2520
    %v2522 = vpop.xlane.xlu0 %2521
    %v2523 = vsel %vm92, %v2501, 0.0
    %2524 = vadd.xlane.f32.xlu0 %v2523
    %v2525 = vpop.xlane.xlu0 %2524
    %vm2526 = vcmp.gt.f32.partialorder %v2504, 0.0
    %vm2527 = vcmp.gt.f32.partialorder %v2507, 0.0
    %vm2528 = vcmp.gt.f32.partialorder %v2510, 0.0
    %vm2529 = vcmp.gt.f32.partialorder %v2513, 0.0
    %vm2530 = vcmp.gt.f32.partialorder %v2516, 0.0
    %vm2531 = vcmp.gt.f32.partialorder %v2519, 0.0
    %vm2532 = vcmp.gt.f32.partialorder %v2522, 0.0
    %vm2533 = vcmp.gt.f32.partialorder %v2525, 0.0
    %v2534 = vrcp.pop %v2504
    %v2535 = vmul.f32 1.0, %v2534
    %v2536 = vrcp.pop %v2507
    %v2537 = vmul.f32 1.0, %v2536
    %v2538 = vrcp.pop %v2510
    %v2539 = vmul.f32 1.0, %v2538
    %v2540 = vrcp.pop %v2513
    %v2541 = vmul.f32 1.0, %v2540
    %v2542 = vrcp.pop %v2516
    %v2543 = vmul.f32 1.0, %v2542
    %v2544 = vrcp.pop %v2519
    %v2545 = vmul.f32 1.0, %v2544
    %v2546 = vrcp.pop %v2522
    %v2547 = vmul.f32 1.0, %v2546
    %v2548 = vrcp.pop %v2525
    %v2549 = vmul.f32 1.0, %v2548
    %v2550 = vsel %vm2526, %v2535, 0.0
    %v2551 = vsel %vm2527, %v2537, 0.0
    %v2552 = vsel %vm2528, %v2539, 0.0
    %v2553 = vsel %vm2529, %v2541, 0.0
    %v2554 = vsel %vm2530, %v2543, 0.0
    %v2555 = vsel %vm2531, %v2545, 0.0
    %v2556 = vsel %vm2532, %v2547, 0.0
    %v2557 = vsel %vm2533, %v2549, 0.0
    %v2558 = vmul.f32 %v2494, %v2550
    %v2559 = vmul.f32 %v2495, %v2551
    %v2560 = vmul.f32 %v2496, %v2552
    %v2561 = vmul.f32 %v2497, %v2553
    %v2562 = vmul.f32 %v2498, %v2554
    %v2563 = vmul.f32 %v2499, %v2555
    %v2564 = vmul.f32 %v2500, %v2556
    %v2565 = vmul.f32 %v2501, %v2557
    %v2567 = vsel %vm92, %v2558, 0
    %v2570 = vsel %vm92, %v2559, 0
    %v2573 = vsel %vm92, %v2560, 0
    %v2576 = vsel %vm92, %v2561, 0
    %v2579 = vsel %vm92, %v2562, 0
    %v2582 = vsel %vm92, %v2563, 0
    %v2585 = vsel %vm92, %v2564, 0
    %v2588 = vsel %vm92, %v2565, 0
    %2590 = vmatprep.subr.mxu0 0.0
    %2591 = vmatpush1.msra.mxu0 %v1648
    %2592 = vmatprep.subr.mxu0 0.0
    %2593 = vmatpush1.msra.mxu0 %v1649
    %2594 = vmatprep.subr.mxu0 0.0
    %2595 = vmatpush1.msra.mxu0 %v1650
    %2596 = vmatprep.subr.mxu0 0.0
    %2597 = vmatpush1.msra.mxu0 %v1651
    %2598 = vmatprep.subr.mxu0 0.0
    %2599 = vmatpush1.msra.mxu0 %v1652
    %2600 = vmatprep.subr.mxu0 0.0
    %2601 = vmatpush1.msra.mxu0 %v1653
    %2602 = vmatprep.subr.mxu0 0.0
    %2603 = vmatpush1.msra.mxu0 %v1654
    %2604 = vmatprep.subr.mxu0 0.0
    %2605 = vmatpush1.msra.mxu0 %v1655
    %2606 = vmatprep.subr.mxu0 0.0
    %2607 = vmatpush1.msra.mxu0 0.0
    %2608 = vmatprep.subr.mxu0 0.0
    %2609 = vmatpush1.msra.mxu0 0.0
    %2610 = vmatprep.subr.mxu0 0.0
    %2611 = vmatpush1.msra.mxu0 0.0
    %2612 = vmatprep.subr.mxu0 0.0
    %2613 = vmatpush1.msra.mxu0 0.0
    %2614 = vmatprep.subr.mxu0 0.0
    %2615 = vmatpush1.msra.mxu0 0.0
    %2616 = vmatprep.subr.mxu0 0.0
    %2617 = vmatpush1.msra.mxu0 0.0
    %2618 = vmatprep.subr.mxu0 0.0
    %2619 = vmatpush1.msra.mxu0 0.0
    %2620 = vmatprep.subr.mxu0 0.0
    %2621 = vmatpush1.msra.mxu0 0.0
    %2622 = vmatprep.subr.mxu0 0.0
    %2623 = vmatpush1.msra.mxu0 0.0
    %2624 = vmatprep.subr.mxu0 0.0
    %2625 = vmatpush1.msra.mxu0 0.0
    %2626 = vmatprep.subr.mxu0 0.0
    %2627 = vmatpush1.msra.mxu0 0.0
    %2628 = vmatprep.subr.mxu0 0.0
    %2629 = vmatpush1.msra.mxu0 0.0
    %2630 = vmatprep.subr.mxu0 0.0
    %2631 = vmatpush1.msra.mxu0 0.0
    %2632 = vmatprep.subr.mxu0 0.0
    %2633 = vmatpush1.msra.mxu0 0.0
    %2634 = vmatprep.subr.mxu0 0.0
    %2635 = vmatpush1.msra.mxu0 0.0
    %2636 = vmatprep.subr.mxu0 0.0
    %2637 = vmatpush1.msra.mxu0 0.0
    %2638 = vmatprep.subr.mxu0 0.0
    %2639 = vmatpush1.msra.mxu0 0.0
    %2640 = vmatprep.subr.mxu0 0.0
    %2641 = vmatpush1.msra.mxu0 0.0
    %2642 = vmatprep.subr.mxu0 0.0
    %2643 = vmatpush1.msra.mxu0 0.0
    %2644 = vmatprep.subr.mxu0 0.0
    %2645 = vmatpush1.msra.mxu0 0.0
    %2646 = vmatprep.subr.mxu0 0.0
    %2647 = vmatpush1.msra.mxu0 0.0
    %2648 = vmatprep.subr.mxu0 0.0
    %2649 = vmatpush1.msra.mxu0 0.0
    %2650 = vmatprep.subr.mxu0 0.0
    %2651 = vmatpush1.msra.mxu0 0.0
    %2652 = vmatprep.subr.mxu0 0.0
    %2653 = vmatpush1.msra.mxu0 0.0
    %2654 = vmatprep.mubr.f32.mxu0 0.0
    %2655 = vmatmul.mubr.f32.gmra.mrb[0].mxu0 %v2567
    %v2656 = vpop.f32.mrb[0].mxu0
    %v2657 = vadd.f32 0.0, %v2656
    %v2658 = vpop.f32.mrb[0].mxu0
    %2659 = vmatprep.mubr.f32.mxu0 0.0
    %2660 = vmatmul.mubr.f32.gmra.mrb[0].mxu0 %v2570
    %v2661 = vpop.f32.mrb[0].mxu0
    %v2662 = vadd.f32 0.0, %v2661
    %v2663 = vpop.f32.mrb[0].mxu0
    %2664 = vmatprep.mubr.f32.mxu0 0.0
    %2665 = vmatmul.mubr.f32.gmra.mrb[0].mxu0 %v2573
    %v2666 = vpop.f32.mrb[0].mxu0
    %v2667 = vadd.f32 0.0, %v2666
    %v2668 = vpop.f32.mrb[0].mxu0
    %2669 = vmatprep.mubr.f32.mxu0 0.0
    %2670 = vmatmul.mubr.f32.gmra.mrb[0].mxu0 %v2576
    %v2671 = vpop.f32.mrb[0].mxu0
    %v2672 = vadd.f32 0.0, %v2671
    %v2673 = vpop.f32.mrb[0].mxu0
    %2674 = vmatprep.mubr.f32.mxu0 0.0
    %2675 = vmatmul.mubr.f32.gmra.mrb[0].mxu0 %v2579
    %v2676 = vpop.f32.mrb[0].mxu0
    %v2677 = vadd.f32 0.0, %v2676
    %v2678 = vpop.f32.mrb[0].mxu0
    %2679 = vmatprep.mubr.f32.mxu0 0.0
    %2680 = vmatmul.mubr.f32.gmra.mrb[0].mxu0 %v2582
    %v2681 = vpop.f32.mrb[0].mxu0
    %v2682 = vadd.f32 0.0, %v2681
    %v2683 = vpop.f32.mrb[0].mxu0
    %2684 = vmatprep.mubr.f32.mxu0 0.0
    %2685 = vmatmul.mubr.f32.gmra.mrb[0].mxu0 %v2585
    %v2686 = vpop.f32.mrb[0].mxu0
    %v2687 = vadd.f32 0.0, %v2686
    %v2688 = vpop.f32.mrb[0].mxu0
    %2689 = vmatprep.mubr.f32.mxu0 0.0
    %2690 = vmatmul.mubr.f32.gmra.mrb[0].mxu0 %v2588
    %v2691 = vpop.f32.mrb[0].mxu0
    %v2692 = vadd.f32 0.0, %v2691
    %v2693 = vpop.f32.mrb[0].mxu0
    %2694 = vdwg.mxu0
    %v2695 = vmul.f32 %v1989, %v1989
    %v2696 = vmul.f32 %v1994, %v1994
    %v2697 = vmul.f32 %v1999, %v1999
    %v2698 = vmul.f32 %v2004, %v2004
    %v2699 = vmul.f32 %v2227, %v2227
    %v2700 = vmul.f32 %v2232, %v2232
    %v2701 = vmul.f32 %v2237, %v2237
    %v2702 = vmul.f32 %v2242, %v2242
    %v2703 = vsel %vm222, %v2695, 0.0
    %2704 = vadd.xlane.f32.xlu0 %v2703
    %v2705 = vpop.xlane.xlu0 %2704
    %v2706 = vsel %vm222, %v2696, 0.0
    %2707 = vadd.xlane.f32.xlu0 %v2706
    %v2708 = vpop.xlane.xlu0 %2707
    %v2709 = vsel %vm222, %v2697, 0.0
    %2710 = vadd.xlane.f32.xlu0 %v2709
    %v2711 = vpop.xlane.xlu0 %2710
    %v2712 = vsel %vm222, %v2698, 0.0
    %2713 = vadd.xlane.f32.xlu0 %v2712
    %v2714 = vpop.xlane.xlu0 %2713
    %v2715 = vsel %vm222, %v2699, 0.0
    %2716 = vadd.xlane.f32.xlu0 %v2715
    %v2717 = vpop.xlane.xlu0 %2716
    %v2718 = vsel %vm222, %v2700, 0.0
    %2719 = vadd.xlane.f32.xlu0 %v2718
    %v2720 = vpop.xlane.xlu0 %2719
    %v2721 = vsel %vm222, %v2701, 0.0
    %2722 = vadd.xlane.f32.xlu0 %v2721
    %v2723 = vpop.xlane.xlu0 %2722
    %v2724 = vsel %vm222, %v2702, 0.0
    %2725 = vadd.xlane.f32.xlu0 %v2724
    %v2726 = vpop.xlane.xlu0 %2725
    %v2727 = vrsqrt.pop %v2705
    %v2728 = vmul.f32 %v2705, %v2727
    %vm2729 = vcmp.eq.f32.partialorder %v2705, inf
    %v2730 = vsel %vm2729, %v2705, %v2728
    %vm2731 = vcmp.eq.f32.partialorder %v2705, 0.0
    %v2732 = vand.u32 %v2705, 2147483648
    %v2733 = vsel %vm2731, %v2732, %v2730
    %v2734 = vrsqrt.pop %v2708
    %v2735 = vmul.f32 %v2708, %v2734
    %vm2736 = vcmp.eq.f32.partialorder %v2708, inf
    %v2737 = vsel %vm2736, %v2708, %v2735
    %vm2738 = vcmp.eq.f32.partialorder %v2708, 0.0
    %v2739 = vand.u32 %v2708, 2147483648
    %v2740 = vsel %vm2738, %v2739, %v2737
    %v2741 = vrsqrt.pop %v2711
    %v2742 = vmul.f32 %v2711, %v2741
    %vm2743 = vcmp.eq.f32.partialorder %v2711, inf
    %v2744 = vsel %vm2743, %v2711, %v2742
    %vm2745 = vcmp.eq.f32.partialorder %v2711, 0.0
    %v2746 = vand.u32 %v2711, 2147483648
    %v2747 = vsel %vm2745, %v2746, %v2744
    %v2748 = vrsqrt.pop %v2714
    %v2749 = vmul.f32 %v2714, %v2748
    %vm2750 = vcmp.eq.f32.partialorder %v2714, inf
    %v2751 = vsel %vm2750, %v2714, %v2749
    %vm2752 = vcmp.eq.f32.partialorder %v2714, 0.0
    %v2753 = vand.u32 %v2714, 2147483648
    %v2754 = vsel %vm2752, %v2753, %v2751
    %v2755 = vrsqrt.pop %v2717
    %v2756 = vmul.f32 %v2717, %v2755
    %vm2757 = vcmp.eq.f32.partialorder %v2717, inf
    %v2758 = vsel %vm2757, %v2717, %v2756
    %vm2759 = vcmp.eq.f32.partialorder %v2717, 0.0
    %v2760 = vand.u32 %v2717, 2147483648
    %v2761 = vsel %vm2759, %v2760, %v2758
    %v2762 = vrsqrt.pop %v2720
    %v2763 = vmul.f32 %v2720, %v2762
    %vm2764 = vcmp.eq.f32.partialorder %v2720, inf
    %v2765 = vsel %vm2764, %v2720, %v2763
    %vm2766 = vcmp.eq.f32.partialorder %v2720, 0.0
    %v2767 = vand.u32 %v2720, 2147483648
    %v2768 = vsel %vm2766, %v2767, %v2765
    %v2769 = vrsqrt.pop %v2723
    %v2770 = vmul.f32 %v2723, %v2769
    %vm2771 = vcmp.eq.f32.partialorder %v2723, inf
    %v2772 = vsel %vm2771, %v2723, %v2770
    %vm2773 = vcmp.eq.f32.partialorder %v2723, 0.0
    %v2774 = vand.u32 %v2723, 2147483648
    %v2775 = vsel %vm2773, %v2774, %v2772
    %v2776 = vrsqrt.pop %v2726
    %v2777 = vmul.f32 %v2726, %v2776
    %vm2778 = vcmp.eq.f32.partialorder %v2726, inf
    %v2779 = vsel %vm2778, %v2726, %v2777
    %vm2780 = vcmp.eq.f32.partialorder %v2726, 0.0
    %v2781 = vand.u32 %v2726, 2147483648
    %v2782 = vsel %vm2780, %v2781, %v2779
    %v2783 = vmax.f32 %v2733, 1e-12
    %v2784 = vmax.f32 %v2740, 1e-12
    %v2785 = vmax.f32 %v2747, 1e-12
    %v2786 = vmax.f32 %v2754, 1e-12
    %v2787 = vmax.f32 %v2761, 1e-12
    %v2788 = vmax.f32 %v2768, 1e-12
    %v2789 = vmax.f32 %v2775, 1e-12
    %v2790 = vmax.f32 %v2782, 1e-12
    %v2791 = vrcp.pop %v2783
    %v2792 = vmul.f32 %v1989, %v2791
    %v2793 = vrcp.pop %v2784
    %v2794 = vmul.f32 %v1994, %v2793
    %v2795 = vrcp.pop %v2785
    %v2796 = vmul.f32 %v1999, %v2795
    %v2797 = vrcp.pop %v2786
    %v2798 = vmul.f32 %v2004, %v2797
    %v2799 = vrcp.pop %v2787
    %v2800 = vmul.f32 %v2227, %v2799
    %v2801 = vrcp.pop %v2788
    %v2802 = vmul.f32 %v2232, %v2801
    %v2803 = vrcp.pop %v2789
    %v2804 = vmul.f32 %v2237, %v2803
    %v2805 = vrcp.pop %v2790
    %v2806 = vmul.f32 %v2242, %v2805
    %v2808 = vsel %vm222, %v2792, 0
    %v2811 = vsel %vm222, %v2794, 0
    %v2814 = vsel %vm222, %v2796, 0
    %v2817 = vsel %vm222, %v2798, 0
    %v2820 = vsel %vm222, %v2800, 0
    %v2823 = vsel %vm222, %v2802, 0
    %v2826 = vsel %vm222, %v2804, 0
    %v2829 = vsel %vm222, %v2806, 0
    %2831 = vmatprep.subr.mxu0 0.0
    %2832 = vmatpush1.xpose.msra.mxu0 %v2808
    %2833 = vmatprep.subr.mxu0 0.0
    %2834 = vmatpush1.xpose.msra.mxu0 %v2811
    %2835 = vmatprep.subr.mxu0 0.0
    %2836 = vmatpush1.xpose.msra.mxu0 %v2814
    %2837 = vmatprep.subr.mxu0 0.0
    %2838 = vmatpush1.xpose.msra.mxu0 %v2817
    %2839 = vmatprep.subr.mxu0 0.0
    %2840 = vmatpush1.xpose.msra.mxu0 %v2820
    %2841 = vmatprep.subr.mxu0 0.0
    %2842 = vmatpush1.xpose.msra.mxu0 %v2823
    %2843 = vmatprep.subr.mxu0 0.0
    %2844 = vmatpush1.xpose.msra.mxu0 %v2826
    %2845 = vmatprep.subr.mxu0 0.0
    %2846 = vmatpush1.xpose.msra.mxu0 %v2829
    %2847 = vmatprep.subr.mxu0 0.0
    %2848 = vmatpush1.xpose.msra.mxu0 0.0
    %2849 = vmatprep.subr.mxu0 0.0
    %2850 = vmatpush1.xpose.msra.mxu0 0.0
    %2851 = vmatprep.subr.mxu0 0.0
    %2852 = vmatpush1.xpose.msra.mxu0 0.0
    %2853 = vmatprep.subr.mxu0 0.0
    %2854 = vmatpush1.xpose.msra.mxu0 0.0
    %2855 = vmatprep.subr.mxu0 0.0
    %2856 = vmatpush1.xpose.msra.mxu0 0.0
    %2857 = vmatprep.subr.mxu0 0.0
    %2858 = vmatpush1.xpose.msra.mxu0 0.0
    %2859 = vmatprep.subr.mxu0 0.0
    %2860 = vmatpush1.xpose.msra.mxu0 0.0
    %2861 = vmatprep.subr.mxu0 0.0
    %2862 = vmatpush1.xpose.msra.mxu0 0.0
    %2863 = vmatprep.subr.mxu0 0.0
    %2864 = vmatpush1.xpose.msra.mxu0 0.0
    %2865 = vmatprep.subr.mxu0 0.0
    %2866 = vmatpush1.xpose.msra.mxu0 0.0
    %2867 = vmatprep.subr.mxu0 0.0
    %2868 = vmatpush1.xpose.msra.mxu0 0.0
    %2869 = vmatprep.subr.mxu0 0.0
    %2870 = vmatpush1.xpose.msra.mxu0 0.0
    %2871 = vmatprep.subr.mxu0 0.0
    %2872 = vmatpush1.xpose.msra.mxu0 0.0
    %2873 = vmatprep.subr.mxu0 0.0
    %2874 = vmatpush1.xpose.msra.mxu0 0.0
    %2875 = vmatprep.subr.mxu0 0.0
    %2876 = vmatpush1.xpose.msra.mxu0 0.0
    %2877 = vmatprep.subr.mxu0 0.0
    %2878 = vmatpush1.xpose.msra.mxu0 0.0
    %2879 = vmatprep.subr.mxu0 0.0
    %2880 = vmatpush1.xpose.msra.mxu0 0.0
    %2881 = vmatprep.subr.mxu0 0.0
    %2882 = vmatpush1.xpose.msra.mxu0 0.0
    %2883 = vmatprep.subr.mxu0 0.0
    %2884 = vmatpush1.xpose.msra.mxu0 0.0
    %2885 = vmatprep.subr.mxu0 0.0
    %2886 = vmatpush1.xpose.msra.mxu0 0.0
    %2887 = vmatprep.subr.mxu0 0.0
    %2888 = vmatpush1.xpose.msra.mxu0 0.0
    %2889 = vmatprep.subr.mxu0 0.0
    %2890 = vmatpush1.xpose.msra.mxu0 0.0
    %2891 = vmatprep.subr.mxu0 0.0
    %2892 = vmatpush1.xpose.msra.mxu0 0.0
    %2893 = vmatprep.subr.mxu0 0.0
    %2894 = vmatpush1.xpose.msra.mxu0 0.0
    %2895 = vmatprep.mubr.f32.mxu0 0.0
    %2896 = vmatmul.mubr.f32.gmra.mrb[0].mxu0 %v2808
    %v2897 = vpop.f32.mrb[0].mxu0
    %v2898 = vadd.f32 1.0, %v2897
    %v2899 = vpop.f32.mrb[0].mxu0
    %2900 = vmatprep.mubr.f32.mxu0 0.0
    %2901 = vmatmul.mubr.f32.gmra.mrb[0].mxu0 %v2811
    %v2902 = vpop.f32.mrb[0].mxu0
    %v2903 = vadd.f32 1.0, %v2902
    %v2904 = vpop.f32.mrb[0].mxu0
    %2905 = vmatprep.mubr.f32.mxu0 0.0
    %2906 = vmatmul.mubr.f32.gmra.mrb[0].mxu0 %v2814
    %v2907 = vpop.f32.mrb[0].mxu0
    %v2908 = vadd.f32 1.0, %v2907
    %v2909 = vpop.f32.mrb[0].mxu0
    %2910 = vmatprep.mubr.f32.mxu0 0.0
    %2911 = vmatmul.mubr.f32.gmra.mrb[0].mxu0 %v2817
    %v2912 = vpop.f32.mrb[0].mxu0
    %v2913 = vadd.f32 1.0, %v2912
    %v2914 = vpop.f32.mrb[0].mxu0
    %2915 = vmatprep.mubr.f32.mxu0 0.0
    %2916 = vmatmul.mubr.f32.gmra.mrb[0].mxu0 %v2820
    %v2917 = vpop.f32.mrb[0].mxu0
    %v2918 = vadd.f32 1.0, %v2917
    %v2919 = vpop.f32.mrb[0].mxu0
    %2920 = vmatprep.mubr.f32.mxu0 0.0
    %2921 = vmatmul.mubr.f32.gmra.mrb[0].mxu0 %v2823
    %v2922 = vpop.f32.mrb[0].mxu0
    %v2923 = vadd.f32 1.0, %v2922
    %v2924 = vpop.f32.mrb[0].mxu0
    %2925 = vmatprep.mubr.f32.mxu0 0.0
    %2926 = vmatmul.mubr.f32.gmra.mrb[0].mxu0 %v2826
    %v2927 = vpop.f32.mrb[0].mxu0
    %v2928 = vadd.f32 1.0, %v2927
    %v2929 = vpop.f32.mrb[0].mxu0
    %2930 = vmatprep.mubr.f32.mxu0 0.0
    %2931 = vmatmul.mubr.f32.gmra.mrb[0].mxu0 %v2829
    %v2932 = vpop.f32.mrb[0].mxu0
    %v2933 = vadd.f32 1.0, %v2932
    %v2934 = vpop.f32.mrb[0].mxu0
    %2935 = vdwg.mxu0
    %v2936 = vmul.f32 %v2898, 0.5
    %v2937 = vmul.f32 %v2903, 0.5
    %v2938 = vmul.f32 %v2908, 0.5
    %v2939 = vmul.f32 %v2913, 0.5
    %v2940 = vmul.f32 %v2918, 0.5
    %v2941 = vmul.f32 %v2923, 0.5
    %v2942 = vmul.f32 %v2928, 0.5
    %v2943 = vmul.f32 %v2933, 0.5
    %v2944 = vmul.f32 %v2936, %v68
    %v2945 = vmul.f32 %v2937, %v69
    %v2946 = vmul.f32 %v2938, %v70
    %v2947 = vmul.f32 %v2939, %v71
    %v2948 = vmul.f32 %v2940, %v72
    %v2949 = vmul.f32 %v2941, %v73
    %v2950 = vmul.f32 %v2942, %v74
    %v2951 = vmul.f32 %v2943, %v75
    %v2952 = vsel %vm92, %v2944, 0.0
    %2953 = vadd.xlane.f32.xlu0 %v2952
    %v2954 = vpop.xlane.xlu0 %2953
    %v2955 = vsel %vm92, %v2945, 0.0
    %2956 = vadd.xlane.f32.xlu0 %v2955
    %v2957 = vpop.xlane.xlu0 %2956
    %v2958 = vsel %vm92, %v2946, 0.0
    %2959 = vadd.xlane.f32.xlu0 %v2958
    %v2960 = vpop.xlane.xlu0 %2959
    %v2961 = vsel %vm92, %v2947, 0.0
    %2962 = vadd.xlane.f32.xlu0 %v2961
    %v2963 = vpop.xlane.xlu0 %2962
    %v2964 = vsel %vm92, %v2948, 0.0
    %2965 = vadd.xlane.f32.xlu0 %v2964
    %v2966 = vpop.xlane.xlu0 %2965
    %v2967 = vsel %vm92, %v2949, 0.0
    %2968 = vadd.xlane.f32.xlu0 %v2967
    %v2969 = vpop.xlane.xlu0 %2968
    %v2970 = vsel %vm92, %v2950, 0.0
    %2971 = vadd.xlane.f32.xlu0 %v2970
    %v2972 = vpop.xlane.xlu0 %2971
    %v2973 = vsel %vm92, %v2951, 0.0
    %2974 = vadd.xlane.f32.xlu0 %v2973
    %v2975 = vpop.xlane.xlu0 %2974
    %vm2976 = vcmp.gt.f32.partialorder %v2954, 0.0
    %vm2977 = vcmp.gt.f32.partialorder %v2957, 0.0
    %vm2978 = vcmp.gt.f32.partialorder %v2960, 0.0
    %vm2979 = vcmp.gt.f32.partialorder %v2963, 0.0
    %vm2980 = vcmp.gt.f32.partialorder %v2966, 0.0
    %vm2981 = vcmp.gt.f32.partialorder %v2969, 0.0
    %vm2982 = vcmp.gt.f32.partialorder %v2972, 0.0
    %vm2983 = vcmp.gt.f32.partialorder %v2975, 0.0
    %v2984 = vrcp.pop %v2954
    %v2985 = vmul.f32 1.0, %v2984
    %v2986 = vrcp.pop %v2957
    %v2987 = vmul.f32 1.0, %v2986
    %v2988 = vrcp.pop %v2960
    %v2989 = vmul.f32 1.0, %v2988
    %v2990 = vrcp.pop %v2963
    %v2991 = vmul.f32 1.0, %v2990
    %v2992 = vrcp.pop %v2966
    %v2993 = vmul.f32 1.0, %v2992
    %v2994 = vrcp.pop %v2969
    %v2995 = vmul.f32 1.0, %v2994
    %v2996 = vrcp.pop %v2972
    %v2997 = vmul.f32 1.0, %v2996
    %v2998 = vrcp.pop %v2975
    %v2999 = vmul.f32 1.0, %v2998
    %v3000 = vsel %vm2976, %v2985, 0.0
    %v3001 = vsel %vm2977, %v2987, 0.0
    %v3002 = vsel %vm2978, %v2989, 0.0
    %v3003 = vsel %vm2979, %v2991, 0.0
    %v3004 = vsel %vm2980, %v2993, 0.0
    %v3005 = vsel %vm2981, %v2995, 0.0
    %v3006 = vsel %vm2982, %v2997, 0.0
    %v3007 = vsel %vm2983, %v2999, 0.0
    %v3008 = vmul.f32 %v2944, %v3000
    %v3009 = vmul.f32 %v2945, %v3001
    %v3010 = vmul.f32 %v2946, %v3002
    %v3011 = vmul.f32 %v2947, %v3003
    %v3012 = vmul.f32 %v2948, %v3004
    %v3013 = vmul.f32 %v2949, %v3005
    %v3014 = vmul.f32 %v2950, %v3006
    %v3015 = vmul.f32 %v2951, %v3007
    %v3017 = vsel %vm92, %v3008, 0
    %v3020 = vsel %vm92, %v3009, 0
    %v3023 = vsel %vm92, %v3010, 0
    %v3026 = vsel %vm92, %v3011, 0
    %v3029 = vsel %vm92, %v3012, 0
    %v3032 = vsel %vm92, %v3013, 0
    %v3035 = vsel %vm92, %v3014, 0
    %v3038 = vsel %vm92, %v3015, 0
    %3040 = vmatprep.subr.mxu0 0.0
    %3041 = vmatpush1.msra.mxu0 %v1648
    %3042 = vmatprep.subr.mxu0 0.0
    %3043 = vmatpush1.msra.mxu0 %v1649
    %3044 = vmatprep.subr.mxu0 0.0
    %3045 = vmatpush1.msra.mxu0 %v1650
    %3046 = vmatprep.subr.mxu0 0.0
    %3047 = vmatpush1.msra.mxu0 %v1651
    %3048 = vmatprep.subr.mxu0 0.0
    %3049 = vmatpush1.msra.mxu0 %v1652
    %3050 = vmatprep.subr.mxu0 0.0
    %3051 = vmatpush1.msra.mxu0 %v1653
    %3052 = vmatprep.subr.mxu0 0.0
    %3053 = vmatpush1.msra.mxu0 %v1654
    %3054 = vmatprep.subr.mxu0 0.0
    %3055 = vmatpush1.msra.mxu0 %v1655
    %3056 = vmatprep.subr.mxu0 0.0
    %3057 = vmatpush1.msra.mxu0 0.0
    %3058 = vmatprep.subr.mxu0 0.0
    %3059 = vmatpush1.msra.mxu0 0.0
    %3060 = vmatprep.subr.mxu0 0.0
    %3061 = vmatpush1.msra.mxu0 0.0
    %3062 = vmatprep.subr.mxu0 0.0
    %3063 = vmatpush1.msra.mxu0 0.0
    %3064 = vmatprep.subr.mxu0 0.0
    %3065 = vmatpush1.msra.mxu0 0.0
    %3066 = vmatprep.subr.mxu0 0.0
    %3067 = vmatpush1.msra.mxu0 0.0
    %3068 = vmatprep.subr.mxu0 0.0
    %3069 = vmatpush1.msra.mxu0 0.0
    %3070 = vmatprep.subr.mxu0 0.0
    %3071 = vmatpush1.msra.mxu0 0.0
    %3072 = vmatprep.subr.mxu0 0.0
    %3073 = vmatpush1.msra.mxu0 0.0
    %3074 = vmatprep.subr.mxu0 0.0
    %3075 = vmatpush1.msra.mxu0 0.0
    %3076 = vmatprep.subr.mxu0 0.0
    %3077 = vmatpush1.msra.mxu0 0.0
    %3078 = vmatprep.subr.mxu0 0.0
    %3079 = vmatpush1.msra.mxu0 0.0
    %3080 = vmatprep.subr.mxu0 0.0
    %3081 = vmatpush1.msra.mxu0 0.0
    %3082 = vmatprep.subr.mxu0 0.0
    %3083 = vmatpush1.msra.mxu0 0.0
    %3084 = vmatprep.subr.mxu0 0.0
    %3085 = vmatpush1.msra.mxu0 0.0
    %3086 = vmatprep.subr.mxu0 0.0
    %3087 = vmatpush1.msra.mxu0 0.0
    %3088 = vmatprep.subr.mxu0 0.0
    %3089 = vmatpush1.msra.mxu0 0.0
    %3090 = vmatprep.subr.mxu0 0.0
    %3091 = vmatpush1.msra.mxu0 0.0
    %3092 = vmatprep.subr.mxu0 0.0
    %3093 = vmatpush1.msra.mxu0 0.0
    %3094 = vmatprep.subr.mxu0 0.0
    %3095 = vmatpush1.msra.mxu0 0.0
    %3096 = vmatprep.subr.mxu0 0.0
    %3097 = vmatpush1.msra.mxu0 0.0
    %3098 = vmatprep.subr.mxu0 0.0
    %3099 = vmatpush1.msra.mxu0 0.0
    %3100 = vmatprep.subr.mxu0 0.0
    %3101 = vmatpush1.msra.mxu0 0.0
    %3102 = vmatprep.subr.mxu0 0.0
    %3103 = vmatpush1.msra.mxu0 0.0
    %3104 = vmatprep.mubr.f32.mxu0 0.0
    %3105 = vmatmul.mubr.f32.gmra.mrb[0].mxu0 %v3017
    %v3106 = vpop.f32.mrb[0].mxu0
    %v3107 = vadd.f32 0.0, %v3106
    %v3108 = vpop.f32.mrb[0].mxu0
    %3109 = vmatprep.mubr.f32.mxu0 0.0
    %3110 = vmatmul.mubr.f32.gmra.mrb[0].mxu0 %v3020
    %v3111 = vpop.f32.mrb[0].mxu0
    %v3112 = vadd.f32 0.0, %v3111
    %v3113 = vpop.f32.mrb[0].mxu0
    %3114 = vmatprep.mubr.f32.mxu0 0.0
    %3115 = vmatmul.mubr.f32.gmra.mrb[0].mxu0 %v3023
    %v3116 = vpop.f32.mrb[0].mxu0
    %v3117 = vadd.f32 0.0, %v3116
    %v3118 = vpop.f32.mrb[0].mxu0
    %3119 = vmatprep.mubr.f32.mxu0 0.0
    %3120 = vmatmul.mubr.f32.gmra.mrb[0].mxu0 %v3026
    %v3121 = vpop.f32.mrb[0].mxu0
    %v3122 = vadd.f32 0.0, %v3121
    %v3123 = vpop.f32.mrb[0].mxu0
    %3124 = vmatprep.mubr.f32.mxu0 0.0
    %3125 = vmatmul.mubr.f32.gmra.mrb[0].mxu0 %v3029
    %v3126 = vpop.f32.mrb[0].mxu0
    %v3127 = vadd.f32 0.0, %v3126
    %v3128 = vpop.f32.mrb[0].mxu0
    %3129 = vmatprep.mubr.f32.mxu0 0.0
    %3130 = vmatmul.mubr.f32.gmra.mrb[0].mxu0 %v3032
    %v3131 = vpop.f32.mrb[0].mxu0
    %v3132 = vadd.f32 0.0, %v3131
    %v3133 = vpop.f32.mrb[0].mxu0
    %3134 = vmatprep.mubr.f32.mxu0 0.0
    %3135 = vmatmul.mubr.f32.gmra.mrb[0].mxu0 %v3035
    %v3136 = vpop.f32.mrb[0].mxu0
    %v3137 = vadd.f32 0.0, %v3136
    %v3138 = vpop.f32.mrb[0].mxu0
    %3139 = vmatprep.mubr.f32.mxu0 0.0
    %3140 = vmatmul.mubr.f32.gmra.mrb[0].mxu0 %v3038
    %v3141 = vpop.f32.mrb[0].mxu0
    %v3142 = vadd.f32 0.0, %v3141
    %v3143 = vpop.f32.mrb[0].mxu0
    %3144 = vdwg.mxu0
    %v3145 = vadd.f32 %v1731, %v1989
    %v3146 = vadd.f32 %v1736, %v1994
    %v3147 = vadd.f32 %v1741, %v1999
    %v3148 = vadd.f32 %v1746, %v2004
    %v3149 = vadd.f32 %v1751, %v2227
    %v3150 = vadd.f32 %v1756, %v2232
    %v3151 = vadd.f32 %v1761, %v2237
    %v3152 = vadd.f32 %v1766, %v2242
    %v3153 = vadd.f32 %v3145, %v2657
    %v3154 = vadd.f32 %v3146, %v2662
    %v3155 = vadd.f32 %v3147, %v2667
    %v3156 = vadd.f32 %v3148, %v2672
    %v3157 = vadd.f32 %v3149, %v2677
    %v3158 = vadd.f32 %v3150, %v2682
    %v3159 = vadd.f32 %v3151, %v2687
    %v3160 = vadd.f32 %v3152, %v2692
    %v3161 = vadd.f32 %v3153, %v3107
    %v3162 = vadd.f32 %v3154, %v3112
    %v3163 = vadd.f32 %v3155, %v3117
    %v3164 = vadd.f32 %v3156, %v3122
    %v3165 = vadd.f32 %v3157, %v3127
    %v3166 = vadd.f32 %v3158, %v3132
    %v3167 = vadd.f32 %v3159, %v3137
    %v3168 = vadd.f32 %v3160, %v3142
    %v3169 = vadd.f32 %v3161, %v1648
    %v3170 = vadd.f32 %v3162, %v1649
    %v3171 = vadd.f32 %v3163, %v1650
    %v3172 = vadd.f32 %v3164, %v1651
    %v3173 = vadd.f32 %v3165, %v1652
    %v3174 = vadd.f32 %v3166, %v1653
    %v3175 = vadd.f32 %v3167, %v1654
    %v3176 = vadd.f32 %v3168, %v1655
    %v3177 = vadd.f32 %v1656, %v3169
    %v3178 = vadd.f32 %v1657, %v3170
    %v3179 = vadd.f32 %v1658, %v3171
    %v3180 = vadd.f32 %v1659, %v3172
    %v3181 = vadd.f32 %v1660, %v3173
    %v3182 = vadd.f32 %v1661, %v3174
    %v3183 = vadd.f32 %v1662, %v3175
    %v3184 = vadd.f32 %v1663, %v3176
    %v3185 = vlaneseq
    %v3186 = vand.u32 %v3185, 127
    %v3187 = vld [vmem:[%s0] sm:$0xff]
    %3188 = vset.pattern.permute.xlu0 0
    %3189 = vperm.xlu0 %3188, %v3187
    %v3190 = vpop.permute.xlu0 %3189
    %vm3191 = vcmp.eq.s32.totalorder %v3186, %v3190
    %v3192 = vsel %vm3191, 1.0, 0.0
    %v3193 = vld [vmem:[%s1] sm:$0xff]
    %3194 = vset.pattern.permute.xlu0 0
    %3195 = vperm.xlu0 %3194, %v3193
    %v3196 = vpop.permute.xlu0 %3195
    %vm3197 = vcmp.eq.s32.totalorder %v3186, %v3196
    %v3198 = vsel %vm3197, 1.0, 0.0
    %v3199 = vld [vmem:[%s2] sm:$0xff]
    %3200 = vset.pattern.permute.xlu0 0
    %3201 = vperm.xlu0 %3200, %v3199
    %v3202 = vpop.permute.xlu0 %3201
    %vm3203 = vcmp.eq.s32.totalorder %v3186, %v3202
    %v3204 = vsel %vm3203, 1.0, 0.0
    %v3206 = vsel %vm222, %v3192, 0
    %3208 = vmatprep.subr.mxu0 0.0
    %3209 = vmatpush1.msra.mxu0 %v3177
    %3210 = vmatprep.subr.mxu0 0.0
    %3211 = vmatpush1.msra.mxu0 %v3178
    %3212 = vmatprep.subr.mxu0 0.0
    %3213 = vmatpush1.msra.mxu0 %v3179
    %3214 = vmatprep.subr.mxu0 0.0
    %3215 = vmatpush1.msra.mxu0 %v3180
    %3216 = vmatprep.subr.mxu0 0.0
    %3217 = vmatpush1.msra.mxu0 0.0
    %3218 = vmatprep.subr.mxu0 0.0
    %3219 = vmatpush1.msra.mxu0 0.0
    %3220 = vmatprep.subr.mxu0 0.0
    %3221 = vmatpush1.msra.mxu0 0.0
    %3222 = vmatprep.subr.mxu0 0.0
    %3223 = vmatpush1.msra.mxu0 0.0
    %3224 = vmatprep.subr.mxu0 0.0
    %3225 = vmatpush1.msra.mxu0 0.0
    %3226 = vmatprep.subr.mxu0 0.0
    %3227 = vmatpush1.msra.mxu0 0.0
    %3228 = vmatprep.subr.mxu0 0.0
    %3229 = vmatpush1.msra.mxu0 0.0
    %3230 = vmatprep.subr.mxu0 0.0
    %3231 = vmatpush1.msra.mxu0 0.0
    %3232 = vmatprep.subr.mxu0 0.0
    %3233 = vmatpush1.msra.mxu0 0.0
    %3234 = vmatprep.subr.mxu0 0.0
    %3235 = vmatpush1.msra.mxu0 0.0
    %3236 = vmatprep.subr.mxu0 0.0
    %3237 = vmatpush1.msra.mxu0 0.0
    %3238 = vmatprep.subr.mxu0 0.0
    %3239 = vmatpush1.msra.mxu0 0.0
    %3240 = vmatprep.subr.mxu0 0.0
    %3241 = vmatpush1.msra.mxu0 0.0
    %3242 = vmatprep.subr.mxu0 0.0
    %3243 = vmatpush1.msra.mxu0 0.0
    %3244 = vmatprep.subr.mxu0 0.0
    %3245 = vmatpush1.msra.mxu0 0.0
    %3246 = vmatprep.subr.mxu0 0.0
    %3247 = vmatpush1.msra.mxu0 0.0
    %3248 = vmatprep.subr.mxu0 0.0
    %3249 = vmatpush1.msra.mxu0 0.0
    %3250 = vmatprep.subr.mxu0 0.0
    %3251 = vmatpush1.msra.mxu0 0.0
    %3252 = vmatprep.subr.mxu0 0.0
    %3253 = vmatpush1.msra.mxu0 0.0
    %3254 = vmatprep.subr.mxu0 0.0
    %3255 = vmatpush1.msra.mxu0 0.0
    %3256 = vmatprep.subr.mxu0 0.0
    %3257 = vmatpush1.msra.mxu0 0.0
    %3258 = vmatprep.subr.mxu0 0.0
    %3259 = vmatpush1.msra.mxu0 0.0
    %3260 = vmatprep.subr.mxu0 0.0
    %3261 = vmatpush1.msra.mxu0 0.0
    %3262 = vmatprep.subr.mxu0 0.0
    %3263 = vmatpush1.msra.mxu0 0.0
    %3264 = vmatprep.subr.mxu0 0.0
    %3265 = vmatpush1.msra.mxu0 0.0
    %3266 = vmatprep.subr.mxu0 0.0
    %3267 = vmatpush1.msra.mxu0 0.0
    %3268 = vmatprep.subr.mxu0 0.0
    %3269 = vmatpush1.msra.mxu0 0.0
    %3270 = vmatprep.subr.mxu0 0.0
    %3271 = vmatpush1.msra.mxu0 0.0
    %3272 = vmatprep.mubr.f32.mxu0 0.0
    %3273 = vmatmul.mubr.f32.gmra.mrb[0].mxu0 %v3206
    %v3274 = vpop.f32.mrb[0].mxu0
    %v3275 = vadd.f32 0.0, %v3274
    %v3276 = vpop.f32.mrb[0].mxu0
    %3277 = vdwg.mxu0
    %v3279 = vsel %vm222, %v3198, 0
    %3281 = vmatprep.subr.mxu0 0.0
    %3282 = vmatpush1.msra.mxu0 %v3181
    %3283 = vmatprep.subr.mxu0 0.0
    %3284 = vmatpush1.msra.mxu0 %v3182
    %3285 = vmatprep.subr.mxu0 0.0
    %3286 = vmatpush1.msra.mxu0 %v3183
    %3287 = vmatprep.subr.mxu0 0.0
    %3288 = vmatpush1.msra.mxu0 %v3184
    %3289 = vmatprep.subr.mxu0 0.0
    %3290 = vmatpush1.msra.mxu0 0.0
    %3291 = vmatprep.subr.mxu0 0.0
    %3292 = vmatpush1.msra.mxu0 0.0
    %3293 = vmatprep.subr.mxu0 0.0
    %3294 = vmatpush1.msra.mxu0 0.0
    %3295 = vmatprep.subr.mxu0 0.0
    %3296 = vmatpush1.msra.mxu0 0.0
    %3297 = vmatprep.subr.mxu0 0.0
    %3298 = vmatpush1.msra.mxu0 0.0
    %3299 = vmatprep.subr.mxu0 0.0
    %3300 = vmatpush1.msra.mxu0 0.0
    %3301 = vmatprep.subr.mxu0 0.0
    %3302 = vmatpush1.msra.mxu0 0.0
    %3303 = vmatprep.subr.mxu0 0.0
    %3304 = vmatpush1.msra.mxu0 0.0
    %3305 = vmatprep.subr.mxu0 0.0
    %3306 = vmatpush1.msra.mxu0 0.0
    %3307 = vmatprep.subr.mxu0 0.0
    %3308 = vmatpush1.msra.mxu0 0.0
    %3309 = vmatprep.subr.mxu0 0.0
    %3310 = vmatpush1.msra.mxu0 0.0
    %3311 = vmatprep.subr.mxu0 0.0
    %3312 = vmatpush1.msra.mxu0 0.0
    %3313 = vmatprep.subr.mxu0 0.0
    %3314 = vmatpush1.msra.mxu0 0.0
    %3315 = vmatprep.subr.mxu0 0.0
    %3316 = vmatpush1.msra.mxu0 0.0
    %3317 = vmatprep.subr.mxu0 0.0
    %3318 = vmatpush1.msra.mxu0 0.0
    %3319 = vmatprep.subr.mxu0 0.0
    %3320 = vmatpush1.msra.mxu0 0.0
    %3321 = vmatprep.subr.mxu0 0.0
    %3322 = vmatpush1.msra.mxu0 0.0
    %3323 = vmatprep.subr.mxu0 0.0
    %3324 = vmatpush1.msra.mxu0 0.0
    %3325 = vmatprep.subr.mxu0 0.0
    %3326 = vmatpush1.msra.mxu0 0.0
    %3327 = vmatprep.subr.mxu0 0.0
    %3328 = vmatpush1.msra.mxu0 0.0
    %3329 = vmatprep.subr.mxu0 0.0
    %3330 = vmatpush1.msra.mxu0 0.0
    %3331 = vmatprep.subr.mxu0 0.0
    %3332 = vmatpush1.msra.mxu0 0.0
    %3333 = vmatprep.subr.mxu0 0.0
    %3334 = vmatpush1.msra.mxu0 0.0
    %3335 = vmatprep.subr.mxu0 0.0
    %3336 = vmatpush1.msra.mxu0 0.0
    %3337 = vmatprep.subr.mxu0 0.0
    %3338 = vmatpush1.msra.mxu0 0.0
    %3339 = vmatprep.subr.mxu0 0.0
    %3340 = vmatpush1.msra.mxu0 0.0
    %3341 = vmatprep.subr.mxu0 0.0
    %3342 = vmatpush1.msra.mxu0 0.0
    %3343 = vmatprep.subr.mxu0 0.0
    %3344 = vmatpush1.msra.mxu0 0.0
    %3345 = vmatprep.mubr.f32.mxu0 0.0
    %3346 = vmatmul.mubr.f32.gmra.mrb[0].mxu0 %v3279
    %v3347 = vpop.f32.mrb[0].mxu0
    %v3348 = vadd.f32 0.0, %v3347
    %v3349 = vpop.f32.mrb[0].mxu0
    %3350 = vdwg.mxu0
    %v3352 = vsel %vm222, %v3204, 0
    %3354 = vmatprep.subr.mxu0 0.0
    %3355 = vmatpush1.msra.mxu0 %v3181
    %3356 = vmatprep.subr.mxu0 0.0
    %3357 = vmatpush1.msra.mxu0 %v3182
    %3358 = vmatprep.subr.mxu0 0.0
    %3359 = vmatpush1.msra.mxu0 %v3183
    %3360 = vmatprep.subr.mxu0 0.0
    %3361 = vmatpush1.msra.mxu0 %v3184
    %3362 = vmatprep.subr.mxu0 0.0
    %3363 = vmatpush1.msra.mxu0 0.0
    %3364 = vmatprep.subr.mxu0 0.0
    %3365 = vmatpush1.msra.mxu0 0.0
    %3366 = vmatprep.subr.mxu0 0.0
    %3367 = vmatpush1.msra.mxu0 0.0
    %3368 = vmatprep.subr.mxu0 0.0
    %3369 = vmatpush1.msra.mxu0 0.0
    %3370 = vmatprep.subr.mxu0 0.0
    %3371 = vmatpush1.msra.mxu0 0.0
    %3372 = vmatprep.subr.mxu0 0.0
    %3373 = vmatpush1.msra.mxu0 0.0
    %3374 = vmatprep.subr.mxu0 0.0
    %3375 = vmatpush1.msra.mxu0 0.0
    %3376 = vmatprep.subr.mxu0 0.0
    %3377 = vmatpush1.msra.mxu0 0.0
    %3378 = vmatprep.subr.mxu0 0.0
    %3379 = vmatpush1.msra.mxu0 0.0
    %3380 = vmatprep.subr.mxu0 0.0
    %3381 = vmatpush1.msra.mxu0 0.0
    %3382 = vmatprep.subr.mxu0 0.0
    %3383 = vmatpush1.msra.mxu0 0.0
    %3384 = vmatprep.subr.mxu0 0.0
    %3385 = vmatpush1.msra.mxu0 0.0
    %3386 = vmatprep.subr.mxu0 0.0
    %3387 = vmatpush1.msra.mxu0 0.0
    %3388 = vmatprep.subr.mxu0 0.0
    %3389 = vmatpush1.msra.mxu0 0.0
    %3390 = vmatprep.subr.mxu0 0.0
    %3391 = vmatpush1.msra.mxu0 0.0
    %3392 = vmatprep.subr.mxu0 0.0
    %3393 = vmatpush1.msra.mxu0 0.0
    %3394 = vmatprep.subr.mxu0 0.0
    %3395 = vmatpush1.msra.mxu0 0.0
    %3396 = vmatprep.subr.mxu0 0.0
    %3397 = vmatpush1.msra.mxu0 0.0
    %3398 = vmatprep.subr.mxu0 0.0
    %3399 = vmatpush1.msra.mxu0 0.0
    %3400 = vmatprep.subr.mxu0 0.0
    %3401 = vmatpush1.msra.mxu0 0.0
    %3402 = vmatprep.subr.mxu0 0.0
    %3403 = vmatpush1.msra.mxu0 0.0
    %3404 = vmatprep.subr.mxu0 0.0
    %3405 = vmatpush1.msra.mxu0 0.0
    %3406 = vmatprep.subr.mxu0 0.0
    %3407 = vmatpush1.msra.mxu0 0.0
    %3408 = vmatprep.subr.mxu0 0.0
    %3409 = vmatpush1.msra.mxu0 0.0
    %3410 = vmatprep.subr.mxu0 0.0
    %3411 = vmatpush1.msra.mxu0 0.0
    %3412 = vmatprep.subr.mxu0 0.0
    %3413 = vmatpush1.msra.mxu0 0.0
    %3414 = vmatprep.subr.mxu0 0.0
    %3415 = vmatpush1.msra.mxu0 0.0
    %3416 = vmatprep.subr.mxu0 0.0
    %3417 = vmatpush1.msra.mxu0 0.0
    %3418 = vmatprep.mubr.f32.mxu0 0.0
    %3419 = vmatmul.mubr.f32.gmra.mrb[0].mxu0 %v3352
    %v3420 = vpop.f32.mrb[0].mxu0
    %v3421 = vadd.f32 0.0, %v3420
    %v3422 = vpop.f32.mrb[0].mxu0
    %3423 = vdwg.mxu0
    %v3424 = vmul.f32 %v3275, %v3348
    %v3425 = vsel %vm222, %v3424, 0.0
    %3426 = vadd.xlane.f32.xlu0 %v3425
    %v3427 = vpop.xlane.xlu0 %3426
    %v3428 = vmul.f32 %v3275, %v3421
    %v3429 = vsel %vm222, %v3428, 0.0
    %3430 = vadd.xlane.f32.xlu0 %v3429
    %v3431 = vpop.xlane.xlu0 %3430
    %v3432 = vsub.f32 %v3431, %v3427
    %v3433 = vmax.f32 %v3432, 0.0
    %v3434 = vand.u32 2147483647, %v3432
    %v3435 = vsub.f32 0.0, %v3434
    %v3436 = vmul.f32 %v3435, 1.442695
    %v3437 = vpow.pop %v3436
    %v3438 = vadd.f32 %v3437, 1.0
    %v3439 = vlog2.pop %v3438
    %v3440 = vmul.f32 %v3439, 0.6931472
    %v3441 = vmul.f32 -0.5, %v3437
    %v3442 = vadd.f32 %v3441, 1.0
    %v3443 = vmul.f32 %v3442, %v3437
    %v3444 = vand.u32 2147483647, %v3437
    %vm3445 = vcmp.lt.f32.partialorder %v3444, 0.0004427343
    %v3446 = vsel %vm3445, %v3443, %v3440
    %v3447 = vadd.f32 %v3433, %v3446
    %v3448 = vrot.slane %v3447, 4
    %v3449 = vadd.f32 %v3447, %v3448
    %v3450 = vrot.slane %v3449, 2
    %v3451 = vadd.f32 %v3449, %v3450
    %v3452 = vrot.slane %v3451, 1
    %v3453 = vadd.f32 %v3451, %v3452
    %v3454 = vrcp.pop 8.0
    %v3455 = vmul.f32 %v3453, %v3454
    %3456 = vmatprep.subr.mxu0 0.0
    %3457 = vmatpush1.msra.mxu0 %v76
    %3458 = vmatprep.subr.mxu0 0.0
    %3459 = vmatpush1.msra.mxu0 %v77
    %3460 = vmatprep.subr.mxu0 0.0
    %3461 = vmatpush1.msra.mxu0 %v78
    %3462 = vmatprep.subr.mxu0 0.0
    %3463 = vmatpush1.msra.mxu0 %v79
    %3464 = vmatprep.subr.mxu0 0.0
    %3465 = vmatpush1.msra.mxu0 0.0
    %3466 = vmatprep.subr.mxu0 0.0
    %3467 = vmatpush1.msra.mxu0 0.0
    %3468 = vmatprep.subr.mxu0 0.0
    %3469 = vmatpush1.msra.mxu0 0.0
    %3470 = vmatprep.subr.mxu0 0.0
    %3471 = vmatpush1.msra.mxu0 0.0
    %3472 = vmatprep.subr.mxu0 0.0
    %3473 = vmatpush1.msra.mxu0 0.0
    %3474 = vmatprep.subr.mxu0 0.0
    %3475 = vmatpush1.msra.mxu0 0.0
    %3476 = vmatprep.subr.mxu0 0.0
    %3477 = vmatpush1.msra.mxu0 0.0
    %3478 = vmatprep.subr.mxu0 0.0
    %3479 = vmatpush1.msra.mxu0 0.0
    %3480 = vmatprep.subr.mxu0 0.0
    %3481 = vmatpush1.msra.mxu0 0.0
    %3482 = vmatprep.subr.mxu0 0.0
    %3483 = vmatpush1.msra.mxu0 0.0
    %3484 = vmatprep.subr.mxu0 0.0
    %3485 = vmatpush1.msra.mxu0 0.0
    %3486 = vmatprep.subr.mxu0 0.0
    %3487 = vmatpush1.msra.mxu0 0.0
    %3488 = vmatprep.subr.mxu0 0.0
    %3489 = vmatpush1.msra.mxu0 0.0
    %3490 = vmatprep.subr.mxu0 0.0
    %3491 = vmatpush1.msra.mxu0 0.0
    %3492 = vmatprep.subr.mxu0 0.0
    %3493 = vmatpush1.msra.mxu0 0.0
    %3494 = vmatprep.subr.mxu0 0.0
    %3495 = vmatpush1.msra.mxu0 0.0
    %3496 = vmatprep.subr.mxu0 0.0
    %3497 = vmatpush1.msra.mxu0 0.0
    %3498 = vmatprep.subr.mxu0 0.0
    %3499 = vmatpush1.msra.mxu0 0.0
    %3500 = vmatprep.subr.mxu0 0.0
    %3501 = vmatpush1.msra.mxu0 0.0
    %3502 = vmatprep.subr.mxu0 0.0
    %3503 = vmatpush1.msra.mxu0 0.0
    %3504 = vmatprep.subr.mxu0 0.0
    %3505 = vmatpush1.msra.mxu0 0.0
    %3506 = vmatprep.subr.mxu0 0.0
    %3507 = vmatpush1.msra.mxu0 0.0
    %3508 = vmatprep.subr.mxu0 0.0
    %3509 = vmatpush1.msra.mxu0 0.0
    %3510 = vmatprep.subr.mxu0 0.0
    %3511 = vmatpush1.msra.mxu0 0.0
    %3512 = vmatprep.subr.mxu0 0.0
    %3513 = vmatpush1.msra.mxu0 0.0
    %3514 = vmatprep.subr.mxu0 0.0
    %3515 = vmatpush1.msra.mxu0 0.0
    %3516 = vmatprep.subr.mxu0 0.0
    %3517 = vmatpush1.msra.mxu0 0.0
    %3518 = vmatprep.subr.mxu0 0.0
    %3519 = vmatpush1.msra.mxu0 0.0
    %3520 = vmatprep.mubr.f32.mxu0 0.0
    %3521 = vmatmul.mubr.f32.gmra.mrb[0].mxu0 %v3206
    %v3522 = vpop.f32.mrb[0].mxu0
    %v3523 = vadd.f32 0.0, %v3522
    %v3524 = vpop.f32.mrb[0].mxu0
    %3525 = vdwg.mxu0
    %v3526 = vmul.f32 %v3523, %v3523
    %v3527 = vsel %vm222, %v3526, 0.0
    %3528 = vadd.xlane.f32.xlu0 %v3527
    %v3529 = vpop.xlane.xlu0 %3528
    %v3530 = vrot.slane %v3529, 4
    %v3531 = vadd.f32 %v3529, %v3530
    %v3532 = vrot.slane %v3531, 2
    %v3533 = vadd.f32 %v3531, %v3532
    %v3534 = vrot.slane %v3533, 1
    %v3535 = vadd.f32 %v3533, %v3534
    %3536 = vmatprep.subr.mxu0 0.0
    %3537 = vmatpush1.msra.mxu0 %v80
    %3538 = vmatprep.subr.mxu0 0.0
    %3539 = vmatpush1.msra.mxu0 %v81
    %3540 = vmatprep.subr.mxu0 0.0
    %3541 = vmatpush1.msra.mxu0 %v82
    %3542 = vmatprep.subr.mxu0 0.0
    %3543 = vmatpush1.msra.mxu0 %v83
    %3544 = vmatprep.subr.mxu0 0.0
    %3545 = vmatpush1.msra.mxu0 0.0
    %3546 = vmatprep.subr.mxu0 0.0
    %3547 = vmatpush1.msra.mxu0 0.0
    %3548 = vmatprep.subr.mxu0 0.0
    %3549 = vmatpush1.msra.mxu0 0.0
    %3550 = vmatprep.subr.mxu0 0.0
    %3551 = vmatpush1.msra.mxu0 0.0
    %3552 = vmatprep.subr.mxu0 0.0
    %3553 = vmatpush1.msra.mxu0 0.0
    %3554 = vmatprep.subr.mxu0 0.0
    %3555 = vmatpush1.msra.mxu0 0.0
    %3556 = vmatprep.subr.mxu0 0.0
    %3557 = vmatpush1.msra.mxu0 0.0
    %3558 = vmatprep.subr.mxu0 0.0
    %3559 = vmatpush1.msra.mxu0 0.0
    %3560 = vmatprep.subr.mxu0 0.0
    %3561 = vmatpush1.msra.mxu0 0.0
    %3562 = vmatprep.subr.mxu0 0.0
    %3563 = vmatpush1.msra.mxu0 0.0
    %3564 = vmatprep.subr.mxu0 0.0
    %3565 = vmatpush1.msra.mxu0 0.0
    %3566 = vmatprep.subr.mxu0 0.0
    %3567 = vmatpush1.msra.mxu0 0.0
    %3568 = vmatprep.subr.mxu0 0.0
    %3569 = vmatpush1.msra.mxu0 0.0
    %3570 = vmatprep.subr.mxu0 0.0
    %3571 = vmatpush1.msra.mxu0 0.0
    %3572 = vmatprep.subr.mxu0 0.0
    %3573 = vmatpush1.msra.mxu0 0.0
    %3574 = vmatprep.subr.mxu0 0.0
    %3575 = vmatpush1.msra.mxu0 0.0
    %3576 = vmatprep.subr.mxu0 0.0
    %3577 = vmatpush1.msra.mxu0 0.0
    %3578 = vmatprep.subr.mxu0 0.0
    %3579 = vmatpush1.msra.mxu0 0.0
    %3580 = vmatprep.subr.mxu0 0.0
    %3581 = vmatpush1.msra.mxu0 0.0
    %3582 = vmatprep.subr.mxu0 0.0
    %3583 = vmatpush1.msra.mxu0 0.0
    %3584 = vmatprep.subr.mxu0 0.0
    %3585 = vmatpush1.msra.mxu0 0.0
    %3586 = vmatprep.subr.mxu0 0.0
    %3587 = vmatpush1.msra.mxu0 0.0
    %3588 = vmatprep.subr.mxu0 0.0
    %3589 = vmatpush1.msra.mxu0 0.0
    %3590 = vmatprep.subr.mxu0 0.0
    %3591 = vmatpush1.msra.mxu0 0.0
    %3592 = vmatprep.subr.mxu0 0.0
    %3593 = vmatpush1.msra.mxu0 0.0
    %3594 = vmatprep.subr.mxu0 0.0
    %3595 = vmatpush1.msra.mxu0 0.0
    %3596 = vmatprep.subr.mxu0 0.0
    %3597 = vmatpush1.msra.mxu0 0.0
    %3598 = vmatprep.subr.mxu0 0.0
    %3599 = vmatpush1.msra.mxu0 0.0
    %3600 = vmatprep.mubr.f32.mxu0 0.0
    %3601 = vmatmul.mubr.f32.gmra.mrb[0].mxu0 %v3279
    %v3602 = vpop.f32.mrb[0].mxu0
    %v3603 = vadd.f32 0.0, %v3602
    %v3604 = vpop.f32.mrb[0].mxu0
    %3605 = vdwg.mxu0
    %v3606 = vmul.f32 %v3603, %v3603
    %v3607 = vsel %vm222, %v3606, 0.0
    %3608 = vadd.xlane.f32.xlu0 %v3607
    %v3609 = vpop.xlane.xlu0 %3608
    %v3610 = vrot.slane %v3609, 4
    %v3611 = vadd.f32 %v3609, %v3610
    %v3612 = vrot.slane %v3611, 2
    %v3613 = vadd.f32 %v3611, %v3612
    %v3614 = vrot.slane %v3613, 1
    %v3615 = vadd.f32 %v3613, %v3614
    %v3616 = vadd.f32 %v3535, %v3615
    %3617 = vmatprep.subr.mxu0 0.0
    %3618 = vmatpush1.msra.mxu0 %v80
    %3619 = vmatprep.subr.mxu0 0.0
    %3620 = vmatpush1.msra.mxu0 %v81
    %3621 = vmatprep.subr.mxu0 0.0
    %3622 = vmatpush1.msra.mxu0 %v82
    %3623 = vmatprep.subr.mxu0 0.0
    %3624 = vmatpush1.msra.mxu0 %v83
    %3625 = vmatprep.subr.mxu0 0.0
    %3626 = vmatpush1.msra.mxu0 0.0
    %3627 = vmatprep.subr.mxu0 0.0
    %3628 = vmatpush1.msra.mxu0 0.0
    %3629 = vmatprep.subr.mxu0 0.0
    %3630 = vmatpush1.msra.mxu0 0.0
    %3631 = vmatprep.subr.mxu0 0.0
    %3632 = vmatpush1.msra.mxu0 0.0
    %3633 = vmatprep.subr.mxu0 0.0
    %3634 = vmatpush1.msra.mxu0 0.0
    %3635 = vmatprep.subr.mxu0 0.0
    %3636 = vmatpush1.msra.mxu0 0.0
    %3637 = vmatprep.subr.mxu0 0.0
    %3638 = vmatpush1.msra.mxu0 0.0
    %3639 = vmatprep.subr.mxu0 0.0
    %3640 = vmatpush1.msra.mxu0 0.0
    %3641 = vmatprep.subr.mxu0 0.0
    %3642 = vmatpush1.msra.mxu0 0.0
    %3643 = vmatprep.subr.mxu0 0.0
    %3644 = vmatpush1.msra.mxu0 0.0
    %3645 = vmatprep.subr.mxu0 0.0
    %3646 = vmatpush1.msra.mxu0 0.0
    %3647 = vmatprep.subr.mxu0 0.0
    %3648 = vmatpush1.msra.mxu0 0.0
    %3649 = vmatprep.subr.mxu0 0.0
    %3650 = vmatpush1.msra.mxu0 0.0
    %3651 = vmatprep.subr.mxu0 0.0
    %3652 = vmatpush1.msra.mxu0 0.0
    %3653 = vmatprep.subr.mxu0 0.0
    %3654 = vmatpush1.msra.mxu0 0.0
    %3655 = vmatprep.subr.mxu0 0.0
    %3656 = vmatpush1.msra.mxu0 0.0
    %3657 = vmatprep.subr.mxu0 0.0
    %3658 = vmatpush1.msra.mxu0 0.0
    %3659 = vmatprep.subr.mxu0 0.0
    %3660 = vmatpush1.msra.mxu0 0.0
    %3661 = vmatprep.subr.mxu0 0.0
    %3662 = vmatpush1.msra.mxu0 0.0
    %3663 = vmatprep.subr.mxu0 0.0
    %3664 = vmatpush1.msra.mxu0 0.0
    %3665 = vmatprep.subr.mxu0 0.0
    %3666 = vmatpush1.msra.mxu0 0.0
    %3667 = vmatprep.subr.mxu0 0.0
    %3668 = vmatpush1.msra.mxu0 0.0
    %3669 = vmatprep.subr.mxu0 0.0
    %3670 = vmatpush1.msra.mxu0 0.0
    %3671 = vmatprep.subr.mxu0 0.0
    %3672 = vmatpush1.msra.mxu0 0.0
    %3673 = vmatprep.subr.mxu0 0.0
    %3674 = vmatpush1.msra.mxu0 0.0
    %3675 = vmatprep.subr.mxu0 0.0
    %3676 = vmatpush1.msra.mxu0 0.0
    %3677 = vmatprep.subr.mxu0 0.0
    %3678 = vmatpush1.msra.mxu0 0.0
    %3679 = vmatprep.subr.mxu0 0.0
    %3680 = vmatpush1.msra.mxu0 0.0
    %3681 = vmatprep.mubr.f32.mxu0 0.0
    %3682 = vmatmul.mubr.f32.gmra.mrb[0].mxu0 %v3352
    %v3683 = vpop.f32.mrb[0].mxu0
    %v3684 = vadd.f32 0.0, %v3683
    %v3685 = vpop.f32.mrb[0].mxu0
    %3686 = vdwg.mxu0
    %v3687 = vmul.f32 %v3684, %v3684
    %v3688 = vsel %vm222, %v3687, 0.0
    %3689 = vadd.xlane.f32.xlu0 %v3688
    %v3690 = vpop.xlane.xlu0 %3689
    %v3691 = vrot.slane %v3690, 4
    %v3692 = vadd.f32 %v3690, %v3691
    %v3693 = vrot.slane %v3692, 2
    %v3694 = vadd.f32 %v3692, %v3693
    %v3695 = vrot.slane %v3694, 1
    %v3696 = vadd.f32 %v3694, %v3695
    %v3697 = vadd.f32 %v3616, %v3696
    %v3698 = vmul.f32 %v3697, 2.5e-05
    %v3699 = vmul.f32 %v84, %v84
    %v3700 = vmul.f32 %v85, %v85
    %v3701 = vmul.f32 %v86, %v86
    %v3702 = vmul.f32 %v87, %v87
    %v3703 = vsel %vm320, %v3699, 0.0
    %3704 = vadd.xlane.f32.xlu0 %v3703
    %v3705 = vpop.xlane.xlu0 %3704
    %v3706 = vsel %vm320, %v3700, 0.0
    %3707 = vadd.xlane.f32.xlu0 %v3706
    %v3708 = vpop.xlane.xlu0 %3707
    %v3709 = vsel %vm320, %v3701, 0.0
    %3710 = vadd.xlane.f32.xlu0 %v3709
    %v3711 = vpop.xlane.xlu0 %3710
    %v3712 = vsel %vm320, %v3702, 0.0
    %3713 = vadd.xlane.f32.xlu0 %v3712
    %v3714 = vpop.xlane.xlu0 %3713
    %v3715 = vadd.f32 %v3705, %v3708
    %v3716 = vadd.f32 %v3715, %v3711
    %v3717 = vadd.f32 %v3716, %v3714
    %v3718 = vrot.slane %v3717, 4
    %v3719 = vadd.f32 %v3717, %v3718
    %v3720 = vrot.slane %v3719, 2
    %v3721 = vadd.f32 %v3719, %v3720
    %v3722 = vrot.slane %v3721, 1
    %v3723 = vadd.f32 %v3721, %v3722
    %v3724 = vmul.f32 %v88, %v88
    %v3725 = vmul.f32 %v89, %v89
    %v3726 = vmul.f32 %v90, %v90
    %v3727 = vmul.f32 %v91, %v91
    %v3728 = vsel %vm320, %v3724, 0.0
    %3729 = vadd.xlane.f32.xlu0 %v3728
    %v3730 = vpop.xlane.xlu0 %3729
    %v3731 = vsel %vm320, %v3725, 0.0
    %3732 = vadd.xlane.f32.xlu0 %v3731
    %v3733 = vpop.xlane.xlu0 %3732
    %v3734 = vsel %vm320, %v3726, 0.0
    %3735 = vadd.xlane.f32.xlu0 %v3734
    %v3736 = vpop.xlane.xlu0 %3735
    %v3737 = vsel %vm320, %v3727, 0.0
    %3738 = vadd.xlane.f32.xlu0 %v3737
    %v3739 = vpop.xlane.xlu0 %3738
    %v3740 = vadd.f32 %v3730, %v3733
    %v3741 = vadd.f32 %v3740, %v3736
    %v3742 = vadd.f32 %v3741, %v3739
    %v3743 = vrot.slane %v3742, 4
    %v3744 = vadd.f32 %v3742, %v3743
    %v3745 = vrot.slane %v3744, 2
    %v3746 = vadd.f32 %v3744, %v3745
    %v3747 = vrot.slane %v3746, 1
    %v3748 = vadd.f32 %v3746, %v3747
    %v3749 = vadd.f32 %v3723, %v3748
    %v3750 = vmul.f32 %v3749, 0.005
    %3755 = vrot.lane.b32.xlu0 %v456, 32
    %v3756 = vpop.permute.xlu0 %3755
    %3757 = vrot.lane.b32.xlu0 %v461, 32
    %v3758 = vpop.permute.xlu0 %3757
    %3759 = vrot.lane.b32.xlu0 %v466, 32
    %v3760 = vpop.permute.xlu0 %3759
    %3761 = vrot.lane.b32.xlu0 %v471, 32
    %v3762 = vpop.permute.xlu0 %3761
    %3771 = vrot.lane.b32.xlu0 %v1136, 64
    %v3772 = vpop.permute.xlu0 %3771
    %3773 = vrot.lane.b32.xlu0 %v1141, 64
    %v3774 = vpop.permute.xlu0 %3773
    %3775 = vrot.lane.b32.xlu0 %v1146, 64
    %v3776 = vpop.permute.xlu0 %3775
    %3777 = vrot.lane.b32.xlu0 %v1151, 64
    %v3778 = vpop.permute.xlu0 %3777
    %3787 = vrot.lane.b32.xlu0 %v1586, 96
    %v3788 = vpop.permute.xlu0 %3787
    %3789 = vrot.lane.b32.xlu0 %v1591, 96
    %v3790 = vpop.permute.xlu0 %3789
    %3791 = vrot.lane.b32.xlu0 %v1596, 96
    %v3792 = vpop.permute.xlu0 %3791
    %3793 = vrot.lane.b32.xlu0 %v1601, 96
    %v3794 = vpop.permute.xlu0 %3793
    %3803 = vrot.lane.b32.xlu0 %v1989, 32
    %v3804 = vpop.permute.xlu0 %3803
    %3805 = vrot.lane.b32.xlu0 %v1994, 32
    %v3806 = vpop.permute.xlu0 %3805
    %3807 = vrot.lane.b32.xlu0 %v1999, 32
    %v3808 = vpop.permute.xlu0 %3807
    %3809 = vrot.lane.b32.xlu0 %v2004, 32
    %v3810 = vpop.permute.xlu0 %3809
    %3819 = vrot.lane.b32.xlu0 %v2657, 64
    %v3820 = vpop.permute.xlu0 %3819
    %3821 = vrot.lane.b32.xlu0 %v2662, 64
    %v3822 = vpop.permute.xlu0 %3821
    %3823 = vrot.lane.b32.xlu0 %v2667, 64
    %v3824 = vpop.permute.xlu0 %3823
    %3825 = vrot.lane.b32.xlu0 %v2672, 64
    %v3826 = vpop.permute.xlu0 %3825
    %3835 = vrot.lane.b32.xlu0 %v3107, 96
    %v3836 = vpop.permute.xlu0 %3835
    %3837 = vrot.lane.b32.xlu0 %v3112, 96
    %v3838 = vpop.permute.xlu0 %3837
    %3839 = vrot.lane.b32.xlu0 %v3117, 96
    %v3840 = vpop.permute.xlu0 %3839
    %3841 = vrot.lane.b32.xlu0 %v3122, 96
    %v3842 = vpop.permute.xlu0 %3841
    %v3847 = vsel %vm222, %v184, %v3756
    %v3848 = vsel %vm222, %v189, %v3758
    %v3849 = vsel %vm222, %v194, %v3760
    %v3850 = vsel %vm222, %v199, %v3762
    %v3851 = vsel %vm92, %v3847, %v3772
    %v3852 = vsel %vm92, %v3848, %v3774
    %v3853 = vsel %vm92, %v3849, %v3776
    %v3854 = vsel %vm92, %v3850, %v3778
    %vm3855 = vcmask 785408
    %v3856 = vsel %vm3855, %v3851, %v3788
    %v3857 = vsel %vm3855, %v3852, %v3790
    %v3858 = vsel %vm3855, %v3853, %v3792
    %v3859 = vsel %vm3855, %v3854, %v3794
    %v3860 = vsel %vm222, %v1731, %v3804
    %v3861 = vsel %vm222, %v1736, %v3806
    %v3862 = vsel %vm222, %v1741, %v3808
    %v3863 = vsel %vm222, %v1746, %v3810
    %v3864 = vsel %vm92, %v3860, %v3820
    %v3865 = vsel %vm92, %v3861, %v3822
    %v3866 = vsel %vm92, %v3862, %v3824
    %v3867 = vsel %vm92, %v3863, %v3826
    %v3868 = vsel %vm3855, %v3864, %v3836
    %v3869 = vsel %vm3855, %v3865, %v3838
    %v3870 = vsel %vm3855, %v3866, %v3840
    %v3871 = vsel %vm3855, %v3867, %v3842
    %3876 = vrot.lane.b32.xlu0 %v706, 32
    %v3877 = vpop.permute.xlu0 %3876
    %3878 = vrot.lane.b32.xlu0 %v711, 32
    %v3879 = vpop.permute.xlu0 %3878
    %3880 = vrot.lane.b32.xlu0 %v716, 32
    %v3881 = vpop.permute.xlu0 %3880
    %3882 = vrot.lane.b32.xlu0 %v721, 32
    %v3883 = vpop.permute.xlu0 %3882
    %3892 = vrot.lane.b32.xlu0 %v1156, 64
    %v3893 = vpop.permute.xlu0 %3892
    %3894 = vrot.lane.b32.xlu0 %v1161, 64
    %v3895 = vpop.permute.xlu0 %3894
    %3896 = vrot.lane.b32.xlu0 %v1166, 64
    %v3897 = vpop.permute.xlu0 %3896
    %3898 = vrot.lane.b32.xlu0 %v1171, 64
    %v3899 = vpop.permute.xlu0 %3898
    %3908 = vrot.lane.b32.xlu0 %v1606, 96
    %v3909 = vpop.permute.xlu0 %3908
    %3910 = vrot.lane.b32.xlu0 %v1611, 96
    %v3911 = vpop.permute.xlu0 %3910
    %3912 = vrot.lane.b32.xlu0 %v1616, 96
    %v3913 = vpop.permute.xlu0 %3912
    %3914 = vrot.lane.b32.xlu0 %v1621, 96
    %v3915 = vpop.permute.xlu0 %3914
    %3924 = vrot.lane.b32.xlu0 %v2227, 32
    %v3925 = vpop.permute.xlu0 %3924
    %3926 = vrot.lane.b32.xlu0 %v2232, 32
    %v3927 = vpop.permute.xlu0 %3926
    %3928 = vrot.lane.b32.xlu0 %v2237, 32
    %v3929 = vpop.permute.xlu0 %3928
    %3930 = vrot.lane.b32.xlu0 %v2242, 32
    %v3931 = vpop.permute.xlu0 %3930
    %3940 = vrot.lane.b32.xlu0 %v2677, 64
    %v3941 = vpop.permute.xlu0 %3940
    %3942 = vrot.lane.b32.xlu0 %v2682, 64
    %v3943 = vpop.permute.xlu0 %3942
    %3944 = vrot.lane.b32.xlu0 %v2687, 64
    %v3945 = vpop.permute.xlu0 %3944
    %3946 = vrot.lane.b32.xlu0 %v2692, 64
    %v3947 = vpop.permute.xlu0 %3946
    %3956 = vrot.lane.b32.xlu0 %v3127, 96
    %v3957 = vpop.permute.xlu0 %3956
    %3958 = vrot.lane.b32.xlu0 %v3132, 96
    %v3959 = vpop.permute.xlu0 %3958
    %3960 = vrot.lane.b32.xlu0 %v3137, 96
    %v3961 = vpop.permute.xlu0 %3960
    %3962 = vrot.lane.b32.xlu0 %v3142, 96
    %v3963 = vpop.permute.xlu0 %3962
    %v3968 = vsel %vm222, %v204, %v3877
    %v3969 = vsel %vm222, %v209, %v3879
    %v3970 = vsel %vm222, %v214, %v3881
    %v3971 = vsel %vm222, %v219, %v3883
    %v3972 = vsel %vm92, %v3968, %v3893
    %v3973 = vsel %vm92, %v3969, %v3895
    %v3974 = vsel %vm92, %v3970, %v3897
    %v3975 = vsel %vm92, %v3971, %v3899
    %v3976 = vsel %vm3855, %v3972, %v3909
    %v3977 = vsel %vm3855, %v3973, %v3911
    %v3978 = vsel %vm3855, %v3974, %v3913
    %v3979 = vsel %vm3855, %v3975, %v3915
    %v3980 = vsel %vm222, %v1751, %v3925
    %v3981 = vsel %vm222, %v1756, %v3927
    %v3982 = vsel %vm222, %v1761, %v3929
    %v3983 = vsel %vm222, %v1766, %v3931
    %v3984 = vsel %vm92, %v3980, %v3941
    %v3985 = vsel %vm92, %v3981, %v3943
    %v3986 = vsel %vm92, %v3982, %v3945
    %v3987 = vsel %vm92, %v3983, %v3947
    %v3988 = vsel %vm3855, %v3984, %v3957
    %v3989 = vsel %vm3855, %v3985, %v3959
    %v3990 = vsel %vm3855, %v3986, %v3961
    %v3991 = vsel %vm3855, %v3987, %v3963
    %3992 = vmatprep.subr.mxu0 %v3868
    %3993 = vmatpush1.msra.mxu0 %v3856
    %3994 = vmatprep.subr.mxu0 %v3869
    %3995 = vmatpush1.msra.mxu0 %v3857
    %3996 = vmatprep.subr.mxu0 %v3870
    %3997 = vmatpush1.msra.mxu0 %v3858
    %3998 = vmatprep.subr.mxu0 %v3871
    %3999 = vmatpush1.msra.mxu0 %v3859
    %4000 = vmatprep.subr.mxu0 0.0
    %4001 = vmatpush1.msra.mxu0 0.0
    %4002 = vmatprep.subr.mxu0 0.0
    %4003 = vmatpush1.msra.mxu0 0.0
    %4004 = vmatprep.subr.mxu0 0.0
    %4005 = vmatpush1.msra.mxu0 0.0
    %4006 = vmatprep.subr.mxu0 0.0
    %4007 = vmatpush1.msra.mxu0 0.0
    %4008 = vmatprep.subr.mxu0 0.0
    %4009 = vmatpush1.msra.mxu0 0.0
    %4010 = vmatprep.subr.mxu0 0.0
    %4011 = vmatpush1.msra.mxu0 0.0
    %4012 = vmatprep.subr.mxu0 0.0
    %4013 = vmatpush1.msra.mxu0 0.0
    %4014 = vmatprep.subr.mxu0 0.0
    %4015 = vmatpush1.msra.mxu0 0.0
    %4016 = vmatprep.subr.mxu0 0.0
    %4017 = vmatpush1.msra.mxu0 0.0
    %4018 = vmatprep.subr.mxu0 0.0
    %4019 = vmatpush1.msra.mxu0 0.0
    %4020 = vmatprep.subr.mxu0 0.0
    %4021 = vmatpush1.msra.mxu0 0.0
    %4022 = vmatprep.subr.mxu0 0.0
    %4023 = vmatpush1.msra.mxu0 0.0
    %4024 = vmatprep.subr.mxu0 0.0
    %4025 = vmatpush1.msra.mxu0 0.0
    %4026 = vmatprep.subr.mxu0 0.0
    %4027 = vmatpush1.msra.mxu0 0.0
    %4028 = vmatprep.subr.mxu0 0.0
    %4029 = vmatpush1.msra.mxu0 0.0
    %4030 = vmatprep.subr.mxu0 0.0
    %4031 = vmatpush1.msra.mxu0 0.0
    %4032 = vmatprep.subr.mxu0 0.0
    %4033 = vmatpush1.msra.mxu0 0.0
    %4034 = vmatprep.subr.mxu0 0.0
    %4035 = vmatpush1.msra.mxu0 0.0
    %4036 = vmatprep.subr.mxu0 0.0
    %4037 = vmatpush1.msra.mxu0 0.0
    %4038 = vmatprep.subr.mxu0 0.0
    %4039 = vmatpush1.msra.mxu0 0.0
    %4040 = vmatprep.subr.mxu0 0.0
    %4041 = vmatpush1.msra.mxu0 0.0
    %4042 = vmatprep.subr.mxu0 0.0
    %4043 = vmatpush1.msra.mxu0 0.0
    %4044 = vmatprep.subr.mxu0 0.0
    %4045 = vmatpush1.msra.mxu0 0.0
    %4046 = vmatprep.subr.mxu0 0.0
    %4047 = vmatpush1.msra.mxu0 0.0
    %4048 = vmatprep.subr.mxu0 0.0
    %4049 = vmatpush1.msra.mxu0 0.0
    %4050 = vmatprep.subr.mxu0 0.0
    %4051 = vmatpush1.msra.mxu0 0.0
    %4052 = vmatprep.subr.mxu0 0.0
    %4053 = vmatpush1.msra.mxu0 0.0
    %4054 = vmatprep.subr.mxu0 0.0
    %4055 = vmatpush1.msra.mxu0 0.0
    %4056 = vmatprep.mubr.f32.mxu0 0.0
    %4057 = vmatmul.mubr.f32.gmra.mrb[0].mxu0 %v3206
    %v4058 = vpop.f32.mrb[0].mxu0
    %v4059 = vadd.f32 0.0, %v4058
    %v4060 = vpop.f32.mrb[0].mxu0
    %v4061 = vadd.f32 0.0, %v4060
    %4062 = vdwg.mxu0
    %4063 = vmatprep.subr.mxu0 %v3988
    %4064 = vmatpush1.msra.mxu0 %v3976
    %4065 = vmatprep.subr.mxu0 %v3989
    %4066 = vmatpush1.msra.mxu0 %v3977
    %4067 = vmatprep.subr.mxu0 %v3990
    %4068 = vmatpush1.msra.mxu0 %v3978
    %4069 = vmatprep.subr.mxu0 %v3991
    %4070 = vmatpush1.msra.mxu0 %v3979
    %4071 = vmatprep.subr.mxu0 0.0
    %4072 = vmatpush1.msra.mxu0 0.0
    %4073 = vmatprep.subr.mxu0 0.0
    %4074 = vmatpush1.msra.mxu0 0.0
    %4075 = vmatprep.subr.mxu0 0.0
    %4076 = vmatpush1.msra.mxu0 0.0
    %4077 = vmatprep.subr.mxu0 0.0
    %4078 = vmatpush1.msra.mxu0 0.0
    %4079 = vmatprep.subr.mxu0 0.0
    %4080 = vmatpush1.msra.mxu0 0.0
    %4081 = vmatprep.subr.mxu0 0.0
    %4082 = vmatpush1.msra.mxu0 0.0
    %4083 = vmatprep.subr.mxu0 0.0
    %4084 = vmatpush1.msra.mxu0 0.0
    %4085 = vmatprep.subr.mxu0 0.0
    %4086 = vmatpush1.msra.mxu0 0.0
    %4087 = vmatprep.subr.mxu0 0.0
    %4088 = vmatpush1.msra.mxu0 0.0
    %4089 = vmatprep.subr.mxu0 0.0
    %4090 = vmatpush1.msra.mxu0 0.0
    %4091 = vmatprep.subr.mxu0 0.0
    %4092 = vmatpush1.msra.mxu0 0.0
    %4093 = vmatprep.subr.mxu0 0.0
    %4094 = vmatpush1.msra.mxu0 0.0
    %4095 = vmatprep.subr.mxu0 0.0
    %4096 = vmatpush1.msra.mxu0 0.0
    %4097 = vmatprep.subr.mxu0 0.0
    %4098 = vmatpush1.msra.mxu0 0.0
    %4099 = vmatprep.subr.mxu0 0.0
    %4100 = vmatpush1.msra.mxu0 0.0
    %4101 = vmatprep.subr.mxu0 0.0
    %4102 = vmatpush1.msra.mxu0 0.0
    %4103 = vmatprep.subr.mxu0 0.0
    %4104 = vmatpush1.msra.mxu0 0.0
    %4105 = vmatprep.subr.mxu0 0.0
    %4106 = vmatpush1.msra.mxu0 0.0
    %4107 = vmatprep.subr.mxu0 0.0
    %4108 = vmatpush1.msra.mxu0 0.0
    %4109 = vmatprep.subr.mxu0 0.0
    %4110 = vmatpush1.msra.mxu0 0.0
    %4111 = vmatprep.subr.mxu0 0.0
    %4112 = vmatpush1.msra.mxu0 0.0
    %4113 = vmatprep.subr.mxu0 0.0
    %4114 = vmatpush1.msra.mxu0 0.0
    %4115 = vmatprep.subr.mxu0 0.0
    %4116 = vmatpush1.msra.mxu0 0.0
    %4117 = vmatprep.subr.mxu0 0.0
    %4118 = vmatpush1.msra.mxu0 0.0
    %4119 = vmatprep.subr.mxu0 0.0
    %4120 = vmatpush1.msra.mxu0 0.0
    %4121 = vmatprep.subr.mxu0 0.0
    %4122 = vmatpush1.msra.mxu0 0.0
    %4123 = vmatprep.subr.mxu0 0.0
    %4124 = vmatpush1.msra.mxu0 0.0
    %4125 = vmatprep.subr.mxu0 0.0
    %4126 = vmatpush1.msra.mxu0 0.0
    %4127 = vmatprep.mubr.f32.mxu0 0.0
    %4128 = vmatmul.mubr.f32.gmra.mrb[0].mxu0 %v3279
    %v4129 = vpop.f32.mrb[0].mxu0
    %v4130 = vadd.f32 0.0, %v4129
    %v4131 = vpop.f32.mrb[0].mxu0
    %v4132 = vadd.f32 0.0, %v4131
    %4133 = vdwg.mxu0
    %v4134 = vmul.f32 %v4059, %v4059
    %v4135 = vsel %vm222, %v4134, 0.0
    %4136 = vadd.xlane.f32.xlu0 %v4135
    %v4137 = vpop.xlane.xlu0 %4136
    %v4138 = vrsqrt.pop %v4137
    %v4139 = vmul.f32 %v4137, %v4138
    %vm4140 = vcmp.eq.f32.partialorder %v4137, inf
    %v4141 = vsel %vm4140, %v4137, %v4139
    %vm4142 = vcmp.eq.f32.partialorder %v4137, 0.0
    %v4143 = vand.u32 %v4137, 2147483648
    %v4144 = vsel %vm4142, %v4143, %v4141
    %v4145 = vmax.f32 %v4144, 1e-12
    %v4146 = vrcp.pop %v4145
    %v4147 = vmul.f32 %v4059, %v4146
    %4149 = vrot.lane.b32.xlu0 %v4134, 96
    %v4150 = vpop.permute.xlu0 %4149
    %v4152 = vsel %vm222, %v4150, 0.0
    %4153 = vadd.xlane.f32.xlu0 %v4152
    %v4154 = vpop.xlane.xlu0 %4153
    %v4155 = vrsqrt.pop %v4154
    %v4156 = vmul.f32 %v4154, %v4155
    %vm4157 = vcmp.eq.f32.partialorder %v4154, inf
    %v4158 = vsel %vm4157, %v4154, %v4156
    %vm4159 = vcmp.eq.f32.partialorder %v4154, 0.0
    %v4160 = vand.u32 %v4154, 2147483648
    %v4161 = vsel %vm4159, %v4160, %v4158
    %v4162 = vmax.f32 %v4161, 1e-12
    %v4163 = vrcp.pop %v4162
    %v4164 = vmul.f32 %v4059, %v4163
    %4165 = vrot.lane.b32.xlu0 %v4134, 64
    %v4166 = vpop.permute.xlu0 %4165
    %v4168 = vsel %vm222, %v4166, 0.0
    %4169 = vadd.xlane.f32.xlu0 %v4168
    %v4170 = vpop.xlane.xlu0 %4169
    %v4171 = vrsqrt.pop %v4170
    %v4172 = vmul.f32 %v4170, %v4171
    %vm4173 = vcmp.eq.f32.partialorder %v4170, inf
    %v4174 = vsel %vm4173, %v4170, %v4172
    %vm4175 = vcmp.eq.f32.partialorder %v4170, 0.0
    %v4176 = vand.u32 %v4170, 2147483648
    %v4177 = vsel %vm4175, %v4176, %v4174
    %v4178 = vmax.f32 %v4177, 1e-12
    %v4179 = vrcp.pop %v4178
    %v4180 = vmul.f32 %v4059, %v4179
    %4181 = vrot.lane.b32.xlu0 %v4134, 32
    %v4182 = vpop.permute.xlu0 %4181
    %v4184 = vsel %vm222, %v4182, 0.0
    %4185 = vadd.xlane.f32.xlu0 %v4184
    %v4186 = vpop.xlane.xlu0 %4185
    %v4187 = vrsqrt.pop %v4186
    %v4188 = vmul.f32 %v4186, %v4187
    %vm4189 = vcmp.eq.f32.partialorder %v4186, inf
    %v4190 = vsel %vm4189, %v4186, %v4188
    %vm4191 = vcmp.eq.f32.partialorder %v4186, 0.0
    %v4192 = vand.u32 %v4186, 2147483648
    %v4193 = vsel %vm4191, %v4192, %v4190
    %v4194 = vmax.f32 %v4193, 1e-12
    %v4195 = vrcp.pop %v4194
    %v4196 = vmul.f32 %v4059, %v4195
    %v4197 = vmul.f32 %v4130, %v4130
    %v4198 = vsel %vm222, %v4197, 0.0
    %4199 = vadd.xlane.f32.xlu0 %v4198
    %v4200 = vpop.xlane.xlu0 %4199
    %v4201 = vrsqrt.pop %v4200
    %v4202 = vmul.f32 %v4200, %v4201
    %vm4203 = vcmp.eq.f32.partialorder %v4200, inf
    %v4204 = vsel %vm4203, %v4200, %v4202
    %vm4205 = vcmp.eq.f32.partialorder %v4200, 0.0
    %v4206 = vand.u32 %v4200, 2147483648
    %v4207 = vsel %vm4205, %v4206, %v4204
    %v4208 = vmax.f32 %v4207, 1e-12
    %v4209 = vrcp.pop %v4208
    %v4210 = vmul.f32 %v4130, %v4209
    %4212 = vrot.lane.b32.xlu0 %v4197, 96
    %v4213 = vpop.permute.xlu0 %4212
    %v4215 = vsel %vm222, %v4213, 0.0
    %4216 = vadd.xlane.f32.xlu0 %v4215
    %v4217 = vpop.xlane.xlu0 %4216
    %v4218 = vrsqrt.pop %v4217
    %v4219 = vmul.f32 %v4217, %v4218
    %vm4220 = vcmp.eq.f32.partialorder %v4217, inf
    %v4221 = vsel %vm4220, %v4217, %v4219
    %vm4222 = vcmp.eq.f32.partialorder %v4217, 0.0
    %v4223 = vand.u32 %v4217, 2147483648
    %v4224 = vsel %vm4222, %v4223, %v4221
    %v4225 = vmax.f32 %v4224, 1e-12
    %v4226 = vrcp.pop %v4225
    %v4227 = vmul.f32 %v4130, %v4226
    %4228 = vrot.lane.b32.xlu0 %v4197, 64
    %v4229 = vpop.permute.xlu0 %4228
    %v4231 = vsel %vm222, %v4229, 0.0
    %4232 = vadd.xlane.f32.xlu0 %v4231
    %v4233 = vpop.xlane.xlu0 %4232
    %v4234 = vrsqrt.pop %v4233
    %v4235 = vmul.f32 %v4233, %v4234
    %vm4236 = vcmp.eq.f32.partialorder %v4233, inf
    %v4237 = vsel %vm4236, %v4233, %v4235
    %vm4238 = vcmp.eq.f32.partialorder %v4233, 0.0
    %v4239 = vand.u32 %v4233, 2147483648
    %v4240 = vsel %vm4238, %v4239, %v4237
    %v4241 = vmax.f32 %v4240, 1e-12
    %v4242 = vrcp.pop %v4241
    %v4243 = vmul.f32 %v4130, %v4242
    %4244 = vrot.lane.b32.xlu0 %v4197, 32
    %v4245 = vpop.permute.xlu0 %4244
    %v4247 = vsel %vm222, %v4245, 0.0
    %4248 = vadd.xlane.f32.xlu0 %v4247
    %v4249 = vpop.xlane.xlu0 %4248
    %v4250 = vrsqrt.pop %v4249
    %v4251 = vmul.f32 %v4249, %v4250
    %vm4252 = vcmp.eq.f32.partialorder %v4249, inf
    %v4253 = vsel %vm4252, %v4249, %v4251
    %vm4254 = vcmp.eq.f32.partialorder %v4249, 0.0
    %v4255 = vand.u32 %v4249, 2147483648
    %v4256 = vsel %vm4254, %v4255, %v4253
    %v4257 = vmax.f32 %v4256, 1e-12
    %v4258 = vrcp.pop %v4257
    %v4259 = vmul.f32 %v4130, %v4258
    %4261 = vrot.lane.b32.xlu0 %v4164, 96
    %v4262 = vpop.permute.xlu0 %4261
    %v4264 = vmul.f32 %v4147, %v4262
    %v4265 = vsel %vm222, %v4264, 0.0
    %4266 = vadd.xlane.f32.xlu0 %v4265
    %v4267 = vpop.xlane.xlu0 %4266
    %v4268 = vmul.f32 %v4267, 1.442695
    %v4269 = vpow.pop %v4268
    %v4271 = vsel %vm222, %v4147, 0
    %v4273 = vsel %vm222, %v4262, 0
    %4275 = vmatprep.subr.mxu0 0.0
    %4276 = vmatpush1.xpose.msra.mxu0 %v4273
    %4277 = vmatprep.subr.mxu0 0.0
    %4278 = vmatpush1.xpose.msra.mxu0 0.0
    %4279 = vmatprep.subr.mxu0 0.0
    %4280 = vmatpush1.xpose.msra.mxu0 0.0
    %4281 = vmatprep.subr.mxu0 0.0
    %4282 = vmatpush1.xpose.msra.mxu0 0.0
    %4283 = vmatprep.subr.mxu0 0.0
    %4284 = vmatpush1.xpose.msra.mxu0 0.0
    %4285 = vmatprep.subr.mxu0 0.0
    %4286 = vmatpush1.xpose.msra.mxu0 0.0
    %4287 = vmatprep.subr.mxu0 0.0
    %4288 = vmatpush1.xpose.msra.mxu0 0.0
    %4289 = vmatprep.subr.mxu0 0.0
    %4290 = vmatpush1.xpose.msra.mxu0 0.0
    %4291 = vmatprep.subr.mxu0 0.0
    %4292 = vmatpush1.xpose.msra.mxu0 0.0
    %4293 = vmatprep.subr.mxu0 0.0
    %4294 = vmatpush1.xpose.msra.mxu0 0.0
    %4295 = vmatprep.subr.mxu0 0.0
    %4296 = vmatpush1.xpose.msra.mxu0 0.0
    %4297 = vmatprep.subr.mxu0 0.0
    %4298 = vmatpush1.xpose.msra.mxu0 0.0
    %4299 = vmatprep.subr.mxu0 0.0
    %4300 = vmatpush1.xpose.msra.mxu0 0.0
    %4301 = vmatprep.subr.mxu0 0.0
    %4302 = vmatpush1.xpose.msra.mxu0 0.0
    %4303 = vmatprep.subr.mxu0 0.0
    %4304 = vmatpush1.xpose.msra.mxu0 0.0
    %4305 = vmatprep.subr.mxu0 0.0
    %4306 = vmatpush1.xpose.msra.mxu0 0.0
    %4307 = vmatprep.subr.mxu0 0.0
    %4308 = vmatpush1.xpose.msra.mxu0 0.0
    %4309 = vmatprep.subr.mxu0 0.0
    %4310 = vmatpush1.xpose.msra.mxu0 0.0
    %4311 = vmatprep.subr.mxu0 0.0
    %4312 = vmatpush1.xpose.msra.mxu0 0.0
    %4313 = vmatprep.subr.mxu0 0.0
    %4314 = vmatpush1.xpose.msra.mxu0 0.0
    %4315 = vmatprep.subr.mxu0 0.0
    %4316 = vmatpush1.xpose.msra.mxu0 0.0
    %4317 = vmatprep.subr.mxu0 0.0
    %4318 = vmatpush1.xpose.msra.mxu0 0.0
    %4319 = vmatprep.subr.mxu0 0.0
    %4320 = vmatpush1.xpose.msra.mxu0 0.0
    %4321 = vmatprep.subr.mxu0 0.0
    %4322 = vmatpush1.xpose.msra.mxu0 0.0
    %4323 = vmatprep.subr.mxu0 0.0
    %4324 = vmatpush1.xpose.msra.mxu0 0.0
    %4325 = vmatprep.subr.mxu0 0.0
    %4326 = vmatpush1.xpose.msra.mxu0 0.0
    %4327 = vmatprep.subr.mxu0 0.0
    %4328 = vmatpush1.xpose.msra.mxu0 0.0
    %4329 = vmatprep.subr.mxu0 0.0
    %4330 = vmatpush1.xpose.msra.mxu0 0.0
    %4331 = vmatprep.subr.mxu0 0.0
    %4332 = vmatpush1.xpose.msra.mxu0 0.0
    %4333 = vmatprep.subr.mxu0 0.0
    %4334 = vmatpush1.xpose.msra.mxu0 0.0
    %4335 = vmatprep.subr.mxu0 0.0
    %4336 = vmatpush1.xpose.msra.mxu0 0.0
    %4337 = vmatprep.subr.mxu0 0.0
    %4338 = vmatpush1.xpose.msra.mxu0 0.0
    %4339 = vmatprep.mubr.f32.mxu0 0.0
    %4340 = vmatmul.mubr.f32.gmra.mrb[0].mxu0 %v4271
    %v4341 = vpop.f32.mrb[0].mxu0
    %v4342 = vadd.f32 0.0, %v4341
    %v4343 = vpop.f32.mrb[0].mxu0
    %4344 = vdwg.mxu0
    %v4345 = vmul.f32 %v4342, 1.442695
    %v4346 = vpow.pop %v4345
    %vm4347 = vcmask 64512
    %v4348 = vsel %vm4347, %v4346, 0.0
    %4349 = vadd.xlane.f32.xlu0 %v4348
    %v4350 = vpop.xlane.xlu0 %4349
    %v4351 = vadd.f32 %v4350, 1e-08
    %v4352 = vrcp.pop %v4351
    %v4353 = vmul.f32 %v4269, %v4352
    %v4354 = vadd.f32 %v4353, 1e-08
    %v4355 = vlog2.pop %v4354
    %v4356 = vmul.f32 %v4355, 0.6931472
    %v4357 = vsub.f32 0.0, %v4356
    %v4358 = vrot.slane %v4357, 4
    %v4359 = vadd.f32 %v4357, %v4358
    %v4360 = vrot.slane %v4359, 2
    %v4361 = vadd.f32 %v4359, %v4360
    %v4362 = vrot.slane %v4361, 1
    %v4363 = vadd.f32 %v4361, %v4362
    %v4364 = vmul.f32 %v4363, %v3454
    %v4365 = vadd.f32 %v4364, 0.0
    %4367 = vrot.lane.b32.xlu0 %v4180, 64
    %v4368 = vpop.permute.xlu0 %4367
    %v4370 = vmul.f32 %v4147, %v4368
    %v4371 = vsel %vm222, %v4370, 0.0
    %4372 = vadd.xlane.f32.xlu0 %v4371
    %v4373 = vpop.xlane.xlu0 %4372
    %v4374 = vmul.f32 %v4373, 1.442695
    %v4375 = vpow.pop %v4374
    %v4376 = vsel %vm222, %v4368, 0
    %4378 = vmatprep.subr.mxu0 0.0
    %4379 = vmatpush1.xpose.msra.mxu0 %v4376
    %4380 = vmatprep.subr.mxu0 0.0
    %4381 = vmatpush1.xpose.msra.mxu0 0.0
    %4382 = vmatprep.subr.mxu0 0.0
    %4383 = vmatpush1.xpose.msra.mxu0 0.0
    %4384 = vmatprep.subr.mxu0 0.0
    %4385 = vmatpush1.xpose.msra.mxu0 0.0
    %4386 = vmatprep.subr.mxu0 0.0
    %4387 = vmatpush1.xpose.msra.mxu0 0.0
    %4388 = vmatprep.subr.mxu0 0.0
    %4389 = vmatpush1.xpose.msra.mxu0 0.0
    %4390 = vmatprep.subr.mxu0 0.0
    %4391 = vmatpush1.xpose.msra.mxu0 0.0
    %4392 = vmatprep.subr.mxu0 0.0
    %4393 = vmatpush1.xpose.msra.mxu0 0.0
    %4394 = vmatprep.subr.mxu0 0.0
    %4395 = vmatpush1.xpose.msra.mxu0 0.0
    %4396 = vmatprep.subr.mxu0 0.0
    %4397 = vmatpush1.xpose.msra.mxu0 0.0
    %4398 = vmatprep.subr.mxu0 0.0
    %4399 = vmatpush1.xpose.msra.mxu0 0.0
    %4400 = vmatprep.subr.mxu0 0.0
    %4401 = vmatpush1.xpose.msra.mxu0 0.0
    %4402 = vmatprep.subr.mxu0 0.0
    %4403 = vmatpush1.xpose.msra.mxu0 0.0
    %4404 = vmatprep.subr.mxu0 0.0
    %4405 = vmatpush1.xpose.msra.mxu0 0.0
    %4406 = vmatprep.subr.mxu0 0.0
    %4407 = vmatpush1.xpose.msra.mxu0 0.0
    %4408 = vmatprep.subr.mxu0 0.0
    %4409 = vmatpush1.xpose.msra.mxu0 0.0
    %4410 = vmatprep.subr.mxu0 0.0
    %4411 = vmatpush1.xpose.msra.mxu0 0.0
    %4412 = vmatprep.subr.mxu0 0.0
    %4413 = vmatpush1.xpose.msra.mxu0 0.0
    %4414 = vmatprep.subr.mxu0 0.0
    %4415 = vmatpush1.xpose.msra.mxu0 0.0
    %4416 = vmatprep.subr.mxu0 0.0
    %4417 = vmatpush1.xpose.msra.mxu0 0.0
    %4418 = vmatprep.subr.mxu0 0.0
    %4419 = vmatpush1.xpose.msra.mxu0 0.0
    %4420 = vmatprep.subr.mxu0 0.0
    %4421 = vmatpush1.xpose.msra.mxu0 0.0
    %4422 = vmatprep.subr.mxu0 0.0
    %4423 = vmatpush1.xpose.msra.mxu0 0.0
    %4424 = vmatprep.subr.mxu0 0.0
    %4425 = vmatpush1.xpose.msra.mxu0 0.0
    %4426 = vmatprep.subr.mxu0 0.0
    %4427 = vmatpush1.xpose.msra.mxu0 0.0
    %4428 = vmatprep.subr.mxu0 0.0
    %4429 = vmatpush1.xpose.msra.mxu0 0.0
    %4430 = vmatprep.subr.mxu0 0.0
    %4431 = vmatpush1.xpose.msra.mxu0 0.0
    %4432 = vmatprep.subr.mxu0 0.0
    %4433 = vmatpush1.xpose.msra.mxu0 0.0
    %4434 = vmatprep.subr.mxu0 0.0
    %4435 = vmatpush1.xpose.msra.mxu0 0.0
    %4436 = vmatprep.subr.mxu0 0.0
    %4437 = vmatpush1.xpose.msra.mxu0 0.0
    %4438 = vmatprep.subr.mxu0 0.0
    %4439 = vmatpush1.xpose.msra.mxu0 0.0
    %4440 = vmatprep.subr.mxu0 0.0
    %4441 = vmatpush1.xpose.msra.mxu0 0.0
    %4442 = vmatprep.mubr.f32.mxu0 0.0
    %4443 = vmatmul.mubr.f32.gmra.mrb[0].mxu0 %v4271
    %v4444 = vpop.f32.mrb[0].mxu0
    %v4445 = vadd.f32 0.0, %v4444
    %v4446 = vpop.f32.mrb[0].mxu0
    %4447 = vdwg.mxu0
    %v4448 = vmul.f32 %v4445, 1.442695
    %v4449 = vpow.pop %v4448
    %v4450 = vsel %vm4347, %v4449, 0.0
    %4451 = vadd.xlane.f32.xlu0 %v4450
    %v4452 = vpop.xlane.xlu0 %4451
    %v4453 = vadd.f32 %v4452, 1e-08
    %v4454 = vrcp.pop %v4453
    %v4455 = vmul.f32 %v4375, %v4454
    %v4456 = vadd.f32 %v4455, 1e-08
    %v4457 = vlog2.pop %v4456
    %v4458 = vmul.f32 %v4457, 0.6931472
    %v4459 = vsub.f32 0.0, %v4458
    %v4460 = vrot.slane %v4459, 4
    %v4461 = vadd.f32 %v4459, %v4460
    %v4462 = vrot.slane %v4461, 2
    %v4463 = vadd.f32 %v4461, %v4462
    %v4464 = vrot.slane %v4463, 1
    %v4465 = vadd.f32 %v4463, %v4464
    %v4466 = vmul.f32 %v4465, %v3454
    %v4467 = vadd.f32 %v4365, %v4466
    %4469 = vrot.lane.b32.xlu0 %v4196, 32
    %v4470 = vpop.permute.xlu0 %4469
    %v4472 = vmul.f32 %v4147, %v4470
    %v4473 = vsel %vm222, %v4472, 0.0
    %4474 = vadd.xlane.f32.xlu0 %v4473
    %v4475 = vpop.xlane.xlu0 %4474
    %v4476 = vmul.f32 %v4475, 1.442695
    %v4477 = vpow.pop %v4476
    %v4478 = vsel %vm222, %v4470, 0
    %4480 = vmatprep.subr.mxu0 0.0
    %4481 = vmatpush1.xpose.msra.mxu0 %v4478
    %4482 = vmatprep.subr.mxu0 0.0
    %4483 = vmatpush1.xpose.msra.mxu0 0.0
    %4484 = vmatprep.subr.mxu0 0.0
    %4485 = vmatpush1.xpose.msra.mxu0 0.0
    %4486 = vmatprep.subr.mxu0 0.0
    %4487 = vmatpush1.xpose.msra.mxu0 0.0
    %4488 = vmatprep.subr.mxu0 0.0
    %4489 = vmatpush1.xpose.msra.mxu0 0.0
    %4490 = vmatprep.subr.mxu0 0.0
    %4491 = vmatpush1.xpose.msra.mxu0 0.0
    %4492 = vmatprep.subr.mxu0 0.0
    %4493 = vmatpush1.xpose.msra.mxu0 0.0
    %4494 = vmatprep.subr.mxu0 0.0
    %4495 = vmatpush1.xpose.msra.mxu0 0.0
    %4496 = vmatprep.subr.mxu0 0.0
    %4497 = vmatpush1.xpose.msra.mxu0 0.0
    %4498 = vmatprep.subr.mxu0 0.0
    %4499 = vmatpush1.xpose.msra.mxu0 0.0
    %4500 = vmatprep.subr.mxu0 0.0
    %4501 = vmatpush1.xpose.msra.mxu0 0.0
    %4502 = vmatprep.subr.mxu0 0.0
    %4503 = vmatpush1.xpose.msra.mxu0 0.0
    %4504 = vmatprep.subr.mxu0 0.0
    %4505 = vmatpush1.xpose.msra.mxu0 0.0
    %4506 = vmatprep.subr.mxu0 0.0
    %4507 = vmatpush1.xpose.msra.mxu0 0.0
    %4508 = vmatprep.subr.mxu0 0.0
    %4509 = vmatpush1.xpose.msra.mxu0 0.0
    %4510 = vmatprep.subr.mxu0 0.0
    %4511 = vmatpush1.xpose.msra.mxu0 0.0
    %4512 = vmatprep.subr.mxu0 0.0
    %4513 = vmatpush1.xpose.msra.mxu0 0.0
    %4514 = vmatprep.subr.mxu0 0.0
    %4515 = vmatpush1.xpose.msra.mxu0 0.0
    %4516 = vmatprep.subr.mxu0 0.0
    %4517 = vmatpush1.xpose.msra.mxu0 0.0
    %4518 = vmatprep.subr.mxu0 0.0
    %4519 = vmatpush1.xpose.msra.mxu0 0.0
    %4520 = vmatprep.subr.mxu0 0.0
    %4521 = vmatpush1.xpose.msra.mxu0 0.0
    %4522 = vmatprep.subr.mxu0 0.0
    %4523 = vmatpush1.xpose.msra.mxu0 0.0
    %4524 = vmatprep.subr.mxu0 0.0
    %4525 = vmatpush1.xpose.msra.mxu0 0.0
    %4526 = vmatprep.subr.mxu0 0.0
    %4527 = vmatpush1.xpose.msra.mxu0 0.0
    %4528 = vmatprep.subr.mxu0 0.0
    %4529 = vmatpush1.xpose.msra.mxu0 0.0
    %4530 = vmatprep.subr.mxu0 0.0
    %4531 = vmatpush1.xpose.msra.mxu0 0.0
    %4532 = vmatprep.subr.mxu0 0.0
    %4533 = vmatpush1.xpose.msra.mxu0 0.0
    %4534 = vmatprep.subr.mxu0 0.0
    %4535 = vmatpush1.xpose.msra.mxu0 0.0
    %4536 = vmatprep.subr.mxu0 0.0
    %4537 = vmatpush1.xpose.msra.mxu0 0.0
    %4538 = vmatprep.subr.mxu0 0.0
    %4539 = vmatpush1.xpose.msra.mxu0 0.0
    %4540 = vmatprep.subr.mxu0 0.0
    %4541 = vmatpush1.xpose.msra.mxu0 0.0
    %4542 = vmatprep.subr.mxu0 0.0
    %4543 = vmatpush1.xpose.msra.mxu0 0.0
    %4544 = vmatprep.mubr.f32.mxu0 0.0
    %4545 = vmatmul.mubr.f32.gmra.mrb[0].mxu0 %v4271
    %v4546 = vpop.f32.mrb[0].mxu0
    %v4547 = vadd.f32 0.0, %v4546
    %v4548 = vpop.f32.mrb[0].mxu0
    %4549 = vdwg.mxu0
    %v4550 = vmul.f32 %v4547, 1.442695
    %v4551 = vpow.pop %v4550
    %v4552 = vsel %vm4347, %v4551, 0.0
    %4553 = vadd.xlane.f32.xlu0 %v4552
    %v4554 = vpop.xlane.xlu0 %4553
    %v4555 = vadd.f32 %v4554, 1e-08
    %v4556 = vrcp.pop %v4555
    %v4557 = vmul.f32 %v4477, %v4556
    %v4558 = vadd.f32 %v4557, 1e-08
    %v4559 = vlog2.pop %v4558
    %v4560 = vmul.f32 %v4559, 0.6931472
    %v4561 = vsub.f32 0.0, %v4560
    %v4562 = vrot.slane %v4561, 4
    %v4563 = vadd.f32 %v4561, %v4562
    %v4564 = vrot.slane %v4563, 2
    %v4565 = vadd.f32 %v4563, %v4564
    %v4566 = vrot.slane %v4565, 1
    %v4567 = vadd.f32 %v4565, %v4566
    %v4568 = vmul.f32 %v4567, %v3454
    %v4569 = vadd.f32 %v4467, %v4568
    %4571 = vrot.lane.b32.xlu0 %v4227, 96
    %v4572 = vpop.permute.xlu0 %4571
    %v4574 = vmul.f32 %v4210, %v4572
    %v4575 = vsel %vm222, %v4574, 0.0
    %4576 = vadd.xlane.f32.xlu0 %v4575
    %v4577 = vpop.xlane.xlu0 %4576
    %v4578 = vmul.f32 %v4577, 1.442695
    %v4579 = vpow.pop %v4578
    %v4581 = vsel %vm222, %v4210, 0
    %v4583 = vsel %vm222, %v4572, 0
    %4585 = vmatprep.subr.mxu0 0.0
    %4586 = vmatpush1.xpose.msra.mxu0 %v4583
    %4587 = vmatprep.subr.mxu0 0.0
    %4588 = vmatpush1.xpose.msra.mxu0 0.0
    %4589 = vmatprep.subr.mxu0 0.0
    %4590 = vmatpush1.xpose.msra.mxu0 0.0
    %4591 = vmatprep.subr.mxu0 0.0
    %4592 = vmatpush1.xpose.msra.mxu0 0.0
    %4593 = vmatprep.subr.mxu0 0.0
    %4594 = vmatpush1.xpose.msra.mxu0 0.0
    %4595 = vmatprep.subr.mxu0 0.0
    %4596 = vmatpush1.xpose.msra.mxu0 0.0
    %4597 = vmatprep.subr.mxu0 0.0
    %4598 = vmatpush1.xpose.msra.mxu0 0.0
    %4599 = vmatprep.subr.mxu0 0.0
    %4600 = vmatpush1.xpose.msra.mxu0 0.0
    %4601 = vmatprep.subr.mxu0 0.0
    %4602 = vmatpush1.xpose.msra.mxu0 0.0
    %4603 = vmatprep.subr.mxu0 0.0
    %4604 = vmatpush1.xpose.msra.mxu0 0.0
    %4605 = vmatprep.subr.mxu0 0.0
    %4606 = vmatpush1.xpose.msra.mxu0 0.0
    %4607 = vmatprep.subr.mxu0 0.0
    %4608 = vmatpush1.xpose.msra.mxu0 0.0
    %4609 = vmatprep.subr.mxu0 0.0
    %4610 = vmatpush1.xpose.msra.mxu0 0.0
    %4611 = vmatprep.subr.mxu0 0.0
    %4612 = vmatpush1.xpose.msra.mxu0 0.0
    %4613 = vmatprep.subr.mxu0 0.0
    %4614 = vmatpush1.xpose.msra.mxu0 0.0
    %4615 = vmatprep.subr.mxu0 0.0
    %4616 = vmatpush1.xpose.msra.mxu0 0.0
    %4617 = vmatprep.subr.mxu0 0.0
    %4618 = vmatpush1.xpose.msra.mxu0 0.0
    %4619 = vmatprep.subr.mxu0 0.0
    %4620 = vmatpush1.xpose.msra.mxu0 0.0
    %4621 = vmatprep.subr.mxu0 0.0
    %4622 = vmatpush1.xpose.msra.mxu0 0.0
    %4623 = vmatprep.subr.mxu0 0.0
    %4624 = vmatpush1.xpose.msra.mxu0 0.0
    %4625 = vmatprep.subr.mxu0 0.0
    %4626 = vmatpush1.xpose.msra.mxu0 0.0
    %4627 = vmatprep.subr.mxu0 0.0
    %4628 = vmatpush1.xpose.msra.mxu0 0.0
    %4629 = vmatprep.subr.mxu0 0.0
    %4630 = vmatpush1.xpose.msra.mxu0 0.0
    %4631 = vmatprep.subr.mxu0 0.0
    %4632 = vmatpush1.xpose.msra.mxu0 0.0
    %4633 = vmatprep.subr.mxu0 0.0
    %4634 = vmatpush1.xpose.msra.mxu0 0.0
    %4635 = vmatprep.subr.mxu0 0.0
    %4636 = vmatpush1.xpose.msra.mxu0 0.0
    %4637 = vmatprep.subr.mxu0 0.0
    %4638 = vmatpush1.xpose.msra.mxu0 0.0
    %4639 = vmatprep.subr.mxu0 0.0
    %4640 = vmatpush1.xpose.msra.mxu0 0.0
    %4641 = vmatprep.subr.mxu0 0.0
    %4642 = vmatpush1.xpose.msra.mxu0 0.0
    %4643 = vmatprep.subr.mxu0 0.0
    %4644 = vmatpush1.xpose.msra.mxu0 0.0
    %4645 = vmatprep.subr.mxu0 0.0
    %4646 = vmatpush1.xpose.msra.mxu0 0.0
    %4647 = vmatprep.subr.mxu0 0.0
    %4648 = vmatpush1.xpose.msra.mxu0 0.0
    %4649 = vmatprep.mubr.f32.mxu0 0.0
    %4650 = vmatmul.mubr.f32.gmra.mrb[0].mxu0 %v4581
    %v4651 = vpop.f32.mrb[0].mxu0
    %v4652 = vadd.f32 0.0, %v4651
    %v4653 = vpop.f32.mrb[0].mxu0
    %4654 = vdwg.mxu0
    %v4655 = vmul.f32 %v4652, 1.442695
    %v4656 = vpow.pop %v4655
    %v4657 = vsel %vm4347, %v4656, 0.0
    %4658 = vadd.xlane.f32.xlu0 %v4657
    %v4659 = vpop.xlane.xlu0 %4658
    %v4660 = vadd.f32 %v4659, 1e-08
    %v4661 = vrcp.pop %v4660
    %v4662 = vmul.f32 %v4579, %v4661
    %v4663 = vadd.f32 %v4662, 1e-08
    %v4664 = vlog2.pop %v4663
    %v4665 = vmul.f32 %v4664, 0.6931472
    %v4666 = vsub.f32 0.0, %v4665
    %v4667 = vrot.slane %v4666, 4
    %v4668 = vadd.f32 %v4666, %v4667
    %v4669 = vrot.slane %v4668, 2
    %v4670 = vadd.f32 %v4668, %v4669
    %v4671 = vrot.slane %v4670, 1
    %v4672 = vadd.f32 %v4670, %v4671
    %v4673 = vmul.f32 %v4672, %v3454
    %v4674 = vadd.f32 %v4569, %v4673
    %4676 = vrot.lane.b32.xlu0 %v4243, 64
    %v4677 = vpop.permute.xlu0 %4676
    %v4679 = vmul.f32 %v4210, %v4677
    %v4680 = vsel %vm222, %v4679, 0.0
    %4681 = vadd.xlane.f32.xlu0 %v4680
    %v4682 = vpop.xlane.xlu0 %4681
    %v4683 = vmul.f32 %v4682, 1.442695
    %v4684 = vpow.pop %v4683
    %v4685 = vsel %vm222, %v4677, 0
    %4687 = vmatprep.subr.mxu0 0.0
    %4688 = vmatpush1.xpose.msra.mxu0 %v4685
    %4689 = vmatprep.subr.mxu0 0.0
    %4690 = vmatpush1.xpose.msra.mxu0 0.0
    %4691 = vmatprep.subr.mxu0 0.0
    %4692 = vmatpush1.xpose.msra.mxu0 0.0
    %4693 = vmatprep.subr.mxu0 0.0
    %4694 = vmatpush1.xpose.msra.mxu0 0.0
    %4695 = vmatprep.subr.mxu0 0.0
    %4696 = vmatpush1.xpose.msra.mxu0 0.0
    %4697 = vmatprep.subr.mxu0 0.0
    %4698 = vmatpush1.xpose.msra.mxu0 0.0
    %4699 = vmatprep.subr.mxu0 0.0
    %4700 = vmatpush1.xpose.msra.mxu0 0.0
    %4701 = vmatprep.subr.mxu0 0.0
    %4702 = vmatpush1.xpose.msra.mxu0 0.0
    %4703 = vmatprep.subr.mxu0 0.0
    %4704 = vmatpush1.xpose.msra.mxu0 0.0
    %4705 = vmatprep.subr.mxu0 0.0
    %4706 = vmatpush1.xpose.msra.mxu0 0.0
    %4707 = vmatprep.subr.mxu0 0.0
    %4708 = vmatpush1.xpose.msra.mxu0 0.0
    %4709 = vmatprep.subr.mxu0 0.0
    %4710 = vmatpush1.xpose.msra.mxu0 0.0
    %4711 = vmatprep.subr.mxu0 0.0
    %4712 = vmatpush1.xpose.msra.mxu0 0.0
    %4713 = vmatprep.subr.mxu0 0.0
    %4714 = vmatpush1.xpose.msra.mxu0 0.0
    %4715 = vmatprep.subr.mxu0 0.0
    %4716 = vmatpush1.xpose.msra.mxu0 0.0
    %4717 = vmatprep.subr.mxu0 0.0
    %4718 = vmatpush1.xpose.msra.mxu0 0.0
    %4719 = vmatprep.subr.mxu0 0.0
    %4720 = vmatpush1.xpose.msra.mxu0 0.0
    %4721 = vmatprep.subr.mxu0 0.0
    %4722 = vmatpush1.xpose.msra.mxu0 0.0
    %4723 = vmatprep.subr.mxu0 0.0
    %4724 = vmatpush1.xpose.msra.mxu0 0.0
    %4725 = vmatprep.subr.mxu0 0.0
    %4726 = vmatpush1.xpose.msra.mxu0 0.0
    %4727 = vmatprep.subr.mxu0 0.0
    %4728 = vmatpush1.xpose.msra.mxu0 0.0
    %4729 = vmatprep.subr.mxu0 0.0
    %4730 = vmatpush1.xpose.msra.mxu0 0.0
    %4731 = vmatprep.subr.mxu0 0.0
    %4732 = vmatpush1.xpose.msra.mxu0 0.0
    %4733 = vmatprep.subr.mxu0 0.0
    %4734 = vmatpush1.xpose.msra.mxu0 0.0
    %4735 = vmatprep.subr.mxu0 0.0
    %4736 = vmatpush1.xpose.msra.mxu0 0.0
    %4737 = vmatprep.subr.mxu0 0.0
    %4738 = vmatpush1.xpose.msra.mxu0 0.0
    %4739 = vmatprep.subr.mxu0 0.0
    %4740 = vmatpush1.xpose.msra.mxu0 0.0
    %4741 = vmatprep.subr.mxu0 0.0
    %4742 = vmatpush1.xpose.msra.mxu0 0.0
    %4743 = vmatprep.subr.mxu0 0.0
    %4744 = vmatpush1.xpose.msra.mxu0 0.0
    %4745 = vmatprep.subr.mxu0 0.0
    %4746 = vmatpush1.xpose.msra.mxu0 0.0
    %4747 = vmatprep.subr.mxu0 0.0
    %4748 = vmatpush1.xpose.msra.mxu0 0.0
    %4749 = vmatprep.subr.mxu0 0.0
    %4750 = vmatpush1.xpose.msra.mxu0 0.0
    %4751 = vmatprep.mubr.f32.mxu0 0.0
    %4752 = vmatmul.mubr.f32.gmra.mrb[0].mxu0 %v4581
    %v4753 = vpop.f32.mrb[0].mxu0
    %v4754 = vadd.f32 0.0, %v4753
    %v4755 = vpop.f32.mrb[0].mxu0
    %4756 = vdwg.mxu0
    %v4757 = vmul.f32 %v4754, 1.442695
    %v4758 = vpow.pop %v4757
    %v4759 = vsel %vm4347, %v4758, 0.0
    %4760 = vadd.xlane.f32.xlu0 %v4759
    %v4761 = vpop.xlane.xlu0 %4760
    %v4762 = vadd.f32 %v4761, 1e-08
    %v4763 = vrcp.pop %v4762
    %v4764 = vmul.f32 %v4684, %v4763
    %v4765 = vadd.f32 %v4764, 1e-08
    %v4766 = vlog2.pop %v4765
    %v4767 = vmul.f32 %v4766, 0.6931472
    %v4768 = vsub.f32 0.0, %v4767
    %v4769 = vrot.slane %v4768, 4
    %v4770 = vadd.f32 %v4768, %v4769
    %v4771 = vrot.slane %v4770, 2
    %v4772 = vadd.f32 %v4770, %v4771
    %v4773 = vrot.slane %v4772, 1
    %v4774 = vadd.f32 %v4772, %v4773
    %v4775 = vmul.f32 %v4774, %v3454
    %v4776 = vadd.f32 %v4674, %v4775
    %4778 = vrot.lane.b32.xlu0 %v4259, 32
    %v4779 = vpop.permute.xlu0 %4778
    %v4781 = vmul.f32 %v4210, %v4779
    %v4782 = vsel %vm222, %v4781, 0.0
    %4783 = vadd.xlane.f32.xlu0 %v4782
    %v4784 = vpop.xlane.xlu0 %4783
    %v4785 = vmul.f32 %v4784, 1.442695
    %v4786 = vpow.pop %v4785
    %v4787 = vsel %vm222, %v4779, 0
    %4789 = vmatprep.subr.mxu0 0.0
    %4790 = vmatpush1.xpose.msra.mxu0 %v4787
    %4791 = vmatprep.subr.mxu0 0.0
    %4792 = vmatpush1.xpose.msra.mxu0 0.0
    %4793 = vmatprep.subr.mxu0 0.0
    %4794 = vmatpush1.xpose.msra.mxu0 0.0
    %4795 = vmatprep.subr.mxu0 0.0
    %4796 = vmatpush1.xpose.msra.mxu0 0.0
    %4797 = vmatprep.subr.mxu0 0.0
    %4798 = vmatpush1.xpose.msra.mxu0 0.0
    %4799 = vmatprep.subr.mxu0 0.0
    %4800 = vmatpush1.xpose.msra.mxu0 0.0
    %4801 = vmatprep.subr.mxu0 0.0
    %4802 = vmatpush1.xpose.msra.mxu0 0.0
    %4803 = vmatprep.subr.mxu0 0.0
    %4804 = vmatpush1.xpose.msra.mxu0 0.0
    %4805 = vmatprep.subr.mxu0 0.0
    %4806 = vmatpush1.xpose.msra.mxu0 0.0
    %4807 = vmatprep.subr.mxu0 0.0
    %4808 = vmatpush1.xpose.msra.mxu0 0.0
    %4809 = vmatprep.subr.mxu0 0.0
    %4810 = vmatpush1.xpose.msra.mxu0 0.0
    %4811 = vmatprep.subr.mxu0 0.0
    %4812 = vmatpush1.xpose.msra.mxu0 0.0
    %4813 = vmatprep.subr.mxu0 0.0
    %4814 = vmatpush1.xpose.msra.mxu0 0.0
    %4815 = vmatprep.subr.mxu0 0.0
    %4816 = vmatpush1.xpose.msra.mxu0 0.0
    %4817 = vmatprep.subr.mxu0 0.0
    %4818 = vmatpush1.xpose.msra.mxu0 0.0
    %4819 = vmatprep.subr.mxu0 0.0
    %4820 = vmatpush1.xpose.msra.mxu0 0.0
    %4821 = vmatprep.subr.mxu0 0.0
    %4822 = vmatpush1.xpose.msra.mxu0 0.0
    %4823 = vmatprep.subr.mxu0 0.0
    %4824 = vmatpush1.xpose.msra.mxu0 0.0
    %4825 = vmatprep.subr.mxu0 0.0
    %4826 = vmatpush1.xpose.msra.mxu0 0.0
    %4827 = vmatprep.subr.mxu0 0.0
    %4828 = vmatpush1.xpose.msra.mxu0 0.0
    %4829 = vmatprep.subr.mxu0 0.0
    %4830 = vmatpush1.xpose.msra.mxu0 0.0
    %4831 = vmatprep.subr.mxu0 0.0
    %4832 = vmatpush1.xpose.msra.mxu0 0.0
    %4833 = vmatprep.subr.mxu0 0.0
    %4834 = vmatpush1.xpose.msra.mxu0 0.0
    %4835 = vmatprep.subr.mxu0 0.0
    %4836 = vmatpush1.xpose.msra.mxu0 0.0
    %4837 = vmatprep.subr.mxu0 0.0
    %4838 = vmatpush1.xpose.msra.mxu0 0.0
    %4839 = vmatprep.subr.mxu0 0.0
    %4840 = vmatpush1.xpose.msra.mxu0 0.0
    %4841 = vmatprep.subr.mxu0 0.0
    %4842 = vmatpush1.xpose.msra.mxu0 0.0
    %4843 = vmatprep.subr.mxu0 0.0
    %4844 = vmatpush1.xpose.msra.mxu0 0.0
    %4845 = vmatprep.subr.mxu0 0.0
    %4846 = vmatpush1.xpose.msra.mxu0 0.0
    %4847 = vmatprep.subr.mxu0 0.0
    %4848 = vmatpush1.xpose.msra.mxu0 0.0
    %4849 = vmatprep.subr.mxu0 0.0
    %4850 = vmatpush1.xpose.msra.mxu0 0.0
    %4851 = vmatprep.subr.mxu0 0.0
    %4852 = vmatpush1.xpose.msra.mxu0 0.0
    %4853 = vmatprep.mubr.f32.mxu0 0.0
    %4854 = vmatmul.mubr.f32.gmra.mrb[0].mxu0 %v4581
    %v4855 = vpop.f32.mrb[0].mxu0
    %v4856 = vadd.f32 0.0, %v4855
    %v4857 = vpop.f32.mrb[0].mxu0
    %4858 = vdwg.mxu0
    %v4859 = vmul.f32 %v4856, 1.442695
    %v4860 = vpow.pop %v4859
    %v4861 = vsel %vm4347, %v4860, 0.0
    %4862 = vadd.xlane.f32.xlu0 %v4861
    %v4863 = vpop.xlane.xlu0 %4862
    %v4864 = vadd.f32 %v4863, 1e-08
    %v4865 = vrcp.pop %v4864
    %v4866 = vmul.f32 %v4786, %v4865
    %v4867 = vadd.f32 %v4866, 1e-08
    %v4868 = vlog2.pop %v4867
    %v4869 = vmul.f32 %v4868, 0.6931472
    %v4870 = vsub.f32 0.0, %v4869
    %v4871 = vrot.slane %v4870, 4
    %v4872 = vadd.f32 %v4870, %v4871
    %v4873 = vrot.slane %v4872, 2
    %v4874 = vadd.f32 %v4872, %v4873
    %v4875 = vrot.slane %v4874, 1
    %v4876 = vadd.f32 %v4874, %v4875
    %v4877 = vmul.f32 %v4876, %v3454
    %v4878 = vadd.f32 %v4776, %v4877
    %v4879 = vmul.f32 %v4061, %v4061
    %v4880 = vsel %vm222, %v4879, 0.0
    %4881 = vadd.xlane.f32.xlu0 %v4880
    %v4882 = vpop.xlane.xlu0 %4881
    %v4883 = vrsqrt.pop %v4882
    %v4884 = vmul.f32 %v4882, %v4883
    %vm4885 = vcmp.eq.f32.partialorder %v4882, inf
    %v4886 = vsel %vm4885, %v4882, %v4884
    %vm4887 = vcmp.eq.f32.partialorder %v4882, 0.0
    %v4888 = vand.u32 %v4882, 2147483648
    %v4889 = vsel %vm4887, %v4888, %v4886
    %v4890 = vmax.f32 %v4889, 1e-12
    %v4891 = vrcp.pop %v4890
    %v4892 = vmul.f32 %v4061, %v4891
    %4894 = vrot.lane.b32.xlu0 %v4879, 96
    %v4895 = vpop.permute.xlu0 %4894
    %v4897 = vsel %vm222, %v4895, 0.0
    %4898 = vadd.xlane.f32.xlu0 %v4897
    %v4899 = vpop.xlane.xlu0 %4898
    %v4900 = vrsqrt.pop %v4899
    %v4901 = vmul.f32 %v4899, %v4900
    %vm4902 = vcmp.eq.f32.partialorder %v4899, inf
    %v4903 = vsel %vm4902, %v4899, %v4901
    %vm4904 = vcmp.eq.f32.partialorder %v4899, 0.0
    %v4905 = vand.u32 %v4899, 2147483648
    %v4906 = vsel %vm4904, %v4905, %v4903
    %v4907 = vmax.f32 %v4906, 1e-12
    %v4908 = vrcp.pop %v4907
    %v4909 = vmul.f32 %v4061, %v4908
    %4910 = vrot.lane.b32.xlu0 %v4879, 64
    %v4911 = vpop.permute.xlu0 %4910
    %v4913 = vsel %vm222, %v4911, 0.0
    %4914 = vadd.xlane.f32.xlu0 %v4913
    %v4915 = vpop.xlane.xlu0 %4914
    %v4916 = vrsqrt.pop %v4915
    %v4917 = vmul.f32 %v4915, %v4916
    %vm4918 = vcmp.eq.f32.partialorder %v4915, inf
    %v4919 = vsel %vm4918, %v4915, %v4917
    %vm4920 = vcmp.eq.f32.partialorder %v4915, 0.0
    %v4921 = vand.u32 %v4915, 2147483648
    %v4922 = vsel %vm4920, %v4921, %v4919
    %v4923 = vmax.f32 %v4922, 1e-12
    %v4924 = vrcp.pop %v4923
    %v4925 = vmul.f32 %v4061, %v4924
    %4926 = vrot.lane.b32.xlu0 %v4879, 32
    %v4927 = vpop.permute.xlu0 %4926
    %v4929 = vsel %vm222, %v4927, 0.0
    %4930 = vadd.xlane.f32.xlu0 %v4929
    %v4931 = vpop.xlane.xlu0 %4930
    %v4932 = vrsqrt.pop %v4931
    %v4933 = vmul.f32 %v4931, %v4932
    %vm4934 = vcmp.eq.f32.partialorder %v4931, inf
    %v4935 = vsel %vm4934, %v4931, %v4933
    %vm4936 = vcmp.eq.f32.partialorder %v4931, 0.0
    %v4937 = vand.u32 %v4931, 2147483648
    %v4938 = vsel %vm4936, %v4937, %v4935
    %v4939 = vmax.f32 %v4938, 1e-12
    %v4940 = vrcp.pop %v4939
    %v4941 = vmul.f32 %v4061, %v4940
    %v4942 = vmul.f32 %v4132, %v4132
    %v4943 = vsel %vm222, %v4942, 0.0
    %4944 = vadd.xlane.f32.xlu0 %v4943
    %v4945 = vpop.xlane.xlu0 %4944
    %v4946 = vrsqrt.pop %v4945
    %v4947 = vmul.f32 %v4945, %v4946
    %vm4948 = vcmp.eq.f32.partialorder %v4945, inf
    %v4949 = vsel %vm4948, %v4945, %v4947
    %vm4950 = vcmp.eq.f32.partialorder %v4945, 0.0
    %v4951 = vand.u32 %v4945, 2147483648
    %v4952 = vsel %vm4950, %v4951, %v4949
    %v4953 = vmax.f32 %v4952, 1e-12
    %v4954 = vrcp.pop %v4953
    %v4955 = vmul.f32 %v4132, %v4954
    %4957 = vrot.lane.b32.xlu0 %v4942, 96
    %v4958 = vpop.permute.xlu0 %4957
    %v4960 = vsel %vm222, %v4958, 0.0
    %4961 = vadd.xlane.f32.xlu0 %v4960
    %v4962 = vpop.xlane.xlu0 %4961
    %v4963 = vrsqrt.pop %v4962
    %v4964 = vmul.f32 %v4962, %v4963
    %vm4965 = vcmp.eq.f32.partialorder %v4962, inf
    %v4966 = vsel %vm4965, %v4962, %v4964
    %vm4967 = vcmp.eq.f32.partialorder %v4962, 0.0
    %v4968 = vand.u32 %v4962, 2147483648
    %v4969 = vsel %vm4967, %v4968, %v4966
    %v4970 = vmax.f32 %v4969, 1e-12
    %v4971 = vrcp.pop %v4970
    %v4972 = vmul.f32 %v4132, %v4971
    %4973 = vrot.lane.b32.xlu0 %v4942, 64
    %v4974 = vpop.permute.xlu0 %4973
    %v4976 = vsel %vm222, %v4974, 0.0
    %4977 = vadd.xlane.f32.xlu0 %v4976
    %v4978 = vpop.xlane.xlu0 %4977
    %v4979 = vrsqrt.pop %v4978
    %v4980 = vmul.f32 %v4978, %v4979
    %vm4981 = vcmp.eq.f32.partialorder %v4978, inf
    %v4982 = vsel %vm4981, %v4978, %v4980
    %vm4983 = vcmp.eq.f32.partialorder %v4978, 0.0
    %v4984 = vand.u32 %v4978, 2147483648
    %v4985 = vsel %vm4983, %v4984, %v4982
    %v4986 = vmax.f32 %v4985, 1e-12
    %v4987 = vrcp.pop %v4986
    %v4988 = vmul.f32 %v4132, %v4987
    %4989 = vrot.lane.b32.xlu0 %v4942, 32
    %v4990 = vpop.permute.xlu0 %4989
    %v4992 = vsel %vm222, %v4990, 0.0
    %4993 = vadd.xlane.f32.xlu0 %v4992
    %v4994 = vpop.xlane.xlu0 %4993
    %v4995 = vrsqrt.pop %v4994
    %v4996 = vmul.f32 %v4994, %v4995
    %vm4997 = vcmp.eq.f32.partialorder %v4994, inf
    %v4998 = vsel %vm4997, %v4994, %v4996
    %vm4999 = vcmp.eq.f32.partialorder %v4994, 0.0
    %v5000 = vand.u32 %v4994, 2147483648
    %v5001 = vsel %vm4999, %v5000, %v4998
    %v5002 = vmax.f32 %v5001, 1e-12
    %v5003 = vrcp.pop %v5002
    %v5004 = vmul.f32 %v4132, %v5003
    %5006 = vrot.lane.b32.xlu0 %v4909, 96
    %v5007 = vpop.permute.xlu0 %5006
    %v5009 = vmul.f32 %v4892, %v5007
    %v5010 = vsel %vm222, %v5009, 0.0
    %5011 = vadd.xlane.f32.xlu0 %v5010
    %v5012 = vpop.xlane.xlu0 %5011
    %v5013 = vmul.f32 %v5012, 1.442695
    %v5014 = vpow.pop %v5013
    %v5016 = vsel %vm222, %v4892, 0
    %v5018 = vsel %vm222, %v5007, 0
    %5020 = vmatprep.subr.mxu0 0.0
    %5021 = vmatpush1.xpose.msra.mxu0 %v5018
    %5022 = vmatprep.subr.mxu0 0.0
    %5023 = vmatpush1.xpose.msra.mxu0 0.0
    %5024 = vmatprep.subr.mxu0 0.0
    %5025 = vmatpush1.xpose.msra.mxu0 0.0
    %5026 = vmatprep.subr.mxu0 0.0
    %5027 = vmatpush1.xpose.msra.mxu0 0.0
    %5028 = vmatprep.subr.mxu0 0.0
    %5029 = vmatpush1.xpose.msra.mxu0 0.0
    %5030 = vmatprep.subr.mxu0 0.0
    %5031 = vmatpush1.xpose.msra.mxu0 0.0
    %5032 = vmatprep.subr.mxu0 0.0
    %5033 = vmatpush1.xpose.msra.mxu0 0.0
    %5034 = vmatprep.subr.mxu0 0.0
    %5035 = vmatpush1.xpose.msra.mxu0 0.0
    %5036 = vmatprep.subr.mxu0 0.0
    %5037 = vmatpush1.xpose.msra.mxu0 0.0
    %5038 = vmatprep.subr.mxu0 0.0
    %5039 = vmatpush1.xpose.msra.mxu0 0.0
    %5040 = vmatprep.subr.mxu0 0.0
    %5041 = vmatpush1.xpose.msra.mxu0 0.0
    %5042 = vmatprep.subr.mxu0 0.0
    %5043 = vmatpush1.xpose.msra.mxu0 0.0
    %5044 = vmatprep.subr.mxu0 0.0
    %5045 = vmatpush1.xpose.msra.mxu0 0.0
    %5046 = vmatprep.subr.mxu0 0.0
    %5047 = vmatpush1.xpose.msra.mxu0 0.0
    %5048 = vmatprep.subr.mxu0 0.0
    %5049 = vmatpush1.xpose.msra.mxu0 0.0
    %5050 = vmatprep.subr.mxu0 0.0
    %5051 = vmatpush1.xpose.msra.mxu0 0.0
    %5052 = vmatprep.subr.mxu0 0.0
    %5053 = vmatpush1.xpose.msra.mxu0 0.0
    %5054 = vmatprep.subr.mxu0 0.0
    %5055 = vmatpush1.xpose.msra.mxu0 0.0
    %5056 = vmatprep.subr.mxu0 0.0
    %5057 = vmatpush1.xpose.msra.mxu0 0.0
    %5058 = vmatprep.subr.mxu0 0.0
    %5059 = vmatpush1.xpose.msra.mxu0 0.0
    %5060 = vmatprep.subr.mxu0 0.0
    %5061 = vmatpush1.xpose.msra.mxu0 0.0
    %5062 = vmatprep.subr.mxu0 0.0
    %5063 = vmatpush1.xpose.msra.mxu0 0.0
    %5064 = vmatprep.subr.mxu0 0.0
    %5065 = vmatpush1.xpose.msra.mxu0 0.0
    %5066 = vmatprep.subr.mxu0 0.0
    %5067 = vmatpush1.xpose.msra.mxu0 0.0
    %5068 = vmatprep.subr.mxu0 0.0
    %5069 = vmatpush1.xpose.msra.mxu0 0.0
    %5070 = vmatprep.subr.mxu0 0.0
    %5071 = vmatpush1.xpose.msra.mxu0 0.0
    %5072 = vmatprep.subr.mxu0 0.0
    %5073 = vmatpush1.xpose.msra.mxu0 0.0
    %5074 = vmatprep.subr.mxu0 0.0
    %5075 = vmatpush1.xpose.msra.mxu0 0.0
    %5076 = vmatprep.subr.mxu0 0.0
    %5077 = vmatpush1.xpose.msra.mxu0 0.0
    %5078 = vmatprep.subr.mxu0 0.0
    %5079 = vmatpush1.xpose.msra.mxu0 0.0
    %5080 = vmatprep.subr.mxu0 0.0
    %5081 = vmatpush1.xpose.msra.mxu0 0.0
    %5082 = vmatprep.subr.mxu0 0.0
    %5083 = vmatpush1.xpose.msra.mxu0 0.0
    %5084 = vmatprep.mubr.f32.mxu0 0.0
    %5085 = vmatmul.mubr.f32.gmra.mrb[0].mxu0 %v5016
    %v5086 = vpop.f32.mrb[0].mxu0
    %v5087 = vadd.f32 0.0, %v5086
    %v5088 = vpop.f32.mrb[0].mxu0
    %5089 = vdwg.mxu0
    %v5090 = vmul.f32 %v5087, 1.442695
    %v5091 = vpow.pop %v5090
    %v5092 = vsel %vm4347, %v5091, 0.0
    %5093 = vadd.xlane.f32.xlu0 %v5092
    %v5094 = vpop.xlane.xlu0 %5093
    %v5095 = vadd.f32 %v5094, 1e-08
    %v5096 = vrcp.pop %v5095
    %v5097 = vmul.f32 %v5014, %v5096
    %v5098 = vadd.f32 %v5097, 1e-08
    %v5099 = vlog2.pop %v5098
    %v5100 = vmul.f32 %v5099, 0.6931472
    %v5101 = vsub.f32 0.0, %v5100
    %v5102 = vrot.slane %v5101, 4
    %v5103 = vadd.f32 %v5101, %v5102
    %v5104 = vrot.slane %v5103, 2
    %v5105 = vadd.f32 %v5103, %v5104
    %v5106 = vrot.slane %v5105, 1
    %v5107 = vadd.f32 %v5105, %v5106
    %v5108 = vmul.f32 %v5107, %v3454
    %v5109 = vadd.f32 %v4878, %v5108
    %5111 = vrot.lane.b32.xlu0 %v4925, 64
    %v5112 = vpop.permute.xlu0 %5111
    %v5114 = vmul.f32 %v4892, %v5112
    %v5115 = vsel %vm222, %v5114, 0.0
    %5116 = vadd.xlane.f32.xlu0 %v5115
    %v5117 = vpop.xlane.xlu0 %5116
    %v5118 = vmul.f32 %v5117, 1.442695
    %v5119 = vpow.pop %v5118
    %v5120 = vsel %vm222, %v5112, 0
    %5122 = vmatprep.subr.mxu0 0.0
    %5123 = vmatpush1.xpose.msra.mxu0 %v5120
    %5124 = vmatprep.subr.mxu0 0.0
    %5125 = vmatpush1.xpose.msra.mxu0 0.0
    %5126 = vmatprep.subr.mxu0 0.0
    %5127 = vmatpush1.xpose.msra.mxu0 0.0
    %5128 = vmatprep.subr.mxu0 0.0
    %5129 = vmatpush1.xpose.msra.mxu0 0.0
    %5130 = vmatprep.subr.mxu0 0.0
    %5131 = vmatpush1.xpose.msra.mxu0 0.0
    %5132 = vmatprep.subr.mxu0 0.0
    %5133 = vmatpush1.xpose.msra.mxu0 0.0
    %5134 = vmatprep.subr.mxu0 0.0
    %5135 = vmatpush1.xpose.msra.mxu0 0.0
    %5136 = vmatprep.subr.mxu0 0.0
    %5137 = vmatpush1.xpose.msra.mxu0 0.0
    %5138 = vmatprep.subr.mxu0 0.0
    %5139 = vmatpush1.xpose.msra.mxu0 0.0
    %5140 = vmatprep.subr.mxu0 0.0
    %5141 = vmatpush1.xpose.msra.mxu0 0.0
    %5142 = vmatprep.subr.mxu0 0.0
    %5143 = vmatpush1.xpose.msra.mxu0 0.0
    %5144 = vmatprep.subr.mxu0 0.0
    %5145 = vmatpush1.xpose.msra.mxu0 0.0
    %5146 = vmatprep.subr.mxu0 0.0
    %5147 = vmatpush1.xpose.msra.mxu0 0.0
    %5148 = vmatprep.subr.mxu0 0.0
    %5149 = vmatpush1.xpose.msra.mxu0 0.0
    %5150 = vmatprep.subr.mxu0 0.0
    %5151 = vmatpush1.xpose.msra.mxu0 0.0
    %5152 = vmatprep.subr.mxu0 0.0
    %5153 = vmatpush1.xpose.msra.mxu0 0.0
    %5154 = vmatprep.subr.mxu0 0.0
    %5155 = vmatpush1.xpose.msra.mxu0 0.0
    %5156 = vmatprep.subr.mxu0 0.0
    %5157 = vmatpush1.xpose.msra.mxu0 0.0
    %5158 = vmatprep.subr.mxu0 0.0
    %5159 = vmatpush1.xpose.msra.mxu0 0.0
    %5160 = vmatprep.subr.mxu0 0.0
    %5161 = vmatpush1.xpose.msra.mxu0 0.0
    %5162 = vmatprep.subr.mxu0 0.0
    %5163 = vmatpush1.xpose.msra.mxu0 0.0
    %5164 = vmatprep.subr.mxu0 0.0
    %5165 = vmatpush1.xpose.msra.mxu0 0.0
    %5166 = vmatprep.subr.mxu0 0.0
    %5167 = vmatpush1.xpose.msra.mxu0 0.0
    %5168 = vmatprep.subr.mxu0 0.0
    %5169 = vmatpush1.xpose.msra.mxu0 0.0
    %5170 = vmatprep.subr.mxu0 0.0
    %5171 = vmatpush1.xpose.msra.mxu0 0.0
    %5172 = vmatprep.subr.mxu0 0.0
    %5173 = vmatpush1.xpose.msra.mxu0 0.0
    %5174 = vmatprep.subr.mxu0 0.0
    %5175 = vmatpush1.xpose.msra.mxu0 0.0
    %5176 = vmatprep.subr.mxu0 0.0
    %5177 = vmatpush1.xpose.msra.mxu0 0.0
    %5178 = vmatprep.subr.mxu0 0.0
    %5179 = vmatpush1.xpose.msra.mxu0 0.0
    %5180 = vmatprep.subr.mxu0 0.0
    %5181 = vmatpush1.xpose.msra.mxu0 0.0
    %5182 = vmatprep.subr.mxu0 0.0
    %5183 = vmatpush1.xpose.msra.mxu0 0.0
    %5184 = vmatprep.subr.mxu0 0.0
    %5185 = vmatpush1.xpose.msra.mxu0 0.0
    %5186 = vmatprep.mubr.f32.mxu0 0.0
    %5187 = vmatmul.mubr.f32.gmra.mrb[0].mxu0 %v5016
    %v5188 = vpop.f32.mrb[0].mxu0
    %v5189 = vadd.f32 0.0, %v5188
    %v5190 = vpop.f32.mrb[0].mxu0
    %5191 = vdwg.mxu0
    %v5192 = vmul.f32 %v5189, 1.442695
    %v5193 = vpow.pop %v5192
    %v5194 = vsel %vm4347, %v5193, 0.0
    %5195 = vadd.xlane.f32.xlu0 %v5194
    %v5196 = vpop.xlane.xlu0 %5195
    %v5197 = vadd.f32 %v5196, 1e-08
    %v5198 = vrcp.pop %v5197
    %v5199 = vmul.f32 %v5119, %v5198
    %v5200 = vadd.f32 %v5199, 1e-08
    %v5201 = vlog2.pop %v5200
    %v5202 = vmul.f32 %v5201, 0.6931472
    %v5203 = vsub.f32 0.0, %v5202
    %v5204 = vrot.slane %v5203, 4
    %v5205 = vadd.f32 %v5203, %v5204
    %v5206 = vrot.slane %v5205, 2
    %v5207 = vadd.f32 %v5205, %v5206
    %v5208 = vrot.slane %v5207, 1
    %v5209 = vadd.f32 %v5207, %v5208
    %v5210 = vmul.f32 %v5209, %v3454
    %v5211 = vadd.f32 %v5109, %v5210
    %5213 = vrot.lane.b32.xlu0 %v4941, 32
    %v5214 = vpop.permute.xlu0 %5213
    %v5216 = vmul.f32 %v4892, %v5214
    %v5217 = vsel %vm222, %v5216, 0.0
    %5218 = vadd.xlane.f32.xlu0 %v5217
    %v5219 = vpop.xlane.xlu0 %5218
    %v5220 = vmul.f32 %v5219, 1.442695
    %v5221 = vpow.pop %v5220
    %v5222 = vsel %vm222, %v5214, 0
    %5224 = vmatprep.subr.mxu0 0.0
    %5225 = vmatpush1.xpose.msra.mxu0 %v5222
    %5226 = vmatprep.subr.mxu0 0.0
    %5227 = vmatpush1.xpose.msra.mxu0 0.0
    %5228 = vmatprep.subr.mxu0 0.0
    %5229 = vmatpush1.xpose.msra.mxu0 0.0
    %5230 = vmatprep.subr.mxu0 0.0
    %5231 = vmatpush1.xpose.msra.mxu0 0.0
    %5232 = vmatprep.subr.mxu0 0.0
    %5233 = vmatpush1.xpose.msra.mxu0 0.0
    %5234 = vmatprep.subr.mxu0 0.0
    %5235 = vmatpush1.xpose.msra.mxu0 0.0
    %5236 = vmatprep.subr.mxu0 0.0
    %5237 = vmatpush1.xpose.msra.mxu0 0.0
    %5238 = vmatprep.subr.mxu0 0.0
    %5239 = vmatpush1.xpose.msra.mxu0 0.0
    %5240 = vmatprep.subr.mxu0 0.0
    %5241 = vmatpush1.xpose.msra.mxu0 0.0
    %5242 = vmatprep.subr.mxu0 0.0
    %5243 = vmatpush1.xpose.msra.mxu0 0.0
    %5244 = vmatprep.subr.mxu0 0.0
    %5245 = vmatpush1.xpose.msra.mxu0 0.0
    %5246 = vmatprep.subr.mxu0 0.0
    %5247 = vmatpush1.xpose.msra.mxu0 0.0
    %5248 = vmatprep.subr.mxu0 0.0
    %5249 = vmatpush1.xpose.msra.mxu0 0.0
    %5250 = vmatprep.subr.mxu0 0.0
    %5251 = vmatpush1.xpose.msra.mxu0 0.0
    %5252 = vmatprep.subr.mxu0 0.0
    %5253 = vmatpush1.xpose.msra.mxu0 0.0
    %5254 = vmatprep.subr.mxu0 0.0
    %5255 = vmatpush1.xpose.msra.mxu0 0.0
    %5256 = vmatprep.subr.mxu0 0.0
    %5257 = vmatpush1.xpose.msra.mxu0 0.0
    %5258 = vmatprep.subr.mxu0 0.0
    %5259 = vmatpush1.xpose.msra.mxu0 0.0
    %5260 = vmatprep.subr.mxu0 0.0
    %5261 = vmatpush1.xpose.msra.mxu0 0.0
    %5262 = vmatprep.subr.mxu0 0.0
    %5263 = vmatpush1.xpose.msra.mxu0 0.0
    %5264 = vmatprep.subr.mxu0 0.0
    %5265 = vmatpush1.xpose.msra.mxu0 0.0
    %5266 = vmatprep.subr.mxu0 0.0
    %5267 = vmatpush1.xpose.msra.mxu0 0.0
    %5268 = vmatprep.subr.mxu0 0.0
    %5269 = vmatpush1.xpose.msra.mxu0 0.0
    %5270 = vmatprep.subr.mxu0 0.0
    %5271 = vmatpush1.xpose.msra.mxu0 0.0
    %5272 = vmatprep.subr.mxu0 0.0
    %5273 = vmatpush1.xpose.msra.mxu0 0.0
    %5274 = vmatprep.subr.mxu0 0.0
    %5275 = vmatpush1.xpose.msra.mxu0 0.0
    %5276 = vmatprep.subr.mxu0 0.0
    %5277 = vmatpush1.xpose.msra.mxu0 0.0
    %5278 = vmatprep.subr.mxu0 0.0
    %5279 = vmatpush1.xpose.msra.mxu0 0.0
    %5280 = vmatprep.subr.mxu0 0.0
    %5281 = vmatpush1.xpose.msra.mxu0 0.0
    %5282 = vmatprep.subr.mxu0 0.0
    %5283 = vmatpush1.xpose.msra.mxu0 0.0
    %5284 = vmatprep.subr.mxu0 0.0
    %5285 = vmatpush1.xpose.msra.mxu0 0.0
    %5286 = vmatprep.subr.mxu0 0.0
    %5287 = vmatpush1.xpose.msra.mxu0 0.0
    %5288 = vmatprep.mubr.f32.mxu0 0.0
    %5289 = vmatmul.mubr.f32.gmra.mrb[0].mxu0 %v5016
    %v5290 = vpop.f32.mrb[0].mxu0
    %v5291 = vadd.f32 0.0, %v5290
    %v5292 = vpop.f32.mrb[0].mxu0
    %5293 = vdwg.mxu0
    %v5294 = vmul.f32 %v5291, 1.442695
    %v5295 = vpow.pop %v5294
    %v5296 = vsel %vm4347, %v5295, 0.0
    %5297 = vadd.xlane.f32.xlu0 %v5296
    %v5298 = vpop.xlane.xlu0 %5297
    %v5299 = vadd.f32 %v5298, 1e-08
    %v5300 = vrcp.pop %v5299
    %v5301 = vmul.f32 %v5221, %v5300
    %v5302 = vadd.f32 %v5301, 1e-08
    %v5303 = vlog2.pop %v5302
    %v5304 = vmul.f32 %v5303, 0.6931472
    %v5305 = vsub.f32 0.0, %v5304
    %v5306 = vrot.slane %v5305, 4
    %v5307 = vadd.f32 %v5305, %v5306
    %v5308 = vrot.slane %v5307, 2
    %v5309 = vadd.f32 %v5307, %v5308
    %v5310 = vrot.slane %v5309, 1
    %v5311 = vadd.f32 %v5309, %v5310
    %v5312 = vmul.f32 %v5311, %v3454
    %v5313 = vadd.f32 %v5211, %v5312
    %5315 = vrot.lane.b32.xlu0 %v4972, 96
    %v5316 = vpop.permute.xlu0 %5315
    %v5318 = vmul.f32 %v4955, %v5316
    %v5319 = vsel %vm222, %v5318, 0.0
    %5320 = vadd.xlane.f32.xlu0 %v5319
    %v5321 = vpop.xlane.xlu0 %5320
    %v5322 = vmul.f32 %v5321, 1.442695
    %v5323 = vpow.pop %v5322
    %v5325 = vsel %vm222, %v4955, 0
    %v5327 = vsel %vm222, %v5316, 0
    %5329 = vmatprep.subr.mxu0 0.0
    %5330 = vmatpush1.xpose.msra.mxu0 %v5327
    %5331 = vmatprep.subr.mxu0 0.0
    %5332 = vmatpush1.xpose.msra.mxu0 0.0
    %5333 = vmatprep.subr.mxu0 0.0
    %5334 = vmatpush1.xpose.msra.mxu0 0.0
    %5335 = vmatprep.subr.mxu0 0.0
    %5336 = vmatpush1.xpose.msra.mxu0 0.0
    %5337 = vmatprep.subr.mxu0 0.0
    %5338 = vmatpush1.xpose.msra.mxu0 0.0
    %5339 = vmatprep.subr.mxu0 0.0
    %5340 = vmatpush1.xpose.msra.mxu0 0.0
    %5341 = vmatprep.subr.mxu0 0.0
    %5342 = vmatpush1.xpose.msra.mxu0 0.0
    %5343 = vmatprep.subr.mxu0 0.0
    %5344 = vmatpush1.xpose.msra.mxu0 0.0
    %5345 = vmatprep.subr.mxu0 0.0
    %5346 = vmatpush1.xpose.msra.mxu0 0.0
    %5347 = vmatprep.subr.mxu0 0.0
    %5348 = vmatpush1.xpose.msra.mxu0 0.0
    %5349 = vmatprep.subr.mxu0 0.0
    %5350 = vmatpush1.xpose.msra.mxu0 0.0
    %5351 = vmatprep.subr.mxu0 0.0
    %5352 = vmatpush1.xpose.msra.mxu0 0.0
    %5353 = vmatprep.subr.mxu0 0.0
    %5354 = vmatpush1.xpose.msra.mxu0 0.0
    %5355 = vmatprep.subr.mxu0 0.0
    %5356 = vmatpush1.xpose.msra.mxu0 0.0
    %5357 = vmatprep.subr.mxu0 0.0
    %5358 = vmatpush1.xpose.msra.mxu0 0.0
    %5359 = vmatprep.subr.mxu0 0.0
    %5360 = vmatpush1.xpose.msra.mxu0 0.0
    %5361 = vmatprep.subr.mxu0 0.0
    %5362 = vmatpush1.xpose.msra.mxu0 0.0
    %5363 = vmatprep.subr.mxu0 0.0
    %5364 = vmatpush1.xpose.msra.mxu0 0.0
    %5365 = vmatprep.subr.mxu0 0.0
    %5366 = vmatpush1.xpose.msra.mxu0 0.0
    %5367 = vmatprep.subr.mxu0 0.0
    %5368 = vmatpush1.xpose.msra.mxu0 0.0
    %5369 = vmatprep.subr.mxu0 0.0
    %5370 = vmatpush1.xpose.msra.mxu0 0.0
    %5371 = vmatprep.subr.mxu0 0.0
    %5372 = vmatpush1.xpose.msra.mxu0 0.0
    %5373 = vmatprep.subr.mxu0 0.0
    %5374 = vmatpush1.xpose.msra.mxu0 0.0
    %5375 = vmatprep.subr.mxu0 0.0
    %5376 = vmatpush1.xpose.msra.mxu0 0.0
    %5377 = vmatprep.subr.mxu0 0.0
    %5378 = vmatpush1.xpose.msra.mxu0 0.0
    %5379 = vmatprep.subr.mxu0 0.0
    %5380 = vmatpush1.xpose.msra.mxu0 0.0
    %5381 = vmatprep.subr.mxu0 0.0
    %5382 = vmatpush1.xpose.msra.mxu0 0.0
    %5383 = vmatprep.subr.mxu0 0.0
    %5384 = vmatpush1.xpose.msra.mxu0 0.0
    %5385 = vmatprep.subr.mxu0 0.0
    %5386 = vmatpush1.xpose.msra.mxu0 0.0
    %5387 = vmatprep.subr.mxu0 0.0
    %5388 = vmatpush1.xpose.msra.mxu0 0.0
    %5389 = vmatprep.subr.mxu0 0.0
    %5390 = vmatpush1.xpose.msra.mxu0 0.0
    %5391 = vmatprep.subr.mxu0 0.0
    %5392 = vmatpush1.xpose.msra.mxu0 0.0
    %5393 = vmatprep.mubr.f32.mxu0 0.0
    %5394 = vmatmul.mubr.f32.gmra.mrb[0].mxu0 %v5325
    %v5395 = vpop.f32.mrb[0].mxu0
    %v5396 = vadd.f32 0.0, %v5395
    %v5397 = vpop.f32.mrb[0].mxu0
    %5398 = vdwg.mxu0
    %v5399 = vmul.f32 %v5396, 1.442695
    %v5400 = vpow.pop %v5399
    %v5401 = vsel %vm4347, %v5400, 0.0
    %5402 = vadd.xlane.f32.xlu0 %v5401
    %v5403 = vpop.xlane.xlu0 %5402
    %v5404 = vadd.f32 %v5403, 1e-08
    %v5405 = vrcp.pop %v5404
    %v5406 = vmul.f32 %v5323, %v5405
    %v5407 = vadd.f32 %v5406, 1e-08
    %v5408 = vlog2.pop %v5407
    %v5409 = vmul.f32 %v5408, 0.6931472
    %v5410 = vsub.f32 0.0, %v5409
    %v5411 = vrot.slane %v5410, 4
    %v5412 = vadd.f32 %v5410, %v5411
    %v5413 = vrot.slane %v5412, 2
    %v5414 = vadd.f32 %v5412, %v5413
    %v5415 = vrot.slane %v5414, 1
    %v5416 = vadd.f32 %v5414, %v5415
    %v5417 = vmul.f32 %v5416, %v3454
    %v5418 = vadd.f32 %v5313, %v5417
    %5420 = vrot.lane.b32.xlu0 %v4988, 64
    %v5421 = vpop.permute.xlu0 %5420
    %v5423 = vmul.f32 %v4955, %v5421
    %v5424 = vsel %vm222, %v5423, 0.0
    %5425 = vadd.xlane.f32.xlu0 %v5424
    %v5426 = vpop.xlane.xlu0 %5425
    %v5427 = vmul.f32 %v5426, 1.442695
    %v5428 = vpow.pop %v5427
    %v5429 = vsel %vm222, %v5421, 0
    %5431 = vmatprep.subr.mxu0 0.0
    %5432 = vmatpush1.xpose.msra.mxu0 %v5429
    %5433 = vmatprep.subr.mxu0 0.0
    %5434 = vmatpush1.xpose.msra.mxu0 0.0
    %5435 = vmatprep.subr.mxu0 0.0
    %5436 = vmatpush1.xpose.msra.mxu0 0.0
    %5437 = vmatprep.subr.mxu0 0.0
    %5438 = vmatpush1.xpose.msra.mxu0 0.0
    %5439 = vmatprep.subr.mxu0 0.0
    %5440 = vmatpush1.xpose.msra.mxu0 0.0
    %5441 = vmatprep.subr.mxu0 0.0
    %5442 = vmatpush1.xpose.msra.mxu0 0.0
    %5443 = vmatprep.subr.mxu0 0.0
    %5444 = vmatpush1.xpose.msra.mxu0 0.0
    %5445 = vmatprep.subr.mxu0 0.0
    %5446 = vmatpush1.xpose.msra.mxu0 0.0
    %5447 = vmatprep.subr.mxu0 0.0
    %5448 = vmatpush1.xpose.msra.mxu0 0.0
    %5449 = vmatprep.subr.mxu0 0.0
    %5450 = vmatpush1.xpose.msra.mxu0 0.0
    %5451 = vmatprep.subr.mxu0 0.0
    %5452 = vmatpush1.xpose.msra.mxu0 0.0
    %5453 = vmatprep.subr.mxu0 0.0
    %5454 = vmatpush1.xpose.msra.mxu0 0.0
    %5455 = vmatprep.subr.mxu0 0.0
    %5456 = vmatpush1.xpose.msra.mxu0 0.0
    %5457 = vmatprep.subr.mxu0 0.0
    %5458 = vmatpush1.xpose.msra.mxu0 0.0
    %5459 = vmatprep.subr.mxu0 0.0
    %5460 = vmatpush1.xpose.msra.mxu0 0.0
    %5461 = vmatprep.subr.mxu0 0.0
    %5462 = vmatpush1.xpose.msra.mxu0 0.0
    %5463 = vmatprep.subr.mxu0 0.0
    %5464 = vmatpush1.xpose.msra.mxu0 0.0
    %5465 = vmatprep.subr.mxu0 0.0
    %5466 = vmatpush1.xpose.msra.mxu0 0.0
    %5467 = vmatprep.subr.mxu0 0.0
    %5468 = vmatpush1.xpose.msra.mxu0 0.0
    %5469 = vmatprep.subr.mxu0 0.0
    %5470 = vmatpush1.xpose.msra.mxu0 0.0
    %5471 = vmatprep.subr.mxu0 0.0
    %5472 = vmatpush1.xpose.msra.mxu0 0.0
    %5473 = vmatprep.subr.mxu0 0.0
    %5474 = vmatpush1.xpose.msra.mxu0 0.0
    %5475 = vmatprep.subr.mxu0 0.0
    %5476 = vmatpush1.xpose.msra.mxu0 0.0
    %5477 = vmatprep.subr.mxu0 0.0
    %5478 = vmatpush1.xpose.msra.mxu0 0.0
    %5479 = vmatprep.subr.mxu0 0.0
    %5480 = vmatpush1.xpose.msra.mxu0 0.0
    %5481 = vmatprep.subr.mxu0 0.0
    %5482 = vmatpush1.xpose.msra.mxu0 0.0
    %5483 = vmatprep.subr.mxu0 0.0
    %5484 = vmatpush1.xpose.msra.mxu0 0.0
    %5485 = vmatprep.subr.mxu0 0.0
    %5486 = vmatpush1.xpose.msra.mxu0 0.0
    %5487 = vmatprep.subr.mxu0 0.0
    %5488 = vmatpush1.xpose.msra.mxu0 0.0
    %5489 = vmatprep.subr.mxu0 0.0
    %5490 = vmatpush1.xpose.msra.mxu0 0.0
    %5491 = vmatprep.subr.mxu0 0.0
    %5492 = vmatpush1.xpose.msra.mxu0 0.0
    %5493 = vmatprep.subr.mxu0 0.0
    %5494 = vmatpush1.xpose.msra.mxu0 0.0
    %5495 = vmatprep.mubr.f32.mxu0 0.0
    %5496 = vmatmul.mubr.f32.gmra.mrb[0].mxu0 %v5325
    %v5497 = vpop.f32.mrb[0].mxu0
    %v5498 = vadd.f32 0.0, %v5497
    %v5499 = vpop.f32.mrb[0].mxu0
    %5500 = vdwg.mxu0
    %v5501 = vmul.f32 %v5498, 1.442695
    %v5502 = vpow.pop %v5501
    %v5503 = vsel %vm4347, %v5502, 0.0
    %5504 = vadd.xlane.f32.xlu0 %v5503
    %v5505 = vpop.xlane.xlu0 %5504
    %v5506 = vadd.f32 %v5505, 1e-08
    %v5507 = vrcp.pop %v5506
    %v5508 = vmul.f32 %v5428, %v5507
    %v5509 = vadd.f32 %v5508, 1e-08
    %v5510 = vlog2.pop %v5509
    %v5511 = vmul.f32 %v5510, 0.6931472
    %v5512 = vsub.f32 0.0, %v5511
    %v5513 = vrot.slane %v5512, 4
    %v5514 = vadd.f32 %v5512, %v5513
    %v5515 = vrot.slane %v5514, 2
    %v5516 = vadd.f32 %v5514, %v5515
    %v5517 = vrot.slane %v5516, 1
    %v5518 = vadd.f32 %v5516, %v5517
    %v5519 = vmul.f32 %v5518, %v3454
    %v5520 = vadd.f32 %v5418, %v5519
    %5522 = vrot.lane.b32.xlu0 %v5004, 32
    %v5523 = vpop.permute.xlu0 %5522
    %v5525 = vmul.f32 %v4955, %v5523
    %v5526 = vsel %vm222, %v5525, 0.0
    %5527 = vadd.xlane.f32.xlu0 %v5526
    %v5528 = vpop.xlane.xlu0 %5527
    %v5529 = vmul.f32 %v5528, 1.442695
    %v5530 = vpow.pop %v5529
    %v5531 = vsel %vm222, %v5523, 0
    %5533 = vmatprep.subr.mxu0 0.0
    %5534 = vmatpush1.xpose.msra.mxu0 %v5531
    %5535 = vmatprep.subr.mxu0 0.0
    %5536 = vmatpush1.xpose.msra.mxu0 0.0
    %5537 = vmatprep.subr.mxu0 0.0
    %5538 = vmatpush1.xpose.msra.mxu0 0.0
    %5539 = vmatprep.subr.mxu0 0.0
    %5540 = vmatpush1.xpose.msra.mxu0 0.0
    %5541 = vmatprep.subr.mxu0 0.0
    %5542 = vmatpush1.xpose.msra.mxu0 0.0
    %5543 = vmatprep.subr.mxu0 0.0
    %5544 = vmatpush1.xpose.msra.mxu0 0.0
    %5545 = vmatprep.subr.mxu0 0.0
    %5546 = vmatpush1.xpose.msra.mxu0 0.0
    %5547 = vmatprep.subr.mxu0 0.0
    %5548 = vmatpush1.xpose.msra.mxu0 0.0
    %5549 = vmatprep.subr.mxu0 0.0
    %5550 = vmatpush1.xpose.msra.mxu0 0.0
    %5551 = vmatprep.subr.mxu0 0.0
    %5552 = vmatpush1.xpose.msra.mxu0 0.0
    %5553 = vmatprep.subr.mxu0 0.0
    %5554 = vmatpush1.xpose.msra.mxu0 0.0
    %5555 = vmatprep.subr.mxu0 0.0
    %5556 = vmatpush1.xpose.msra.mxu0 0.0
    %5557 = vmatprep.subr.mxu0 0.0
    %5558 = vmatpush1.xpose.msra.mxu0 0.0
    %5559 = vmatprep.subr.mxu0 0.0
    %5560 = vmatpush1.xpose.msra.mxu0 0.0
    %5561 = vmatprep.subr.mxu0 0.0
    %5562 = vmatpush1.xpose.msra.mxu0 0.0
    %5563 = vmatprep.subr.mxu0 0.0
    %5564 = vmatpush1.xpose.msra.mxu0 0.0
    %5565 = vmatprep.subr.mxu0 0.0
    %5566 = vmatpush1.xpose.msra.mxu0 0.0
    %5567 = vmatprep.subr.mxu0 0.0
    %5568 = vmatpush1.xpose.msra.mxu0 0.0
    %5569 = vmatprep.subr.mxu0 0.0
    %5570 = vmatpush1.xpose.msra.mxu0 0.0
    %5571 = vmatprep.subr.mxu0 0.0
    %5572 = vmatpush1.xpose.msra.mxu0 0.0
    %5573 = vmatprep.subr.mxu0 0.0
    %5574 = vmatpush1.xpose.msra.mxu0 0.0
    %5575 = vmatprep.subr.mxu0 0.0
    %5576 = vmatpush1.xpose.msra.mxu0 0.0
    %5577 = vmatprep.subr.mxu0 0.0
    %5578 = vmatpush1.xpose.msra.mxu0 0.0
    %5579 = vmatprep.subr.mxu0 0.0
    %5580 = vmatpush1.xpose.msra.mxu0 0.0
    %5581 = vmatprep.subr.mxu0 0.0
    %5582 = vmatpush1.xpose.msra.mxu0 0.0
    %5583 = vmatprep.subr.mxu0 0.0
    %5584 = vmatpush1.xpose.msra.mxu0 0.0
    %5585 = vmatprep.subr.mxu0 0.0
    %5586 = vmatpush1.xpose.msra.mxu0 0.0
    %5587 = vmatprep.subr.mxu0 0.0
    %5588 = vmatpush1.xpose.msra.mxu0 0.0
    %5589 = vmatprep.subr.mxu0 0.0
    %5590 = vmatpush1.xpose.msra.mxu0 0.0
    %5591 = vmatprep.subr.mxu0 0.0
    %5592 = vmatpush1.xpose.msra.mxu0 0.0
    %5593 = vmatprep.subr.mxu0 0.0
    %5594 = vmatpush1.xpose.msra.mxu0 0.0
    %5595 = vmatprep.subr.mxu0 0.0
    %5596 = vmatpush1.xpose.msra.mxu0 0.0
    %5597 = vmatprep.mubr.f32.mxu0 0.0
    %5598 = vmatmul.mubr.f32.gmra.mrb[0].mxu0 %v5325
    %v5599 = vpop.f32.mrb[0].mxu0
    %v5600 = vadd.f32 0.0, %v5599
    %v5601 = vpop.f32.mrb[0].mxu0
    %5602 = vdwg.mxu0
    %v5603 = vmul.f32 %v5600, 1.442695
    %v5604 = vpow.pop %v5603
    %v5605 = vsel %vm4347, %v5604, 0.0
    %5606 = vadd.xlane.f32.xlu0 %v5605
    %v5607 = vpop.xlane.xlu0 %5606
    %v5608 = vadd.f32 %v5607, 1e-08
    %v5609 = vrcp.pop %v5608
    %v5610 = vmul.f32 %v5530, %v5609
    %v5611 = vadd.f32 %v5610, 1e-08
    %v5612 = vlog2.pop %v5611
    %v5613 = vmul.f32 %v5612, 0.6931472
    %v5614 = vsub.f32 0.0, %v5613
    %v5615 = vrot.slane %v5614, 4
    %v5616 = vadd.f32 %v5614, %v5615
    %v5617 = vrot.slane %v5616, 2
    %v5618 = vadd.f32 %v5616, %v5617
    %v5619 = vrot.slane %v5618, 1
    %v5620 = vadd.f32 %v5618, %v5619
    %v5621 = vmul.f32 %v5620, %v3454
    %v5622 = vadd.f32 %v5520, %v5621
    %v5623 = vmul.f32 %v5622, 0.1
    %vm5624 = vcmp.eq.s32.totalorder %v3186, 0
    %v5625 = vsel %vm5624, %v3455, 0.0
    %vm5626 = vcmp.eq.s32.totalorder %v3186, 1
    %v5627 = vsel %vm5626, %v3698, 0.0
    %v5628 = vadd.f32 %v5625, %v5627
    %vm5629 = vcmp.eq.s32.totalorder %v3186, 2
    %v5630 = vsel %vm5629, %v3750, 0.0
    %v5631 = vadd.f32 %v5628, %v5630
    %vm5632 = vcmp.eq.s32.totalorder %v3186, 3
    %v5633 = vsel %vm5632, %v5623, 0.0
    %v5634 = vadd.f32 %v5631, %v5633
    %5635 = vst [vmem:[%s9] sm:$0x1] %v5634
    // Predicated region
    $region46: #{dccf_forward.1} parent=1 // pred_check
      _
    $region47: #{dccf_forward.1} parent=1 // pred_check_branch
      %5637 = sbr.rel (0) target = $region49
    $region48: #{dccf_forward.1} parent=1 // pred_region
      _
    $region49: #{dccf_forward.1} parent=1 // pred_fallthru
      _
    // Predicated region
    $region50: #{dccf_forward.1} parent=1 // pred_check
      _
    $region51: #{dccf_forward.1} parent=1 // pred_check_branch
      %5639 = sbr.rel (0) target = $region53
    $region52: #{dccf_forward.1} parent=1 // pred_region
      _
    $region53: #{dccf_forward.1} parent=1 // pred_fallthru
      _
    %5640 = vsyncpa [#allocation3], 1
    %5641 = vsyncpa [#allocation5], 1

</llo_original>
